<compile_context>
chip_gen: v7x
topology: tpu7x:2x2x1
jax: 0.10.0
libtpu: 0.0.40
codegen_flags: <defaults>
</compile_context>

<pallas_src>
import functools

import jax
import jax.numpy as jnp
from jax.experimental import pallas as pl
from jax.experimental.pallas import tpu as pltpu

EPS = 1e-5                    # nn.BatchNorm1d default eps
MATMUL_DTYPE = jnp.bfloat16   # MXU operand dtype
ACT_DTYPE = jnp.bfloat16      # storage dtype for the streamed h2 intermediate


# --------------------------------------------------------------------------
# helpers
# --------------------------------------------------------------------------

def _row_tile(size, cap, min_blocks=1):
    """Largest multiple of 8 that divides `size`, is <= cap, and keeps at least
    `min_blocks` grid steps (so v7x's 2 TensorCores have work to shard)."""
    limit = min(cap, size)
    if min_blocks > 1 and size // min_blocks >= 8:
        limit = min(limit, size // min_blocks)
    best = 8
    for t in range(8, limit + 1, 8):
        if size % t == 0:
            best = t
    return best


def _stats(h):
    """(rows, C) f32 -> (1, 2, C) per-tile [sum, sum_sq]."""
    s = jnp.sum(h, axis=0, keepdims=True)
    q = jnp.sum(h * h, axis=0, keepdims=True)
    return jnp.concatenate([s, q], axis=0)[None]


def _bn_affine(stats, rows, gamma, beta):
    """Per-tile partial stats -> BN (training-mode) scale/shift, f32."""
    s = jnp.sum(stats[:, 0, :], axis=0)
    q = jnp.sum(stats[:, 1, :], axis=0)
    mean = s / rows
    var = jnp.maximum(q / rows - mean * mean, 0.0)   # biased variance
    scale = gamma * jax.lax.rsqrt(var + EPS)         # (1, C)
    shift = beta - mean * scale                      # (1, C)
    return scale, shift


def _bn_relu_rows(h, gamma, beta):
    """In-kernel one-pass BN (training mode over rows) + ReLU, f32."""
    inv = 1.0 / h.shape[0]
    mean = jnp.sum(h, axis=0, keepdims=True) * inv
    var = jnp.maximum(jnp.sum(h * h, axis=0, keepdims=True) * inv - mean * mean, 0.0)
    scale = gamma * jax.lax.rsqrt(var + EPS)
    shift = beta - mean * scale
    return jnp.maximum(h * scale + shift, 0.0)


# --------------------------------------------------------------------------
# kernels
# --------------------------------------------------------------------------

def stage1_kernel(x_ref, w1_ref, b1_ref, st_ref):
    # Stats-only pass: x (TM, 8 zero-padded) @ W1 + b1 -> BN1 partial stats.
    h = jnp.dot(x_ref[...], w1_ref[...], preferred_element_type=jnp.float32) + b1_ref[...]
    st_ref[...] = _stats(h)


def stage2_kernel(x_ref, w1_ref, b1_ref, a1_ref, c1_ref, w2_ref, b2_ref,
                  h2_ref, st_ref):
    # Recompute x@W1 (cheap), BN1+ReLU, @W2 + b2; emit h2 (bf16) + BN2 partial stats.
    h1 = jnp.dot(x_ref[...], w1_ref[...], preferred_element_type=jnp.float32) + b1_ref[...]
    act1 = jnp.maximum(h1 * a1_ref[...] + c1_ref[...], 0.0)
    h = jnp.dot(act1.astype(MATMUL_DTYPE), w2_ref[...],
                preferred_element_type=jnp.float32) + b2_ref[...]
    h2_ref[...] = h.astype(ACT_DTYPE)
    st_ref[...] = _stats(h)


def stage3_kernel(h2_ref, a2_ref, c2_ref, w3_ref, b3_ref,
                  st_ref, red_ref, mx_sc, mn_sc):
    # Fused: BN2+ReLU -> @W3 + b3 (single execution of the dominant matmul).
    # Emits BN3 partial stats + per-batch running max/min of the RAW h3.
    # BN3+ReLU is applied to the reduced vectors in the wrapper (monotone per channel).
    t = pl.program_id(1)
    act2 = jnp.maximum(h2_ref[...].astype(jnp.float32) * a2_ref[...] + c2_ref[...], 0.0)
    h = jnp.dot(act2.astype(MATMUL_DTYPE), w3_ref[...],
                preferred_element_type=jnp.float32) + b3_ref[...]
    st_ref[...] = _stats(h)

    tmax = jnp.max(h, axis=0, keepdims=True)   # (1, 1024)
    tmin = jnp.min(h, axis=0, keepdims=True)

    @pl.when(t == 0)
    def _():
        mx_sc[...] = tmax
        mn_sc[...] = tmin

    @pl.when(t > 0)
    def _():
        mx_sc[...] = jnp.maximum(mx_sc[...], tmax)
        mn_sc[...] = jnp.minimum(mn_sc[...], tmin)

    @pl.when(t == pl.num_programs(1) - 1)
    def _():
        red_ref[...] = jnp.concatenate([mx_sc[...], mn_sc[...]], axis=0)[None]


def head_kernel(p_ref, fw1_ref, fb1_ref, fg1_ref, fbe1_ref,
                fw2_ref, fb2_ref, fg2_ref, fbe2_ref,
                fw3_ref, fb3_ref, out_ref):
    # FC head on the (B, 1024) pooled features: 1024 -> 512 -> 256 -> n*n (padded to 128).
    f = jnp.dot(p_ref[...].astype(MATMUL_DTYPE), fw1_ref[...],
                preferred_element_type=jnp.float32) + fb1_ref[...]
    f = _bn_relu_rows(f, fg1_ref[...], fbe1_ref[...])
    f = jnp.dot(f.astype(MATMUL_DTYPE), fw2_ref[...],
                preferred_element_type=jnp.float32) + fb2_ref[...]
    f = _bn_relu_rows(f, fg2_ref[...], fbe2_ref[...])
    out_ref[...] = jnp.dot(f.astype(MATMUL_DTYPE), fw3_ref[...],
                           preferred_element_type=jnp.float32) + fb3_ref[...]


# --------------------------------------------------------------------------
# parameters (PyTorch-default init, weights pre-transposed to (in, out))
# --------------------------------------------------------------------------

def init_params(key, n):
    layer_dims = [(3, 64), (64, 128), (128, 1024), (1024, 512), (512, 256), (256, n * n)]
    has_norm = [True, True, True, True, True, False]
    params = []
    keys = jax.random.split(key, 2 * len(layer_dims))
    for i, ((fan_in, fan_out), norm) in enumerate(zip(layer_dims, has_norm)):
        bound = 1.0 / jnp.sqrt(float(fan_in))          # nn.Linear default init
        w = jax.random.uniform(keys[2 * i], (fan_in, fan_out), jnp.float32, -bound, bound)
        b = jax.random.uniform(keys[2 * i + 1], (1, fan_out), jnp.float32, -bound, bound)
        params += [w, b]
        if norm:                                        # BatchNorm1d: weight=1, bias=0
            params += [jnp.ones((1, fan_out), jnp.float32),
                       jnp.zeros((1, fan_out), jnp.float32)]
    return params


# --------------------------------------------------------------------------
# forward
# --------------------------------------------------------------------------

@functools.partial(jax.jit, static_argnums=(2,))
def tnet_forward(x, params, n):
    (w1, b1, g1, be1,
     w2, b2, g2, be2,
     w3, b3, g3, be3,
     fw1, fb1, fg1, fbe1,
     fw2, fb2, fg2, fbe2,
     fw3, fb3) = params

    B, N, _ = x.shape
    M = B * N
    assert M % 8 == 0 and N % 8 == 0, "B*N and N must be multiples of 8"

    TM = _row_tile(M, 1024, min_blocks=4)   # row tile for passes 1/2 (keep >=4 steps for v7x)
    NM = M // TM
    TN = _row_tile(N, 1024)                 # per-batch point tile for the fused pass 3
    NT = N // TN

    # --- parameter / input prep: pad degenerate dims, cast matmul operands ---
    # TODO(synk): the x pad/cast is a separate tiny XLA pass over x; could be folded
    # into pass 1/2 with a (TM, 3) block if it ever shows up in profiles.
    x_pad = jnp.pad(x.reshape(M, 3), ((0, 0), (0, 5))).astype(MATMUL_DTYPE)   # K=3 -> 8
    w1p = jnp.pad(w1, ((0, 5), (0, 0))).astype(MATMUL_DTYPE)                  # (8, 64)
    w2c = w2.astype(MATMUL_DTYPE)
    w3c = w3.astype(MATMUL_DTYPE)
    fw1c = fw1.astype(MATMUL_DTYPE)
    fw2c = fw2.astype(MATMUL_DTYPE)
    out_pad = ((n * n + 127) // 128) * 128                                    # lane-dense output
    fw3p = jnp.pad(fw3, ((0, 0), (0, out_pad - n * n))).astype(MATMUL_DTYPE)
    fb3p = jnp.pad(fb3, ((0, 0), (0, out_pad - n * n)))

    parallel = pltpu.CompilerParams(dimension_semantics=("parallel",))

    # ---- pass 1: x @ W1 + b1, BN1 partial stats only (no h1 materialization) ----
    st1 = pl.pallas_call(
        stage1_kernel,
        grid=(NM,),
        in_specs=[
            pl.BlockSpec((TM, 8), lambda i: (i, 0)),
            pl.BlockSpec((8, 64), lambda i: (0, 0)),
            pl.BlockSpec((1, 64), lambda i: (0, 0)),
        ],
        out_specs=pl.BlockSpec((1, 2, 64), lambda i: (i, 0, 0)),
        out_shape=jax.ShapeDtypeStruct((NM, 2, 64), jnp.float32),
        compiler_params=parallel,
    )(x_pad, w1p, b1)
    a1, c1 = _bn_affine(st1, M, g1, be1)

    # ---- pass 2: recompute x@W1, BN1+ReLU -> @W2 + b2; emit h2 + BN2 stats ------
    h2_pre, st2 = pl.pallas_call(
        stage2_kernel,
        grid=(NM,),
        in_specs=[
            pl.BlockSpec((TM, 8), lambda i: (i, 0)),
            pl.BlockSpec((8, 64), lambda i: (0, 0)),
            pl.BlockSpec((1, 64), lambda i: (0, 0)),
            pl.BlockSpec((1, 64), lambda i: (0, 0)),
            pl.BlockSpec((1, 64), lambda i: (0, 0)),
            pl.BlockSpec((64, 128), lambda i: (0, 0)),
            pl.BlockSpec((1, 128), lambda i: (0, 0)),
        ],
        out_specs=[
            pl.BlockSpec((TM, 128), lambda i: (i, 0)),
            pl.BlockSpec((1, 2, 128), lambda i: (i, 0, 0)),
        ],
        out_shape=[
            jax.ShapeDtypeStruct((M, 128), ACT_DTYPE),
            jax.ShapeDtypeStruct((NM, 2, 128), jnp.float32),
        ],
        compiler_params=parallel,
    )(x_pad, w1p, b1, a1, c1, w2c, b2)
    a2, c2 = _bn_affine(st2, M, g2, be2)

    # ---- pass 3 (fused): BN2+ReLU -> @W3 + b3 once; BN3 stats + per-batch raw max/min
    st3, red = pl.pallas_call(
        stage3_kernel,
        grid=(B, NT),
        in_specs=[
            pl.BlockSpec((TN, 128), lambda b, t: (b * NT + t, 0)),
            pl.BlockSpec((1, 128), lambda b, t: (0, 0)),
            pl.BlockSpec((1, 128), lambda b, t: (0, 0)),
            pl.BlockSpec((128, 1024), lambda b, t: (0, 0)),
            pl.BlockSpec((1, 1024), lambda b, t: (0, 0)),
        ],
        out_specs=[
            pl.BlockSpec((1, 2, 1024), lambda b, t: (b * NT + t, 0, 0)),
            pl.BlockSpec((1, 2, 1024), lambda b, t: (b, 0, 0)),     # resident over t
        ],
        out_shape=[
            jax.ShapeDtypeStruct((B * NT, 2, 1024), jnp.float32),
            jax.ShapeDtypeStruct((B, 2, 1024), jnp.float32),        # [max, min] of raw h3
        ],
        scratch_shapes=[pltpu.VMEM((1, 1024), jnp.float32),
                        pltpu.VMEM((1, 1024), jnp.float32)],
        compiler_params=pltpu.CompilerParams(
            dimension_semantics=("parallel", "arbitrary")),
    )(h2_pre, a2, c2, w3c, b3)
    a3, c3 = _bn_affine(st3, M, g3, be3)

    # BN3 + ReLU commuted with the per-batch max: monotone per channel, so pick the
    # raw max where scale>0 and the raw min where scale<=0 (exact, gamma-sign safe).
    mx = red[:, 0, :]
    mn = red[:, 1, :]
    pooled = jnp.maximum(jnp.where(a3 > 0.0, mx, mn) * a3 + c3, 0.0)           # (B, 1024)

    # ---- FC head (tiny: B rows) ----------------------------------------------
    vmem = pl.BlockSpec(memory_space=pltpu.MemorySpace.VMEM)
    head_out = pl.pallas_call(
        head_kernel,
        in_specs=[vmem] * 11,
        out_specs=vmem,
        out_shape=jax.ShapeDtypeStruct((B, out_pad), jnp.float32),
    )(pooled, fw1c, fb1, fg1, fbe1, fw2c, fb2, fg2, fbe2, fw3p, fb3p)

    return head_out[:, : n * n].reshape(B, n, n)                               # x.view(-1, n, n)


if __name__ == "__main__":
    n = 3            # TNet(n=3): 3x3 spatial transform
    B, N = 4, 512    # small: 4 clouds, 512 points each, 3 coords

    key = jax.random.PRNGKey(0)
    kx, kp = jax.random.split(key)
    x = jax.random.normal(kx, (B, N, 3), dtype=jnp.float32)
    params = init_params(kp, n)

    out = tnet_forward(x, params, n)
    out = jax.block_until_ready(out)
    assert out.shape == (B, n, n) and out.dtype == jnp.float32
    assert bool(jnp.all(jnp.isfinite(out)))
    print("KERNEL_OK")
</pallas_src>

<mosaic_0001>
module attributes {stable_mosaic.version = 11 : i64} {
  func.func @stage1_kernel(%arg0: i32, %arg1: memref<512x8xbf16, #tpu.memory_space<vmem>>, %arg2: memref<8x64xbf16, #tpu.memory_space<vmem>>, %arg3: memref<1x64xf32, #tpu.memory_space<vmem>>, %arg4: memref<1x2x64xf32, #tpu.memory_space<vmem>>) attributes {dimension_semantics = [#tpu.dimension_semantics<parallel>], iteration_bounds = array<i64: 4>, scalar_prefetch = 0 : i64, scratch_operands = 0 : i64, tpu.core_type = #tpu.core_type<tc>, window_params = [{transform_indices = @transform_0, window_bounds = array<i64: 512, 8>}, {pipeline_mode = #tpu.pipeline_mode<synchronous>, transform_indices = @transform_1, window_bounds = array<i64: 8, 64>}, {pipeline_mode = #tpu.pipeline_mode<synchronous>, transform_indices = @transform_2, window_bounds = array<i64: 1, 64>}, {transform_indices = @transform_3, window_bounds = array<i64: 1, 2, 64>}]} {
    %c0 = arith.constant 0 : index
    %c0_0 = arith.constant 0 : index
    %0 = vector.load %arg1[%c0, %c0_0] : memref<512x8xbf16, #tpu.memory_space<vmem>>, vector<512x8xbf16>
    %c0_1 = arith.constant 0 : index
    %c0_2 = arith.constant 0 : index
    %1 = vector.load %arg2[%c0_1, %c0_2] : memref<8x64xbf16, #tpu.memory_space<vmem>>, vector<8x64xbf16>
    %cst = arith.constant dense<0.000000e+00> : vector<512x64xf32>
    %2 = tpu.matmul %0, %1, %cst {dimension_numbers = #tpu.dot_dimension_numbers<[1], [0], [0], [1], [0, 0, 1, 1], [], []>} : vector<512x8xbf16>, vector<8x64xbf16>, vector<512x64xf32> -> vector<512x64xf32>
    %c0_3 = arith.constant 0 : index
    %c0_4 = arith.constant 0 : index
    %3 = vector.load %arg3[%c0_3, %c0_4] : memref<1x64xf32, #tpu.memory_space<vmem>>, vector<1x64xf32>
    %4 = vector.broadcast %3 : vector<1x64xf32> to vector<512x64xf32>
    %5 = arith.addf %2, %4 : vector<512x64xf32>
    %cst_5 = arith.constant dense<0.000000e+00> : vector<64xf32>
    %6 = vector.multi_reduction <add>, %5, %cst_5 [0] : vector<512x64xf32> to vector<64xf32>
    %7 = vector.shape_cast %6 : vector<64xf32> to vector<1x64xf32>
    %8 = arith.mulf %5, %5 : vector<512x64xf32>
    %cst_6 = arith.constant dense<0.000000e+00> : vector<64xf32>
    %9 = vector.multi_reduction <add>, %8, %cst_6 [0] : vector<512x64xf32> to vector<64xf32>
    %10 = vector.shape_cast %9 : vector<64xf32> to vector<1x64xf32>
    %11 = tpu.concatenate %7, %10 in 0 : vector<1x64xf32>, vector<1x64xf32> -> vector<2x64xf32>
    %12 = vector.shape_cast %11 : vector<2x64xf32> to vector<1x2x64xf32>
    %c0_7 = arith.constant 0 : index
    %c0_8 = arith.constant 0 : index
    %c0_9 = arith.constant 0 : index
    %13 = vector.load %arg4[%c0_7, %c0_8, %c0_9] : memref<1x2x64xf32, #tpu.memory_space<vmem>>, vector<1x2x64xf32>
    tpu.vector_store %arg4[%c0_7, %c0_8, %c0_9], %12 {strides = array<i32>} : memref<1x2x64xf32, #tpu.memory_space<vmem>>, vector<1x2x64xf32>,
    return
  }
  func.func @transform_0(%arg0: i32) -> (i32, i32) {
    %c0_i32 = arith.constant 0 : i32
    %c0_i32_0 = arith.constant 0 : i32
    return %arg0, %c0_i32 : i32, i32
  }
  func.func @transform_1(%arg0: i32) -> (i32, i32) {
    %c0_i32 = arith.constant 0 : i32
    %c0_i32_0 = arith.constant 0 : i32
    %c0_i32_1 = arith.constant 0 : i32
    return %c0_i32, %c0_i32_0 : i32, i32
  }
  func.func @transform_2(%arg0: i32) -> (i32, i32) {
    %c0_i32 = arith.constant 0 : i32
    %c0_i32_0 = arith.constant 0 : i32
    %c0_i32_1 = arith.constant 0 : i32
    return %c0_i32, %c0_i32_0 : i32, i32
  }
  func.func @transform_3(%arg0: i32) -> (i32, i32, i32) {
    %c0_i32 = arith.constant 0 : i32
    %c0_i32_0 = arith.constant 0 : i32
    %c0_i32_1 = arith.constant 0 : i32
    return %arg0, %c0_i32, %c0_i32_0 : i32, i32, i32
  }
}

module attributes {stable_mosaic.version = 11 : i64} {
  func.func @stage2_kernel(%arg0: i32, %arg1: memref<512x8xbf16, #tpu.memory_space<vmem>>, %arg2: memref<8x64xbf16, #tpu.memory_space<vmem>>, %arg3: memref<1x64xf32, #tpu.memory_space<vmem>>, %arg4: memref<1x64xf32, #tpu.memory_space<vmem>>, %arg5: memref<1x64xf32, #tpu.memory_space<vmem>>, %arg6: memref<64x128xbf16, #tpu.memory_space<vmem>>, %arg7: memref<1x128xf32, #tpu.memory_space<vmem>>, %arg8: memref<512x128xbf16, #tpu.memory_space<vmem>>, %arg9: memref<1x2x128xf32, #tpu.memory_space<vmem>>) attributes {dimension_semantics = [#tpu.dimension_semantics<parallel>], iteration_bounds = array<i64: 4>, scalar_prefetch = 0 : i64, scratch_operands = 0 : i64, tpu.core_type = #tpu.core_type<tc>, window_params = [{transform_indices = @transform_0, window_bounds = array<i64: 512, 8>}, {pipeline_mode = #tpu.pipeline_mode<synchronous>, transform_indices = @transform_1, window_bounds = array<i64: 8, 64>}, {pipeline_mode = #tpu.pipeline_mode<synchronous>, transform_indices = @transform_2, window_bounds = array<i64: 1, 64>}, {pipeline_mode = #tpu.pipeline_mode<synchronous>, transform_indices = @transform_3, window_bounds = array<i64: 1, 64>}, {pipeline_mode = #tpu.pipeline_mode<synchronous>, transform_indices = @transform_4, window_bounds = array<i64: 1, 64>}, {pipeline_mode = #tpu.pipeline_mode<synchronous>, transform_indices = @transform_5, window_bounds = array<i64: 64, 128>}, {pipeline_mode = #tpu.pipeline_mode<synchronous>, transform_indices = @transform_6, window_bounds = array<i64: 1, 128>}, {transform_indices = @transform_7, window_bounds = array<i64: 512, 128>}, {transform_indices = @transform_8, window_bounds = array<i64: 1, 2, 128>}]} {
    %c0 = arith.constant 0 : index
    %c0_0 = arith.constant 0 : index
    %0 = vector.load %arg1[%c0, %c0_0] : memref<512x8xbf16, #tpu.memory_space<vmem>>, vector<512x8xbf16>
    %c0_1 = arith.constant 0 : index
    %c0_2 = arith.constant 0 : index
    %1 = vector.load %arg2[%c0_1, %c0_2] : memref<8x64xbf16, #tpu.memory_space<vmem>>, vector<8x64xbf16>
    %cst = arith.constant dense<0.000000e+00> : vector<512x64xf32>
    %2 = tpu.matmul %0, %1, %cst {dimension_numbers = #tpu.dot_dimension_numbers<[1], [0], [0], [1], [0, 0, 1, 1], [], []>} : vector<512x8xbf16>, vector<8x64xbf16>, vector<512x64xf32> -> vector<512x64xf32>
    %c0_3 = arith.constant 0 : index
    %c0_4 = arith.constant 0 : index
    %3 = vector.load %arg3[%c0_3, %c0_4] : memref<1x64xf32, #tpu.memory_space<vmem>>, vector<1x64xf32>
    %4 = vector.broadcast %3 : vector<1x64xf32> to vector<512x64xf32>
    %5 = arith.addf %2, %4 : vector<512x64xf32>
    %c0_5 = arith.constant 0 : index
    %c0_6 = arith.constant 0 : index
    %6 = vector.load %arg4[%c0_5, %c0_6] : memref<1x64xf32, #tpu.memory_space<vmem>>, vector<1x64xf32>
    %7 = vector.broadcast %6 : vector<1x64xf32> to vector<512x64xf32>
    %8 = arith.mulf %5, %7 : vector<512x64xf32>
    %c0_7 = arith.constant 0 : index
    %c0_8 = arith.constant 0 : index
    %9 = vector.load %arg5[%c0_7, %c0_8] : memref<1x64xf32, #tpu.memory_space<vmem>>, vector<1x64xf32>
    %10 = vector.broadcast %9 : vector<1x64xf32> to vector<512x64xf32>
    %11 = arith.addf %8, %10 : vector<512x64xf32>
    %cst_9 = arith.constant 0.000000e+00 : f32
    %12 = vector.broadcast %cst_9 : f32 to vector<512x64xf32>
    %13 = arith.maximumf %11, %12 : vector<512x64xf32>
    %14 = arith.truncf %13 : vector<512x64xf32> to vector<512x64xbf16>
    %c0_10 = arith.constant 0 : index
    %c0_11 = arith.constant 0 : index
    %15 = vector.load %arg6[%c0_10, %c0_11] : memref<64x128xbf16, #tpu.memory_space<vmem>>, vector<64x128xbf16>
    %cst_12 = arith.constant dense<0.000000e+00> : vector<512x128xf32>
    %16 = tpu.matmul %14, %15, %cst_12 {dimension_numbers = #tpu.dot_dimension_numbers<[1], [0], [0], [1], [0, 0, 1, 1], [], []>} : vector<512x64xbf16>, vector<64x128xbf16>, vector<512x128xf32> -> vector<512x128xf32>
    %c0_13 = arith.constant 0 : index
    %c0_14 = arith.constant 0 : index
    %17 = vector.load %arg7[%c0_13, %c0_14] : memref<1x128xf32, #tpu.memory_space<vmem>>, vector<1x128xf32>
    %18 = vector.broadcast %17 : vector<1x128xf32> to vector<512x128xf32>
    %19 = arith.addf %16, %18 : vector<512x128xf32>
    %20 = arith.truncf %19 : vector<512x128xf32> to vector<512x128xbf16>
    %c0_15 = arith.constant 0 : index
    %c0_16 = arith.constant 0 : index
    %21 = vector.load %arg8[%c0_15, %c0_16] : memref<512x128xbf16, #tpu.memory_space<vmem>>, vector<512x128xbf16>
    tpu.vector_store %arg8[%c0_15, %c0_16], %20 {strides = array<i32>} : memref<512x128xbf16, #tpu.memory_space<vmem>>, vector<512x128xbf16>,
    %cst_17 = arith.constant dense<0.000000e+00> : vector<128xf32>
    %22 = vector.multi_reduction <add>, %19, %cst_17 [0] : vector<512x128xf32> to vector<128xf32>
    %23 = vector.shape_cast %22 : vector<128xf32> to vector<1x128xf32>
    %24 = arith.mulf %19, %19 : vector<512x128xf32>
    %cst_18 = arith.constant dense<0.000000e+00> : vector<128xf32>
    %25 = vector.multi_reduction <add>, %24, %cst_18 [0] : vector<512x128xf32> to vector<128xf32>
    %26 = vector.shape_cast %25 : vector<128xf32> to vector<1x128xf32>
    %27 = tpu.concatenate %23, %26 in 0 : vector<1x128xf32>, vector<1x128xf32> -> vector<2x128xf32>
    %28 = vector.shape_cast %27 : vector<2x128xf32> to vector<1x2x128xf32>
    %c0_19 = arith.constant 0 : index
    %c0_20 = arith.constant 0 : index
    %c0_21 = arith.constant 0 : index
    %29 = vector.load %arg9[%c0_19, %c0_20, %c0_21] : memref<1x2x128xf32, #tpu.memory_space<vmem>>, vector<1x2x128xf32>
    tpu.vector_store %arg9[%c0_19, %c0_20, %c0_21], %28 {strides = array<i32>} : memref<1x2x128xf32, #tpu.memory_space<vmem>>, vector<1x2x128xf32>,
    return
  }
  func.func @transform_0(%arg0: i32) -> (i32, i32) {
    %c0_i32 = arith.constant 0 : i32
    %c0_i32_0 = arith.constant 0 : i32
    return %arg0, %c0_i32 : i32, i32
  }
  func.func @transform_1(%arg0: i32) -> (i32, i32) {
    %c0_i32 = arith.constant 0 : i32
    %c0_i32_0 = arith.constant 0 : i32
    %c0_i32_1 = arith.constant 0 : i32
    return %c0_i32, %c0_i32_0 : i32, i32
  }
  func.func @transform_2(%arg0: i32) -> (i32, i32) {
    %c0_i32 = arith.constant 0 : i32
    %c0_i32_0 = arith.constant 0 : i32
    %c0_i32_1 = arith.constant 0 : i32
    return %c0_i32, %c0_i32_0 : i32, i32
  }
  func.func @transform_3(%arg0: i32) -> (i32, i32) {
    %c0_i32 = arith.constant 0 : i32
    %c0_i32_0 = arith.constant 0 : i32
    %c0_i32_1 = arith.constant 0 : i32
    return %c0_i32, %c0_i32_0 : i32, i32
  }
  func.func @transform_4(%arg0: i32) -> (i32, i32) {
    %c0_i32 = arith.constant 0 : i32
    %c0_i32_0 = arith.constant 0 : i32
    %c0_i32_1 = arith.constant 0 : i32
    return %c0_i32, %c0_i32_0 : i32, i32
  }
  func.func @transform_5(%arg0: i32) -> (i32, i32) {
    %c0_i32 = arith.constant 0 : i32
    %c0_i32_0 = arith.constant 0 : i32
    %c0_i32_1 = arith.constant 0 : i32
    return %c0_i32, %c0_i32_0 : i32, i32
  }
  func.func @transform_6(%arg0: i32) -> (i32, i32) {
    %c0_i32 = arith.constant 0 : i32
    %c0_i32_0 = arith.constant 0 : i32
    %c0_i32_1 = arith.constant 0 : i32
    return %c0_i32, %c0_i32_0 : i32, i32
  }
  func.func @transform_7(%arg0: i32) -> (i32, i32) {
    %c0_i32 = arith.constant 0 : i32
    %c0_i32_0 = arith.constant 0 : i32
    return %arg0, %c0_i32 : i32, i32
  }
  func.func @transform_8(%arg0: i32) -> (i32, i32, i32) {
    %c0_i32 = arith.constant 0 : i32
    %c0_i32_0 = arith.constant 0 : i32
    %c0_i32_1 = arith.constant 0 : i32
    return %arg0, %c0_i32, %c0_i32_0 : i32, i32, i32
  }
}

module attributes {stable_mosaic.version = 11 : i64} {
  func.func @stage3_kernel(%arg0: i32, %arg1: i32, %arg2: memref<512x128xbf16, #tpu.memory_space<vmem>>, %arg3: memref<1x128xf32, #tpu.memory_space<vmem>>, %arg4: memref<1x128xf32, #tpu.memory_space<vmem>>, %arg5: memref<128x1024xbf16, #tpu.memory_space<vmem>>, %arg6: memref<1x1024xf32, #tpu.memory_space<vmem>>, %arg7: memref<1x2x1024xf32, #tpu.memory_space<vmem>>, %arg8: memref<1x2x1024xf32, #tpu.memory_space<vmem>>, %arg9: memref<1x1024xf32, #tpu.memory_space<vmem>>, %arg10: memref<1x1024xf32, #tpu.memory_space<vmem>>) attributes {dimension_semantics = [#tpu.dimension_semantics<parallel>, #tpu.dimension_semantics<arbitrary>], iteration_bounds = array<i64: 4, 1>, scalar_prefetch = 0 : i64, scratch_operands = 2 : i64, tpu.core_type = #tpu.core_type<tc>, window_params = [{transform_indices = @transform_0, window_bounds = array<i64: 512, 128>}, {pipeline_mode = #tpu.pipeline_mode<synchronous>, transform_indices = @transform_1, window_bounds = array<i64: 1, 128>}, {pipeline_mode = #tpu.pipeline_mode<synchronous>, transform_indices = @transform_2, window_bounds = array<i64: 1, 128>}, {pipeline_mode = #tpu.pipeline_mode<synchronous>, transform_indices = @transform_3, window_bounds = array<i64: 128, 1024>}, {pipeline_mode = #tpu.pipeline_mode<synchronous>, transform_indices = @transform_4, window_bounds = array<i64: 1, 1024>}, {transform_indices = @transform_5, window_bounds = array<i64: 1, 2, 1024>}, {transform_indices = @transform_6, window_bounds = array<i64: 1, 2, 1024>}]} {
    %c0 = arith.constant 0 : index
    %c0_0 = arith.constant 0 : index
    %0 = vector.load %arg2[%c0, %c0_0] : memref<512x128xbf16, #tpu.memory_space<vmem>>, vector<512x128xbf16>
    %1 = arith.extf %0 : vector<512x128xbf16> to vector<512x128xf32>
    %c0_1 = arith.constant 0 : index
    %c0_2 = arith.constant 0 : index
    %2 = vector.load %arg3[%c0_1, %c0_2] : memref<1x128xf32, #tpu.memory_space<vmem>>, vector<1x128xf32>
    %3 = vector.broadcast %2 : vector<1x128xf32> to vector<512x128xf32>
    %4 = arith.mulf %1, %3 : vector<512x128xf32>
    %c0_3 = arith.constant 0 : index
    %c0_4 = arith.constant 0 : index
    %5 = vector.load %arg4[%c0_3, %c0_4] : memref<1x128xf32, #tpu.memory_space<vmem>>, vector<1x128xf32>
    %6 = vector.broadcast %5 : vector<1x128xf32> to vector<512x128xf32>
    %7 = arith.addf %4, %6 : vector<512x128xf32>
    %cst = arith.constant 0.000000e+00 : f32
    %8 = vector.broadcast %cst : f32 to vector<512x128xf32>
    %9 = arith.maximumf %7, %8 : vector<512x128xf32>
    %10 = arith.truncf %9 : vector<512x128xf32> to vector<512x128xbf16>
    %c0_5 = arith.constant 0 : index
    %c0_6 = arith.constant 0 : index
    %11 = vector.load %arg5[%c0_5, %c0_6] : memref<128x1024xbf16, #tpu.memory_space<vmem>>, vector<128x1024xbf16>
    %cst_7 = arith.constant dense<0.000000e+00> : vector<512x1024xf32>
    %12 = tpu.matmul %10, %11, %cst_7 {dimension_numbers = #tpu.dot_dimension_numbers<[1], [0], [0], [1], [0, 0, 1, 1], [], []>} : vector<512x128xbf16>, vector<128x1024xbf16>, vector<512x1024xf32> -> vector<512x1024xf32>
    %c0_8 = arith.constant 0 : index
    %c0_9 = arith.constant 0 : index
    %13 = vector.load %arg6[%c0_8, %c0_9] : memref<1x1024xf32, #tpu.memory_space<vmem>>, vector<1x1024xf32>
    %14 = vector.broadcast %13 : vector<1x1024xf32> to vector<512x1024xf32>
    %15 = arith.addf %12, %14 : vector<512x1024xf32>
    %cst_10 = arith.constant dense<0.000000e+00> : vector<1024xf32>
    %16 = vector.multi_reduction <add>, %15, %cst_10 [0] : vector<512x1024xf32> to vector<1024xf32>
    %17 = vector.shape_cast %16 : vector<1024xf32> to vector<1x1024xf32>
    %18 = arith.mulf %15, %15 : vector<512x1024xf32>
    %cst_11 = arith.constant dense<0.000000e+00> : vector<1024xf32>
    %19 = vector.multi_reduction <add>, %18, %cst_11 [0] : vector<512x1024xf32> to vector<1024xf32>
    %20 = vector.shape_cast %19 : vector<1024xf32> to vector<1x1024xf32>
    %21 = tpu.concatenate %17, %20 in 0 : vector<1x1024xf32>, vector<1x1024xf32> -> vector<2x1024xf32>
    %22 = vector.shape_cast %21 : vector<2x1024xf32> to vector<1x2x1024xf32>
    %c0_12 = arith.constant 0 : index
    %c0_13 = arith.constant 0 : index
    %c0_14 = arith.constant 0 : index
    %23 = vector.load %arg7[%c0_12, %c0_13, %c0_14] : memref<1x2x1024xf32, #tpu.memory_space<vmem>>, vector<1x2x1024xf32>
    tpu.vector_store %arg7[%c0_12, %c0_13, %c0_14], %22 {strides = array<i32>} : memref<1x2x1024xf32, #tpu.memory_space<vmem>>, vector<1x2x1024xf32>,
    %cst_15 = arith.constant dense<0xFF800000> : vector<1024xf32>
    %24 = vector.multi_reduction <maximumf>, %15, %cst_15 [0] : vector<512x1024xf32> to vector<1024xf32>
    %25 = vector.shape_cast %24 : vector<1024xf32> to vector<1x1024xf32>
    %cst_16 = arith.constant dense<0x7F800000> : vector<1024xf32>
    %26 = vector.multi_reduction <minimumf>, %15, %cst_16 [0] : vector<512x1024xf32> to vector<1024xf32>
    %27 = vector.shape_cast %26 : vector<1024xf32> to vector<1x1024xf32>
    %c0_i32 = arith.constant 0 : i32
    %28 = arith.cmpi eq, %arg1, %c0_i32 : i32
    %29 = arith.extui %28 : i1 to i32
    %c0_i32_17 = arith.constant 0 : i32
    %30 = arith.cmpi ne, %29, %c0_i32_17 : i32
    scf.if %30 {
      %c0_22 = arith.constant 0 : index
      %c0_23 = arith.constant 0 : index
      %37 = vector.load %arg9[%c0_22, %c0_23] : memref<1x1024xf32, #tpu.memory_space<vmem>>, vector<1x1024xf32>
      tpu.vector_store %arg9[%c0_22, %c0_23], %25 {strides = array<i32>} : memref<1x1024xf32, #tpu.memory_space<vmem>>, vector<1x1024xf32>,
      %c0_24 = arith.constant 0 : index
      %c0_25 = arith.constant 0 : index
      %38 = vector.load %arg10[%c0_24, %c0_25] : memref<1x1024xf32, #tpu.memory_space<vmem>>, vector<1x1024xf32>
      tpu.vector_store %arg10[%c0_24, %c0_25], %27 {strides = array<i32>} : memref<1x1024xf32, #tpu.memory_space<vmem>>, vector<1x1024xf32>,
    } else {
    }
    %c0_i32_18 = arith.constant 0 : i32
    %31 = arith.cmpi sgt, %arg1, %c0_i32_18 : i32
    %32 = arith.extui %31 : i1 to i32
    %c0_i32_19 = arith.constant 0 : i32
    %33 = arith.cmpi ne, %32, %c0_i32_19 : i32
    scf.if %33 {
      %c0_22 = arith.constant 0 : index
      %c0_23 = arith.constant 0 : index
      %37 = vector.load %arg9[%c0_22, %c0_23] : memref<1x1024xf32, #tpu.memory_space<vmem>>, vector<1x1024xf32>
      %38 = arith.maximumf %37, %25 : vector<1x1024xf32>
      %c0_24 = arith.constant 0 : index
      %c0_25 = arith.constant 0 : index
      %39 = vector.load %arg9[%c0_24, %c0_25] : memref<1x1024xf32, #tpu.memory_space<vmem>>, vector<1x1024xf32>
      tpu.vector_store %arg9[%c0_24, %c0_25], %38 {strides = array<i32>} : memref<1x1024xf32, #tpu.memory_space<vmem>>, vector<1x1024xf32>,
      %c0_26 = arith.constant 0 : index
      %c0_27 = arith.constant 0 : index
      %40 = vector.load %arg10[%c0_26, %c0_27] : memref<1x1024xf32, #tpu.memory_space<vmem>>, vector<1x1024xf32>
      %41 = arith.minimumf %40, %27 : vector<1x1024xf32>
      %c0_28 = arith.constant 0 : index
      %c0_29 = arith.constant 0 : index
      %42 = vector.load %arg10[%c0_28, %c0_29] : memref<1x1024xf32, #tpu.memory_space<vmem>>, vector<1x1024xf32>
      tpu.vector_store %arg10[%c0_28, %c0_29], %41 {strides = array<i32>} : memref<1x1024xf32, #tpu.memory_space<vmem>>, vector<1x1024xf32>,
    } else {
    }
    %c0_i32_20 = arith.constant 0 : i32
    %34 = arith.cmpi eq, %arg1, %c0_i32_20 : i32
    %35 = arith.extui %34 : i1 to i32
    %c0_i32_21 = arith.constant 0 : i32
    %36 = arith.cmpi ne, %35, %c0_i32_21 : i32
    scf.if %36 {
      %c0_22 = arith.constant 0 : index
      %c0_23 = arith.constant 0 : index
      %37 = vector.load %arg9[%c0_22, %c0_23] : memref<1x1024xf32, #tpu.memory_space<vmem>>, vector<1x1024xf32>
      %c0_24 = arith.constant 0 : index
      %c0_25 = arith.constant 0 : index
      %38 = vector.load %arg10[%c0_24, %c0_25] : memref<1x1024xf32, #tpu.memory_space<vmem>>, vector<1x1024xf32>
      %39 = tpu.concatenate %37, %38 in 0 : vector<1x1024xf32>, vector<1x1024xf32> -> vector<2x1024xf32>
      %40 = vector.shape_cast %39 : vector<2x1024xf32> to vector<1x2x1024xf32>
      %c0_26 = arith.constant 0 : index
      %c0_27 = arith.constant 0 : index
      %c0_28 = arith.constant 0 : index
      %41 = vector.load %arg8[%c0_26, %c0_27, %c0_28] : memref<1x2x1024xf32, #tpu.memory_space<vmem>>, vector<1x2x1024xf32>
      tpu.vector_store %arg8[%c0_26, %c0_27, %c0_28], %40 {strides = array<i32>} : memref<1x2x1024xf32, #tpu.memory_space<vmem>>, vector<1x2x1024xf32>,
    } else {
    }
    return
  }
  func.func @transform_0(%arg0: i32, %arg1: i32) -> (i32, i32) {
    %c1_i32 = arith.constant 1 : i32
    %0 = arith.muli %arg0, %c1_i32 : i32
    %1 = arith.addi %0, %arg1 : i32
    %c0_i32 = arith.constant 0 : i32
    %c0_i32_0 = arith.constant 0 : i32
    return %1, %c0_i32 : i32, i32
  }
  func.func @transform_1(%arg0: i32, %arg1: i32) -> (i32, i32) {
    %c0_i32 = arith.constant 0 : i32
    %c0_i32_0 = arith.constant 0 : i32
    %c0_i32_1 = arith.constant 0 : i32
    return %c0_i32, %c0_i32_0 : i32, i32
  }
  func.func @transform_2(%arg0: i32, %arg1: i32) -> (i32, i32) {
    %c0_i32 = arith.constant 0 : i32
    %c0_i32_0 = arith.constant 0 : i32
    %c0_i32_1 = arith.constant 0 : i32
    return %c0_i32, %c0_i32_0 : i32, i32
  }
  func.func @transform_3(%arg0: i32, %arg1: i32) -> (i32, i32) {
    %c0_i32 = arith.constant 0 : i32
    %c0_i32_0 = arith.constant 0 : i32
    %c0_i32_1 = arith.constant 0 : i32
    return %c0_i32, %c0_i32_0 : i32, i32
  }
  func.func @transform_4(%arg0: i32, %arg1: i32) -> (i32, i32) {
    %c0_i32 = arith.constant 0 : i32
    %c0_i32_0 = arith.constant 0 : i32
    %c0_i32_1 = arith.constant 0 : i32
    return %c0_i32, %c0_i32_0 : i32, i32
  }
  func.func @transform_5(%arg0: i32, %arg1: i32) -> (i32, i32, i32) {
    %c1_i32 = arith.constant 1 : i32
    %0 = arith.muli %arg0, %c1_i32 : i32
    %1 = arith.addi %0, %arg1 : i32
    %c0_i32 = arith.constant 0 : i32
    %c0_i32_0 = arith.constant 0 : i32
    %c0_i32_1 = arith.constant 0 : i32
    return %1, %c0_i32, %c0_i32_0 : i32, i32, i32
  }
  func.func @transform_6(%arg0: i32, %arg1: i32) -> (i32, i32, i32) {
    %c0_i32 = arith.constant 0 : i32
    %c0_i32_0 = arith.constant 0 : i32
    %c0_i32_1 = arith.constant 0 : i32
    return %arg0, %c0_i32, %c0_i32_0 : i32, i32, i32
  }
}

module attributes {stable_mosaic.version = 11 : i64} {
  func.func @head_kernel(%arg0: memref<4x1024xf32, #tpu.memory_space<vmem>>, %arg1: memref<1024x512xbf16, #tpu.memory_space<vmem>>, %arg2: memref<1x512xf32, #tpu.memory_space<vmem>>, %arg3: memref<1x512xf32, #tpu.memory_space<vmem>>, %arg4: memref<1x512xf32, #tpu.memory_space<vmem>>, %arg5: memref<512x256xbf16, #tpu.memory_space<vmem>>, %arg6: memref<1x256xf32, #tpu.memory_space<vmem>>, %arg7: memref<1x256xf32, #tpu.memory_space<vmem>>, %arg8: memref<1x256xf32, #tpu.memory_space<vmem>>, %arg9: memref<256x128xbf16, #tpu.memory_space<vmem>>, %arg10: memref<1x128xf32, #tpu.memory_space<vmem>>, %arg11: memref<4x128xf32, #tpu.memory_space<vmem>>) attributes {dimension_semantics = [], scalar_prefetch = 0 : i64, scratch_operands = 0 : i64, tpu.core_type = #tpu.core_type<tc>} {
    %c0 = arith.constant 0 : index
    %c0_0 = arith.constant 0 : index
    %0 = vector.load %arg0[%c0, %c0_0] : memref<4x1024xf32, #tpu.memory_space<vmem>>, vector<4x1024xf32>
    %1 = arith.truncf %0 : vector<4x1024xf32> to vector<4x1024xbf16>
    %c0_1 = arith.constant 0 : index
    %c0_2 = arith.constant 0 : index
    %2 = vector.load %arg1[%c0_1, %c0_2] : memref<1024x512xbf16, #tpu.memory_space<vmem>>, vector<1024x512xbf16>
    %cst = arith.constant dense<0.000000e+00> : vector<4x512xf32>
    %3 = tpu.matmul %1, %2, %cst {dimension_numbers = #tpu.dot_dimension_numbers<[1], [0], [0], [1], [0, 0, 1, 1], [], []>} : vector<4x1024xbf16>, vector<1024x512xbf16>, vector<4x512xf32> -> vector<4x512xf32>
    %c0_3 = arith.constant 0 : index
    %c0_4 = arith.constant 0 : index
    %4 = vector.load %arg2[%c0_3, %c0_4] : memref<1x512xf32, #tpu.memory_space<vmem>>, vector<1x512xf32>
    %5 = vector.broadcast %4 : vector<1x512xf32> to vector<4x512xf32>
    %6 = arith.addf %3, %5 : vector<4x512xf32>
    %c0_5 = arith.constant 0 : index
    %c0_6 = arith.constant 0 : index
    %7 = vector.load %arg3[%c0_5, %c0_6] : memref<1x512xf32, #tpu.memory_space<vmem>>, vector<1x512xf32>
    %c0_7 = arith.constant 0 : index
    %c0_8 = arith.constant 0 : index
    %8 = vector.load %arg4[%c0_7, %c0_8] : memref<1x512xf32, #tpu.memory_space<vmem>>, vector<1x512xf32>
    %cst_9 = arith.constant dense<0.000000e+00> : vector<512xf32>
    %9 = vector.multi_reduction <add>, %6, %cst_9 [0] : vector<4x512xf32> to vector<512xf32>
    %10 = vector.shape_cast %9 : vector<512xf32> to vector<1x512xf32>
    %cst_10 = arith.constant 2.500000e-01 : f32
    %11 = vector.broadcast %cst_10 : f32 to vector<1x512xf32>
    %12 = arith.mulf %10, %11 : vector<1x512xf32>
    %13 = arith.mulf %6, %6 : vector<4x512xf32>
    %cst_11 = arith.constant dense<0.000000e+00> : vector<512xf32>
    %14 = vector.multi_reduction <add>, %13, %cst_11 [0] : vector<4x512xf32> to vector<512xf32>
    %15 = vector.shape_cast %14 : vector<512xf32> to vector<1x512xf32>
    %cst_12 = arith.constant 2.500000e-01 : f32
    %16 = vector.broadcast %cst_12 : f32 to vector<1x512xf32>
    %17 = arith.mulf %15, %16 : vector<1x512xf32>
    %18 = arith.mulf %12, %12 : vector<1x512xf32>
    %19 = arith.subf %17, %18 : vector<1x512xf32>
    %cst_13 = arith.constant 0.000000e+00 : f32
    %20 = vector.broadcast %cst_13 : f32 to vector<1x512xf32>
    %21 = arith.maximumf %19, %20 : vector<1x512xf32>
    %cst_14 = arith.constant 9.99999974E-6 : f32
    %22 = vector.broadcast %cst_14 : f32 to vector<1x512xf32>
    %23 = arith.addf %21, %22 : vector<1x512xf32>
    %24 = math.rsqrt %23 : vector<1x512xf32>
    %25 = arith.mulf %7, %24 : vector<1x512xf32>
    %26 = arith.mulf %12, %25 : vector<1x512xf32>
    %27 = arith.subf %8, %26 : vector<1x512xf32>
    %28 = vector.broadcast %25 : vector<1x512xf32> to vector<4x512xf32>
    %29 = arith.mulf %6, %28 : vector<4x512xf32>
    %30 = vector.broadcast %27 : vector<1x512xf32> to vector<4x512xf32>
    %31 = arith.addf %29, %30 : vector<4x512xf32>
    %cst_15 = arith.constant 0.000000e+00 : f32
    %32 = vector.broadcast %cst_15 : f32 to vector<4x512xf32>
    %33 = arith.maximumf %31, %32 : vector<4x512xf32>
    %34 = arith.truncf %33 : vector<4x512xf32> to vector<4x512xbf16>
    %c0_16 = arith.constant 0 : index
    %c0_17 = arith.constant 0 : index
    %35 = vector.load %arg5[%c0_16, %c0_17] : memref<512x256xbf16, #tpu.memory_space<vmem>>, vector<512x256xbf16>
    %cst_18 = arith.constant dense<0.000000e+00> : vector<4x256xf32>
    %36 = tpu.matmul %34, %35, %cst_18 {dimension_numbers = #tpu.dot_dimension_numbers<[1], [0], [0], [1], [0, 0, 1, 1], [], []>} : vector<4x512xbf16>, vector<512x256xbf16>, vector<4x256xf32> -> vector<4x256xf32>
    %c0_19 = arith.constant 0 : index
    %c0_20 = arith.constant 0 : index
    %37 = vector.load %arg6[%c0_19, %c0_20] : memref<1x256xf32, #tpu.memory_space<vmem>>, vector<1x256xf32>
    %38 = vector.broadcast %37 : vector<1x256xf32> to vector<4x256xf32>
    %39 = arith.addf %36, %38 : vector<4x256xf32>
    %c0_21 = arith.constant 0 : index
    %c0_22 = arith.constant 0 : index
    %40 = vector.load %arg7[%c0_21, %c0_22] : memref<1x256xf32, #tpu.memory_space<vmem>>, vector<1x256xf32>
    %c0_23 = arith.constant 0 : index
    %c0_24 = arith.constant 0 : index
    %41 = vector.load %arg8[%c0_23, %c0_24] : memref<1x256xf32, #tpu.memory_space<vmem>>, vector<1x256xf32>
    %cst_25 = arith.constant dense<0.000000e+00> : vector<256xf32>
    %42 = vector.multi_reduction <add>, %39, %cst_25 [0] : vector<4x256xf32> to vector<256xf32>
    %43 = vector.shape_cast %42 : vector<256xf32> to vector<1x256xf32>
    %cst_26 = arith.constant 2.500000e-01 : f32
    %44 = vector.broadcast %cst_26 : f32 to vector<1x256xf32>
    %45 = arith.mulf %43, %44 : vector<1x256xf32>
    %46 = arith.mulf %39, %39 : vector<4x256xf32>
    %cst_27 = arith.constant dense<0.000000e+00> : vector<256xf32>
    %47 = vector.multi_reduction <add>, %46, %cst_27 [0] : vector<4x256xf32> to vector<256xf32>
    %48 = vector.shape_cast %47 : vector<256xf32> to vector<1x256xf32>
    %cst_28 = arith.constant 2.500000e-01 : f32
    %49 = vector.broadcast %cst_28 : f32 to vector<1x256xf32>
    %50 = arith.mulf %48, %49 : vector<1x256xf32>
    %51 = arith.mulf %45, %45 : vector<1x256xf32>
    %52 = arith.subf %50, %51 : vector<1x256xf32>
    %cst_29 = arith.constant 0.000000e+00 : f32
    %53 = vector.broadcast %cst_29 : f32 to vector<1x256xf32>
    %54 = arith.maximumf %52, %53 : vector<1x256xf32>
    %cst_30 = arith.constant 9.99999974E-6 : f32
    %55 = vector.broadcast %cst_30 : f32 to vector<1x256xf32>
    %56 = arith.addf %54, %55 : vector<1x256xf32>
    %57 = math.rsqrt %56 : vector<1x256xf32>
    %58 = arith.mulf %40, %57 : vector<1x256xf32>
    %59 = arith.mulf %45, %58 : vector<1x256xf32>
    %60 = arith.subf %41, %59 : vector<1x256xf32>
    %61 = vector.broadcast %58 : vector<1x256xf32> to vector<4x256xf32>
    %62 = arith.mulf %39, %61 : vector<4x256xf32>
    %63 = vector.broadcast %60 : vector<1x256xf32> to vector<4x256xf32>
    %64 = arith.addf %62, %63 : vector<4x256xf32>
    %cst_31 = arith.constant 0.000000e+00 : f32
    %65 = vector.broadcast %cst_31 : f32 to vector<4x256xf32>
    %66 = arith.maximumf %64, %65 : vector<4x256xf32>
    %67 = arith.truncf %66 : vector<4x256xf32> to vector<4x256xbf16>
    %c0_32 = arith.constant 0 : index
    %c0_33 = arith.constant 0 : index
    %68 = vector.load %arg9[%c0_32, %c0_33] : memref<256x128xbf16, #tpu.memory_space<vmem>>, vector<256x128xbf16>
    %cst_34 = arith.constant dense<0.000000e+00> : vector<4x128xf32>
    %69 = tpu.matmul %67, %68, %cst_34 {dimension_numbers = #tpu.dot_dimension_numbers<[1], [0], [0], [1], [0, 0, 1, 1], [], []>} : vector<4x256xbf16>, vector<256x128xbf16>, vector<4x128xf32> -> vector<4x128xf32>
    %c0_35 = arith.constant 0 : index
    %c0_36 = arith.constant 0 : index
    %70 = vector.load %arg10[%c0_35, %c0_36] : memref<1x128xf32, #tpu.memory_space<vmem>>, vector<1x128xf32>
    %71 = vector.broadcast %70 : vector<1x128xf32> to vector<4x128xf32>
    %72 = arith.addf %69, %71 : vector<4x128xf32>
    %c0_37 = arith.constant 0 : index
    %c0_38 = arith.constant 0 : index
    %73 = vector.load %arg11[%c0_37, %c0_38] : memref<4x128xf32, #tpu.memory_space<vmem>>, vector<4x128xf32>
    tpu.vector_store %arg11[%c0_37, %c0_38], %72 {strides = array<i32>} : memref<4x128xf32, #tpu.memory_space<vmem>>, vector<4x128xf32>,
    return
  }
}

</mosaic_0001>

<llo_original>
// kernel: tnet_forward.4
$region0: #{tnet_forward.4}
  #allocation0 [shape = 'u32[]', space=smem, size = 0x4, offset = 0x4, fixed_abs, tag = 'smem constant byte address 0x4 - core index']
  #allocation1 [shape = 'u32[144,128]{1,0:T(1,128)}', space=vmem, size = 0x12000, scoped, tag = 'internal scratch']
  %s0 = inlined_call_operand.vmem [shape: bf16[2048,8], index: 0, kind: input, shape index: {}]
  %s1 = inlined_call_operand.vmem [shape: bf16[8,64], index: 1, kind: input, shape index: {}]
  %s2 = inlined_call_operand.hbm [shape: f32[1,64], index: 2, kind: input, shape index: {}]
  %s3 = inlined_call_operand.vmem [shape: f32[4,2,64], index: 3, kind: output, shape index: {}]
  %s4 = sld [smem:[#allocation0]]
  $region49: #{tnet_forward.4} parent=0
    _
  %s6 = ssub.s32 1, %s4
  %s7 = scalar_select 0, %s6, %s4
  $region1: #{tnet_forward.4} parent=0
    #allocation2 [shape = 'u8[512]{0}', space=vmem, size = 0x400, scoped, tag = 'input window, operand 2, single buffered']
    #allocation3 [shape = 's32[2]{0}', space=sflag, size = 0x8, scoped, tag = 'scoped memory for tnet_forward.4']
    %8 = vsyncpa [#allocation3], 0
    loop: start=0, step=1, limit=6
    $region2: #{tnet_forward.4} parent=1 // loop_pre_header
      _
    $region3: #{tnet_forward.4} parent=1 // loop_header
      %s10 = sphi 0, %s14
      %p11 = scmp.ge.s32.totalorder %s10, 6
      %s20 = sphi 0, %s22
      %s23 = sphi 0, %s20
      %s24 = sphi 0, %s23
      %s40 = sphi 0, %s24
      %s44 = sphi 0, %s44
      %s46 = sphi 0, %s44
      %s47 = sphi 0, %s46
      %s61 = sphi 0, %s47
      %s65 = sphi 0, %s65
      %s67 = sphi 0, %s65
      %s68 = sphi 0, %s67
      %s82 = sphi 0, %s68
      %s88 = sphi 0, %s90
      %s91 = sphi 0, %s88
      %s92 = sphi 0, %s91
      %s108 = sphi 0, %s92
    $region4: #{tnet_forward.4} parent=1 // loop_header_branch
      %13 = sbr.rel (%p11) target = $region8
    $region5: #{tnet_forward.4} parent=1 // loop_body
      %s15 = ssub.s32 %s10, 1
      %s16 = ssub.s32 %s10, 2
      %s17 = sadd.s32 %s10, 1
      %s18 = ssub.s32 %s10, %s17
      %p19 = scmp.eq.s32.totalorder %s18, 0
      %s21 = sadd.s32 %s20, 1
      %s22 = scalar_select %p19, %s20, %s21
      %p25 = pneg %p19
      %p26 = scmp.eq.s32.totalorder %s10, 3
      %p27 = por %p25, %p26
      %p28 = scmp.ne.s32.totalorder %s20, %s23
      %p29 = scmp.eq.s32.totalorder %s10, 0
      %p30 = por %p28, %p29
      %p31 = scmp.ne.s32.totalorder %s20, %s23
      %p32 = scmp.eq.s32.totalorder %s15, 3
      %p33 = por %p31, %p32
      %p34 = scmp.ne.s32.totalorder %s23, %s24
      %p35 = scmp.eq.s32.totalorder %s15, 0
      %p36 = por %p34, %p35
      %p37 = scmp.ne.s32.totalorder %s23, %s24
      %p38 = scmp.eq.s32.totalorder %s16, 3
      %p39 = por %p37, %p38
      %p41 = scmp.ne.s32.totalorder %s24, %s40
      %p42 = scmp.eq.s32.totalorder %s16, 0
      %p43 = por %p41, %p42
      %s45 = sadd.s32 %s44, 1
      %p48 = scmp.eq.s32.totalorder %s10, 3
      %p49 = scmp.ne.s32.totalorder %s44, %s46
      %p50 = scmp.eq.s32.totalorder %s10, 0
      %p51 = por %p49, %p50
      %p52 = scmp.ne.s32.totalorder %s44, %s46
      %p53 = scmp.eq.s32.totalorder %s15, 3
      %p54 = por %p52, %p53
      %p55 = scmp.ne.s32.totalorder %s46, %s47
      %p56 = scmp.eq.s32.totalorder %s15, 0
      %p57 = por %p55, %p56
      %p58 = scmp.ne.s32.totalorder %s46, %s47
      %p59 = scmp.eq.s32.totalorder %s16, 3
      %p60 = por %p58, %p59
      %p62 = scmp.ne.s32.totalorder %s47, %s61
      %p63 = scmp.eq.s32.totalorder %s16, 0
      %p64 = por %p62, %p63
      %s66 = sadd.s32 %s65, 1
      %p69 = scmp.eq.s32.totalorder %s10, 3
      %p70 = scmp.ne.s32.totalorder %s65, %s67
      %p71 = scmp.eq.s32.totalorder %s10, 0
      %p72 = por %p70, %p71
      %p73 = scmp.ne.s32.totalorder %s65, %s67
      %p74 = scmp.eq.s32.totalorder %s15, 3
      %p75 = por %p73, %p74
      %p76 = scmp.ne.s32.totalorder %s67, %s68
      %p77 = scmp.eq.s32.totalorder %s15, 0
      %p78 = por %p76, %p77
      %p79 = scmp.ne.s32.totalorder %s67, %s68
      %p80 = scmp.eq.s32.totalorder %s16, 3
      %p81 = por %p79, %p80
      %p83 = scmp.ne.s32.totalorder %s68, %s82
      %p84 = scmp.eq.s32.totalorder %s16, 0
      %p85 = por %p83, %p84
      %s86 = ssub.s32 %s10, %s17
      %p87 = scmp.eq.s32.totalorder %s86, 0
      %s89 = sadd.s32 %s88, 1
      %s90 = scalar_select %p87, %s88, %s89
      %p93 = pneg %p87
      %p94 = scmp.eq.s32.totalorder %s10, 3
      %p95 = por %p93, %p94
      %p96 = scmp.ne.s32.totalorder %s88, %s91
      %p97 = scmp.eq.s32.totalorder %s10, 0
      %p98 = por %p96, %p97
      %p99 = scmp.ne.s32.totalorder %s88, %s91
      %p100 = scmp.eq.s32.totalorder %s15, 3
      %p101 = por %p99, %p100
      %p102 = scmp.ne.s32.totalorder %s91, %s92
      %p103 = scmp.eq.s32.totalorder %s15, 0
      %p104 = por %p102, %p103
      %p105 = scmp.ne.s32.totalorder %s91, %s92
      %p106 = scmp.eq.s32.totalorder %s16, 3
      %p107 = por %p105, %p106
      %p109 = scmp.ne.s32.totalorder %s92, %s108
      %p110 = scmp.eq.s32.totalorder %s16, 0
      %p111 = por %p109, %p110
      %p112 = scmp.le.s32.totalorder 1, %s10
      %p113 = scmp.lt.s32.totalorder %s10, 5
      %p114 = pnand %p112, %p113
      %p115 = pneg %p114
      // Predicated region
      $region9: #{tnet_forward.4} parent=5 // pred_check
        _
      $region10: #{tnet_forward.4} parent=5 // pred_check_branch
        %117 = sbr.rel (%p114) target = $region12
      $region11: #{tnet_forward.4} parent=5 // pred_region
        %s118 = ssub.s32 %s10, 1
        // Predicated region
        $region13: #{tnet_forward.4} parent=11 // pred_check
          %p119 = pneg %p57
        $region14: #{tnet_forward.4} parent=11 // pred_check_branch
          %121 = sbr.rel (%p119) target = $region16
        $region15: #{tnet_forward.4} parent=11 // pred_region
          _
        $region16: #{tnet_forward.4} parent=11 // pred_fallthru
          _
        // Predicated region
        $region17: #{tnet_forward.4} parent=11 // pred_check
          %p122 = pneg %p78
        $region18: #{tnet_forward.4} parent=11 // pred_check_branch
          %124 = sbr.rel (%p122) target = $region20
        $region19: #{tnet_forward.4} parent=11 // pred_region
          %s126 = ssub.s32 16, 16
          %127 = vsyncadd [#allocation3], %s126
          %s129 = sshll.u32 [#allocation2], 4
          %s130 = int_to_ptr.vmem [resolvable:$true] %s129
          %132 = dma.hbm_to_vmem [thread:$0]  %s2, 16, %s130, [#allocation3]
        $region20: #{tnet_forward.4} parent=11 // pred_fallthru
          _
      $region12: #{tnet_forward.4} parent=5 // pred_fallthru
        _
      %p133 = scmp.lt.s32.totalorder %s10, 4
      // Predicated region
      $region21: #{tnet_forward.4} parent=5 // pred_check
        %p134 = pneg %p133
      $region22: #{tnet_forward.4} parent=5 // pred_check_branch
        %136 = sbr.rel (%p134) target = $region24
      $region23: #{tnet_forward.4} parent=5 // pred_region
        // Predicated region
        $region25: #{tnet_forward.4} parent=23 // pred_check
          %p137 = pneg %p30
        $region26: #{tnet_forward.4} parent=23 // pred_check_branch
          %139 = sbr.rel (%p137) target = $region28
        $region27: #{tnet_forward.4} parent=23 // pred_region
          %s140 = smul.u32 64, %s10
          %p141 = scmp.lt.s32.totalorder %s140, 255
          %s142 = scalar_select %p141, %s140, 255
          %s143 = smul.addr %s142, 4
          %s144 = scalar_lea.vmem %s0, %s143
          %s145 = smul.u32 64, %s10
        $region28: #{tnet_forward.4} parent=23 // pred_fallthru
          _
      $region24: #{tnet_forward.4} parent=5 // pred_fallthru
        _
      %p146 = scmp.le.s32.totalorder 1, %s10
      %p147 = scmp.lt.s32.totalorder %s10, 5
      %p148 = pnand %p146, %p147
      %p149 = pneg %p148
      // Predicated region
      $region29: #{tnet_forward.4} parent=5 // pred_check
        _
      $region30: #{tnet_forward.4} parent=5 // pred_check_branch
        %151 = sbr.rel (%p148) target = $region32
      $region31: #{tnet_forward.4} parent=5 // pred_region
        %s152 = ssub.s32 %s10, 1
        // Predicated region
        $region33: #{tnet_forward.4} parent=31 // pred_check
          %p153 = pneg %p78
        $region34: #{tnet_forward.4} parent=31 // pred_check_branch
          %155 = sbr.rel (%p153) target = $region36
        $region35: #{tnet_forward.4} parent=31 // pred_region
          %156 = dma.done [#allocation3], 16
        $region36: #{tnet_forward.4} parent=31 // pred_fallthru
          _
        %s157 = smul.u32 64, %s15
        %p158 = scmp.lt.s32.totalorder %s157, 255
        %s159 = scalar_select %p158, %s157, 255
        %s160 = smul.addr %s159, 4
        %s161 = scalar_lea.vmem %s0, %s160
        %p162 = pneg %p36
        %p163 = pneg %p33
        %p164 = pneg %p57
        %p165 = pneg %p54
        %p166 = pneg %p78
        %p167 = pneg %p75
        %p168 = pneg %p104
        %p169 = pneg %p101
        %p170 = scmp.lt.s32.totalorder %s15, 3
        %s171 = scalar_select %p170, %s15, 3
        %s172 = smul.addr %s171, 2
        %s173 = scalar_lea.vmem %s3, %s172
        %s174 = smul.u32 64, %s15
        %p175 = scmp.lt.s32.totalorder %s174, 255
        %s176 = scalar_select %p175, %s174, 255
        %s177 = smul.addr %s176, 4
        %s178 = scalar_lea.vmem %s0, %s177
        %s179 = smul.u32 64, %s15
        %p180 = scmp.lt.s32.totalorder %s15, 3
        %s181 = scalar_select %p180, %s15, 3
        %s182 = smul.addr %s181, 2
        %s183 = scalar_lea.vmem %s3, %s182
        %v185 = vld [vmem:[%s178] sm:$0xf]
        %v186 = vld [vmem:[%s178 + $0x4] sm:$0xf]
        %v187 = vld [vmem:[%s178 + $0x8] sm:$0xf]
        %v188 = vld [vmem:[%s178 + $0xc] sm:$0xf]
        %v189 = vld [vmem:[%s178 + $0x10] sm:$0xf]
        %v190 = vld [vmem:[%s178 + $0x14] sm:$0xf]
        %v191 = vld [vmem:[%s178 + $0x18] sm:$0xf]
        %v192 = vld [vmem:[%s178 + $0x1c] sm:$0xf]
        %v193 = vld [vmem:[%s178 + $0x20] sm:$0xf]
        %v194 = vld [vmem:[%s178 + $0x24] sm:$0xf]
        %v195 = vld [vmem:[%s178 + $0x28] sm:$0xf]
        %v196 = vld [vmem:[%s178 + $0x2c] sm:$0xf]
        %v197 = vld [vmem:[%s178 + $0x30] sm:$0xf]
        %v198 = vld [vmem:[%s178 + $0x34] sm:$0xf]
        %v199 = vld [vmem:[%s178 + $0x38] sm:$0xf]
        %v200 = vld [vmem:[%s178 + $0x3c] sm:$0xf]
        %v201 = vld [vmem:[%s178 + $0x40] sm:$0xf]
        %v202 = vld [vmem:[%s178 + $0x44] sm:$0xf]
        %v203 = vld [vmem:[%s178 + $0x48] sm:$0xf]
        %v204 = vld [vmem:[%s178 + $0x4c] sm:$0xf]
        %v205 = vld [vmem:[%s178 + $0x50] sm:$0xf]
        %v206 = vld [vmem:[%s178 + $0x54] sm:$0xf]
        %v207 = vld [vmem:[%s178 + $0x58] sm:$0xf]
        %v208 = vld [vmem:[%s178 + $0x5c] sm:$0xf]
        %v209 = vld [vmem:[%s178 + $0x60] sm:$0xf]
        %v210 = vld [vmem:[%s178 + $0x64] sm:$0xf]
        %v211 = vld [vmem:[%s178 + $0x68] sm:$0xf]
        %v212 = vld [vmem:[%s178 + $0x6c] sm:$0xf]
        %v213 = vld [vmem:[%s178 + $0x70] sm:$0xf]
        %v214 = vld [vmem:[%s178 + $0x74] sm:$0xf]
        %v215 = vld [vmem:[%s178 + $0x78] sm:$0xf]
        %v216 = vld [vmem:[%s178 + $0x7c] sm:$0xf]
        %v217 = vld [vmem:[%s178 + $0x80] sm:$0xf]
        %v218 = vld [vmem:[%s178 + $0x84] sm:$0xf]
        %v219 = vld [vmem:[%s178 + $0x88] sm:$0xf]
        %v220 = vld [vmem:[%s178 + $0x8c] sm:$0xf]
        %v221 = vld [vmem:[%s178 + $0x90] sm:$0xf]
        %v222 = vld [vmem:[%s178 + $0x94] sm:$0xf]
        %v223 = vld [vmem:[%s178 + $0x98] sm:$0xf]
        %v224 = vld [vmem:[%s178 + $0x9c] sm:$0xf]
        %v225 = vld [vmem:[%s178 + $0xa0] sm:$0xf]
        %v226 = vld [vmem:[%s178 + $0xa4] sm:$0xf]
        %v227 = vld [vmem:[%s178 + $0xa8] sm:$0xf]
        %v228 = vld [vmem:[%s178 + $0xac] sm:$0xf]
        %v229 = vld [vmem:[%s178 + $0xb0] sm:$0xf]
        %v230 = vld [vmem:[%s178 + $0xb4] sm:$0xf]
        %v231 = vld [vmem:[%s178 + $0xb8] sm:$0xf]
        %v232 = vld [vmem:[%s178 + $0xbc] sm:$0xf]
        %v233 = vld [vmem:[%s178 + $0xc0] sm:$0xf]
        %v234 = vld [vmem:[%s178 + $0xc4] sm:$0xf]
        %v235 = vld [vmem:[%s178 + $0xc8] sm:$0xf]
        %v236 = vld [vmem:[%s178 + $0xcc] sm:$0xf]
        %v237 = vld [vmem:[%s178 + $0xd0] sm:$0xf]
        %v238 = vld [vmem:[%s178 + $0xd4] sm:$0xf]
        %v239 = vld [vmem:[%s178 + $0xd8] sm:$0xf]
        %v240 = vld [vmem:[%s178 + $0xdc] sm:$0xf]
        %v241 = vld [vmem:[%s178 + $0xe0] sm:$0xf]
        %v242 = vld [vmem:[%s178 + $0xe4] sm:$0xf]
        %v243 = vld [vmem:[%s178 + $0xe8] sm:$0xf]
        %v244 = vld [vmem:[%s178 + $0xec] sm:$0xf]
        %v245 = vld [vmem:[%s178 + $0xf0] sm:$0xf]
        %v246 = vld [vmem:[%s178 + $0xf4] sm:$0xf]
        %v247 = vld [vmem:[%s178 + $0xf8] sm:$0xf]
        %v248 = vld [vmem:[%s178 + $0xfc] sm:$0xf]
        %v249 = vld [vmem:[%s1] sm:$0xf]
        %v250 = vld [vmem:[#allocation2] sm:$0x1]
        %v252 = vlaneseq
        %v253 = vshrl.u32 %v252, 7
        %v254 = vsub.s32 0, %v253
        %v255 = vrot.slane %v250, %v254
        %v321 = vunpack.c.l.b16 %v185
        %v322 = vunpack.c.l.b16 %v186
        %v323 = vunpack.c.l.b16 %v187
        %v324 = vunpack.c.l.b16 %v188
        %v325 = vunpack.c.l.b16 %v189
        %v326 = vunpack.c.l.b16 %v190
        %v327 = vunpack.c.l.b16 %v191
        %v328 = vunpack.c.l.b16 %v192
        %v329 = vunpack.c.l.b16 %v193
        %v330 = vunpack.c.l.b16 %v194
        %v331 = vunpack.c.l.b16 %v195
        %v332 = vunpack.c.l.b16 %v196
        %v333 = vunpack.c.l.b16 %v197
        %v334 = vunpack.c.l.b16 %v198
        %v335 = vunpack.c.l.b16 %v199
        %v336 = vunpack.c.l.b16 %v200
        %v337 = vunpack.c.l.b16 %v201
        %v338 = vunpack.c.l.b16 %v202
        %v339 = vunpack.c.l.b16 %v203
        %v340 = vunpack.c.l.b16 %v204
        %v341 = vunpack.c.l.b16 %v205
        %v342 = vunpack.c.l.b16 %v206
        %v343 = vunpack.c.l.b16 %v207
        %v344 = vunpack.c.l.b16 %v208
        %v345 = vunpack.c.l.b16 %v209
        %v346 = vunpack.c.l.b16 %v210
        %v347 = vunpack.c.l.b16 %v211
        %v348 = vunpack.c.l.b16 %v212
        %v349 = vunpack.c.l.b16 %v213
        %v350 = vunpack.c.l.b16 %v214
        %v351 = vunpack.c.l.b16 %v215
        %v352 = vunpack.c.l.b16 %v216
        %v353 = vunpack.c.l.b16 %v217
        %v354 = vunpack.c.l.b16 %v218
        %v355 = vunpack.c.l.b16 %v219
        %v356 = vunpack.c.l.b16 %v220
        %v357 = vunpack.c.l.b16 %v221
        %v358 = vunpack.c.l.b16 %v222
        %v359 = vunpack.c.l.b16 %v223
        %v360 = vunpack.c.l.b16 %v224
        %v361 = vunpack.c.l.b16 %v225
        %v362 = vunpack.c.l.b16 %v226
        %v363 = vunpack.c.l.b16 %v227
        %v364 = vunpack.c.l.b16 %v228
        %v365 = vunpack.c.l.b16 %v229
        %v366 = vunpack.c.l.b16 %v230
        %v367 = vunpack.c.l.b16 %v231
        %v368 = vunpack.c.l.b16 %v232
        %v369 = vunpack.c.l.b16 %v233
        %v370 = vunpack.c.l.b16 %v234
        %v371 = vunpack.c.l.b16 %v235
        %v372 = vunpack.c.l.b16 %v236
        %v373 = vunpack.c.l.b16 %v237
        %v374 = vunpack.c.l.b16 %v238
        %v375 = vunpack.c.l.b16 %v239
        %v376 = vunpack.c.l.b16 %v240
        %v377 = vunpack.c.l.b16 %v241
        %v378 = vunpack.c.l.b16 %v242
        %v379 = vunpack.c.l.b16 %v243
        %v380 = vunpack.c.l.b16 %v244
        %v381 = vunpack.c.l.b16 %v245
        %v382 = vunpack.c.l.b16 %v246
        %v383 = vunpack.c.l.b16 %v247
        %v384 = vunpack.c.l.b16 %v248
        %v385 = vpack.c.b16 %v322, %v321
        %v386 = vpack.c.b16 %v324, %v323
        %v387 = vpack.c.b16 %v326, %v325
        %v388 = vpack.c.b16 %v328, %v327
        %v389 = vpack.c.b16 %v330, %v329
        %v390 = vpack.c.b16 %v332, %v331
        %v391 = vpack.c.b16 %v334, %v333
        %v392 = vpack.c.b16 %v336, %v335
        %v393 = vpack.c.b16 %v338, %v337
        %v394 = vpack.c.b16 %v340, %v339
        %v395 = vpack.c.b16 %v342, %v341
        %v396 = vpack.c.b16 %v344, %v343
        %v397 = vpack.c.b16 %v346, %v345
        %v398 = vpack.c.b16 %v348, %v347
        %v399 = vpack.c.b16 %v350, %v349
        %v400 = vpack.c.b16 %v352, %v351
        %v401 = vpack.c.b16 %v354, %v353
        %v402 = vpack.c.b16 %v356, %v355
        %v403 = vpack.c.b16 %v358, %v357
        %v404 = vpack.c.b16 %v360, %v359
        %v405 = vpack.c.b16 %v362, %v361
        %v406 = vpack.c.b16 %v364, %v363
        %v407 = vpack.c.b16 %v366, %v365
        %v408 = vpack.c.b16 %v368, %v367
        %v409 = vpack.c.b16 %v370, %v369
        %v410 = vpack.c.b16 %v372, %v371
        %v411 = vpack.c.b16 %v374, %v373
        %v412 = vpack.c.b16 %v376, %v375
        %v413 = vpack.c.b16 %v378, %v377
        %v414 = vpack.c.b16 %v380, %v379
        %v415 = vpack.c.b16 %v382, %v381
        %v416 = vpack.c.b16 %v384, %v383
        %vm417 = vcmask 64512
        %v419 = vsel %vm417, %v385, 0
        %v422 = vsel %vm417, %v386, 0
        %v425 = vsel %vm417, %v387, 0
        %v428 = vsel %vm417, %v388, 0
        %v431 = vsel %vm417, %v389, 0
        %v434 = vsel %vm417, %v390, 0
        %v437 = vsel %vm417, %v391, 0
        %v440 = vsel %vm417, %v392, 0
        %v443 = vsel %vm417, %v393, 0
        %v446 = vsel %vm417, %v394, 0
        %v449 = vsel %vm417, %v395, 0
        %v452 = vsel %vm417, %v396, 0
        %v455 = vsel %vm417, %v397, 0
        %v458 = vsel %vm417, %v398, 0
        %v461 = vsel %vm417, %v399, 0
        %v464 = vsel %vm417, %v400, 0
        %v467 = vsel %vm417, %v401, 0
        %v470 = vsel %vm417, %v402, 0
        %v473 = vsel %vm417, %v403, 0
        %v476 = vsel %vm417, %v404, 0
        %v479 = vsel %vm417, %v405, 0
        %v482 = vsel %vm417, %v406, 0
        %v485 = vsel %vm417, %v407, 0
        %v488 = vsel %vm417, %v408, 0
        %v491 = vsel %vm417, %v409, 0
        %v494 = vsel %vm417, %v410, 0
        %v497 = vsel %vm417, %v411, 0
        %v500 = vsel %vm417, %v412, 0
        %v503 = vsel %vm417, %v413, 0
        %v506 = vsel %vm417, %v414, 0
        %v509 = vsel %vm417, %v415, 0
        %v512 = vsel %vm417, %v416, 0
        %vm514 = vcmask 1043456
        %v516 = vsel %vm514, %v249, 0
        %518 = vmatprep.subr.bf16.mxu0 0
        %519 = vmatpush1.bf16.msra.mxu0 %v516
        %520 = vmatprep.subr.bf16.mxu0 0
        %521 = vmatpush1.bf16.msra.mxu0 0
        %522 = vmatprep.subr.bf16.mxu0 0
        %523 = vmatpush1.bf16.msra.mxu0 0
        %524 = vmatprep.subr.bf16.mxu0 0
        %525 = vmatpush1.bf16.msra.mxu0 0
        %526 = vmatprep.subr.bf16.mxu0 0
        %527 = vmatpush1.bf16.msra.mxu0 0
        %528 = vmatprep.subr.bf16.mxu0 0
        %529 = vmatpush1.bf16.msra.mxu0 0
        %530 = vmatprep.subr.bf16.mxu0 0
        %531 = vmatpush1.bf16.msra.mxu0 0
        %532 = vmatprep.subr.bf16.mxu0 0
        %533 = vmatpush1.bf16.msra.mxu0 0
        %534 = vmatprep.subr.bf16.mxu0 0
        %535 = vmatpush1.bf16.msra.mxu0 0
        %536 = vmatprep.subr.bf16.mxu0 0
        %537 = vmatpush1.bf16.msra.mxu0 0
        %538 = vmatprep.subr.bf16.mxu0 0
        %539 = vmatpush1.bf16.msra.mxu0 0
        %540 = vmatprep.subr.bf16.mxu0 0
        %541 = vmatpush1.bf16.msra.mxu0 0
        %542 = vmatprep.subr.bf16.mxu0 0
        %543 = vmatpush1.bf16.msra.mxu0 0
        %544 = vmatprep.subr.bf16.mxu0 0
        %545 = vmatpush1.bf16.msra.mxu0 0
        %546 = vmatprep.subr.bf16.mxu0 0
        %547 = vmatpush1.bf16.msra.mxu0 0
        %548 = vmatprep.subr.bf16.mxu0 0
        %549 = vmatpush1.bf16.msra.mxu0 0
        %550 = vmatprep.mubr.bf16.mxu0 0
        %551 = vmatmul.mubr.bf16.gmra.mrb[0].mxu0 %v419
        %v552 = vpop.f32.mrb[0].mxu0
        %v553 = vadd.f32 %v255, %v552
        %v554 = vpop.f32.mrb[0].mxu0
        %v555 = vpop.f32.mrb[0].mxu0
        %v556 = vadd.f32 %v255, %v555
        %v557 = vpop.f32.mrb[0].mxu0
        %558 = vmatprep.mubr.bf16.mxu0 0
        %559 = vmatmul.mubr.bf16.gmra.mrb[0].mxu0 %v422
        %v560 = vpop.f32.mrb[0].mxu0
        %v561 = vadd.f32 %v255, %v560
        %v562 = vpop.f32.mrb[0].mxu0
        %v563 = vpop.f32.mrb[0].mxu0
        %v564 = vadd.f32 %v255, %v563
        %v565 = vpop.f32.mrb[0].mxu0
        %566 = vmatprep.mubr.bf16.mxu0 0
        %567 = vmatmul.mubr.bf16.gmra.mrb[0].mxu0 %v425
        %v568 = vpop.f32.mrb[0].mxu0
        %v569 = vadd.f32 %v255, %v568
        %v570 = vpop.f32.mrb[0].mxu0
        %v571 = vpop.f32.mrb[0].mxu0
        %v572 = vadd.f32 %v255, %v571
        %v573 = vpop.f32.mrb[0].mxu0
        %574 = vmatprep.mubr.bf16.mxu0 0
        %575 = vmatmul.mubr.bf16.gmra.mrb[0].mxu0 %v428
        %v576 = vpop.f32.mrb[0].mxu0
        %v577 = vadd.f32 %v255, %v576
        %v578 = vpop.f32.mrb[0].mxu0
        %v579 = vpop.f32.mrb[0].mxu0
        %v580 = vadd.f32 %v255, %v579
        %v581 = vpop.f32.mrb[0].mxu0
        %582 = vmatprep.mubr.bf16.mxu0 0
        %583 = vmatmul.mubr.bf16.gmra.mrb[0].mxu0 %v431
        %v584 = vpop.f32.mrb[0].mxu0
        %v585 = vadd.f32 %v255, %v584
        %v586 = vpop.f32.mrb[0].mxu0
        %v587 = vpop.f32.mrb[0].mxu0
        %v588 = vadd.f32 %v255, %v587
        %v589 = vpop.f32.mrb[0].mxu0
        %590 = vmatprep.mubr.bf16.mxu0 0
        %591 = vmatmul.mubr.bf16.gmra.mrb[0].mxu0 %v434
        %v592 = vpop.f32.mrb[0].mxu0
        %v593 = vadd.f32 %v255, %v592
        %v594 = vpop.f32.mrb[0].mxu0
        %v595 = vpop.f32.mrb[0].mxu0
        %v596 = vadd.f32 %v255, %v595
        %v597 = vpop.f32.mrb[0].mxu0
        %598 = vmatprep.mubr.bf16.mxu0 0
        %599 = vmatmul.mubr.bf16.gmra.mrb[0].mxu0 %v437
        %v600 = vpop.f32.mrb[0].mxu0
        %v601 = vadd.f32 %v255, %v600
        %v602 = vpop.f32.mrb[0].mxu0
        %v603 = vpop.f32.mrb[0].mxu0
        %v604 = vadd.f32 %v255, %v603
        %v605 = vpop.f32.mrb[0].mxu0
        %606 = vmatprep.mubr.bf16.mxu0 0
        %607 = vmatmul.mubr.bf16.gmra.mrb[0].mxu0 %v440
        %v608 = vpop.f32.mrb[0].mxu0
        %v609 = vadd.f32 %v255, %v608
        %v610 = vpop.f32.mrb[0].mxu0
        %v611 = vpop.f32.mrb[0].mxu0
        %v612 = vadd.f32 %v255, %v611
        %v613 = vpop.f32.mrb[0].mxu0
        %614 = vmatprep.mubr.bf16.mxu0 0
        %615 = vmatmul.mubr.bf16.gmra.mrb[0].mxu0 %v443
        %v616 = vpop.f32.mrb[0].mxu0
        %v617 = vadd.f32 %v255, %v616
        %v618 = vpop.f32.mrb[0].mxu0
        %v619 = vpop.f32.mrb[0].mxu0
        %v620 = vadd.f32 %v255, %v619
        %v621 = vpop.f32.mrb[0].mxu0
        %622 = vmatprep.mubr.bf16.mxu0 0
        %623 = vmatmul.mubr.bf16.gmra.mrb[0].mxu0 %v446
        %v624 = vpop.f32.mrb[0].mxu0
        %v625 = vadd.f32 %v255, %v624
        %v626 = vpop.f32.mrb[0].mxu0
        %v627 = vpop.f32.mrb[0].mxu0
        %v628 = vadd.f32 %v255, %v627
        %v629 = vpop.f32.mrb[0].mxu0
        %630 = vmatprep.mubr.bf16.mxu0 0
        %631 = vmatmul.mubr.bf16.gmra.mrb[0].mxu0 %v449
        %v632 = vpop.f32.mrb[0].mxu0
        %v633 = vadd.f32 %v255, %v632
        %v634 = vpop.f32.mrb[0].mxu0
        %v635 = vpop.f32.mrb[0].mxu0
        %v636 = vadd.f32 %v255, %v635
        %v637 = vpop.f32.mrb[0].mxu0
        %638 = vmatprep.mubr.bf16.mxu0 0
        %639 = vmatmul.mubr.bf16.gmra.mrb[0].mxu0 %v452
        %v640 = vpop.f32.mrb[0].mxu0
        %v641 = vadd.f32 %v255, %v640
        %v642 = vpop.f32.mrb[0].mxu0
        %v643 = vpop.f32.mrb[0].mxu0
        %v644 = vadd.f32 %v255, %v643
        %v645 = vpop.f32.mrb[0].mxu0
        %646 = vmatprep.mubr.bf16.mxu0 0
        %647 = vmatmul.mubr.bf16.gmra.mrb[0].mxu0 %v455
        %v648 = vpop.f32.mrb[0].mxu0
        %v649 = vadd.f32 %v255, %v648
        %v650 = vpop.f32.mrb[0].mxu0
        %v651 = vpop.f32.mrb[0].mxu0
        %v652 = vadd.f32 %v255, %v651
        %v653 = vpop.f32.mrb[0].mxu0
        %654 = vmatprep.mubr.bf16.mxu0 0
        %655 = vmatmul.mubr.bf16.gmra.mrb[0].mxu0 %v458
        %v656 = vpop.f32.mrb[0].mxu0
        %v657 = vadd.f32 %v255, %v656
        %v658 = vpop.f32.mrb[0].mxu0
        %v659 = vpop.f32.mrb[0].mxu0
        %v660 = vadd.f32 %v255, %v659
        %v661 = vpop.f32.mrb[0].mxu0
        %662 = vmatprep.mubr.bf16.mxu0 0
        %663 = vmatmul.mubr.bf16.gmra.mrb[0].mxu0 %v461
        %v664 = vpop.f32.mrb[0].mxu0
        %v665 = vadd.f32 %v255, %v664
        %v666 = vpop.f32.mrb[0].mxu0
        %v667 = vpop.f32.mrb[0].mxu0
        %v668 = vadd.f32 %v255, %v667
        %v669 = vpop.f32.mrb[0].mxu0
        %670 = vmatprep.mubr.bf16.mxu0 0
        %671 = vmatmul.mubr.bf16.gmra.mrb[0].mxu0 %v464
        %v672 = vpop.f32.mrb[0].mxu0
        %v673 = vadd.f32 %v255, %v672
        %v674 = vpop.f32.mrb[0].mxu0
        %v675 = vpop.f32.mrb[0].mxu0
        %v676 = vadd.f32 %v255, %v675
        %v677 = vpop.f32.mrb[0].mxu0
        %678 = vmatprep.mubr.bf16.mxu0 0
        %679 = vmatmul.mubr.bf16.gmra.mrb[0].mxu0 %v467
        %v680 = vpop.f32.mrb[0].mxu0
        %v681 = vadd.f32 %v255, %v680
        %v682 = vpop.f32.mrb[0].mxu0
        %v683 = vpop.f32.mrb[0].mxu0
        %v684 = vadd.f32 %v255, %v683
        %v685 = vpop.f32.mrb[0].mxu0
        %686 = vmatprep.mubr.bf16.mxu0 0
        %687 = vmatmul.mubr.bf16.gmra.mrb[0].mxu0 %v470
        %v688 = vpop.f32.mrb[0].mxu0
        %v689 = vadd.f32 %v255, %v688
        %v690 = vpop.f32.mrb[0].mxu0
        %v691 = vpop.f32.mrb[0].mxu0
        %v692 = vadd.f32 %v255, %v691
        %v693 = vpop.f32.mrb[0].mxu0
        %694 = vmatprep.mubr.bf16.mxu0 0
        %695 = vmatmul.mubr.bf16.gmra.mrb[0].mxu0 %v473
        %v696 = vpop.f32.mrb[0].mxu0
        %v697 = vadd.f32 %v255, %v696
        %v698 = vpop.f32.mrb[0].mxu0
        %v699 = vpop.f32.mrb[0].mxu0
        %v700 = vadd.f32 %v255, %v699
        %v701 = vpop.f32.mrb[0].mxu0
        %702 = vmatprep.mubr.bf16.mxu0 0
        %703 = vmatmul.mubr.bf16.gmra.mrb[0].mxu0 %v476
        %v704 = vpop.f32.mrb[0].mxu0
        %v705 = vadd.f32 %v255, %v704
        %v706 = vpop.f32.mrb[0].mxu0
        %v707 = vpop.f32.mrb[0].mxu0
        %v708 = vadd.f32 %v255, %v707
        %v709 = vpop.f32.mrb[0].mxu0
        %710 = vmatprep.mubr.bf16.mxu0 0
        %711 = vmatmul.mubr.bf16.gmra.mrb[0].mxu0 %v479
        %v712 = vpop.f32.mrb[0].mxu0
        %v713 = vadd.f32 %v255, %v712
        %v714 = vpop.f32.mrb[0].mxu0
        %v715 = vpop.f32.mrb[0].mxu0
        %v716 = vadd.f32 %v255, %v715
        %v717 = vpop.f32.mrb[0].mxu0
        %718 = vmatprep.mubr.bf16.mxu0 0
        %719 = vmatmul.mubr.bf16.gmra.mrb[0].mxu0 %v482
        %v720 = vpop.f32.mrb[0].mxu0
        %v721 = vadd.f32 %v255, %v720
        %v722 = vpop.f32.mrb[0].mxu0
        %v723 = vpop.f32.mrb[0].mxu0
        %v724 = vadd.f32 %v255, %v723
        %v725 = vpop.f32.mrb[0].mxu0
        %726 = vmatprep.mubr.bf16.mxu0 0
        %727 = vmatmul.mubr.bf16.gmra.mrb[0].mxu0 %v485
        %v728 = vpop.f32.mrb[0].mxu0
        %v729 = vadd.f32 %v255, %v728
        %v730 = vpop.f32.mrb[0].mxu0
        %v731 = vpop.f32.mrb[0].mxu0
        %v732 = vadd.f32 %v255, %v731
        %v733 = vpop.f32.mrb[0].mxu0
        %734 = vmatprep.mubr.bf16.mxu0 0
        %735 = vmatmul.mubr.bf16.gmra.mrb[0].mxu0 %v488
        %v736 = vpop.f32.mrb[0].mxu0
        %v737 = vadd.f32 %v255, %v736
        %v738 = vpop.f32.mrb[0].mxu0
        %v739 = vpop.f32.mrb[0].mxu0
        %v740 = vadd.f32 %v255, %v739
        %v741 = vpop.f32.mrb[0].mxu0
        %742 = vmatprep.mubr.bf16.mxu0 0
        %743 = vmatmul.mubr.bf16.gmra.mrb[0].mxu0 %v491
        %v744 = vpop.f32.mrb[0].mxu0
        %v745 = vadd.f32 %v255, %v744
        %v746 = vpop.f32.mrb[0].mxu0
        %v747 = vpop.f32.mrb[0].mxu0
        %v748 = vadd.f32 %v255, %v747
        %v749 = vpop.f32.mrb[0].mxu0
        %750 = vmatprep.mubr.bf16.mxu0 0
        %751 = vmatmul.mubr.bf16.gmra.mrb[0].mxu0 %v494
        %v752 = vpop.f32.mrb[0].mxu0
        %v753 = vadd.f32 %v255, %v752
        %v754 = vpop.f32.mrb[0].mxu0
        %v755 = vpop.f32.mrb[0].mxu0
        %v756 = vadd.f32 %v255, %v755
        %v757 = vpop.f32.mrb[0].mxu0
        %758 = vmatprep.mubr.bf16.mxu0 0
        %759 = vmatmul.mubr.bf16.gmra.mrb[0].mxu0 %v497
        %v760 = vpop.f32.mrb[0].mxu0
        %v761 = vadd.f32 %v255, %v760
        %v762 = vpop.f32.mrb[0].mxu0
        %v763 = vpop.f32.mrb[0].mxu0
        %v764 = vadd.f32 %v255, %v763
        %v765 = vpop.f32.mrb[0].mxu0
        %766 = vmatprep.mubr.bf16.mxu0 0
        %767 = vmatmul.mubr.bf16.gmra.mrb[0].mxu0 %v500
        %v768 = vpop.f32.mrb[0].mxu0
        %v769 = vadd.f32 %v255, %v768
        %v770 = vpop.f32.mrb[0].mxu0
        %v771 = vpop.f32.mrb[0].mxu0
        %v772 = vadd.f32 %v255, %v771
        %v773 = vpop.f32.mrb[0].mxu0
        %774 = vmatprep.mubr.bf16.mxu0 0
        %775 = vmatmul.mubr.bf16.gmra.mrb[0].mxu0 %v503
        %v776 = vpop.f32.mrb[0].mxu0
        %v777 = vadd.f32 %v255, %v776
        %v778 = vpop.f32.mrb[0].mxu0
        %v779 = vpop.f32.mrb[0].mxu0
        %v780 = vadd.f32 %v255, %v779
        %v781 = vpop.f32.mrb[0].mxu0
        %782 = vmatprep.mubr.bf16.mxu0 0
        %783 = vmatmul.mubr.bf16.gmra.mrb[0].mxu0 %v506
        %v784 = vpop.f32.mrb[0].mxu0
        %v785 = vadd.f32 %v255, %v784
        %v786 = vpop.f32.mrb[0].mxu0
        %v787 = vpop.f32.mrb[0].mxu0
        %v788 = vadd.f32 %v255, %v787
        %v789 = vpop.f32.mrb[0].mxu0
        %790 = vmatprep.mubr.bf16.mxu0 0
        %791 = vmatmul.mubr.bf16.gmra.mrb[0].mxu0 %v509
        %v792 = vpop.f32.mrb[0].mxu0
        %v793 = vadd.f32 %v255, %v792
        %v794 = vpop.f32.mrb[0].mxu0
        %v795 = vpop.f32.mrb[0].mxu0
        %v796 = vadd.f32 %v255, %v795
        %v797 = vpop.f32.mrb[0].mxu0
        %798 = vmatprep.mubr.bf16.mxu0 0
        %799 = vmatmul.mubr.bf16.gmra.mrb[0].mxu0 %v512
        %v800 = vpop.f32.mrb[0].mxu0
        %v801 = vadd.f32 %v255, %v800
        %v802 = vpop.f32.mrb[0].mxu0
        %v803 = vpop.f32.mrb[0].mxu0
        %v804 = vadd.f32 %v255, %v803
        %v805 = vpop.f32.mrb[0].mxu0
        %806 = vdwg.mxu0
        %vm807 = vcmask 523264
        %v808 = vsel %vm807, %v553, 0.0
        %v809 = vsel %vm807, %v556, 0.0
        %v810 = vadd.f32 %v808, %v809
        %v811 = vsel %vm807, %v561, 0.0
        %v812 = vadd.f32 %v810, %v811
        %v813 = vsel %vm807, %v564, 0.0
        %v814 = vadd.f32 %v812, %v813
        %v815 = vsel %vm807, %v569, 0.0
        %v816 = vadd.f32 %v814, %v815
        %v817 = vsel %vm807, %v572, 0.0
        %v818 = vadd.f32 %v816, %v817
        %v819 = vsel %vm807, %v577, 0.0
        %v820 = vadd.f32 %v818, %v819
        %v821 = vsel %vm807, %v580, 0.0
        %v822 = vadd.f32 %v820, %v821
        %v823 = vsel %vm807, %v585, 0.0
        %v824 = vadd.f32 %v822, %v823
        %v825 = vsel %vm807, %v588, 0.0
        %v826 = vadd.f32 %v824, %v825
        %v827 = vsel %vm807, %v593, 0.0
        %v828 = vadd.f32 %v826, %v827
        %v829 = vsel %vm807, %v596, 0.0
        %v830 = vadd.f32 %v828, %v829
        %v831 = vsel %vm807, %v601, 0.0
        %v832 = vadd.f32 %v830, %v831
        %v833 = vsel %vm807, %v604, 0.0
        %v834 = vadd.f32 %v832, %v833
        %v835 = vsel %vm807, %v609, 0.0
        %v836 = vadd.f32 %v834, %v835
        %v837 = vsel %vm807, %v612, 0.0
        %v838 = vadd.f32 %v836, %v837
        %v839 = vsel %vm807, %v617, 0.0
        %v840 = vadd.f32 %v838, %v839
        %v841 = vsel %vm807, %v620, 0.0
        %v842 = vadd.f32 %v840, %v841
        %v843 = vsel %vm807, %v625, 0.0
        %v844 = vadd.f32 %v842, %v843
        %v845 = vsel %vm807, %v628, 0.0
        %v846 = vadd.f32 %v844, %v845
        %v847 = vsel %vm807, %v633, 0.0
        %v848 = vadd.f32 %v846, %v847
        %v849 = vsel %vm807, %v636, 0.0
        %v850 = vadd.f32 %v848, %v849
        %v851 = vsel %vm807, %v641, 0.0
        %v852 = vadd.f32 %v850, %v851
        %v853 = vsel %vm807, %v644, 0.0
        %v854 = vadd.f32 %v852, %v853
        %v855 = vsel %vm807, %v649, 0.0
        %v856 = vadd.f32 %v854, %v855
        %v857 = vsel %vm807, %v652, 0.0
        %v858 = vadd.f32 %v856, %v857
        %v859 = vsel %vm807, %v657, 0.0
        %v860 = vadd.f32 %v858, %v859
        %v861 = vsel %vm807, %v660, 0.0
        %v862 = vadd.f32 %v860, %v861
        %v863 = vsel %vm807, %v665, 0.0
        %v864 = vadd.f32 %v862, %v863
        %v865 = vsel %vm807, %v668, 0.0
        %v866 = vadd.f32 %v864, %v865
        %v867 = vsel %vm807, %v673, 0.0
        %v868 = vadd.f32 %v866, %v867
        %v869 = vsel %vm807, %v676, 0.0
        %v870 = vadd.f32 %v868, %v869
        %v871 = vsel %vm807, %v681, 0.0
        %v872 = vadd.f32 %v870, %v871
        %v873 = vsel %vm807, %v684, 0.0
        %v874 = vadd.f32 %v872, %v873
        %v875 = vsel %vm807, %v689, 0.0
        %v876 = vadd.f32 %v874, %v875
        %v877 = vsel %vm807, %v692, 0.0
        %v878 = vadd.f32 %v876, %v877
        %v879 = vsel %vm807, %v697, 0.0
        %v880 = vadd.f32 %v878, %v879
        %v881 = vsel %vm807, %v700, 0.0
        %v882 = vadd.f32 %v880, %v881
        %v883 = vsel %vm807, %v705, 0.0
        %v884 = vadd.f32 %v882, %v883
        %v885 = vsel %vm807, %v708, 0.0
        %v886 = vadd.f32 %v884, %v885
        %v887 = vsel %vm807, %v713, 0.0
        %v888 = vadd.f32 %v886, %v887
        %v889 = vsel %vm807, %v716, 0.0
        %v890 = vadd.f32 %v888, %v889
        %v891 = vsel %vm807, %v721, 0.0
        %v892 = vadd.f32 %v890, %v891
        %v893 = vsel %vm807, %v724, 0.0
        %v894 = vadd.f32 %v892, %v893
        %v895 = vsel %vm807, %v729, 0.0
        %v896 = vadd.f32 %v894, %v895
        %v897 = vsel %vm807, %v732, 0.0
        %v898 = vadd.f32 %v896, %v897
        %v899 = vsel %vm807, %v737, 0.0
        %v900 = vadd.f32 %v898, %v899
        %v901 = vsel %vm807, %v740, 0.0
        %v902 = vadd.f32 %v900, %v901
        %v903 = vsel %vm807, %v745, 0.0
        %v904 = vadd.f32 %v902, %v903
        %v905 = vsel %vm807, %v748, 0.0
        %v906 = vadd.f32 %v904, %v905
        %v907 = vsel %vm807, %v753, 0.0
        %v908 = vadd.f32 %v906, %v907
        %v909 = vsel %vm807, %v756, 0.0
        %v910 = vadd.f32 %v908, %v909
        %v911 = vsel %vm807, %v761, 0.0
        %v912 = vadd.f32 %v910, %v911
        %v913 = vsel %vm807, %v764, 0.0
        %v914 = vadd.f32 %v912, %v913
        %v915 = vsel %vm807, %v769, 0.0
        %v916 = vadd.f32 %v914, %v915
        %v917 = vsel %vm807, %v772, 0.0
        %v918 = vadd.f32 %v916, %v917
        %v919 = vsel %vm807, %v777, 0.0
        %v920 = vadd.f32 %v918, %v919
        %v921 = vsel %vm807, %v780, 0.0
        %v922 = vadd.f32 %v920, %v921
        %v923 = vsel %vm807, %v785, 0.0
        %v924 = vadd.f32 %v922, %v923
        %v925 = vsel %vm807, %v788, 0.0
        %v926 = vadd.f32 %v924, %v925
        %v927 = vsel %vm807, %v793, 0.0
        %v928 = vadd.f32 %v926, %v927
        %v929 = vsel %vm807, %v796, 0.0
        %v930 = vadd.f32 %v928, %v929
        %v931 = vsel %vm807, %v801, 0.0
        %v932 = vadd.f32 %v930, %v931
        %v933 = vsel %vm807, %v804, 0.0
        %v934 = vadd.f32 %v932, %v933
        %v935 = vrot.slane %v934, 4
        %v936 = vadd.f32 %v934, %v935
        %v937 = vrot.slane %v936, 2
        %v938 = vadd.f32 %v936, %v937
        %v939 = vrot.slane %v938, 1
        %v940 = vadd.f32 %v938, %v939
        %v941 = vmul.f32 %v553, %v553
        %v942 = vmul.f32 %v556, %v556
        %v943 = vmul.f32 %v561, %v561
        %v944 = vmul.f32 %v564, %v564
        %v945 = vmul.f32 %v569, %v569
        %v946 = vmul.f32 %v572, %v572
        %v947 = vmul.f32 %v577, %v577
        %v948 = vmul.f32 %v580, %v580
        %v949 = vmul.f32 %v585, %v585
        %v950 = vmul.f32 %v588, %v588
        %v951 = vmul.f32 %v593, %v593
        %v952 = vmul.f32 %v596, %v596
        %v953 = vmul.f32 %v601, %v601
        %v954 = vmul.f32 %v604, %v604
        %v955 = vmul.f32 %v609, %v609
        %v956 = vmul.f32 %v612, %v612
        %v957 = vmul.f32 %v617, %v617
        %v958 = vmul.f32 %v620, %v620
        %v959 = vmul.f32 %v625, %v625
        %v960 = vmul.f32 %v628, %v628
        %v961 = vmul.f32 %v633, %v633
        %v962 = vmul.f32 %v636, %v636
        %v963 = vmul.f32 %v641, %v641
        %v964 = vmul.f32 %v644, %v644
        %v965 = vmul.f32 %v649, %v649
        %v966 = vmul.f32 %v652, %v652
        %v967 = vmul.f32 %v657, %v657
        %v968 = vmul.f32 %v660, %v660
        %v969 = vmul.f32 %v665, %v665
        %v970 = vmul.f32 %v668, %v668
        %v971 = vmul.f32 %v673, %v673
        %v972 = vmul.f32 %v676, %v676
        %v973 = vmul.f32 %v681, %v681
        %v974 = vmul.f32 %v684, %v684
        %v975 = vmul.f32 %v689, %v689
        %v976 = vmul.f32 %v692, %v692
        %v977 = vmul.f32 %v697, %v697
        %v978 = vmul.f32 %v700, %v700
        %v979 = vmul.f32 %v705, %v705
        %v980 = vmul.f32 %v708, %v708
        %v981 = vmul.f32 %v713, %v713
        %v982 = vmul.f32 %v716, %v716
        %v983 = vmul.f32 %v721, %v721
        %v984 = vmul.f32 %v724, %v724
        %v985 = vmul.f32 %v729, %v729
        %v986 = vmul.f32 %v732, %v732
        %v987 = vmul.f32 %v737, %v737
        %v988 = vmul.f32 %v740, %v740
        %v989 = vmul.f32 %v745, %v745
        %v990 = vmul.f32 %v748, %v748
        %v991 = vmul.f32 %v753, %v753
        %v992 = vmul.f32 %v756, %v756
        %v993 = vmul.f32 %v761, %v761
        %v994 = vmul.f32 %v764, %v764
        %v995 = vmul.f32 %v769, %v769
        %v996 = vmul.f32 %v772, %v772
        %v997 = vmul.f32 %v777, %v777
        %v998 = vmul.f32 %v780, %v780
        %v999 = vmul.f32 %v785, %v785
        %v1000 = vmul.f32 %v788, %v788
        %v1001 = vmul.f32 %v793, %v793
        %v1002 = vmul.f32 %v796, %v796
        %v1003 = vmul.f32 %v801, %v801
        %v1004 = vmul.f32 %v804, %v804
        %v1005 = vsel %vm807, %v941, 0.0
        %v1006 = vsel %vm807, %v942, 0.0
        %v1007 = vadd.f32 %v1005, %v1006
        %v1008 = vsel %vm807, %v943, 0.0
        %v1009 = vadd.f32 %v1007, %v1008
        %v1010 = vsel %vm807, %v944, 0.0
        %v1011 = vadd.f32 %v1009, %v1010
        %v1012 = vsel %vm807, %v945, 0.0
        %v1013 = vadd.f32 %v1011, %v1012
        %v1014 = vsel %vm807, %v946, 0.0
        %v1015 = vadd.f32 %v1013, %v1014
        %v1016 = vsel %vm807, %v947, 0.0
        %v1017 = vadd.f32 %v1015, %v1016
        %v1018 = vsel %vm807, %v948, 0.0
        %v1019 = vadd.f32 %v1017, %v1018
        %v1020 = vsel %vm807, %v949, 0.0
        %v1021 = vadd.f32 %v1019, %v1020
        %v1022 = vsel %vm807, %v950, 0.0
        %v1023 = vadd.f32 %v1021, %v1022
        %v1024 = vsel %vm807, %v951, 0.0
        %v1025 = vadd.f32 %v1023, %v1024
        %v1026 = vsel %vm807, %v952, 0.0
        %v1027 = vadd.f32 %v1025, %v1026
        %v1028 = vsel %vm807, %v953, 0.0
        %v1029 = vadd.f32 %v1027, %v1028
        %v1030 = vsel %vm807, %v954, 0.0
        %v1031 = vadd.f32 %v1029, %v1030
        %v1032 = vsel %vm807, %v955, 0.0
        %v1033 = vadd.f32 %v1031, %v1032
        %v1034 = vsel %vm807, %v956, 0.0
        %v1035 = vadd.f32 %v1033, %v1034
        %v1036 = vsel %vm807, %v957, 0.0
        %v1037 = vadd.f32 %v1035, %v1036
        %v1038 = vsel %vm807, %v958, 0.0
        %v1039 = vadd.f32 %v1037, %v1038
        %v1040 = vsel %vm807, %v959, 0.0
        %v1041 = vadd.f32 %v1039, %v1040
        %v1042 = vsel %vm807, %v960, 0.0
        %v1043 = vadd.f32 %v1041, %v1042
        %v1044 = vsel %vm807, %v961, 0.0
        %v1045 = vadd.f32 %v1043, %v1044
        %v1046 = vsel %vm807, %v962, 0.0
        %v1047 = vadd.f32 %v1045, %v1046
        %v1048 = vsel %vm807, %v963, 0.0
        %v1049 = vadd.f32 %v1047, %v1048
        %v1050 = vsel %vm807, %v964, 0.0
        %v1051 = vadd.f32 %v1049, %v1050
        %v1052 = vsel %vm807, %v965, 0.0
        %v1053 = vadd.f32 %v1051, %v1052
        %v1054 = vsel %vm807, %v966, 0.0
        %v1055 = vadd.f32 %v1053, %v1054
        %v1056 = vsel %vm807, %v967, 0.0
        %v1057 = vadd.f32 %v1055, %v1056
        %v1058 = vsel %vm807, %v968, 0.0
        %v1059 = vadd.f32 %v1057, %v1058
        %v1060 = vsel %vm807, %v969, 0.0
        %v1061 = vadd.f32 %v1059, %v1060
        %v1062 = vsel %vm807, %v970, 0.0
        %v1063 = vadd.f32 %v1061, %v1062
        %v1064 = vsel %vm807, %v971, 0.0
        %v1065 = vadd.f32 %v1063, %v1064
        %v1066 = vsel %vm807, %v972, 0.0
        %v1067 = vadd.f32 %v1065, %v1066
        %v1068 = vsel %vm807, %v973, 0.0
        %v1069 = vadd.f32 %v1067, %v1068
        %v1070 = vsel %vm807, %v974, 0.0
        %v1071 = vadd.f32 %v1069, %v1070
        %v1072 = vsel %vm807, %v975, 0.0
        %v1073 = vadd.f32 %v1071, %v1072
        %v1074 = vsel %vm807, %v976, 0.0
        %v1075 = vadd.f32 %v1073, %v1074
        %v1076 = vsel %vm807, %v977, 0.0
        %v1077 = vadd.f32 %v1075, %v1076
        %v1078 = vsel %vm807, %v978, 0.0
        %v1079 = vadd.f32 %v1077, %v1078
        %v1080 = vsel %vm807, %v979, 0.0
        %v1081 = vadd.f32 %v1079, %v1080
        %v1082 = vsel %vm807, %v980, 0.0
        %v1083 = vadd.f32 %v1081, %v1082
        %v1084 = vsel %vm807, %v981, 0.0
        %v1085 = vadd.f32 %v1083, %v1084
        %v1086 = vsel %vm807, %v982, 0.0
        %v1087 = vadd.f32 %v1085, %v1086
        %v1088 = vsel %vm807, %v983, 0.0
        %v1089 = vadd.f32 %v1087, %v1088
        %v1090 = vsel %vm807, %v984, 0.0
        %v1091 = vadd.f32 %v1089, %v1090
        %v1092 = vsel %vm807, %v985, 0.0
        %v1093 = vadd.f32 %v1091, %v1092
        %v1094 = vsel %vm807, %v986, 0.0
        %v1095 = vadd.f32 %v1093, %v1094
        %v1096 = vsel %vm807, %v987, 0.0
        %v1097 = vadd.f32 %v1095, %v1096
        %v1098 = vsel %vm807, %v988, 0.0
        %v1099 = vadd.f32 %v1097, %v1098
        %v1100 = vsel %vm807, %v989, 0.0
        %v1101 = vadd.f32 %v1099, %v1100
        %v1102 = vsel %vm807, %v990, 0.0
        %v1103 = vadd.f32 %v1101, %v1102
        %v1104 = vsel %vm807, %v991, 0.0
        %v1105 = vadd.f32 %v1103, %v1104
        %v1106 = vsel %vm807, %v992, 0.0
        %v1107 = vadd.f32 %v1105, %v1106
        %v1108 = vsel %vm807, %v993, 0.0
        %v1109 = vadd.f32 %v1107, %v1108
        %v1110 = vsel %vm807, %v994, 0.0
        %v1111 = vadd.f32 %v1109, %v1110
        %v1112 = vsel %vm807, %v995, 0.0
        %v1113 = vadd.f32 %v1111, %v1112
        %v1114 = vsel %vm807, %v996, 0.0
        %v1115 = vadd.f32 %v1113, %v1114
        %v1116 = vsel %vm807, %v997, 0.0
        %v1117 = vadd.f32 %v1115, %v1116
        %v1118 = vsel %vm807, %v998, 0.0
        %v1119 = vadd.f32 %v1117, %v1118
        %v1120 = vsel %vm807, %v999, 0.0
        %v1121 = vadd.f32 %v1119, %v1120
        %v1122 = vsel %vm807, %v1000, 0.0
        %v1123 = vadd.f32 %v1121, %v1122
        %v1124 = vsel %vm807, %v1001, 0.0
        %v1125 = vadd.f32 %v1123, %v1124
        %v1126 = vsel %vm807, %v1002, 0.0
        %v1127 = vadd.f32 %v1125, %v1126
        %v1128 = vsel %vm807, %v1003, 0.0
        %v1129 = vadd.f32 %v1127, %v1128
        %v1130 = vsel %vm807, %v1004, 0.0
        %v1131 = vadd.f32 %v1129, %v1130
        %v1132 = vrot.slane %v1131, 4
        %v1133 = vadd.f32 %v1131, %v1132
        %v1134 = vrot.slane %v1133, 2
        %v1135 = vadd.f32 %v1133, %v1134
        %v1136 = vrot.slane %v1135, 1
        %v1137 = vadd.f32 %v1135, %v1136
        %vm1138 = vcmask 1040384
        %v1139 = vsel %vm1138, %v940, %v1137
        %vm1140 = vcmask 517120
        %1141 = vst.msk [vmem:[%s183] sm:$0x3] %vm1140, %v1139
        %p1142 = scmp.lt.s32.totalorder %s15, 3
        %s1143 = scalar_select %p1142, %s15, 3
        %s1144 = smul.addr %s1143, 2
        %s1145 = scalar_lea.vmem %s3, %s1144
        // Predicated region
        $region37: #{tnet_forward.4} parent=31 // pred_check
          %p1146 = pneg %p101
        $region38: #{tnet_forward.4} parent=31 // pred_check_branch
          %1148 = sbr.rel (%p1146) target = $region40
        $region39: #{tnet_forward.4} parent=31 // pred_region
          _
        $region40: #{tnet_forward.4} parent=31 // pred_fallthru
          _
      $region32: #{tnet_forward.4} parent=5 // pred_fallthru
        _
      %p1149 = scmp.le.s32.totalorder 2, %s10
      // Predicated region
      $region41: #{tnet_forward.4} parent=5 // pred_check
        %p1150 = pneg %p1149
      $region42: #{tnet_forward.4} parent=5 // pred_check_branch
        %1152 = sbr.rel (%p1150) target = $region44
      $region43: #{tnet_forward.4} parent=5 // pred_region
        %s1153 = ssub.s32 %s10, 2
        // Predicated region
        $region45: #{tnet_forward.4} parent=43 // pred_check
          %p1154 = pneg %p107
        $region46: #{tnet_forward.4} parent=43 // pred_check_branch
          %1156 = sbr.rel (%p1154) target = $region48
        $region47: #{tnet_forward.4} parent=43 // pred_region
          %p1157 = scmp.lt.s32.totalorder %s16, 3
          %s1158 = scalar_select %p1157, %s16, 3
          %s1159 = smul.addr %s1158, 2
          %s1160 = scalar_lea.vmem %s3, %s1159
        $region48: #{tnet_forward.4} parent=43 // pred_fallthru
          _
      $region44: #{tnet_forward.4} parent=5 // pred_fallthru
        _
    $region6: #{tnet_forward.4} parent=1 // loop_footer
      %s14 = sadd.s32 1, %s10
    $region7: #{tnet_forward.4} parent=1 // loop_footer_branch
      %9 = sbr.rel target = $region3
    $region8: #{tnet_forward.4} parent=1 // loop_exit
      _
    %1161 = vsyncpa [#allocation3], 1
    %s1162 = scalar_lea.sflag [#allocation3], 1
    %1163 = vsyncpa %s1162, 1

// kernel: tnet_forward.5
$region0: #{tnet_forward.5}
  #allocation0 [shape = 'u32[]', space=smem, size = 0x4, offset = 0x4, fixed_abs, tag = 'smem constant byte address 0x4 - core index']
  #allocation1 [shape = 'u32[144,128]{1,0:T(1,128)}', space=vmem, size = 0x12000, scoped, tag = 'internal scratch']
  %s0 = inlined_call_operand.vmem [shape: bf16[2048,8], index: 0, kind: input, shape index: {}]
  %s1 = inlined_call_operand.vmem [shape: bf16[8,64], index: 1, kind: input, shape index: {}]
  %s2 = inlined_call_operand.vmem [shape: f32[1,64], index: 2, kind: input, shape index: {}]
  %s3 = inlined_call_operand.vmem [shape: f32[1,64], index: 3, kind: input, shape index: {}]
  %s4 = inlined_call_operand.vmem [shape: f32[1,64], index: 4, kind: input, shape index: {}]
  %s5 = inlined_call_operand.vmem [shape: bf16[64,128], index: 5, kind: input, shape index: {}]
  %s6 = inlined_call_operand.vmem [shape: f32[1,128], index: 6, kind: input, shape index: {}]
  %s7 = inlined_call_operand.vmem [shape: bf16[2048,128], index: 7, kind: output, shape index: {0}]
  %s8 = inlined_call_operand.vmem [shape: f32[4,2,128], index: 8, kind: output, shape index: {1}]
  %9 = xla_tuple %s7, %s8
  %s10 = sld [smem:[#allocation0]]
  $region69: #{tnet_forward.5} parent=0
    _
  %s12 = ssub.s32 1, %s10
  %s13 = scalar_select 0, %s12, %s10
  loop: start=0, step=1, limit=6
  $region2: #{tnet_forward.5} parent=0 // loop_pre_header
    _
  $region3: #{tnet_forward.5} parent=0 // loop_header
    %s15 = sphi 0, %s19
    %p16 = scmp.ge.s32.totalorder %s15, 6
    %s25 = sphi 0, %s27
    %s28 = sphi 0, %s25
    %s29 = sphi 0, %s28
    %s45 = sphi 0, %s29
    %s49 = sphi 0, %s49
    %s51 = sphi 0, %s49
    %s52 = sphi 0, %s51
    %s66 = sphi 0, %s52
    %s70 = sphi 0, %s70
    %s72 = sphi 0, %s70
    %s73 = sphi 0, %s72
    %s87 = sphi 0, %s73
    %s91 = sphi 0, %s91
    %s93 = sphi 0, %s91
    %s94 = sphi 0, %s93
    %s108 = sphi 0, %s94
    %s112 = sphi 0, %s112
    %s114 = sphi 0, %s112
    %s115 = sphi 0, %s114
    %s129 = sphi 0, %s115
    %s133 = sphi 0, %s133
    %s135 = sphi 0, %s133
    %s136 = sphi 0, %s135
    %s150 = sphi 0, %s136
    %s154 = sphi 0, %s154
    %s156 = sphi 0, %s154
    %s157 = sphi 0, %s156
    %s171 = sphi 0, %s157
    %s177 = sphi 0, %s179
    %s180 = sphi 0, %s177
    %s181 = sphi 0, %s180
    %s197 = sphi 0, %s181
    %s203 = sphi 0, %s205
    %s206 = sphi 0, %s203
    %s207 = sphi 0, %s206
    %s223 = sphi 0, %s207
  $region4: #{tnet_forward.5} parent=0 // loop_header_branch
    %18 = sbr.rel (%p16) target = $region8
  $region5: #{tnet_forward.5} parent=0 // loop_body
    %s20 = ssub.s32 %s15, 1
    %s21 = ssub.s32 %s15, 2
    %s22 = sadd.s32 %s15, 1
    %s23 = ssub.s32 %s15, %s22
    %p24 = scmp.eq.s32.totalorder %s23, 0
    %s26 = sadd.s32 %s25, 1
    %s27 = scalar_select %p24, %s25, %s26
    %p30 = pneg %p24
    %p31 = scmp.eq.s32.totalorder %s15, 3
    %p32 = por %p30, %p31
    %p33 = scmp.ne.s32.totalorder %s25, %s28
    %p34 = scmp.eq.s32.totalorder %s15, 0
    %p35 = por %p33, %p34
    %p36 = scmp.ne.s32.totalorder %s25, %s28
    %p37 = scmp.eq.s32.totalorder %s20, 3
    %p38 = por %p36, %p37
    %p39 = scmp.ne.s32.totalorder %s28, %s29
    %p40 = scmp.eq.s32.totalorder %s20, 0
    %p41 = por %p39, %p40
    %p42 = scmp.ne.s32.totalorder %s28, %s29
    %p43 = scmp.eq.s32.totalorder %s21, 3
    %p44 = por %p42, %p43
    %p46 = scmp.ne.s32.totalorder %s29, %s45
    %p47 = scmp.eq.s32.totalorder %s21, 0
    %p48 = por %p46, %p47
    %s50 = sadd.s32 %s49, 1
    %p53 = scmp.eq.s32.totalorder %s15, 3
    %p54 = scmp.ne.s32.totalorder %s49, %s51
    %p55 = scmp.eq.s32.totalorder %s15, 0
    %p56 = por %p54, %p55
    %p57 = scmp.ne.s32.totalorder %s49, %s51
    %p58 = scmp.eq.s32.totalorder %s20, 3
    %p59 = por %p57, %p58
    %p60 = scmp.ne.s32.totalorder %s51, %s52
    %p61 = scmp.eq.s32.totalorder %s20, 0
    %p62 = por %p60, %p61
    %p63 = scmp.ne.s32.totalorder %s51, %s52
    %p64 = scmp.eq.s32.totalorder %s21, 3
    %p65 = por %p63, %p64
    %p67 = scmp.ne.s32.totalorder %s52, %s66
    %p68 = scmp.eq.s32.totalorder %s21, 0
    %p69 = por %p67, %p68
    %s71 = sadd.s32 %s70, 1
    %p74 = scmp.eq.s32.totalorder %s15, 3
    %p75 = scmp.ne.s32.totalorder %s70, %s72
    %p76 = scmp.eq.s32.totalorder %s15, 0
    %p77 = por %p75, %p76
    %p78 = scmp.ne.s32.totalorder %s70, %s72
    %p79 = scmp.eq.s32.totalorder %s20, 3
    %p80 = por %p78, %p79
    %p81 = scmp.ne.s32.totalorder %s72, %s73
    %p82 = scmp.eq.s32.totalorder %s20, 0
    %p83 = por %p81, %p82
    %p84 = scmp.ne.s32.totalorder %s72, %s73
    %p85 = scmp.eq.s32.totalorder %s21, 3
    %p86 = por %p84, %p85
    %p88 = scmp.ne.s32.totalorder %s73, %s87
    %p89 = scmp.eq.s32.totalorder %s21, 0
    %p90 = por %p88, %p89
    %s92 = sadd.s32 %s91, 1
    %p95 = scmp.eq.s32.totalorder %s15, 3
    %p96 = scmp.ne.s32.totalorder %s91, %s93
    %p97 = scmp.eq.s32.totalorder %s15, 0
    %p98 = por %p96, %p97
    %p99 = scmp.ne.s32.totalorder %s91, %s93
    %p100 = scmp.eq.s32.totalorder %s20, 3
    %p101 = por %p99, %p100
    %p102 = scmp.ne.s32.totalorder %s93, %s94
    %p103 = scmp.eq.s32.totalorder %s20, 0
    %p104 = por %p102, %p103
    %p105 = scmp.ne.s32.totalorder %s93, %s94
    %p106 = scmp.eq.s32.totalorder %s21, 3
    %p107 = por %p105, %p106
    %p109 = scmp.ne.s32.totalorder %s94, %s108
    %p110 = scmp.eq.s32.totalorder %s21, 0
    %p111 = por %p109, %p110
    %s113 = sadd.s32 %s112, 1
    %p116 = scmp.eq.s32.totalorder %s15, 3
    %p117 = scmp.ne.s32.totalorder %s112, %s114
    %p118 = scmp.eq.s32.totalorder %s15, 0
    %p119 = por %p117, %p118
    %p120 = scmp.ne.s32.totalorder %s112, %s114
    %p121 = scmp.eq.s32.totalorder %s20, 3
    %p122 = por %p120, %p121
    %p123 = scmp.ne.s32.totalorder %s114, %s115
    %p124 = scmp.eq.s32.totalorder %s20, 0
    %p125 = por %p123, %p124
    %p126 = scmp.ne.s32.totalorder %s114, %s115
    %p127 = scmp.eq.s32.totalorder %s21, 3
    %p128 = por %p126, %p127
    %p130 = scmp.ne.s32.totalorder %s115, %s129
    %p131 = scmp.eq.s32.totalorder %s21, 0
    %p132 = por %p130, %p131
    %s134 = sadd.s32 %s133, 1
    %p137 = scmp.eq.s32.totalorder %s15, 3
    %p138 = scmp.ne.s32.totalorder %s133, %s135
    %p139 = scmp.eq.s32.totalorder %s15, 0
    %p140 = por %p138, %p139
    %p141 = scmp.ne.s32.totalorder %s133, %s135
    %p142 = scmp.eq.s32.totalorder %s20, 3
    %p143 = por %p141, %p142
    %p144 = scmp.ne.s32.totalorder %s135, %s136
    %p145 = scmp.eq.s32.totalorder %s20, 0
    %p146 = por %p144, %p145
    %p147 = scmp.ne.s32.totalorder %s135, %s136
    %p148 = scmp.eq.s32.totalorder %s21, 3
    %p149 = por %p147, %p148
    %p151 = scmp.ne.s32.totalorder %s136, %s150
    %p152 = scmp.eq.s32.totalorder %s21, 0
    %p153 = por %p151, %p152
    %s155 = sadd.s32 %s154, 1
    %p158 = scmp.eq.s32.totalorder %s15, 3
    %p159 = scmp.ne.s32.totalorder %s154, %s156
    %p160 = scmp.eq.s32.totalorder %s15, 0
    %p161 = por %p159, %p160
    %p162 = scmp.ne.s32.totalorder %s154, %s156
    %p163 = scmp.eq.s32.totalorder %s20, 3
    %p164 = por %p162, %p163
    %p165 = scmp.ne.s32.totalorder %s156, %s157
    %p166 = scmp.eq.s32.totalorder %s20, 0
    %p167 = por %p165, %p166
    %p168 = scmp.ne.s32.totalorder %s156, %s157
    %p169 = scmp.eq.s32.totalorder %s21, 3
    %p170 = por %p168, %p169
    %p172 = scmp.ne.s32.totalorder %s157, %s171
    %p173 = scmp.eq.s32.totalorder %s21, 0
    %p174 = por %p172, %p173
    %s175 = ssub.s32 %s15, %s22
    %p176 = scmp.eq.s32.totalorder %s175, 0
    %s178 = sadd.s32 %s177, 1
    %s179 = scalar_select %p176, %s177, %s178
    %p182 = pneg %p176
    %p183 = scmp.eq.s32.totalorder %s15, 3
    %p184 = por %p182, %p183
    %p185 = scmp.ne.s32.totalorder %s177, %s180
    %p186 = scmp.eq.s32.totalorder %s15, 0
    %p187 = por %p185, %p186
    %p188 = scmp.ne.s32.totalorder %s177, %s180
    %p189 = scmp.eq.s32.totalorder %s20, 3
    %p190 = por %p188, %p189
    %p191 = scmp.ne.s32.totalorder %s180, %s181
    %p192 = scmp.eq.s32.totalorder %s20, 0
    %p193 = por %p191, %p192
    %p194 = scmp.ne.s32.totalorder %s180, %s181
    %p195 = scmp.eq.s32.totalorder %s21, 3
    %p196 = por %p194, %p195
    %p198 = scmp.ne.s32.totalorder %s181, %s197
    %p199 = scmp.eq.s32.totalorder %s21, 0
    %p200 = por %p198, %p199
    %s201 = ssub.s32 %s15, %s22
    %p202 = scmp.eq.s32.totalorder %s201, 0
    %s204 = sadd.s32 %s203, 1
    %s205 = scalar_select %p202, %s203, %s204
    %p208 = pneg %p202
    %p209 = scmp.eq.s32.totalorder %s15, 3
    %p210 = por %p208, %p209
    %p211 = scmp.ne.s32.totalorder %s203, %s206
    %p212 = scmp.eq.s32.totalorder %s15, 0
    %p213 = por %p211, %p212
    %p214 = scmp.ne.s32.totalorder %s203, %s206
    %p215 = scmp.eq.s32.totalorder %s20, 3
    %p216 = por %p214, %p215
    %p217 = scmp.ne.s32.totalorder %s206, %s207
    %p218 = scmp.eq.s32.totalorder %s20, 0
    %p219 = por %p217, %p218
    %p220 = scmp.ne.s32.totalorder %s206, %s207
    %p221 = scmp.eq.s32.totalorder %s21, 3
    %p222 = por %p220, %p221
    %p224 = scmp.ne.s32.totalorder %s207, %s223
    %p225 = scmp.eq.s32.totalorder %s21, 0
    %p226 = por %p224, %p225
    %p227 = scmp.le.s32.totalorder 1, %s15
    %p228 = scmp.lt.s32.totalorder %s15, 5
    %p229 = pnand %p227, %p228
    %p230 = pneg %p229
    // Predicated region
    $region9: #{tnet_forward.5} parent=5 // pred_check
      _
    $region10: #{tnet_forward.5} parent=5 // pred_check_branch
      %232 = sbr.rel (%p229) target = $region12
    $region11: #{tnet_forward.5} parent=5 // pred_region
      %s233 = ssub.s32 %s15, 1
      // Predicated region
      $region13: #{tnet_forward.5} parent=11 // pred_check
        %p234 = pneg %p62
      $region14: #{tnet_forward.5} parent=11 // pred_check_branch
        %236 = sbr.rel (%p234) target = $region16
      $region15: #{tnet_forward.5} parent=11 // pred_region
        _
      $region16: #{tnet_forward.5} parent=11 // pred_fallthru
        _
      // Predicated region
      $region17: #{tnet_forward.5} parent=11 // pred_check
        %p237 = pneg %p83
      $region18: #{tnet_forward.5} parent=11 // pred_check_branch
        %239 = sbr.rel (%p237) target = $region20
      $region19: #{tnet_forward.5} parent=11 // pred_region
        _
      $region20: #{tnet_forward.5} parent=11 // pred_fallthru
        _
      // Predicated region
      $region21: #{tnet_forward.5} parent=11 // pred_check
        %p240 = pneg %p104
      $region22: #{tnet_forward.5} parent=11 // pred_check_branch
        %242 = sbr.rel (%p240) target = $region24
      $region23: #{tnet_forward.5} parent=11 // pred_region
        _
      $region24: #{tnet_forward.5} parent=11 // pred_fallthru
        _
      // Predicated region
      $region25: #{tnet_forward.5} parent=11 // pred_check
        %p243 = pneg %p125
      $region26: #{tnet_forward.5} parent=11 // pred_check_branch
        %245 = sbr.rel (%p243) target = $region28
      $region27: #{tnet_forward.5} parent=11 // pred_region
        _
      $region28: #{tnet_forward.5} parent=11 // pred_fallthru
        _
      // Predicated region
      $region29: #{tnet_forward.5} parent=11 // pred_check
        %p246 = pneg %p146
      $region30: #{tnet_forward.5} parent=11 // pred_check_branch
        %248 = sbr.rel (%p246) target = $region32
      $region31: #{tnet_forward.5} parent=11 // pred_region
        _
      $region32: #{tnet_forward.5} parent=11 // pred_fallthru
        _
      // Predicated region
      $region33: #{tnet_forward.5} parent=11 // pred_check
        %p249 = pneg %p167
      $region34: #{tnet_forward.5} parent=11 // pred_check_branch
        %251 = sbr.rel (%p249) target = $region36
      $region35: #{tnet_forward.5} parent=11 // pred_region
        _
      $region36: #{tnet_forward.5} parent=11 // pred_fallthru
        _
    $region12: #{tnet_forward.5} parent=5 // pred_fallthru
      _
    %p252 = scmp.lt.s32.totalorder %s15, 4
    // Predicated region
    $region37: #{tnet_forward.5} parent=5 // pred_check
      %p253 = pneg %p252
    $region38: #{tnet_forward.5} parent=5 // pred_check_branch
      %255 = sbr.rel (%p253) target = $region40
    $region39: #{tnet_forward.5} parent=5 // pred_region
      // Predicated region
      $region41: #{tnet_forward.5} parent=39 // pred_check
        %p256 = pneg %p35
      $region42: #{tnet_forward.5} parent=39 // pred_check_branch
        %258 = sbr.rel (%p256) target = $region44
      $region43: #{tnet_forward.5} parent=39 // pred_region
        %s259 = smul.u32 64, %s15
        %p260 = scmp.lt.s32.totalorder %s259, 255
        %s261 = scalar_select %p260, %s259, 255
        %s262 = smul.addr %s261, 4
        %s263 = scalar_lea.vmem %s0, %s262
        %s264 = smul.u32 64, %s15
      $region44: #{tnet_forward.5} parent=39 // pred_fallthru
        _
    $region40: #{tnet_forward.5} parent=5 // pred_fallthru
      _
    %p265 = scmp.le.s32.totalorder 1, %s15
    %p266 = scmp.lt.s32.totalorder %s15, 5
    %p267 = pnand %p265, %p266
    %p268 = pneg %p267
    // Predicated region
    $region45: #{tnet_forward.5} parent=5 // pred_check
      _
    $region46: #{tnet_forward.5} parent=5 // pred_check_branch
      %270 = sbr.rel (%p267) target = $region48
    $region47: #{tnet_forward.5} parent=5 // pred_region
      %s271 = ssub.s32 %s15, 1
      %s272 = smul.u32 64, %s20
      %p273 = scmp.lt.s32.totalorder %s272, 255
      %s274 = scalar_select %p273, %s272, 255
      %s275 = smul.addr %s274, 4
      %s276 = scalar_lea.vmem %s0, %s275
      %p277 = pneg %p41
      %p278 = pneg %p38
      %p279 = pneg %p62
      %p280 = pneg %p59
      %p281 = pneg %p83
      %p282 = pneg %p80
      %p283 = pneg %p104
      %p284 = pneg %p101
      %p285 = pneg %p125
      %p286 = pneg %p122
      %p287 = pneg %p146
      %p288 = pneg %p143
      %p289 = pneg %p167
      %p290 = pneg %p164
      %p291 = pneg %p193
      %p292 = pneg %p190
      %s293 = smul.u32 64, %s20
      %p294 = scmp.lt.s32.totalorder %s293, 255
      %s295 = scalar_select %p294, %s293, 255
      %s296 = smul.addr %s295, 4
      %s297 = scalar_lea.vmem %s7, %s296
      %p298 = pneg %p219
      %p299 = pneg %p216
      %p300 = scmp.lt.s32.totalorder %s20, 3
      %s301 = scalar_select %p300, %s20, 3
      %s302 = smul.addr %s301, 2
      %s303 = scalar_lea.vmem %s8, %s302
      %s304 = smul.u32 64, %s20
      %p305 = scmp.lt.s32.totalorder %s304, 255
      %s306 = scalar_select %p305, %s304, 255
      %s307 = smul.addr %s306, 4
      %s308 = scalar_lea.vmem %s0, %s307
      %s309 = smul.u32 64, %s20
      %s310 = smul.u32 64, %s20
      %p311 = scmp.lt.s32.totalorder %s310, 255
      %s312 = scalar_select %p311, %s310, 255
      %s313 = smul.addr %s312, 4
      %s314 = scalar_lea.vmem %s7, %s313
      %s315 = smul.u32 64, %s20
      %p316 = scmp.lt.s32.totalorder %s20, 3
      %s317 = scalar_select %p316, %s20, 3
      %s318 = smul.addr %s317, 2
      %s319 = scalar_lea.vmem %s8, %s318
      %v321 = vld [vmem:[%s308] sm:$0xf]
      %v322 = vld [vmem:[%s308 + $0x4] sm:$0xf]
      %v323 = vld [vmem:[%s308 + $0x8] sm:$0xf]
      %v324 = vld [vmem:[%s308 + $0xc] sm:$0xf]
      %v325 = vld [vmem:[%s308 + $0x10] sm:$0xf]
      %v326 = vld [vmem:[%s308 + $0x14] sm:$0xf]
      %v327 = vld [vmem:[%s308 + $0x18] sm:$0xf]
      %v328 = vld [vmem:[%s308 + $0x1c] sm:$0xf]
      %v329 = vld [vmem:[%s308 + $0x20] sm:$0xf]
      %v330 = vld [vmem:[%s308 + $0x24] sm:$0xf]
      %v331 = vld [vmem:[%s308 + $0x28] sm:$0xf]
      %v332 = vld [vmem:[%s308 + $0x2c] sm:$0xf]
      %v333 = vld [vmem:[%s308 + $0x30] sm:$0xf]
      %v334 = vld [vmem:[%s308 + $0x34] sm:$0xf]
      %v335 = vld [vmem:[%s308 + $0x38] sm:$0xf]
      %v336 = vld [vmem:[%s308 + $0x3c] sm:$0xf]
      %v337 = vld [vmem:[%s308 + $0x40] sm:$0xf]
      %v338 = vld [vmem:[%s308 + $0x44] sm:$0xf]
      %v339 = vld [vmem:[%s308 + $0x48] sm:$0xf]
      %v340 = vld [vmem:[%s308 + $0x4c] sm:$0xf]
      %v341 = vld [vmem:[%s308 + $0x50] sm:$0xf]
      %v342 = vld [vmem:[%s308 + $0x54] sm:$0xf]
      %v343 = vld [vmem:[%s308 + $0x58] sm:$0xf]
      %v344 = vld [vmem:[%s308 + $0x5c] sm:$0xf]
      %v345 = vld [vmem:[%s308 + $0x60] sm:$0xf]
      %v346 = vld [vmem:[%s308 + $0x64] sm:$0xf]
      %v347 = vld [vmem:[%s308 + $0x68] sm:$0xf]
      %v348 = vld [vmem:[%s308 + $0x6c] sm:$0xf]
      %v349 = vld [vmem:[%s308 + $0x70] sm:$0xf]
      %v350 = vld [vmem:[%s308 + $0x74] sm:$0xf]
      %v351 = vld [vmem:[%s308 + $0x78] sm:$0xf]
      %v352 = vld [vmem:[%s308 + $0x7c] sm:$0xf]
      %v353 = vld [vmem:[%s308 + $0x80] sm:$0xf]
      %v354 = vld [vmem:[%s308 + $0x84] sm:$0xf]
      %v355 = vld [vmem:[%s308 + $0x88] sm:$0xf]
      %v356 = vld [vmem:[%s308 + $0x8c] sm:$0xf]
      %v357 = vld [vmem:[%s308 + $0x90] sm:$0xf]
      %v358 = vld [vmem:[%s308 + $0x94] sm:$0xf]
      %v359 = vld [vmem:[%s308 + $0x98] sm:$0xf]
      %v360 = vld [vmem:[%s308 + $0x9c] sm:$0xf]
      %v361 = vld [vmem:[%s308 + $0xa0] sm:$0xf]
      %v362 = vld [vmem:[%s308 + $0xa4] sm:$0xf]
      %v363 = vld [vmem:[%s308 + $0xa8] sm:$0xf]
      %v364 = vld [vmem:[%s308 + $0xac] sm:$0xf]
      %v365 = vld [vmem:[%s308 + $0xb0] sm:$0xf]
      %v366 = vld [vmem:[%s308 + $0xb4] sm:$0xf]
      %v367 = vld [vmem:[%s308 + $0xb8] sm:$0xf]
      %v368 = vld [vmem:[%s308 + $0xbc] sm:$0xf]
      %v369 = vld [vmem:[%s308 + $0xc0] sm:$0xf]
      %v370 = vld [vmem:[%s308 + $0xc4] sm:$0xf]
      %v371 = vld [vmem:[%s308 + $0xc8] sm:$0xf]
      %v372 = vld [vmem:[%s308 + $0xcc] sm:$0xf]
      %v373 = vld [vmem:[%s308 + $0xd0] sm:$0xf]
      %v374 = vld [vmem:[%s308 + $0xd4] sm:$0xf]
      %v375 = vld [vmem:[%s308 + $0xd8] sm:$0xf]
      %v376 = vld [vmem:[%s308 + $0xdc] sm:$0xf]
      %v377 = vld [vmem:[%s308 + $0xe0] sm:$0xf]
      %v378 = vld [vmem:[%s308 + $0xe4] sm:$0xf]
      %v379 = vld [vmem:[%s308 + $0xe8] sm:$0xf]
      %v380 = vld [vmem:[%s308 + $0xec] sm:$0xf]
      %v381 = vld [vmem:[%s308 + $0xf0] sm:$0xf]
      %v382 = vld [vmem:[%s308 + $0xf4] sm:$0xf]
      %v383 = vld [vmem:[%s308 + $0xf8] sm:$0xf]
      %v384 = vld [vmem:[%s308 + $0xfc] sm:$0xf]
      %v385 = vld [vmem:[%s1] sm:$0xf]
      %v386 = vld [vmem:[%s2] sm:$0x1]
      %v388 = vlaneseq
      %v389 = vshrl.u32 %v388, 7
      %v390 = vsub.s32 0, %v389
      %v391 = vrot.slane %v386, %v390
      %v457 = vunpack.c.l.b16 %v321
      %v458 = vunpack.c.l.b16 %v322
      %v459 = vunpack.c.l.b16 %v323
      %v460 = vunpack.c.l.b16 %v324
      %v461 = vunpack.c.l.b16 %v325
      %v462 = vunpack.c.l.b16 %v326
      %v463 = vunpack.c.l.b16 %v327
      %v464 = vunpack.c.l.b16 %v328
      %v465 = vunpack.c.l.b16 %v329
      %v466 = vunpack.c.l.b16 %v330
      %v467 = vunpack.c.l.b16 %v331
      %v468 = vunpack.c.l.b16 %v332
      %v469 = vunpack.c.l.b16 %v333
      %v470 = vunpack.c.l.b16 %v334
      %v471 = vunpack.c.l.b16 %v335
      %v472 = vunpack.c.l.b16 %v336
      %v473 = vunpack.c.l.b16 %v337
      %v474 = vunpack.c.l.b16 %v338
      %v475 = vunpack.c.l.b16 %v339
      %v476 = vunpack.c.l.b16 %v340
      %v477 = vunpack.c.l.b16 %v341
      %v478 = vunpack.c.l.b16 %v342
      %v479 = vunpack.c.l.b16 %v343
      %v480 = vunpack.c.l.b16 %v344
      %v481 = vunpack.c.l.b16 %v345
      %v482 = vunpack.c.l.b16 %v346
      %v483 = vunpack.c.l.b16 %v347
      %v484 = vunpack.c.l.b16 %v348
      %v485 = vunpack.c.l.b16 %v349
      %v486 = vunpack.c.l.b16 %v350
      %v487 = vunpack.c.l.b16 %v351
      %v488 = vunpack.c.l.b16 %v352
      %v489 = vunpack.c.l.b16 %v353
      %v490 = vunpack.c.l.b16 %v354
      %v491 = vunpack.c.l.b16 %v355
      %v492 = vunpack.c.l.b16 %v356
      %v493 = vunpack.c.l.b16 %v357
      %v494 = vunpack.c.l.b16 %v358
      %v495 = vunpack.c.l.b16 %v359
      %v496 = vunpack.c.l.b16 %v360
      %v497 = vunpack.c.l.b16 %v361
      %v498 = vunpack.c.l.b16 %v362
      %v499 = vunpack.c.l.b16 %v363
      %v500 = vunpack.c.l.b16 %v364
      %v501 = vunpack.c.l.b16 %v365
      %v502 = vunpack.c.l.b16 %v366
      %v503 = vunpack.c.l.b16 %v367
      %v504 = vunpack.c.l.b16 %v368
      %v505 = vunpack.c.l.b16 %v369
      %v506 = vunpack.c.l.b16 %v370
      %v507 = vunpack.c.l.b16 %v371
      %v508 = vunpack.c.l.b16 %v372
      %v509 = vunpack.c.l.b16 %v373
      %v510 = vunpack.c.l.b16 %v374
      %v511 = vunpack.c.l.b16 %v375
      %v512 = vunpack.c.l.b16 %v376
      %v513 = vunpack.c.l.b16 %v377
      %v514 = vunpack.c.l.b16 %v378
      %v515 = vunpack.c.l.b16 %v379
      %v516 = vunpack.c.l.b16 %v380
      %v517 = vunpack.c.l.b16 %v381
      %v518 = vunpack.c.l.b16 %v382
      %v519 = vunpack.c.l.b16 %v383
      %v520 = vunpack.c.l.b16 %v384
      %v521 = vpack.c.b16 %v458, %v457
      %v522 = vpack.c.b16 %v460, %v459
      %v523 = vpack.c.b16 %v462, %v461
      %v524 = vpack.c.b16 %v464, %v463
      %v525 = vpack.c.b16 %v466, %v465
      %v526 = vpack.c.b16 %v468, %v467
      %v527 = vpack.c.b16 %v470, %v469
      %v528 = vpack.c.b16 %v472, %v471
      %v529 = vpack.c.b16 %v474, %v473
      %v530 = vpack.c.b16 %v476, %v475
      %v531 = vpack.c.b16 %v478, %v477
      %v532 = vpack.c.b16 %v480, %v479
      %v533 = vpack.c.b16 %v482, %v481
      %v534 = vpack.c.b16 %v484, %v483
      %v535 = vpack.c.b16 %v486, %v485
      %v536 = vpack.c.b16 %v488, %v487
      %v537 = vpack.c.b16 %v490, %v489
      %v538 = vpack.c.b16 %v492, %v491
      %v539 = vpack.c.b16 %v494, %v493
      %v540 = vpack.c.b16 %v496, %v495
      %v541 = vpack.c.b16 %v498, %v497
      %v542 = vpack.c.b16 %v500, %v499
      %v543 = vpack.c.b16 %v502, %v501
      %v544 = vpack.c.b16 %v504, %v503
      %v545 = vpack.c.b16 %v506, %v505
      %v546 = vpack.c.b16 %v508, %v507
      %v547 = vpack.c.b16 %v510, %v509
      %v548 = vpack.c.b16 %v512, %v511
      %v549 = vpack.c.b16 %v514, %v513
      %v550 = vpack.c.b16 %v516, %v515
      %v551 = vpack.c.b16 %v518, %v517
      %v552 = vpack.c.b16 %v520, %v519
      %vm553 = vcmask 64512
      %v555 = vsel %vm553, %v521, 0
      %v558 = vsel %vm553, %v522, 0
      %v561 = vsel %vm553, %v523, 0
      %v564 = vsel %vm553, %v524, 0
      %v567 = vsel %vm553, %v525, 0
      %v570 = vsel %vm553, %v526, 0
      %v573 = vsel %vm553, %v527, 0
      %v576 = vsel %vm553, %v528, 0
      %v579 = vsel %vm553, %v529, 0
      %v582 = vsel %vm553, %v530, 0
      %v585 = vsel %vm553, %v531, 0
      %v588 = vsel %vm553, %v532, 0
      %v591 = vsel %vm553, %v533, 0
      %v594 = vsel %vm553, %v534, 0
      %v597 = vsel %vm553, %v535, 0
      %v600 = vsel %vm553, %v536, 0
      %v603 = vsel %vm553, %v537, 0
      %v606 = vsel %vm553, %v538, 0
      %v609 = vsel %vm553, %v539, 0
      %v612 = vsel %vm553, %v540, 0
      %v615 = vsel %vm553, %v541, 0
      %v618 = vsel %vm553, %v542, 0
      %v621 = vsel %vm553, %v543, 0
      %v624 = vsel %vm553, %v544, 0
      %v627 = vsel %vm553, %v545, 0
      %v630 = vsel %vm553, %v546, 0
      %v633 = vsel %vm553, %v547, 0
      %v636 = vsel %vm553, %v548, 0
      %v639 = vsel %vm553, %v549, 0
      %v642 = vsel %vm553, %v550, 0
      %v645 = vsel %vm553, %v551, 0
      %v648 = vsel %vm553, %v552, 0
      %vm650 = vcmask 1043456
      %v652 = vsel %vm650, %v385, 0
      %654 = vmatprep.subr.bf16.mxu0 0
      %655 = vmatpush1.bf16.msra.mxu0 %v652
      %656 = vmatprep.subr.bf16.mxu0 0
      %657 = vmatpush1.bf16.msra.mxu0 0
      %658 = vmatprep.subr.bf16.mxu0 0
      %659 = vmatpush1.bf16.msra.mxu0 0
      %660 = vmatprep.subr.bf16.mxu0 0
      %661 = vmatpush1.bf16.msra.mxu0 0
      %662 = vmatprep.subr.bf16.mxu0 0
      %663 = vmatpush1.bf16.msra.mxu0 0
      %664 = vmatprep.subr.bf16.mxu0 0
      %665 = vmatpush1.bf16.msra.mxu0 0
      %666 = vmatprep.subr.bf16.mxu0 0
      %667 = vmatpush1.bf16.msra.mxu0 0
      %668 = vmatprep.subr.bf16.mxu0 0
      %669 = vmatpush1.bf16.msra.mxu0 0
      %670 = vmatprep.subr.bf16.mxu0 0
      %671 = vmatpush1.bf16.msra.mxu0 0
      %672 = vmatprep.subr.bf16.mxu0 0
      %673 = vmatpush1.bf16.msra.mxu0 0
      %674 = vmatprep.subr.bf16.mxu0 0
      %675 = vmatpush1.bf16.msra.mxu0 0
      %676 = vmatprep.subr.bf16.mxu0 0
      %677 = vmatpush1.bf16.msra.mxu0 0
      %678 = vmatprep.subr.bf16.mxu0 0
      %679 = vmatpush1.bf16.msra.mxu0 0
      %680 = vmatprep.subr.bf16.mxu0 0
      %681 = vmatpush1.bf16.msra.mxu0 0
      %682 = vmatprep.subr.bf16.mxu0 0
      %683 = vmatpush1.bf16.msra.mxu0 0
      %684 = vmatprep.subr.bf16.mxu0 0
      %685 = vmatpush1.bf16.msra.mxu0 0
      %686 = vmatprep.mubr.bf16.mxu0 0
      %687 = vmatmul.mubr.bf16.gmra.mrb[0].mxu0 %v555
      %v688 = vpop.f32.mrb[0].mxu0
      %v689 = vadd.f32 %v391, %v688
      %v690 = vpop.f32.mrb[0].mxu0
      %v691 = vpop.f32.mrb[0].mxu0
      %v692 = vadd.f32 %v391, %v691
      %v693 = vpop.f32.mrb[0].mxu0
      %694 = vmatprep.mubr.bf16.mxu0 0
      %695 = vmatmul.mubr.bf16.gmra.mrb[0].mxu0 %v558
      %v696 = vpop.f32.mrb[0].mxu0
      %v697 = vadd.f32 %v391, %v696
      %v698 = vpop.f32.mrb[0].mxu0
      %v699 = vpop.f32.mrb[0].mxu0
      %v700 = vadd.f32 %v391, %v699
      %v701 = vpop.f32.mrb[0].mxu0
      %702 = vmatprep.mubr.bf16.mxu0 0
      %703 = vmatmul.mubr.bf16.gmra.mrb[0].mxu0 %v561
      %v704 = vpop.f32.mrb[0].mxu0
      %v705 = vadd.f32 %v391, %v704
      %v706 = vpop.f32.mrb[0].mxu0
      %v707 = vpop.f32.mrb[0].mxu0
      %v708 = vadd.f32 %v391, %v707
      %v709 = vpop.f32.mrb[0].mxu0
      %710 = vmatprep.mubr.bf16.mxu0 0
      %711 = vmatmul.mubr.bf16.gmra.mrb[0].mxu0 %v564
      %v712 = vpop.f32.mrb[0].mxu0
      %v713 = vadd.f32 %v391, %v712
      %v714 = vpop.f32.mrb[0].mxu0
      %v715 = vpop.f32.mrb[0].mxu0
      %v716 = vadd.f32 %v391, %v715
      %v717 = vpop.f32.mrb[0].mxu0
      %718 = vmatprep.mubr.bf16.mxu0 0
      %719 = vmatmul.mubr.bf16.gmra.mrb[0].mxu0 %v567
      %v720 = vpop.f32.mrb[0].mxu0
      %v721 = vadd.f32 %v391, %v720
      %v722 = vpop.f32.mrb[0].mxu0
      %v723 = vpop.f32.mrb[0].mxu0
      %v724 = vadd.f32 %v391, %v723
      %v725 = vpop.f32.mrb[0].mxu0
      %726 = vmatprep.mubr.bf16.mxu0 0
      %727 = vmatmul.mubr.bf16.gmra.mrb[0].mxu0 %v570
      %v728 = vpop.f32.mrb[0].mxu0
      %v729 = vadd.f32 %v391, %v728
      %v730 = vpop.f32.mrb[0].mxu0
      %v731 = vpop.f32.mrb[0].mxu0
      %v732 = vadd.f32 %v391, %v731
      %v733 = vpop.f32.mrb[0].mxu0
      %734 = vmatprep.mubr.bf16.mxu0 0
      %735 = vmatmul.mubr.bf16.gmra.mrb[0].mxu0 %v573
      %v736 = vpop.f32.mrb[0].mxu0
      %v737 = vadd.f32 %v391, %v736
      %v738 = vpop.f32.mrb[0].mxu0
      %v739 = vpop.f32.mrb[0].mxu0
      %v740 = vadd.f32 %v391, %v739
      %v741 = vpop.f32.mrb[0].mxu0
      %742 = vmatprep.mubr.bf16.mxu0 0
      %743 = vmatmul.mubr.bf16.gmra.mrb[0].mxu0 %v576
      %v744 = vpop.f32.mrb[0].mxu0
      %v745 = vadd.f32 %v391, %v744
      %v746 = vpop.f32.mrb[0].mxu0
      %v747 = vpop.f32.mrb[0].mxu0
      %v748 = vadd.f32 %v391, %v747
      %v749 = vpop.f32.mrb[0].mxu0
      %750 = vmatprep.mubr.bf16.mxu0 0
      %751 = vmatmul.mubr.bf16.gmra.mrb[0].mxu0 %v579
      %v752 = vpop.f32.mrb[0].mxu0
      %v753 = vadd.f32 %v391, %v752
      %v754 = vpop.f32.mrb[0].mxu0
      %v755 = vpop.f32.mrb[0].mxu0
      %v756 = vadd.f32 %v391, %v755
      %v757 = vpop.f32.mrb[0].mxu0
      %758 = vmatprep.mubr.bf16.mxu0 0
      %759 = vmatmul.mubr.bf16.gmra.mrb[0].mxu0 %v582
      %v760 = vpop.f32.mrb[0].mxu0
      %v761 = vadd.f32 %v391, %v760
      %v762 = vpop.f32.mrb[0].mxu0
      %v763 = vpop.f32.mrb[0].mxu0
      %v764 = vadd.f32 %v391, %v763
      %v765 = vpop.f32.mrb[0].mxu0
      %766 = vmatprep.mubr.bf16.mxu0 0
      %767 = vmatmul.mubr.bf16.gmra.mrb[0].mxu0 %v585
      %v768 = vpop.f32.mrb[0].mxu0
      %v769 = vadd.f32 %v391, %v768
      %v770 = vpop.f32.mrb[0].mxu0
      %v771 = vpop.f32.mrb[0].mxu0
      %v772 = vadd.f32 %v391, %v771
      %v773 = vpop.f32.mrb[0].mxu0
      %774 = vmatprep.mubr.bf16.mxu0 0
      %775 = vmatmul.mubr.bf16.gmra.mrb[0].mxu0 %v588
      %v776 = vpop.f32.mrb[0].mxu0
      %v777 = vadd.f32 %v391, %v776
      %v778 = vpop.f32.mrb[0].mxu0
      %v779 = vpop.f32.mrb[0].mxu0
      %v780 = vadd.f32 %v391, %v779
      %v781 = vpop.f32.mrb[0].mxu0
      %782 = vmatprep.mubr.bf16.mxu0 0
      %783 = vmatmul.mubr.bf16.gmra.mrb[0].mxu0 %v591
      %v784 = vpop.f32.mrb[0].mxu0
      %v785 = vadd.f32 %v391, %v784
      %v786 = vpop.f32.mrb[0].mxu0
      %v787 = vpop.f32.mrb[0].mxu0
      %v788 = vadd.f32 %v391, %v787
      %v789 = vpop.f32.mrb[0].mxu0
      %790 = vmatprep.mubr.bf16.mxu0 0
      %791 = vmatmul.mubr.bf16.gmra.mrb[0].mxu0 %v594
      %v792 = vpop.f32.mrb[0].mxu0
      %v793 = vadd.f32 %v391, %v792
      %v794 = vpop.f32.mrb[0].mxu0
      %v795 = vpop.f32.mrb[0].mxu0
      %v796 = vadd.f32 %v391, %v795
      %v797 = vpop.f32.mrb[0].mxu0
      %798 = vmatprep.mubr.bf16.mxu0 0
      %799 = vmatmul.mubr.bf16.gmra.mrb[0].mxu0 %v597
      %v800 = vpop.f32.mrb[0].mxu0
      %v801 = vadd.f32 %v391, %v800
      %v802 = vpop.f32.mrb[0].mxu0
      %v803 = vpop.f32.mrb[0].mxu0
      %v804 = vadd.f32 %v391, %v803
      %v805 = vpop.f32.mrb[0].mxu0
      %806 = vmatprep.mubr.bf16.mxu0 0
      %807 = vmatmul.mubr.bf16.gmra.mrb[0].mxu0 %v600
      %v808 = vpop.f32.mrb[0].mxu0
      %v809 = vadd.f32 %v391, %v808
      %v810 = vpop.f32.mrb[0].mxu0
      %v811 = vpop.f32.mrb[0].mxu0
      %v812 = vadd.f32 %v391, %v811
      %v813 = vpop.f32.mrb[0].mxu0
      %814 = vmatprep.mubr.bf16.mxu0 0
      %815 = vmatmul.mubr.bf16.gmra.mrb[0].mxu0 %v603
      %v816 = vpop.f32.mrb[0].mxu0
      %v817 = vadd.f32 %v391, %v816
      %v818 = vpop.f32.mrb[0].mxu0
      %v819 = vpop.f32.mrb[0].mxu0
      %v820 = vadd.f32 %v391, %v819
      %v821 = vpop.f32.mrb[0].mxu0
      %822 = vmatprep.mubr.bf16.mxu0 0
      %823 = vmatmul.mubr.bf16.gmra.mrb[0].mxu0 %v606
      %v824 = vpop.f32.mrb[0].mxu0
      %v825 = vadd.f32 %v391, %v824
      %v826 = vpop.f32.mrb[0].mxu0
      %v827 = vpop.f32.mrb[0].mxu0
      %v828 = vadd.f32 %v391, %v827
      %v829 = vpop.f32.mrb[0].mxu0
      %830 = vmatprep.mubr.bf16.mxu0 0
      %831 = vmatmul.mubr.bf16.gmra.mrb[0].mxu0 %v609
      %v832 = vpop.f32.mrb[0].mxu0
      %v833 = vadd.f32 %v391, %v832
      %v834 = vpop.f32.mrb[0].mxu0
      %v835 = vpop.f32.mrb[0].mxu0
      %v836 = vadd.f32 %v391, %v835
      %v837 = vpop.f32.mrb[0].mxu0
      %838 = vmatprep.mubr.bf16.mxu0 0
      %839 = vmatmul.mubr.bf16.gmra.mrb[0].mxu0 %v612
      %v840 = vpop.f32.mrb[0].mxu0
      %v841 = vadd.f32 %v391, %v840
      %v842 = vpop.f32.mrb[0].mxu0
      %v843 = vpop.f32.mrb[0].mxu0
      %v844 = vadd.f32 %v391, %v843
      %v845 = vpop.f32.mrb[0].mxu0
      %846 = vmatprep.mubr.bf16.mxu0 0
      %847 = vmatmul.mubr.bf16.gmra.mrb[0].mxu0 %v615
      %v848 = vpop.f32.mrb[0].mxu0
      %v849 = vadd.f32 %v391, %v848
      %v850 = vpop.f32.mrb[0].mxu0
      %v851 = vpop.f32.mrb[0].mxu0
      %v852 = vadd.f32 %v391, %v851
      %v853 = vpop.f32.mrb[0].mxu0
      %854 = vmatprep.mubr.bf16.mxu0 0
      %855 = vmatmul.mubr.bf16.gmra.mrb[0].mxu0 %v618
      %v856 = vpop.f32.mrb[0].mxu0
      %v857 = vadd.f32 %v391, %v856
      %v858 = vpop.f32.mrb[0].mxu0
      %v859 = vpop.f32.mrb[0].mxu0
      %v860 = vadd.f32 %v391, %v859
      %v861 = vpop.f32.mrb[0].mxu0
      %862 = vmatprep.mubr.bf16.mxu0 0
      %863 = vmatmul.mubr.bf16.gmra.mrb[0].mxu0 %v621
      %v864 = vpop.f32.mrb[0].mxu0
      %v865 = vadd.f32 %v391, %v864
      %v866 = vpop.f32.mrb[0].mxu0
      %v867 = vpop.f32.mrb[0].mxu0
      %v868 = vadd.f32 %v391, %v867
      %v869 = vpop.f32.mrb[0].mxu0
      %870 = vmatprep.mubr.bf16.mxu0 0
      %871 = vmatmul.mubr.bf16.gmra.mrb[0].mxu0 %v624
      %v872 = vpop.f32.mrb[0].mxu0
      %v873 = vadd.f32 %v391, %v872
      %v874 = vpop.f32.mrb[0].mxu0
      %v875 = vpop.f32.mrb[0].mxu0
      %v876 = vadd.f32 %v391, %v875
      %v877 = vpop.f32.mrb[0].mxu0
      %878 = vmatprep.mubr.bf16.mxu0 0
      %879 = vmatmul.mubr.bf16.gmra.mrb[0].mxu0 %v627
      %v880 = vpop.f32.mrb[0].mxu0
      %v881 = vadd.f32 %v391, %v880
      %v882 = vpop.f32.mrb[0].mxu0
      %v883 = vpop.f32.mrb[0].mxu0
      %v884 = vadd.f32 %v391, %v883
      %v885 = vpop.f32.mrb[0].mxu0
      %886 = vmatprep.mubr.bf16.mxu0 0
      %887 = vmatmul.mubr.bf16.gmra.mrb[0].mxu0 %v630
      %v888 = vpop.f32.mrb[0].mxu0
      %v889 = vadd.f32 %v391, %v888
      %v890 = vpop.f32.mrb[0].mxu0
      %v891 = vpop.f32.mrb[0].mxu0
      %v892 = vadd.f32 %v391, %v891
      %v893 = vpop.f32.mrb[0].mxu0
      %894 = vmatprep.mubr.bf16.mxu0 0
      %895 = vmatmul.mubr.bf16.gmra.mrb[0].mxu0 %v633
      %v896 = vpop.f32.mrb[0].mxu0
      %v897 = vadd.f32 %v391, %v896
      %v898 = vpop.f32.mrb[0].mxu0
      %v899 = vpop.f32.mrb[0].mxu0
      %v900 = vadd.f32 %v391, %v899
      %v901 = vpop.f32.mrb[0].mxu0
      %902 = vmatprep.mubr.bf16.mxu0 0
      %903 = vmatmul.mubr.bf16.gmra.mrb[0].mxu0 %v636
      %v904 = vpop.f32.mrb[0].mxu0
      %v905 = vadd.f32 %v391, %v904
      %v906 = vpop.f32.mrb[0].mxu0
      %v907 = vpop.f32.mrb[0].mxu0
      %v908 = vadd.f32 %v391, %v907
      %v909 = vpop.f32.mrb[0].mxu0
      %910 = vmatprep.mubr.bf16.mxu0 0
      %911 = vmatmul.mubr.bf16.gmra.mrb[0].mxu0 %v639
      %v912 = vpop.f32.mrb[0].mxu0
      %v913 = vadd.f32 %v391, %v912
      %v914 = vpop.f32.mrb[0].mxu0
      %v915 = vpop.f32.mrb[0].mxu0
      %v916 = vadd.f32 %v391, %v915
      %v917 = vpop.f32.mrb[0].mxu0
      %918 = vmatprep.mubr.bf16.mxu0 0
      %919 = vmatmul.mubr.bf16.gmra.mrb[0].mxu0 %v642
      %v920 = vpop.f32.mrb[0].mxu0
      %v921 = vadd.f32 %v391, %v920
      %v922 = vpop.f32.mrb[0].mxu0
      %v923 = vpop.f32.mrb[0].mxu0
      %v924 = vadd.f32 %v391, %v923
      %v925 = vpop.f32.mrb[0].mxu0
      %926 = vmatprep.mubr.bf16.mxu0 0
      %927 = vmatmul.mubr.bf16.gmra.mrb[0].mxu0 %v645
      %v928 = vpop.f32.mrb[0].mxu0
      %v929 = vadd.f32 %v391, %v928
      %v930 = vpop.f32.mrb[0].mxu0
      %v931 = vpop.f32.mrb[0].mxu0
      %v932 = vadd.f32 %v391, %v931
      %v933 = vpop.f32.mrb[0].mxu0
      %934 = vmatprep.mubr.bf16.mxu0 0
      %935 = vmatmul.mubr.bf16.gmra.mrb[0].mxu0 %v648
      %v936 = vpop.f32.mrb[0].mxu0
      %v937 = vadd.f32 %v391, %v936
      %v938 = vpop.f32.mrb[0].mxu0
      %v939 = vpop.f32.mrb[0].mxu0
      %v940 = vadd.f32 %v391, %v939
      %v941 = vpop.f32.mrb[0].mxu0
      %942 = vdwg.mxu0
      %v943 = vld [vmem:[%s3] sm:$0x1]
      %v945 = vlaneseq
      %v946 = vshrl.u32 %v945, 7
      %v947 = vsub.s32 0, %v946
      %v948 = vrot.slane %v943, %v947
      %v950 = vmul.f32 %v689, %v948
      %v951 = vmul.f32 %v692, %v948
      %v952 = vmul.f32 %v697, %v948
      %v953 = vmul.f32 %v700, %v948
      %v954 = vmul.f32 %v705, %v948
      %v955 = vmul.f32 %v708, %v948
      %v956 = vmul.f32 %v713, %v948
      %v957 = vmul.f32 %v716, %v948
      %v958 = vmul.f32 %v721, %v948
      %v959 = vmul.f32 %v724, %v948
      %v960 = vmul.f32 %v729, %v948
      %v961 = vmul.f32 %v732, %v948
      %v962 = vmul.f32 %v737, %v948
      %v963 = vmul.f32 %v740, %v948
      %v964 = vmul.f32 %v745, %v948
      %v965 = vmul.f32 %v748, %v948
      %v966 = vmul.f32 %v753, %v948
      %v967 = vmul.f32 %v756, %v948
      %v968 = vmul.f32 %v761, %v948
      %v969 = vmul.f32 %v764, %v948
      %v970 = vmul.f32 %v769, %v948
      %v971 = vmul.f32 %v772, %v948
      %v972 = vmul.f32 %v777, %v948
      %v973 = vmul.f32 %v780, %v948
      %v974 = vmul.f32 %v785, %v948
      %v975 = vmul.f32 %v788, %v948
      %v976 = vmul.f32 %v793, %v948
      %v977 = vmul.f32 %v796, %v948
      %v978 = vmul.f32 %v801, %v948
      %v979 = vmul.f32 %v804, %v948
      %v980 = vmul.f32 %v809, %v948
      %v981 = vmul.f32 %v812, %v948
      %v982 = vmul.f32 %v817, %v948
      %v983 = vmul.f32 %v820, %v948
      %v984 = vmul.f32 %v825, %v948
      %v985 = vmul.f32 %v828, %v948
      %v986 = vmul.f32 %v833, %v948
      %v987 = vmul.f32 %v836, %v948
      %v988 = vmul.f32 %v841, %v948
      %v989 = vmul.f32 %v844, %v948
      %v990 = vmul.f32 %v849, %v948
      %v991 = vmul.f32 %v852, %v948
      %v992 = vmul.f32 %v857, %v948
      %v993 = vmul.f32 %v860, %v948
      %v994 = vmul.f32 %v865, %v948
      %v995 = vmul.f32 %v868, %v948
      %v996 = vmul.f32 %v873, %v948
      %v997 = vmul.f32 %v876, %v948
      %v998 = vmul.f32 %v881, %v948
      %v999 = vmul.f32 %v884, %v948
      %v1000 = vmul.f32 %v889, %v948
      %v1001 = vmul.f32 %v892, %v948
      %v1002 = vmul.f32 %v897, %v948
      %v1003 = vmul.f32 %v900, %v948
      %v1004 = vmul.f32 %v905, %v948
      %v1005 = vmul.f32 %v908, %v948
      %v1006 = vmul.f32 %v913, %v948
      %v1007 = vmul.f32 %v916, %v948
      %v1008 = vmul.f32 %v921, %v948
      %v1009 = vmul.f32 %v924, %v948
      %v1010 = vmul.f32 %v929, %v948
      %v1011 = vmul.f32 %v932, %v948
      %v1012 = vmul.f32 %v937, %v948
      %v1013 = vmul.f32 %v940, %v948
      %v1014 = vld [vmem:[%s4] sm:$0x1]
      %v1016 = vlaneseq
      %v1017 = vshrl.u32 %v1016, 7
      %v1018 = vsub.s32 0, %v1017
      %v1019 = vrot.slane %v1014, %v1018
      %v1021 = vadd.f32 %v950, %v1019
      %v1022 = vadd.f32 %v951, %v1019
      %v1023 = vadd.f32 %v952, %v1019
      %v1024 = vadd.f32 %v953, %v1019
      %v1025 = vadd.f32 %v954, %v1019
      %v1026 = vadd.f32 %v955, %v1019
      %v1027 = vadd.f32 %v956, %v1019
      %v1028 = vadd.f32 %v957, %v1019
      %v1029 = vadd.f32 %v958, %v1019
      %v1030 = vadd.f32 %v959, %v1019
      %v1031 = vadd.f32 %v960, %v1019
      %v1032 = vadd.f32 %v961, %v1019
      %v1033 = vadd.f32 %v962, %v1019
      %v1034 = vadd.f32 %v963, %v1019
      %v1035 = vadd.f32 %v964, %v1019
      %v1036 = vadd.f32 %v965, %v1019
      %v1037 = vadd.f32 %v966, %v1019
      %v1038 = vadd.f32 %v967, %v1019
      %v1039 = vadd.f32 %v968, %v1019
      %v1040 = vadd.f32 %v969, %v1019
      %v1041 = vadd.f32 %v970, %v1019
      %v1042 = vadd.f32 %v971, %v1019
      %v1043 = vadd.f32 %v972, %v1019
      %v1044 = vadd.f32 %v973, %v1019
      %v1045 = vadd.f32 %v974, %v1019
      %v1046 = vadd.f32 %v975, %v1019
      %v1047 = vadd.f32 %v976, %v1019
      %v1048 = vadd.f32 %v977, %v1019
      %v1049 = vadd.f32 %v978, %v1019
      %v1050 = vadd.f32 %v979, %v1019
      %v1051 = vadd.f32 %v980, %v1019
      %v1052 = vadd.f32 %v981, %v1019
      %v1053 = vadd.f32 %v982, %v1019
      %v1054 = vadd.f32 %v983, %v1019
      %v1055 = vadd.f32 %v984, %v1019
      %v1056 = vadd.f32 %v985, %v1019
      %v1057 = vadd.f32 %v986, %v1019
      %v1058 = vadd.f32 %v987, %v1019
      %v1059 = vadd.f32 %v988, %v1019
      %v1060 = vadd.f32 %v989, %v1019
      %v1061 = vadd.f32 %v990, %v1019
      %v1062 = vadd.f32 %v991, %v1019
      %v1063 = vadd.f32 %v992, %v1019
      %v1064 = vadd.f32 %v993, %v1019
      %v1065 = vadd.f32 %v994, %v1019
      %v1066 = vadd.f32 %v995, %v1019
      %v1067 = vadd.f32 %v996, %v1019
      %v1068 = vadd.f32 %v997, %v1019
      %v1069 = vadd.f32 %v998, %v1019
      %v1070 = vadd.f32 %v999, %v1019
      %v1071 = vadd.f32 %v1000, %v1019
      %v1072 = vadd.f32 %v1001, %v1019
      %v1073 = vadd.f32 %v1002, %v1019
      %v1074 = vadd.f32 %v1003, %v1019
      %v1075 = vadd.f32 %v1004, %v1019
      %v1076 = vadd.f32 %v1005, %v1019
      %v1077 = vadd.f32 %v1006, %v1019
      %v1078 = vadd.f32 %v1007, %v1019
      %v1079 = vadd.f32 %v1008, %v1019
      %v1080 = vadd.f32 %v1009, %v1019
      %v1081 = vadd.f32 %v1010, %v1019
      %v1082 = vadd.f32 %v1011, %v1019
      %v1083 = vadd.f32 %v1012, %v1019
      %v1084 = vadd.f32 %v1013, %v1019
      %v1085 = vmax.f32 %v1021, 0.0
      %v1086 = vmax.f32 %v1022, 0.0
      %v1087 = vmax.f32 %v1023, 0.0
      %v1088 = vmax.f32 %v1024, 0.0
      %v1089 = vmax.f32 %v1025, 0.0
      %v1090 = vmax.f32 %v1026, 0.0
      %v1091 = vmax.f32 %v1027, 0.0
      %v1092 = vmax.f32 %v1028, 0.0
      %v1093 = vmax.f32 %v1029, 0.0
      %v1094 = vmax.f32 %v1030, 0.0
      %v1095 = vmax.f32 %v1031, 0.0
      %v1096 = vmax.f32 %v1032, 0.0
      %v1097 = vmax.f32 %v1033, 0.0
      %v1098 = vmax.f32 %v1034, 0.0
      %v1099 = vmax.f32 %v1035, 0.0
      %v1100 = vmax.f32 %v1036, 0.0
      %v1101 = vmax.f32 %v1037, 0.0
      %v1102 = vmax.f32 %v1038, 0.0
      %v1103 = vmax.f32 %v1039, 0.0
      %v1104 = vmax.f32 %v1040, 0.0
      %v1105 = vmax.f32 %v1041, 0.0
      %v1106 = vmax.f32 %v1042, 0.0
      %v1107 = vmax.f32 %v1043, 0.0
      %v1108 = vmax.f32 %v1044, 0.0
      %v1109 = vmax.f32 %v1045, 0.0
      %v1110 = vmax.f32 %v1046, 0.0
      %v1111 = vmax.f32 %v1047, 0.0
      %v1112 = vmax.f32 %v1048, 0.0
      %v1113 = vmax.f32 %v1049, 0.0
      %v1114 = vmax.f32 %v1050, 0.0
      %v1115 = vmax.f32 %v1051, 0.0
      %v1116 = vmax.f32 %v1052, 0.0
      %v1117 = vmax.f32 %v1053, 0.0
      %v1118 = vmax.f32 %v1054, 0.0
      %v1119 = vmax.f32 %v1055, 0.0
      %v1120 = vmax.f32 %v1056, 0.0
      %v1121 = vmax.f32 %v1057, 0.0
      %v1122 = vmax.f32 %v1058, 0.0
      %v1123 = vmax.f32 %v1059, 0.0
      %v1124 = vmax.f32 %v1060, 0.0
      %v1125 = vmax.f32 %v1061, 0.0
      %v1126 = vmax.f32 %v1062, 0.0
      %v1127 = vmax.f32 %v1063, 0.0
      %v1128 = vmax.f32 %v1064, 0.0
      %v1129 = vmax.f32 %v1065, 0.0
      %v1130 = vmax.f32 %v1066, 0.0
      %v1131 = vmax.f32 %v1067, 0.0
      %v1132 = vmax.f32 %v1068, 0.0
      %v1133 = vmax.f32 %v1069, 0.0
      %v1134 = vmax.f32 %v1070, 0.0
      %v1135 = vmax.f32 %v1071, 0.0
      %v1136 = vmax.f32 %v1072, 0.0
      %v1137 = vmax.f32 %v1073, 0.0
      %v1138 = vmax.f32 %v1074, 0.0
      %v1139 = vmax.f32 %v1075, 0.0
      %v1140 = vmax.f32 %v1076, 0.0
      %v1141 = vmax.f32 %v1077, 0.0
      %v1142 = vmax.f32 %v1078, 0.0
      %v1143 = vmax.f32 %v1079, 0.0
      %v1144 = vmax.f32 %v1080, 0.0
      %v1145 = vmax.f32 %v1081, 0.0
      %v1146 = vmax.f32 %v1082, 0.0
      %v1147 = vmax.f32 %v1083, 0.0
      %v1148 = vmax.f32 %v1084, 0.0
      %v1149 = vpack.c.bf16 %v1086, %v1085
      %v1150 = vpack.c.bf16 %v1088, %v1087
      %v1151 = vpack.c.bf16 %v1090, %v1089
      %v1152 = vpack.c.bf16 %v1092, %v1091
      %v1153 = vpack.c.bf16 %v1094, %v1093
      %v1154 = vpack.c.bf16 %v1096, %v1095
      %v1155 = vpack.c.bf16 %v1098, %v1097
      %v1156 = vpack.c.bf16 %v1100, %v1099
      %v1157 = vpack.c.bf16 %v1102, %v1101
      %v1158 = vpack.c.bf16 %v1104, %v1103
      %v1159 = vpack.c.bf16 %v1106, %v1105
      %v1160 = vpack.c.bf16 %v1108, %v1107
      %v1161 = vpack.c.bf16 %v1110, %v1109
      %v1162 = vpack.c.bf16 %v1112, %v1111
      %v1163 = vpack.c.bf16 %v1114, %v1113
      %v1164 = vpack.c.bf16 %v1116, %v1115
      %v1165 = vpack.c.bf16 %v1118, %v1117
      %v1166 = vpack.c.bf16 %v1120, %v1119
      %v1167 = vpack.c.bf16 %v1122, %v1121
      %v1168 = vpack.c.bf16 %v1124, %v1123
      %v1169 = vpack.c.bf16 %v1126, %v1125
      %v1170 = vpack.c.bf16 %v1128, %v1127
      %v1171 = vpack.c.bf16 %v1130, %v1129
      %v1172 = vpack.c.bf16 %v1132, %v1131
      %v1173 = vpack.c.bf16 %v1134, %v1133
      %v1174 = vpack.c.bf16 %v1136, %v1135
      %v1175 = vpack.c.bf16 %v1138, %v1137
      %v1176 = vpack.c.bf16 %v1140, %v1139
      %v1177 = vpack.c.bf16 %v1142, %v1141
      %v1178 = vpack.c.bf16 %v1144, %v1143
      %v1179 = vpack.c.bf16 %v1146, %v1145
      %v1180 = vpack.c.bf16 %v1148, %v1147
      %v1181 = vld [vmem:[%s5] sm:$0xf]
      %v1182 = vld [vmem:[%s5 + $0x4] sm:$0xf]
      %v1183 = vld [vmem:[%s5 + $0x8] sm:$0xf]
      %v1184 = vld [vmem:[%s5 + $0xc] sm:$0xf]
      %v1185 = vld [vmem:[%s5 + $0x10] sm:$0xf]
      %v1186 = vld [vmem:[%s5 + $0x14] sm:$0xf]
      %v1187 = vld [vmem:[%s5 + $0x18] sm:$0xf]
      %v1188 = vld [vmem:[%s5 + $0x1c] sm:$0xf]
      %v1189 = vld [vmem:[%s6] sm:$0x1]
      %v1191 = vlaneseq
      %v1192 = vshrl.u32 %v1191, 7
      %v1193 = vsub.s32 0, %v1192
      %v1194 = vrot.slane %v1189, %v1193
      %v1204 = vunpack.c.l.b16 %v1181
      %v1205 = vunpack.c.l.b16 %v1182
      %v1206 = vunpack.c.l.b16 %v1183
      %v1207 = vunpack.c.l.b16 %v1184
      %v1208 = vunpack.c.l.b16 %v1185
      %v1209 = vunpack.c.l.b16 %v1186
      %v1210 = vunpack.c.l.b16 %v1187
      %v1211 = vunpack.c.l.b16 %v1188
      %v1212 = vpack.c.b16 %v1205, %v1204
      %v1213 = vpack.c.b16 %v1207, %v1206
      %v1214 = vpack.c.b16 %v1209, %v1208
      %v1215 = vpack.c.b16 %v1211, %v1210
      %vm1220 = vcmask 523264
      %v1222 = vsel %vm1220, %v1149, 0
      %v1225 = vsel %vm1220, %v1150, 0
      %v1228 = vsel %vm1220, %v1151, 0
      %v1231 = vsel %vm1220, %v1152, 0
      %v1234 = vsel %vm1220, %v1153, 0
      %v1237 = vsel %vm1220, %v1154, 0
      %v1240 = vsel %vm1220, %v1155, 0
      %v1243 = vsel %vm1220, %v1156, 0
      %v1246 = vsel %vm1220, %v1157, 0
      %v1249 = vsel %vm1220, %v1158, 0
      %v1252 = vsel %vm1220, %v1159, 0
      %v1255 = vsel %vm1220, %v1160, 0
      %v1258 = vsel %vm1220, %v1161, 0
      %v1261 = vsel %vm1220, %v1162, 0
      %v1264 = vsel %vm1220, %v1163, 0
      %v1267 = vsel %vm1220, %v1164, 0
      %v1270 = vsel %vm1220, %v1165, 0
      %v1273 = vsel %vm1220, %v1166, 0
      %v1276 = vsel %vm1220, %v1167, 0
      %v1279 = vsel %vm1220, %v1168, 0
      %v1282 = vsel %vm1220, %v1169, 0
      %v1285 = vsel %vm1220, %v1170, 0
      %v1288 = vsel %vm1220, %v1171, 0
      %v1291 = vsel %vm1220, %v1172, 0
      %v1294 = vsel %vm1220, %v1173, 0
      %v1297 = vsel %vm1220, %v1174, 0
      %v1300 = vsel %vm1220, %v1175, 0
      %v1303 = vsel %vm1220, %v1176, 0
      %v1306 = vsel %vm1220, %v1177, 0
      %v1309 = vsel %vm1220, %v1178, 0
      %v1312 = vsel %vm1220, %v1179, 0
      %v1315 = vsel %vm1220, %v1180, 0
      %1317 = vmatprep.subr.bf16.mxu0 0
      %1318 = vmatpush1.bf16.msra.mxu0 %v1212
      %1319 = vmatprep.subr.bf16.mxu0 0
      %1320 = vmatpush1.bf16.msra.mxu0 %v1213
      %1321 = vmatprep.subr.bf16.mxu0 0
      %1322 = vmatpush1.bf16.msra.mxu0 %v1214
      %1323 = vmatprep.subr.bf16.mxu0 0
      %1324 = vmatpush1.bf16.msra.mxu0 %v1215
      %1325 = vmatprep.subr.bf16.mxu0 0
      %1326 = vmatpush1.bf16.msra.mxu0 0
      %1327 = vmatprep.subr.bf16.mxu0 0
      %1328 = vmatpush1.bf16.msra.mxu0 0
      %1329 = vmatprep.subr.bf16.mxu0 0
      %1330 = vmatpush1.bf16.msra.mxu0 0
      %1331 = vmatprep.subr.bf16.mxu0 0
      %1332 = vmatpush1.bf16.msra.mxu0 0
      %1333 = vmatprep.subr.bf16.mxu0 0
      %1334 = vmatpush1.bf16.msra.mxu0 0
      %1335 = vmatprep.subr.bf16.mxu0 0
      %1336 = vmatpush1.bf16.msra.mxu0 0
      %1337 = vmatprep.subr.bf16.mxu0 0
      %1338 = vmatpush1.bf16.msra.mxu0 0
      %1339 = vmatprep.subr.bf16.mxu0 0
      %1340 = vmatpush1.bf16.msra.mxu0 0
      %1341 = vmatprep.subr.bf16.mxu0 0
      %1342 = vmatpush1.bf16.msra.mxu0 0
      %1343 = vmatprep.subr.bf16.mxu0 0
      %1344 = vmatpush1.bf16.msra.mxu0 0
      %1345 = vmatprep.subr.bf16.mxu0 0
      %1346 = vmatpush1.bf16.msra.mxu0 0
      %1347 = vmatprep.subr.bf16.mxu0 0
      %1348 = vmatpush1.bf16.msra.mxu0 0
      %1349 = vmatprep.mubr.bf16.mxu0 0
      %1350 = vmatmul.mubr.bf16.gmra.mrb[0].mxu0 %v1222
      %v1351 = vpop.f32.mrb[0].mxu0
      %v1352 = vadd.f32 %v1194, %v1351
      %v1353 = vpop.f32.mrb[0].mxu0
      %v1354 = vpop.f32.mrb[0].mxu0
      %v1355 = vadd.f32 %v1194, %v1354
      %v1356 = vpop.f32.mrb[0].mxu0
      %1357 = vmatprep.mubr.bf16.mxu0 0
      %1358 = vmatmul.mubr.bf16.gmra.mrb[0].mxu0 %v1225
      %v1359 = vpop.f32.mrb[0].mxu0
      %v1360 = vadd.f32 %v1194, %v1359
      %v1361 = vpop.f32.mrb[0].mxu0
      %v1362 = vpop.f32.mrb[0].mxu0
      %v1363 = vadd.f32 %v1194, %v1362
      %v1364 = vpop.f32.mrb[0].mxu0
      %1365 = vmatprep.mubr.bf16.mxu0 0
      %1366 = vmatmul.mubr.bf16.gmra.mrb[0].mxu0 %v1228
      %v1367 = vpop.f32.mrb[0].mxu0
      %v1368 = vadd.f32 %v1194, %v1367
      %v1369 = vpop.f32.mrb[0].mxu0
      %v1370 = vpop.f32.mrb[0].mxu0
      %v1371 = vadd.f32 %v1194, %v1370
      %v1372 = vpop.f32.mrb[0].mxu0
      %1373 = vmatprep.mubr.bf16.mxu0 0
      %1374 = vmatmul.mubr.bf16.gmra.mrb[0].mxu0 %v1231
      %v1375 = vpop.f32.mrb[0].mxu0
      %v1376 = vadd.f32 %v1194, %v1375
      %v1377 = vpop.f32.mrb[0].mxu0
      %v1378 = vpop.f32.mrb[0].mxu0
      %v1379 = vadd.f32 %v1194, %v1378
      %v1380 = vpop.f32.mrb[0].mxu0
      %1381 = vmatprep.mubr.bf16.mxu0 0
      %1382 = vmatmul.mubr.bf16.gmra.mrb[0].mxu0 %v1234
      %v1383 = vpop.f32.mrb[0].mxu0
      %v1384 = vadd.f32 %v1194, %v1383
      %v1385 = vpop.f32.mrb[0].mxu0
      %v1386 = vpop.f32.mrb[0].mxu0
      %v1387 = vadd.f32 %v1194, %v1386
      %v1388 = vpop.f32.mrb[0].mxu0
      %1389 = vmatprep.mubr.bf16.mxu0 0
      %1390 = vmatmul.mubr.bf16.gmra.mrb[0].mxu0 %v1237
      %v1391 = vpop.f32.mrb[0].mxu0
      %v1392 = vadd.f32 %v1194, %v1391
      %v1393 = vpop.f32.mrb[0].mxu0
      %v1394 = vpop.f32.mrb[0].mxu0
      %v1395 = vadd.f32 %v1194, %v1394
      %v1396 = vpop.f32.mrb[0].mxu0
      %1397 = vmatprep.mubr.bf16.mxu0 0
      %1398 = vmatmul.mubr.bf16.gmra.mrb[0].mxu0 %v1240
      %v1399 = vpop.f32.mrb[0].mxu0
      %v1400 = vadd.f32 %v1194, %v1399
      %v1401 = vpop.f32.mrb[0].mxu0
      %v1402 = vpop.f32.mrb[0].mxu0
      %v1403 = vadd.f32 %v1194, %v1402
      %v1404 = vpop.f32.mrb[0].mxu0
      %1405 = vmatprep.mubr.bf16.mxu0 0
      %1406 = vmatmul.mubr.bf16.gmra.mrb[0].mxu0 %v1243
      %v1407 = vpop.f32.mrb[0].mxu0
      %v1408 = vadd.f32 %v1194, %v1407
      %v1409 = vpop.f32.mrb[0].mxu0
      %v1410 = vpop.f32.mrb[0].mxu0
      %v1411 = vadd.f32 %v1194, %v1410
      %v1412 = vpop.f32.mrb[0].mxu0
      %1413 = vmatprep.mubr.bf16.mxu0 0
      %1414 = vmatmul.mubr.bf16.gmra.mrb[0].mxu0 %v1246
      %v1415 = vpop.f32.mrb[0].mxu0
      %v1416 = vadd.f32 %v1194, %v1415
      %v1417 = vpop.f32.mrb[0].mxu0
      %v1418 = vpop.f32.mrb[0].mxu0
      %v1419 = vadd.f32 %v1194, %v1418
      %v1420 = vpop.f32.mrb[0].mxu0
      %1421 = vmatprep.mubr.bf16.mxu0 0
      %1422 = vmatmul.mubr.bf16.gmra.mrb[0].mxu0 %v1249
      %v1423 = vpop.f32.mrb[0].mxu0
      %v1424 = vadd.f32 %v1194, %v1423
      %v1425 = vpop.f32.mrb[0].mxu0
      %v1426 = vpop.f32.mrb[0].mxu0
      %v1427 = vadd.f32 %v1194, %v1426
      %v1428 = vpop.f32.mrb[0].mxu0
      %1429 = vmatprep.mubr.bf16.mxu0 0
      %1430 = vmatmul.mubr.bf16.gmra.mrb[0].mxu0 %v1252
      %v1431 = vpop.f32.mrb[0].mxu0
      %v1432 = vadd.f32 %v1194, %v1431
      %v1433 = vpop.f32.mrb[0].mxu0
      %v1434 = vpop.f32.mrb[0].mxu0
      %v1435 = vadd.f32 %v1194, %v1434
      %v1436 = vpop.f32.mrb[0].mxu0
      %1437 = vmatprep.mubr.bf16.mxu0 0
      %1438 = vmatmul.mubr.bf16.gmra.mrb[0].mxu0 %v1255
      %v1439 = vpop.f32.mrb[0].mxu0
      %v1440 = vadd.f32 %v1194, %v1439
      %v1441 = vpop.f32.mrb[0].mxu0
      %v1442 = vpop.f32.mrb[0].mxu0
      %v1443 = vadd.f32 %v1194, %v1442
      %v1444 = vpop.f32.mrb[0].mxu0
      %1445 = vmatprep.mubr.bf16.mxu0 0
      %1446 = vmatmul.mubr.bf16.gmra.mrb[0].mxu0 %v1258
      %v1447 = vpop.f32.mrb[0].mxu0
      %v1448 = vadd.f32 %v1194, %v1447
      %v1449 = vpop.f32.mrb[0].mxu0
      %v1450 = vpop.f32.mrb[0].mxu0
      %v1451 = vadd.f32 %v1194, %v1450
      %v1452 = vpop.f32.mrb[0].mxu0
      %1453 = vmatprep.mubr.bf16.mxu0 0
      %1454 = vmatmul.mubr.bf16.gmra.mrb[0].mxu0 %v1261
      %v1455 = vpop.f32.mrb[0].mxu0
      %v1456 = vadd.f32 %v1194, %v1455
      %v1457 = vpop.f32.mrb[0].mxu0
      %v1458 = vpop.f32.mrb[0].mxu0
      %v1459 = vadd.f32 %v1194, %v1458
      %v1460 = vpop.f32.mrb[0].mxu0
      %1461 = vmatprep.mubr.bf16.mxu0 0
      %1462 = vmatmul.mubr.bf16.gmra.mrb[0].mxu0 %v1264
      %v1463 = vpop.f32.mrb[0].mxu0
      %v1464 = vadd.f32 %v1194, %v1463
      %v1465 = vpop.f32.mrb[0].mxu0
      %v1466 = vpop.f32.mrb[0].mxu0
      %v1467 = vadd.f32 %v1194, %v1466
      %v1468 = vpop.f32.mrb[0].mxu0
      %1469 = vmatprep.mubr.bf16.mxu0 0
      %1470 = vmatmul.mubr.bf16.gmra.mrb[0].mxu0 %v1267
      %v1471 = vpop.f32.mrb[0].mxu0
      %v1472 = vadd.f32 %v1194, %v1471
      %v1473 = vpop.f32.mrb[0].mxu0
      %v1474 = vpop.f32.mrb[0].mxu0
      %v1475 = vadd.f32 %v1194, %v1474
      %v1476 = vpop.f32.mrb[0].mxu0
      %1477 = vmatprep.mubr.bf16.mxu0 0
      %1478 = vmatmul.mubr.bf16.gmra.mrb[0].mxu0 %v1270
      %v1479 = vpop.f32.mrb[0].mxu0
      %v1480 = vadd.f32 %v1194, %v1479
      %v1481 = vpop.f32.mrb[0].mxu0
      %v1482 = vpop.f32.mrb[0].mxu0
      %v1483 = vadd.f32 %v1194, %v1482
      %v1484 = vpop.f32.mrb[0].mxu0
      %1485 = vmatprep.mubr.bf16.mxu0 0
      %1486 = vmatmul.mubr.bf16.gmra.mrb[0].mxu0 %v1273
      %v1487 = vpop.f32.mrb[0].mxu0
      %v1488 = vadd.f32 %v1194, %v1487
      %v1489 = vpop.f32.mrb[0].mxu0
      %v1490 = vpop.f32.mrb[0].mxu0
      %v1491 = vadd.f32 %v1194, %v1490
      %v1492 = vpop.f32.mrb[0].mxu0
      %1493 = vmatprep.mubr.bf16.mxu0 0
      %1494 = vmatmul.mubr.bf16.gmra.mrb[0].mxu0 %v1276
      %v1495 = vpop.f32.mrb[0].mxu0
      %v1496 = vadd.f32 %v1194, %v1495
      %v1497 = vpop.f32.mrb[0].mxu0
      %v1498 = vpop.f32.mrb[0].mxu0
      %v1499 = vadd.f32 %v1194, %v1498
      %v1500 = vpop.f32.mrb[0].mxu0
      %1501 = vmatprep.mubr.bf16.mxu0 0
      %1502 = vmatmul.mubr.bf16.gmra.mrb[0].mxu0 %v1279
      %v1503 = vpop.f32.mrb[0].mxu0
      %v1504 = vadd.f32 %v1194, %v1503
      %v1505 = vpop.f32.mrb[0].mxu0
      %v1506 = vpop.f32.mrb[0].mxu0
      %v1507 = vadd.f32 %v1194, %v1506
      %v1508 = vpop.f32.mrb[0].mxu0
      %1509 = vmatprep.mubr.bf16.mxu0 0
      %1510 = vmatmul.mubr.bf16.gmra.mrb[0].mxu0 %v1282
      %v1511 = vpop.f32.mrb[0].mxu0
      %v1512 = vadd.f32 %v1194, %v1511
      %v1513 = vpop.f32.mrb[0].mxu0
      %v1514 = vpop.f32.mrb[0].mxu0
      %v1515 = vadd.f32 %v1194, %v1514
      %v1516 = vpop.f32.mrb[0].mxu0
      %1517 = vmatprep.mubr.bf16.mxu0 0
      %1518 = vmatmul.mubr.bf16.gmra.mrb[0].mxu0 %v1285
      %v1519 = vpop.f32.mrb[0].mxu0
      %v1520 = vadd.f32 %v1194, %v1519
      %v1521 = vpop.f32.mrb[0].mxu0
      %v1522 = vpop.f32.mrb[0].mxu0
      %v1523 = vadd.f32 %v1194, %v1522
      %v1524 = vpop.f32.mrb[0].mxu0
      %1525 = vmatprep.mubr.bf16.mxu0 0
      %1526 = vmatmul.mubr.bf16.gmra.mrb[0].mxu0 %v1288
      %v1527 = vpop.f32.mrb[0].mxu0
      %v1528 = vadd.f32 %v1194, %v1527
      %v1529 = vpop.f32.mrb[0].mxu0
      %v1530 = vpop.f32.mrb[0].mxu0
      %v1531 = vadd.f32 %v1194, %v1530
      %v1532 = vpop.f32.mrb[0].mxu0
      %1533 = vmatprep.mubr.bf16.mxu0 0
      %1534 = vmatmul.mubr.bf16.gmra.mrb[0].mxu0 %v1291
      %v1535 = vpop.f32.mrb[0].mxu0
      %v1536 = vadd.f32 %v1194, %v1535
      %v1537 = vpop.f32.mrb[0].mxu0
      %v1538 = vpop.f32.mrb[0].mxu0
      %v1539 = vadd.f32 %v1194, %v1538
      %v1540 = vpop.f32.mrb[0].mxu0
      %1541 = vmatprep.mubr.bf16.mxu0 0
      %1542 = vmatmul.mubr.bf16.gmra.mrb[0].mxu0 %v1294
      %v1543 = vpop.f32.mrb[0].mxu0
      %v1544 = vadd.f32 %v1194, %v1543
      %v1545 = vpop.f32.mrb[0].mxu0
      %v1546 = vpop.f32.mrb[0].mxu0
      %v1547 = vadd.f32 %v1194, %v1546
      %v1548 = vpop.f32.mrb[0].mxu0
      %1549 = vmatprep.mubr.bf16.mxu0 0
      %1550 = vmatmul.mubr.bf16.gmra.mrb[0].mxu0 %v1297
      %v1551 = vpop.f32.mrb[0].mxu0
      %v1552 = vadd.f32 %v1194, %v1551
      %v1553 = vpop.f32.mrb[0].mxu0
      %v1554 = vpop.f32.mrb[0].mxu0
      %v1555 = vadd.f32 %v1194, %v1554
      %v1556 = vpop.f32.mrb[0].mxu0
      %1557 = vmatprep.mubr.bf16.mxu0 0
      %1558 = vmatmul.mubr.bf16.gmra.mrb[0].mxu0 %v1300
      %v1559 = vpop.f32.mrb[0].mxu0
      %v1560 = vadd.f32 %v1194, %v1559
      %v1561 = vpop.f32.mrb[0].mxu0
      %v1562 = vpop.f32.mrb[0].mxu0
      %v1563 = vadd.f32 %v1194, %v1562
      %v1564 = vpop.f32.mrb[0].mxu0
      %1565 = vmatprep.mubr.bf16.mxu0 0
      %1566 = vmatmul.mubr.bf16.gmra.mrb[0].mxu0 %v1303
      %v1567 = vpop.f32.mrb[0].mxu0
      %v1568 = vadd.f32 %v1194, %v1567
      %v1569 = vpop.f32.mrb[0].mxu0
      %v1570 = vpop.f32.mrb[0].mxu0
      %v1571 = vadd.f32 %v1194, %v1570
      %v1572 = vpop.f32.mrb[0].mxu0
      %1573 = vmatprep.mubr.bf16.mxu0 0
      %1574 = vmatmul.mubr.bf16.gmra.mrb[0].mxu0 %v1306
      %v1575 = vpop.f32.mrb[0].mxu0
      %v1576 = vadd.f32 %v1194, %v1575
      %v1577 = vpop.f32.mrb[0].mxu0
      %v1578 = vpop.f32.mrb[0].mxu0
      %v1579 = vadd.f32 %v1194, %v1578
      %v1580 = vpop.f32.mrb[0].mxu0
      %1581 = vmatprep.mubr.bf16.mxu0 0
      %1582 = vmatmul.mubr.bf16.gmra.mrb[0].mxu0 %v1309
      %v1583 = vpop.f32.mrb[0].mxu0
      %v1584 = vadd.f32 %v1194, %v1583
      %v1585 = vpop.f32.mrb[0].mxu0
      %v1586 = vpop.f32.mrb[0].mxu0
      %v1587 = vadd.f32 %v1194, %v1586
      %v1588 = vpop.f32.mrb[0].mxu0
      %1589 = vmatprep.mubr.bf16.mxu0 0
      %1590 = vmatmul.mubr.bf16.gmra.mrb[0].mxu0 %v1312
      %v1591 = vpop.f32.mrb[0].mxu0
      %v1592 = vadd.f32 %v1194, %v1591
      %v1593 = vpop.f32.mrb[0].mxu0
      %v1594 = vpop.f32.mrb[0].mxu0
      %v1595 = vadd.f32 %v1194, %v1594
      %v1596 = vpop.f32.mrb[0].mxu0
      %1597 = vmatprep.mubr.bf16.mxu0 0
      %1598 = vmatmul.mubr.bf16.gmra.mrb[0].mxu0 %v1315
      %v1599 = vpop.f32.mrb[0].mxu0
      %v1600 = vadd.f32 %v1194, %v1599
      %v1601 = vpop.f32.mrb[0].mxu0
      %v1602 = vpop.f32.mrb[0].mxu0
      %v1603 = vadd.f32 %v1194, %v1602
      %v1604 = vpop.f32.mrb[0].mxu0
      %1605 = vdwg.mxu0
      %v1606 = vpack.c.bf16 %v1355, %v1352
      %v1607 = vpack.c.bf16 %v1363, %v1360
      %v1608 = vpack.c.bf16 %v1371, %v1368
      %v1609 = vpack.c.bf16 %v1379, %v1376
      %v1610 = vpack.c.bf16 %v1387, %v1384
      %v1611 = vpack.c.bf16 %v1395, %v1392
      %v1612 = vpack.c.bf16 %v1403, %v1400
      %v1613 = vpack.c.bf16 %v1411, %v1408
      %v1614 = vpack.c.bf16 %v1419, %v1416
      %v1615 = vpack.c.bf16 %v1427, %v1424
      %v1616 = vpack.c.bf16 %v1435, %v1432
      %v1617 = vpack.c.bf16 %v1443, %v1440
      %v1618 = vpack.c.bf16 %v1451, %v1448
      %v1619 = vpack.c.bf16 %v1459, %v1456
      %v1620 = vpack.c.bf16 %v1467, %v1464
      %v1621 = vpack.c.bf16 %v1475, %v1472
      %v1622 = vpack.c.bf16 %v1483, %v1480
      %v1623 = vpack.c.bf16 %v1491, %v1488
      %v1624 = vpack.c.bf16 %v1499, %v1496
      %v1625 = vpack.c.bf16 %v1507, %v1504
      %v1626 = vpack.c.bf16 %v1515, %v1512
      %v1627 = vpack.c.bf16 %v1523, %v1520
      %v1628 = vpack.c.bf16 %v1531, %v1528
      %v1629 = vpack.c.bf16 %v1539, %v1536
      %v1630 = vpack.c.bf16 %v1547, %v1544
      %v1631 = vpack.c.bf16 %v1555, %v1552
      %v1632 = vpack.c.bf16 %v1563, %v1560
      %v1633 = vpack.c.bf16 %v1571, %v1568
      %v1634 = vpack.c.bf16 %v1579, %v1576
      %v1635 = vpack.c.bf16 %v1587, %v1584
      %v1636 = vpack.c.bf16 %v1595, %v1592
      %v1637 = vpack.c.bf16 %v1603, %v1600
      %v1670 = vunpack.c.l.b16 %v1606
      %v1671 = vunpack.c.h.b16 %v1606
      %v1672 = vunpack.c.l.b16 %v1607
      %v1673 = vunpack.c.h.b16 %v1607
      %v1674 = vunpack.c.l.b16 %v1608
      %v1675 = vunpack.c.h.b16 %v1608
      %v1676 = vunpack.c.l.b16 %v1609
      %v1677 = vunpack.c.h.b16 %v1609
      %v1678 = vunpack.c.l.b16 %v1610
      %v1679 = vunpack.c.h.b16 %v1610
      %v1680 = vunpack.c.l.b16 %v1611
      %v1681 = vunpack.c.h.b16 %v1611
      %v1682 = vunpack.c.l.b16 %v1612
      %v1683 = vunpack.c.h.b16 %v1612
      %v1684 = vunpack.c.l.b16 %v1613
      %v1685 = vunpack.c.h.b16 %v1613
      %v1686 = vunpack.c.l.b16 %v1614
      %v1687 = vunpack.c.h.b16 %v1614
      %v1688 = vunpack.c.l.b16 %v1615
      %v1689 = vunpack.c.h.b16 %v1615
      %v1690 = vunpack.c.l.b16 %v1616
      %v1691 = vunpack.c.h.b16 %v1616
      %v1692 = vunpack.c.l.b16 %v1617
      %v1693 = vunpack.c.h.b16 %v1617
      %v1694 = vunpack.c.l.b16 %v1618
      %v1695 = vunpack.c.h.b16 %v1618
      %v1696 = vunpack.c.l.b16 %v1619
      %v1697 = vunpack.c.h.b16 %v1619
      %v1698 = vunpack.c.l.b16 %v1620
      %v1699 = vunpack.c.h.b16 %v1620
      %v1700 = vunpack.c.l.b16 %v1621
      %v1701 = vunpack.c.h.b16 %v1621
      %v1702 = vunpack.c.l.b16 %v1622
      %v1703 = vunpack.c.h.b16 %v1622
      %v1704 = vunpack.c.l.b16 %v1623
      %v1705 = vunpack.c.h.b16 %v1623
      %v1706 = vunpack.c.l.b16 %v1624
      %v1707 = vunpack.c.h.b16 %v1624
      %v1708 = vunpack.c.l.b16 %v1625
      %v1709 = vunpack.c.h.b16 %v1625
      %v1710 = vunpack.c.l.b16 %v1626
      %v1711 = vunpack.c.h.b16 %v1626
      %v1712 = vunpack.c.l.b16 %v1627
      %v1713 = vunpack.c.h.b16 %v1627
      %v1714 = vunpack.c.l.b16 %v1628
      %v1715 = vunpack.c.h.b16 %v1628
      %v1716 = vunpack.c.l.b16 %v1629
      %v1717 = vunpack.c.h.b16 %v1629
      %v1718 = vunpack.c.l.b16 %v1630
      %v1719 = vunpack.c.h.b16 %v1630
      %v1720 = vunpack.c.l.b16 %v1631
      %v1721 = vunpack.c.h.b16 %v1631
      %v1722 = vunpack.c.l.b16 %v1632
      %v1723 = vunpack.c.h.b16 %v1632
      %v1724 = vunpack.c.l.b16 %v1633
      %v1725 = vunpack.c.h.b16 %v1633
      %v1726 = vunpack.c.l.b16 %v1634
      %v1727 = vunpack.c.h.b16 %v1634
      %v1728 = vunpack.c.l.b16 %v1635
      %v1729 = vunpack.c.h.b16 %v1635
      %v1730 = vunpack.c.l.b16 %v1636
      %v1731 = vunpack.c.h.b16 %v1636
      %v1732 = vunpack.c.l.b16 %v1637
      %v1733 = vunpack.c.h.b16 %v1637
      %v1734 = vpack.c.b16 %v1670, %v1670
      %v1735 = vpack.c.b16 %v1671, %v1671
      %v1736 = vpack.c.b16 %v1672, %v1672
      %v1737 = vpack.c.b16 %v1673, %v1673
      %v1738 = vpack.c.b16 %v1674, %v1674
      %v1739 = vpack.c.b16 %v1675, %v1675
      %v1740 = vpack.c.b16 %v1676, %v1676
      %v1741 = vpack.c.b16 %v1677, %v1677
      %v1742 = vpack.c.b16 %v1678, %v1678
      %v1743 = vpack.c.b16 %v1679, %v1679
      %v1744 = vpack.c.b16 %v1680, %v1680
      %v1745 = vpack.c.b16 %v1681, %v1681
      %v1746 = vpack.c.b16 %v1682, %v1682
      %v1747 = vpack.c.b16 %v1683, %v1683
      %v1748 = vpack.c.b16 %v1684, %v1684
      %v1749 = vpack.c.b16 %v1685, %v1685
      %v1750 = vpack.c.b16 %v1686, %v1686
      %v1751 = vpack.c.b16 %v1687, %v1687
      %v1752 = vpack.c.b16 %v1688, %v1688
      %v1753 = vpack.c.b16 %v1689, %v1689
      %v1754 = vpack.c.b16 %v1690, %v1690
      %v1755 = vpack.c.b16 %v1691, %v1691
      %v1756 = vpack.c.b16 %v1692, %v1692
      %v1757 = vpack.c.b16 %v1693, %v1693
      %v1758 = vpack.c.b16 %v1694, %v1694
      %v1759 = vpack.c.b16 %v1695, %v1695
      %v1760 = vpack.c.b16 %v1696, %v1696
      %v1761 = vpack.c.b16 %v1697, %v1697
      %v1762 = vpack.c.b16 %v1698, %v1698
      %v1763 = vpack.c.b16 %v1699, %v1699
      %v1764 = vpack.c.b16 %v1700, %v1700
      %v1765 = vpack.c.b16 %v1701, %v1701
      %v1766 = vpack.c.b16 %v1702, %v1702
      %v1767 = vpack.c.b16 %v1703, %v1703
      %v1768 = vpack.c.b16 %v1704, %v1704
      %v1769 = vpack.c.b16 %v1705, %v1705
      %v1770 = vpack.c.b16 %v1706, %v1706
      %v1771 = vpack.c.b16 %v1707, %v1707
      %v1772 = vpack.c.b16 %v1708, %v1708
      %v1773 = vpack.c.b16 %v1709, %v1709
      %v1774 = vpack.c.b16 %v1710, %v1710
      %v1775 = vpack.c.b16 %v1711, %v1711
      %v1776 = vpack.c.b16 %v1712, %v1712
      %v1777 = vpack.c.b16 %v1713, %v1713
      %v1778 = vpack.c.b16 %v1714, %v1714
      %v1779 = vpack.c.b16 %v1715, %v1715
      %v1780 = vpack.c.b16 %v1716, %v1716
      %v1781 = vpack.c.b16 %v1717, %v1717
      %v1782 = vpack.c.b16 %v1718, %v1718
      %v1783 = vpack.c.b16 %v1719, %v1719
      %v1784 = vpack.c.b16 %v1720, %v1720
      %v1785 = vpack.c.b16 %v1721, %v1721
      %v1786 = vpack.c.b16 %v1722, %v1722
      %v1787 = vpack.c.b16 %v1723, %v1723
      %v1788 = vpack.c.b16 %v1724, %v1724
      %v1789 = vpack.c.b16 %v1725, %v1725
      %v1790 = vpack.c.b16 %v1726, %v1726
      %v1791 = vpack.c.b16 %v1727, %v1727
      %v1792 = vpack.c.b16 %v1728, %v1728
      %v1793 = vpack.c.b16 %v1729, %v1729
      %v1794 = vpack.c.b16 %v1730, %v1730
      %v1795 = vpack.c.b16 %v1731, %v1731
      %v1796 = vpack.c.b16 %v1732, %v1732
      %v1797 = vpack.c.b16 %v1733, %v1733
      %1862 = vst [vmem:[%s314] sm:$0xf] %v1734
      %1863 = vst [vmem:[%s314 + $0x4] sm:$0xf] %v1735
      %1864 = vst [vmem:[%s314 + $0x8] sm:$0xf] %v1736
      %1865 = vst [vmem:[%s314 + $0xc] sm:$0xf] %v1737
      %1866 = vst [vmem:[%s314 + $0x10] sm:$0xf] %v1738
      %1867 = vst [vmem:[%s314 + $0x14] sm:$0xf] %v1739
      %1868 = vst [vmem:[%s314 + $0x18] sm:$0xf] %v1740
      %1869 = vst [vmem:[%s314 + $0x1c] sm:$0xf] %v1741
      %1870 = vst [vmem:[%s314 + $0x20] sm:$0xf] %v1742
      %1871 = vst [vmem:[%s314 + $0x24] sm:$0xf] %v1743
      %1872 = vst [vmem:[%s314 + $0x28] sm:$0xf] %v1744
      %1873 = vst [vmem:[%s314 + $0x2c] sm:$0xf] %v1745
      %1874 = vst [vmem:[%s314 + $0x30] sm:$0xf] %v1746
      %1875 = vst [vmem:[%s314 + $0x34] sm:$0xf] %v1747
      %1876 = vst [vmem:[%s314 + $0x38] sm:$0xf] %v1748
      %1877 = vst [vmem:[%s314 + $0x3c] sm:$0xf] %v1749
      %1878 = vst [vmem:[%s314 + $0x40] sm:$0xf] %v1750
      %1879 = vst [vmem:[%s314 + $0x44] sm:$0xf] %v1751
      %1880 = vst [vmem:[%s314 + $0x48] sm:$0xf] %v1752
      %1881 = vst [vmem:[%s314 + $0x4c] sm:$0xf] %v1753
      %1882 = vst [vmem:[%s314 + $0x50] sm:$0xf] %v1754
      %1883 = vst [vmem:[%s314 + $0x54] sm:$0xf] %v1755
      %1884 = vst [vmem:[%s314 + $0x58] sm:$0xf] %v1756
      %1885 = vst [vmem:[%s314 + $0x5c] sm:$0xf] %v1757
      %1886 = vst [vmem:[%s314 + $0x60] sm:$0xf] %v1758
      %1887 = vst [vmem:[%s314 + $0x64] sm:$0xf] %v1759
      %1888 = vst [vmem:[%s314 + $0x68] sm:$0xf] %v1760
      %1889 = vst [vmem:[%s314 + $0x6c] sm:$0xf] %v1761
      %1890 = vst [vmem:[%s314 + $0x70] sm:$0xf] %v1762
      %1891 = vst [vmem:[%s314 + $0x74] sm:$0xf] %v1763
      %1892 = vst [vmem:[%s314 + $0x78] sm:$0xf] %v1764
      %1893 = vst [vmem:[%s314 + $0x7c] sm:$0xf] %v1765
      %1894 = vst [vmem:[%s314 + $0x80] sm:$0xf] %v1766
      %1895 = vst [vmem:[%s314 + $0x84] sm:$0xf] %v1767
      %1896 = vst [vmem:[%s314 + $0x88] sm:$0xf] %v1768
      %1897 = vst [vmem:[%s314 + $0x8c] sm:$0xf] %v1769
      %1898 = vst [vmem:[%s314 + $0x90] sm:$0xf] %v1770
      %1899 = vst [vmem:[%s314 + $0x94] sm:$0xf] %v1771
      %1900 = vst [vmem:[%s314 + $0x98] sm:$0xf] %v1772
      %1901 = vst [vmem:[%s314 + $0x9c] sm:$0xf] %v1773
      %1902 = vst [vmem:[%s314 + $0xa0] sm:$0xf] %v1774
      %1903 = vst [vmem:[%s314 + $0xa4] sm:$0xf] %v1775
      %1904 = vst [vmem:[%s314 + $0xa8] sm:$0xf] %v1776
      %1905 = vst [vmem:[%s314 + $0xac] sm:$0xf] %v1777
      %1906 = vst [vmem:[%s314 + $0xb0] sm:$0xf] %v1778
      %1907 = vst [vmem:[%s314 + $0xb4] sm:$0xf] %v1779
      %1908 = vst [vmem:[%s314 + $0xb8] sm:$0xf] %v1780
      %1909 = vst [vmem:[%s314 + $0xbc] sm:$0xf] %v1781
      %1910 = vst [vmem:[%s314 + $0xc0] sm:$0xf] %v1782
      %1911 = vst [vmem:[%s314 + $0xc4] sm:$0xf] %v1783
      %1912 = vst [vmem:[%s314 + $0xc8] sm:$0xf] %v1784
      %1913 = vst [vmem:[%s314 + $0xcc] sm:$0xf] %v1785
      %1914 = vst [vmem:[%s314 + $0xd0] sm:$0xf] %v1786
      %1915 = vst [vmem:[%s314 + $0xd4] sm:$0xf] %v1787
      %1916 = vst [vmem:[%s314 + $0xd8] sm:$0xf] %v1788
      %1917 = vst [vmem:[%s314 + $0xdc] sm:$0xf] %v1789
      %1918 = vst [vmem:[%s314 + $0xe0] sm:$0xf] %v1790
      %1919 = vst [vmem:[%s314 + $0xe4] sm:$0xf] %v1791
      %1920 = vst [vmem:[%s314 + $0xe8] sm:$0xf] %v1792
      %1921 = vst [vmem:[%s314 + $0xec] sm:$0xf] %v1793
      %1922 = vst [vmem:[%s314 + $0xf0] sm:$0xf] %v1794
      %1923 = vst [vmem:[%s314 + $0xf4] sm:$0xf] %v1795
      %1924 = vst [vmem:[%s314 + $0xf8] sm:$0xf] %v1796
      %1925 = vst [vmem:[%s314 + $0xfc] sm:$0xf] %v1797
      %v1926 = vadd.f32 %v1352, %v1355
      %v1927 = vadd.f32 %v1926, %v1360
      %v1928 = vadd.f32 %v1927, %v1363
      %v1929 = vadd.f32 %v1928, %v1368
      %v1930 = vadd.f32 %v1929, %v1371
      %v1931 = vadd.f32 %v1930, %v1376
      %v1932 = vadd.f32 %v1931, %v1379
      %v1933 = vadd.f32 %v1932, %v1384
      %v1934 = vadd.f32 %v1933, %v1387
      %v1935 = vadd.f32 %v1934, %v1392
      %v1936 = vadd.f32 %v1935, %v1395
      %v1937 = vadd.f32 %v1936, %v1400
      %v1938 = vadd.f32 %v1937, %v1403
      %v1939 = vadd.f32 %v1938, %v1408
      %v1940 = vadd.f32 %v1939, %v1411
      %v1941 = vadd.f32 %v1940, %v1416
      %v1942 = vadd.f32 %v1941, %v1419
      %v1943 = vadd.f32 %v1942, %v1424
      %v1944 = vadd.f32 %v1943, %v1427
      %v1945 = vadd.f32 %v1944, %v1432
      %v1946 = vadd.f32 %v1945, %v1435
      %v1947 = vadd.f32 %v1946, %v1440
      %v1948 = vadd.f32 %v1947, %v1443
      %v1949 = vadd.f32 %v1948, %v1448
      %v1950 = vadd.f32 %v1949, %v1451
      %v1951 = vadd.f32 %v1950, %v1456
      %v1952 = vadd.f32 %v1951, %v1459
      %v1953 = vadd.f32 %v1952, %v1464
      %v1954 = vadd.f32 %v1953, %v1467
      %v1955 = vadd.f32 %v1954, %v1472
      %v1956 = vadd.f32 %v1955, %v1475
      %v1957 = vadd.f32 %v1956, %v1480
      %v1958 = vadd.f32 %v1957, %v1483
      %v1959 = vadd.f32 %v1958, %v1488
      %v1960 = vadd.f32 %v1959, %v1491
      %v1961 = vadd.f32 %v1960, %v1496
      %v1962 = vadd.f32 %v1961, %v1499
      %v1963 = vadd.f32 %v1962, %v1504
      %v1964 = vadd.f32 %v1963, %v1507
      %v1965 = vadd.f32 %v1964, %v1512
      %v1966 = vadd.f32 %v1965, %v1515
      %v1967 = vadd.f32 %v1966, %v1520
      %v1968 = vadd.f32 %v1967, %v1523
      %v1969 = vadd.f32 %v1968, %v1528
      %v1970 = vadd.f32 %v1969, %v1531
      %v1971 = vadd.f32 %v1970, %v1536
      %v1972 = vadd.f32 %v1971, %v1539
      %v1973 = vadd.f32 %v1972, %v1544
      %v1974 = vadd.f32 %v1973, %v1547
      %v1975 = vadd.f32 %v1974, %v1552
      %v1976 = vadd.f32 %v1975, %v1555
      %v1977 = vadd.f32 %v1976, %v1560
      %v1978 = vadd.f32 %v1977, %v1563
      %v1979 = vadd.f32 %v1978, %v1568
      %v1980 = vadd.f32 %v1979, %v1571
      %v1981 = vadd.f32 %v1980, %v1576
      %v1982 = vadd.f32 %v1981, %v1579
      %v1983 = vadd.f32 %v1982, %v1584
      %v1984 = vadd.f32 %v1983, %v1587
      %v1985 = vadd.f32 %v1984, %v1592
      %v1986 = vadd.f32 %v1985, %v1595
      %v1987 = vadd.f32 %v1986, %v1600
      %v1988 = vadd.f32 %v1987, %v1603
      %v1989 = vrot.slane %v1988, 4
      %v1990 = vadd.f32 %v1988, %v1989
      %v1991 = vrot.slane %v1990, 2
      %v1992 = vadd.f32 %v1990, %v1991
      %v1993 = vrot.slane %v1992, 1
      %v1994 = vadd.f32 %v1992, %v1993
      %v1995 = vmul.f32 %v1352, %v1352
      %v1996 = vmul.f32 %v1355, %v1355
      %v1997 = vmul.f32 %v1360, %v1360
      %v1998 = vmul.f32 %v1363, %v1363
      %v1999 = vmul.f32 %v1368, %v1368
      %v2000 = vmul.f32 %v1371, %v1371
      %v2001 = vmul.f32 %v1376, %v1376
      %v2002 = vmul.f32 %v1379, %v1379
      %v2003 = vmul.f32 %v1384, %v1384
      %v2004 = vmul.f32 %v1387, %v1387
      %v2005 = vmul.f32 %v1392, %v1392
      %v2006 = vmul.f32 %v1395, %v1395
      %v2007 = vmul.f32 %v1400, %v1400
      %v2008 = vmul.f32 %v1403, %v1403
      %v2009 = vmul.f32 %v1408, %v1408
      %v2010 = vmul.f32 %v1411, %v1411
      %v2011 = vmul.f32 %v1416, %v1416
      %v2012 = vmul.f32 %v1419, %v1419
      %v2013 = vmul.f32 %v1424, %v1424
      %v2014 = vmul.f32 %v1427, %v1427
      %v2015 = vmul.f32 %v1432, %v1432
      %v2016 = vmul.f32 %v1435, %v1435
      %v2017 = vmul.f32 %v1440, %v1440
      %v2018 = vmul.f32 %v1443, %v1443
      %v2019 = vmul.f32 %v1448, %v1448
      %v2020 = vmul.f32 %v1451, %v1451
      %v2021 = vmul.f32 %v1456, %v1456
      %v2022 = vmul.f32 %v1459, %v1459
      %v2023 = vmul.f32 %v1464, %v1464
      %v2024 = vmul.f32 %v1467, %v1467
      %v2025 = vmul.f32 %v1472, %v1472
      %v2026 = vmul.f32 %v1475, %v1475
      %v2027 = vmul.f32 %v1480, %v1480
      %v2028 = vmul.f32 %v1483, %v1483
      %v2029 = vmul.f32 %v1488, %v1488
      %v2030 = vmul.f32 %v1491, %v1491
      %v2031 = vmul.f32 %v1496, %v1496
      %v2032 = vmul.f32 %v1499, %v1499
      %v2033 = vmul.f32 %v1504, %v1504
      %v2034 = vmul.f32 %v1507, %v1507
      %v2035 = vmul.f32 %v1512, %v1512
      %v2036 = vmul.f32 %v1515, %v1515
      %v2037 = vmul.f32 %v1520, %v1520
      %v2038 = vmul.f32 %v1523, %v1523
      %v2039 = vmul.f32 %v1528, %v1528
      %v2040 = vmul.f32 %v1531, %v1531
      %v2041 = vmul.f32 %v1536, %v1536
      %v2042 = vmul.f32 %v1539, %v1539
      %v2043 = vmul.f32 %v1544, %v1544
      %v2044 = vmul.f32 %v1547, %v1547
      %v2045 = vmul.f32 %v1552, %v1552
      %v2046 = vmul.f32 %v1555, %v1555
      %v2047 = vmul.f32 %v1560, %v1560
      %v2048 = vmul.f32 %v1563, %v1563
      %v2049 = vmul.f32 %v1568, %v1568
      %v2050 = vmul.f32 %v1571, %v1571
      %v2051 = vmul.f32 %v1576, %v1576
      %v2052 = vmul.f32 %v1579, %v1579
      %v2053 = vmul.f32 %v1584, %v1584
      %v2054 = vmul.f32 %v1587, %v1587
      %v2055 = vmul.f32 %v1592, %v1592
      %v2056 = vmul.f32 %v1595, %v1595
      %v2057 = vmul.f32 %v1600, %v1600
      %v2058 = vmul.f32 %v1603, %v1603
      %v2059 = vadd.f32 %v1995, %v1996
      %v2060 = vadd.f32 %v2059, %v1997
      %v2061 = vadd.f32 %v2060, %v1998
      %v2062 = vadd.f32 %v2061, %v1999
      %v2063 = vadd.f32 %v2062, %v2000
      %v2064 = vadd.f32 %v2063, %v2001
      %v2065 = vadd.f32 %v2064, %v2002
      %v2066 = vadd.f32 %v2065, %v2003
      %v2067 = vadd.f32 %v2066, %v2004
      %v2068 = vadd.f32 %v2067, %v2005
      %v2069 = vadd.f32 %v2068, %v2006
      %v2070 = vadd.f32 %v2069, %v2007
      %v2071 = vadd.f32 %v2070, %v2008
      %v2072 = vadd.f32 %v2071, %v2009
      %v2073 = vadd.f32 %v2072, %v2010
      %v2074 = vadd.f32 %v2073, %v2011
      %v2075 = vadd.f32 %v2074, %v2012
      %v2076 = vadd.f32 %v2075, %v2013
      %v2077 = vadd.f32 %v2076, %v2014
      %v2078 = vadd.f32 %v2077, %v2015
      %v2079 = vadd.f32 %v2078, %v2016
      %v2080 = vadd.f32 %v2079, %v2017
      %v2081 = vadd.f32 %v2080, %v2018
      %v2082 = vadd.f32 %v2081, %v2019
      %v2083 = vadd.f32 %v2082, %v2020
      %v2084 = vadd.f32 %v2083, %v2021
      %v2085 = vadd.f32 %v2084, %v2022
      %v2086 = vadd.f32 %v2085, %v2023
      %v2087 = vadd.f32 %v2086, %v2024
      %v2088 = vadd.f32 %v2087, %v2025
      %v2089 = vadd.f32 %v2088, %v2026
      %v2090 = vadd.f32 %v2089, %v2027
      %v2091 = vadd.f32 %v2090, %v2028
      %v2092 = vadd.f32 %v2091, %v2029
      %v2093 = vadd.f32 %v2092, %v2030
      %v2094 = vadd.f32 %v2093, %v2031
      %v2095 = vadd.f32 %v2094, %v2032
      %v2096 = vadd.f32 %v2095, %v2033
      %v2097 = vadd.f32 %v2096, %v2034
      %v2098 = vadd.f32 %v2097, %v2035
      %v2099 = vadd.f32 %v2098, %v2036
      %v2100 = vadd.f32 %v2099, %v2037
      %v2101 = vadd.f32 %v2100, %v2038
      %v2102 = vadd.f32 %v2101, %v2039
      %v2103 = vadd.f32 %v2102, %v2040
      %v2104 = vadd.f32 %v2103, %v2041
      %v2105 = vadd.f32 %v2104, %v2042
      %v2106 = vadd.f32 %v2105, %v2043
      %v2107 = vadd.f32 %v2106, %v2044
      %v2108 = vadd.f32 %v2107, %v2045
      %v2109 = vadd.f32 %v2108, %v2046
      %v2110 = vadd.f32 %v2109, %v2047
      %v2111 = vadd.f32 %v2110, %v2048
      %v2112 = vadd.f32 %v2111, %v2049
      %v2113 = vadd.f32 %v2112, %v2050
      %v2114 = vadd.f32 %v2113, %v2051
      %v2115 = vadd.f32 %v2114, %v2052
      %v2116 = vadd.f32 %v2115, %v2053
      %v2117 = vadd.f32 %v2116, %v2054
      %v2118 = vadd.f32 %v2117, %v2055
      %v2119 = vadd.f32 %v2118, %v2056
      %v2120 = vadd.f32 %v2119, %v2057
      %v2121 = vadd.f32 %v2120, %v2058
      %v2122 = vrot.slane %v2121, 4
      %v2123 = vadd.f32 %v2121, %v2122
      %v2124 = vrot.slane %v2123, 2
      %v2125 = vadd.f32 %v2123, %v2124
      %v2126 = vrot.slane %v2125, 1
      %v2127 = vadd.f32 %v2125, %v2126
      %vm2128 = vcmask 1040384
      %v2129 = vsel %vm2128, %v1994, %v2127
      %2130 = vst [vmem:[%s319] sm:$0x3] %v2129
      %s2131 = smul.u32 64, %s20
      %p2132 = scmp.lt.s32.totalorder %s2131, 255
      %s2133 = scalar_select %p2132, %s2131, 255
      %s2134 = smul.addr %s2133, 4
      %s2135 = scalar_lea.vmem %s7, %s2134
      %p2136 = scmp.lt.s32.totalorder %s20, 3
      %s2137 = scalar_select %p2136, %s20, 3
      %s2138 = smul.addr %s2137, 2
      %s2139 = scalar_lea.vmem %s8, %s2138
      // Predicated region
      $region49: #{tnet_forward.5} parent=47 // pred_check
        %p2140 = pneg %p190
      $region50: #{tnet_forward.5} parent=47 // pred_check_branch
        %2142 = sbr.rel (%p2140) target = $region52
      $region51: #{tnet_forward.5} parent=47 // pred_region
        %s2143 = smul.u32 64, %s20
      $region52: #{tnet_forward.5} parent=47 // pred_fallthru
        _
      // Predicated region
      $region53: #{tnet_forward.5} parent=47 // pred_check
        %p2144 = pneg %p216
      $region54: #{tnet_forward.5} parent=47 // pred_check_branch
        %2146 = sbr.rel (%p2144) target = $region56
      $region55: #{tnet_forward.5} parent=47 // pred_region
        _
      $region56: #{tnet_forward.5} parent=47 // pred_fallthru
        _
    $region48: #{tnet_forward.5} parent=5 // pred_fallthru
      _
    %p2147 = scmp.le.s32.totalorder 2, %s15
    // Predicated region
    $region57: #{tnet_forward.5} parent=5 // pred_check
      %p2148 = pneg %p2147
    $region58: #{tnet_forward.5} parent=5 // pred_check_branch
      %2150 = sbr.rel (%p2148) target = $region60
    $region59: #{tnet_forward.5} parent=5 // pred_region
      %s2151 = ssub.s32 %s15, 2
      // Predicated region
      $region61: #{tnet_forward.5} parent=59 // pred_check
        %p2152 = pneg %p196
      $region62: #{tnet_forward.5} parent=59 // pred_check_branch
        %2154 = sbr.rel (%p2152) target = $region64
      $region63: #{tnet_forward.5} parent=59 // pred_region
        %s2155 = smul.u32 64, %s21
        %p2156 = scmp.lt.s32.totalorder %s2155, 255
        %s2157 = scalar_select %p2156, %s2155, 255
        %s2158 = smul.addr %s2157, 4
        %s2159 = scalar_lea.vmem %s7, %s2158
      $region64: #{tnet_forward.5} parent=59 // pred_fallthru
        _
      // Predicated region
      $region65: #{tnet_forward.5} parent=59 // pred_check
        %p2160 = pneg %p222
      $region66: #{tnet_forward.5} parent=59 // pred_check_branch
        %2162 = sbr.rel (%p2160) target = $region68
      $region67: #{tnet_forward.5} parent=59 // pred_region
        %p2163 = scmp.lt.s32.totalorder %s21, 3
        %s2164 = scalar_select %p2163, %s21, 3
        %s2165 = smul.addr %s2164, 2
        %s2166 = scalar_lea.vmem %s8, %s2165
      $region68: #{tnet_forward.5} parent=59 // pred_fallthru
        _
    $region60: #{tnet_forward.5} parent=5 // pred_fallthru
      _
  $region6: #{tnet_forward.5} parent=0 // loop_footer
    %s19 = sadd.s32 1, %s15
  $region7: #{tnet_forward.5} parent=0 // loop_footer_branch
    %14 = sbr.rel target = $region3
  $region8: #{tnet_forward.5} parent=0 // loop_exit
    _

// kernel: tnet_forward.6
$region0: #{tnet_forward.6}
  #allocation0 [shape = 'u32[]', space=smem, size = 0x4, offset = 0x4, fixed_abs, tag = 'smem constant byte address 0x4 - core index']
  #allocation1 [shape = 'u32[144,128]{1,0:T(1,128)}', space=vmem, size = 0x12000, scoped, tag = 'internal scratch']
  #allocation2 [shape = 'f32[1,1024]{1,0:T(1,128)}', space=vmem, size = 0x1000, scoped, tag = 'scratch operand']
  #allocation3 [shape = 'f32[1,1024]{1,0:T(1,128)}', space=vmem, size = 0x1000, scoped, tag = 'scratch operand']
  %s0 = inlined_call_operand.vmem [shape: bf16[2048,128], index: 0, kind: input, shape index: {}]
  %s1 = inlined_call_operand.vmem [shape: f32[1,128], index: 1, kind: input, shape index: {}]
  %s2 = inlined_call_operand.vmem [shape: f32[1,128], index: 2, kind: input, shape index: {}]
  %s3 = inlined_call_operand.vmem [shape: bf16[128,1024], index: 3, kind: input, shape index: {}]
  %s4 = inlined_call_operand.vmem [shape: f32[1,1024], index: 4, kind: input, shape index: {}]
  %s5 = inlined_call_operand.vmem [shape: f32[4,2,1024], index: 5, kind: output, shape index: {0}]
  %s6 = inlined_call_operand.vmem [shape: f32[4,2,1024], index: 6, kind: output, shape index: {1}]
  %7 = xla_tuple %s5, %s6
  %s8 = sld [smem:[#allocation0]]
  $region73: #{tnet_forward.6} parent=0
    _
  %s10 = ssub.s32 1, %s8
  %s11 = scalar_select 0, %s10, %s8
  loop: start=0, step=1, limit=6
  $region2: #{tnet_forward.6} parent=0 // loop_pre_header
    _
  $region3: #{tnet_forward.6} parent=0 // loop_header
    %s13 = sphi 0, %s17
    %p14 = scmp.ge.s32.totalorder %s13, 6
    %s20 = sphi 0, %s32
    %s21 = sphi 0, %s28
    %s22 = sphi 0, %s20
    %s23 = sphi 0, %s21
    %s24 = sphi 0, %s22
    %s25 = sphi 0, %s23
    %s37 = sphi 0, %s39
    %s40 = sphi 0, %s37
    %s41 = sphi 0, %s40
    %s57 = sphi 0, %s41
    %s61 = sphi 0, %s61
    %s63 = sphi 0, %s61
    %s64 = sphi 0, %s63
    %s78 = sphi 0, %s64
    %s82 = sphi 0, %s82
    %s84 = sphi 0, %s82
    %s85 = sphi 0, %s84
    %s99 = sphi 0, %s85
    %s103 = sphi 0, %s103
    %s105 = sphi 0, %s103
    %s106 = sphi 0, %s105
    %s120 = sphi 0, %s106
    %s124 = sphi 0, %s124
    %s126 = sphi 0, %s124
    %s127 = sphi 0, %s126
    %s141 = sphi 0, %s127
    %s149 = sphi 0, %s151
    %s152 = sphi 0, %s149
    %s153 = sphi 0, %s152
    %s169 = sphi 0, %s153
    %s175 = sphi 0, %s177
    %s178 = sphi 0, %s175
    %s179 = sphi 0, %s178
    %s195 = sphi 0, %s179
  $region4: #{tnet_forward.6} parent=0 // loop_header_branch
    %16 = sbr.rel (%p14) target = $region8
  $region5: #{tnet_forward.6} parent=0 // loop_body
    %s18 = ssub.s32 %s13, 1
    %s19 = ssub.s32 %s13, 2
    %s26 = sadd.s32 1, %s21
    %p27 = scmp.ge.s32.totalorder %s26, 1
    %s28 = scalar_select %p27, 0, %s26
    %s29 = sadd.s32 1, %s20
    %s30 = scalar_select %p27, %s29, %s20
    %p31 = scmp.ge.s32.totalorder %s30, 4
    %s32 = scalar_select %p31, 0, %s30
    %s33 = sadd.s32 %s20, %s21
    %s34 = sadd.s32 %s32, %s28
    %s35 = ssub.s32 %s33, %s34
    %p36 = scmp.eq.s32.totalorder %s35, 0
    %s38 = sadd.s32 %s37, 1
    %s39 = scalar_select %p36, %s37, %s38
    %p42 = pneg %p36
    %p43 = scmp.eq.s32.totalorder %s13, 3
    %p44 = por %p42, %p43
    %p45 = scmp.ne.s32.totalorder %s37, %s40
    %p46 = scmp.eq.s32.totalorder %s13, 0
    %p47 = por %p45, %p46
    %p48 = scmp.ne.s32.totalorder %s37, %s40
    %p49 = scmp.eq.s32.totalorder %s18, 3
    %p50 = por %p48, %p49
    %p51 = scmp.ne.s32.totalorder %s40, %s41
    %p52 = scmp.eq.s32.totalorder %s18, 0
    %p53 = por %p51, %p52
    %p54 = scmp.ne.s32.totalorder %s40, %s41
    %p55 = scmp.eq.s32.totalorder %s19, 3
    %p56 = por %p54, %p55
    %p58 = scmp.ne.s32.totalorder %s41, %s57
    %p59 = scmp.eq.s32.totalorder %s19, 0
    %p60 = por %p58, %p59
    %s62 = sadd.s32 %s61, 1
    %p65 = scmp.eq.s32.totalorder %s13, 3
    %p66 = scmp.ne.s32.totalorder %s61, %s63
    %p67 = scmp.eq.s32.totalorder %s13, 0
    %p68 = por %p66, %p67
    %p69 = scmp.ne.s32.totalorder %s61, %s63
    %p70 = scmp.eq.s32.totalorder %s18, 3
    %p71 = por %p69, %p70
    %p72 = scmp.ne.s32.totalorder %s63, %s64
    %p73 = scmp.eq.s32.totalorder %s18, 0
    %p74 = por %p72, %p73
    %p75 = scmp.ne.s32.totalorder %s63, %s64
    %p76 = scmp.eq.s32.totalorder %s19, 3
    %p77 = por %p75, %p76
    %p79 = scmp.ne.s32.totalorder %s64, %s78
    %p80 = scmp.eq.s32.totalorder %s19, 0
    %p81 = por %p79, %p80
    %s83 = sadd.s32 %s82, 1
    %p86 = scmp.eq.s32.totalorder %s13, 3
    %p87 = scmp.ne.s32.totalorder %s82, %s84
    %p88 = scmp.eq.s32.totalorder %s13, 0
    %p89 = por %p87, %p88
    %p90 = scmp.ne.s32.totalorder %s82, %s84
    %p91 = scmp.eq.s32.totalorder %s18, 3
    %p92 = por %p90, %p91
    %p93 = scmp.ne.s32.totalorder %s84, %s85
    %p94 = scmp.eq.s32.totalorder %s18, 0
    %p95 = por %p93, %p94
    %p96 = scmp.ne.s32.totalorder %s84, %s85
    %p97 = scmp.eq.s32.totalorder %s19, 3
    %p98 = por %p96, %p97
    %p100 = scmp.ne.s32.totalorder %s85, %s99
    %p101 = scmp.eq.s32.totalorder %s19, 0
    %p102 = por %p100, %p101
    %s104 = sadd.s32 %s103, 1
    %p107 = scmp.eq.s32.totalorder %s13, 3
    %p108 = scmp.ne.s32.totalorder %s103, %s105
    %p109 = scmp.eq.s32.totalorder %s13, 0
    %p110 = por %p108, %p109
    %p111 = scmp.ne.s32.totalorder %s103, %s105
    %p112 = scmp.eq.s32.totalorder %s18, 3
    %p113 = por %p111, %p112
    %p114 = scmp.ne.s32.totalorder %s105, %s106
    %p115 = scmp.eq.s32.totalorder %s18, 0
    %p116 = por %p114, %p115
    %p117 = scmp.ne.s32.totalorder %s105, %s106
    %p118 = scmp.eq.s32.totalorder %s19, 3
    %p119 = por %p117, %p118
    %p121 = scmp.ne.s32.totalorder %s106, %s120
    %p122 = scmp.eq.s32.totalorder %s19, 0
    %p123 = por %p121, %p122
    %s125 = sadd.s32 %s124, 1
    %p128 = scmp.eq.s32.totalorder %s13, 3
    %p129 = scmp.ne.s32.totalorder %s124, %s126
    %p130 = scmp.eq.s32.totalorder %s13, 0
    %p131 = por %p129, %p130
    %p132 = scmp.ne.s32.totalorder %s124, %s126
    %p133 = scmp.eq.s32.totalorder %s18, 3
    %p134 = por %p132, %p133
    %p135 = scmp.ne.s32.totalorder %s126, %s127
    %p136 = scmp.eq.s32.totalorder %s18, 0
    %p137 = por %p135, %p136
    %p138 = scmp.ne.s32.totalorder %s126, %s127
    %p139 = scmp.eq.s32.totalorder %s19, 3
    %p140 = por %p138, %p139
    %p142 = scmp.ne.s32.totalorder %s127, %s141
    %p143 = scmp.eq.s32.totalorder %s19, 0
    %p144 = por %p142, %p143
    %s145 = sadd.s32 %s20, %s21
    %s146 = sadd.s32 %s32, %s28
    %s147 = ssub.s32 %s145, %s146
    %p148 = scmp.eq.s32.totalorder %s147, 0
    %s150 = sadd.s32 %s149, 1
    %s151 = scalar_select %p148, %s149, %s150
    %p154 = pneg %p148
    %p155 = scmp.eq.s32.totalorder %s13, 3
    %p156 = por %p154, %p155
    %p157 = scmp.ne.s32.totalorder %s149, %s152
    %p158 = scmp.eq.s32.totalorder %s13, 0
    %p159 = por %p157, %p158
    %p160 = scmp.ne.s32.totalorder %s149, %s152
    %p161 = scmp.eq.s32.totalorder %s18, 3
    %p162 = por %p160, %p161
    %p163 = scmp.ne.s32.totalorder %s152, %s153
    %p164 = scmp.eq.s32.totalorder %s18, 0
    %p165 = por %p163, %p164
    %p166 = scmp.ne.s32.totalorder %s152, %s153
    %p167 = scmp.eq.s32.totalorder %s19, 3
    %p168 = por %p166, %p167
    %p170 = scmp.ne.s32.totalorder %s153, %s169
    %p171 = scmp.eq.s32.totalorder %s19, 0
    %p172 = por %p170, %p171
    %s173 = ssub.s32 %s20, %s32
    %p174 = scmp.eq.s32.totalorder %s173, 0
    %s176 = sadd.s32 %s175, 1
    %s177 = scalar_select %p174, %s175, %s176
    %p180 = pneg %p174
    %p181 = scmp.eq.s32.totalorder %s13, 3
    %p182 = por %p180, %p181
    %p183 = scmp.ne.s32.totalorder %s175, %s178
    %p184 = scmp.eq.s32.totalorder %s13, 0
    %p185 = por %p183, %p184
    %p186 = scmp.ne.s32.totalorder %s175, %s178
    %p187 = scmp.eq.s32.totalorder %s18, 3
    %p188 = por %p186, %p187
    %p189 = scmp.ne.s32.totalorder %s178, %s179
    %p190 = scmp.eq.s32.totalorder %s18, 0
    %p191 = por %p189, %p190
    %p192 = scmp.ne.s32.totalorder %s178, %s179
    %p193 = scmp.eq.s32.totalorder %s19, 3
    %p194 = por %p192, %p193
    %p196 = scmp.ne.s32.totalorder %s179, %s195
    %p197 = scmp.eq.s32.totalorder %s19, 0
    %p198 = por %p196, %p197
    %p199 = scmp.le.s32.totalorder 1, %s13
    %p200 = scmp.lt.s32.totalorder %s13, 5
    %p201 = pnand %p199, %p200
    %p202 = pneg %p201
    // Predicated region
    $region9: #{tnet_forward.6} parent=5 // pred_check
      _
    $region10: #{tnet_forward.6} parent=5 // pred_check_branch
      %204 = sbr.rel (%p201) target = $region12
    $region11: #{tnet_forward.6} parent=5 // pred_region
      %s205 = ssub.s32 %s13, 1
      // Predicated region
      $region13: #{tnet_forward.6} parent=11 // pred_check
        %p206 = pneg %p74
      $region14: #{tnet_forward.6} parent=11 // pred_check_branch
        %208 = sbr.rel (%p206) target = $region16
      $region15: #{tnet_forward.6} parent=11 // pred_region
        _
      $region16: #{tnet_forward.6} parent=11 // pred_fallthru
        _
      // Predicated region
      $region17: #{tnet_forward.6} parent=11 // pred_check
        %p209 = pneg %p95
      $region18: #{tnet_forward.6} parent=11 // pred_check_branch
        %211 = sbr.rel (%p209) target = $region20
      $region19: #{tnet_forward.6} parent=11 // pred_region
        _
      $region20: #{tnet_forward.6} parent=11 // pred_fallthru
        _
      // Predicated region
      $region21: #{tnet_forward.6} parent=11 // pred_check
        %p212 = pneg %p116
      $region22: #{tnet_forward.6} parent=11 // pred_check_branch
        %214 = sbr.rel (%p212) target = $region24
      $region23: #{tnet_forward.6} parent=11 // pred_region
        _
      $region24: #{tnet_forward.6} parent=11 // pred_fallthru
        _
      // Predicated region
      $region25: #{tnet_forward.6} parent=11 // pred_check
        %p215 = pneg %p137
      $region26: #{tnet_forward.6} parent=11 // pred_check_branch
        %217 = sbr.rel (%p215) target = $region28
      $region27: #{tnet_forward.6} parent=11 // pred_region
        _
      $region28: #{tnet_forward.6} parent=11 // pred_fallthru
        _
    $region12: #{tnet_forward.6} parent=5 // pred_fallthru
      _
    %p218 = scmp.lt.s32.totalorder %s13, 4
    // Predicated region
    $region29: #{tnet_forward.6} parent=5 // pred_check
      %p219 = pneg %p218
    $region30: #{tnet_forward.6} parent=5 // pred_check_branch
      %221 = sbr.rel (%p219) target = $region32
    $region31: #{tnet_forward.6} parent=5 // pred_region
      // Predicated region
      $region33: #{tnet_forward.6} parent=31 // pred_check
        %p222 = pneg %p47
      $region34: #{tnet_forward.6} parent=31 // pred_check_branch
        %224 = sbr.rel (%p222) target = $region36
      $region35: #{tnet_forward.6} parent=31 // pred_region
        %s225 = sadd.s32 %s20, %s21
        %s226 = smul.u32 64, %s225
        %p227 = scmp.lt.s32.totalorder %s226, 255
        %s228 = scalar_select %p227, %s226, 255
        %s229 = smul.addr %s228, 4
        %s230 = scalar_lea.vmem %s0, %s229
        %s231 = sadd.s32 %s20, %s21
        %s232 = smul.u32 64, %s231
      $region36: #{tnet_forward.6} parent=31 // pred_fallthru
        _
    $region32: #{tnet_forward.6} parent=5 // pred_fallthru
      _
    %p233 = scmp.le.s32.totalorder 1, %s13
    %p234 = scmp.lt.s32.totalorder %s13, 5
    %p235 = pnand %p233, %p234
    %p236 = pneg %p235
    // Predicated region
    $region37: #{tnet_forward.6} parent=5 // pred_check
      _
    $region38: #{tnet_forward.6} parent=5 // pred_check_branch
      %238 = sbr.rel (%p235) target = $region40
    $region39: #{tnet_forward.6} parent=5 // pred_region
      %s239 = ssub.s32 %s13, 1
      %s240 = sadd.s32 %s22, %s23
      %s241 = smul.u32 64, %s240
      %p242 = scmp.lt.s32.totalorder %s241, 255
      %s243 = scalar_select %p242, %s241, 255
      %s244 = smul.addr %s243, 4
      %s245 = scalar_lea.vmem %s0, %s244
      %p246 = pneg %p53
      %p247 = pneg %p50
      %p248 = pneg %p74
      %p249 = pneg %p71
      %p250 = pneg %p95
      %p251 = pneg %p92
      %p252 = pneg %p116
      %p253 = pneg %p113
      %p254 = pneg %p137
      %p255 = pneg %p134
      %p256 = pneg %p165
      %p257 = pneg %p162
      %s258 = sadd.s32 %s22, %s23
      %p259 = scmp.lt.s32.totalorder %s258, 3
      %s260 = scalar_select %p259, %s258, 3
      %s261 = smul.addr %s260, 8
      %s262 = smul.addr %s261, 2
      %s263 = scalar_lea.vmem %s5, %s262
      %p264 = pneg %p191
      %p265 = pneg %p188
      %p266 = scmp.lt.s32.totalorder %s22, 3
      %s267 = scalar_select %p266, %s22, 3
      %s268 = smul.addr %s267, 8
      %s269 = smul.addr %s268, 2
      %s270 = scalar_lea.vmem %s6, %s269
      %s271 = sadd.s32 %s22, %s23
      %s272 = smul.u32 64, %s271
      %p273 = scmp.lt.s32.totalorder %s272, 255
      %s274 = scalar_select %p273, %s272, 255
      %s275 = smul.addr %s274, 4
      %s276 = scalar_lea.vmem %s0, %s275
      %s277 = sadd.s32 %s22, %s23
      %s278 = smul.u32 64, %s277
      %s279 = sadd.s32 %s22, %s23
      %p280 = scmp.lt.s32.totalorder %s279, 3
      %s281 = scalar_select %p280, %s279, 3
      %s282 = smul.addr %s281, 8
      %s283 = smul.addr %s282, 2
      %s284 = scalar_lea.vmem %s5, %s283
      %s285 = sadd.s32 %s22, %s23
      %p286 = scmp.lt.s32.totalorder %s22, 3
      %s287 = scalar_select %p286, %s22, 3
      %s288 = smul.addr %s287, 8
      %s289 = smul.addr %s288, 2
      %s290 = scalar_lea.vmem %s6, %s289
      %v292 = vld [vmem:[%s276] sm:$0xf]
      %v293 = vld [vmem:[%s276 + $0x4] sm:$0xf]
      %v294 = vld [vmem:[%s276 + $0x8] sm:$0xf]
      %v295 = vld [vmem:[%s276 + $0xc] sm:$0xf]
      %v296 = vld [vmem:[%s276 + $0x10] sm:$0xf]
      %v297 = vld [vmem:[%s276 + $0x14] sm:$0xf]
      %v298 = vld [vmem:[%s276 + $0x18] sm:$0xf]
      %v299 = vld [vmem:[%s276 + $0x1c] sm:$0xf]
      %v300 = vld [vmem:[%s276 + $0x20] sm:$0xf]
      %v301 = vld [vmem:[%s276 + $0x24] sm:$0xf]
      %v302 = vld [vmem:[%s276 + $0x28] sm:$0xf]
      %v303 = vld [vmem:[%s276 + $0x2c] sm:$0xf]
      %v304 = vld [vmem:[%s276 + $0x30] sm:$0xf]
      %v305 = vld [vmem:[%s276 + $0x34] sm:$0xf]
      %v306 = vld [vmem:[%s276 + $0x38] sm:$0xf]
      %v307 = vld [vmem:[%s276 + $0x3c] sm:$0xf]
      %v308 = vld [vmem:[%s276 + $0x40] sm:$0xf]
      %v309 = vld [vmem:[%s276 + $0x44] sm:$0xf]
      %v310 = vld [vmem:[%s276 + $0x48] sm:$0xf]
      %v311 = vld [vmem:[%s276 + $0x4c] sm:$0xf]
      %v312 = vld [vmem:[%s276 + $0x50] sm:$0xf]
      %v313 = vld [vmem:[%s276 + $0x54] sm:$0xf]
      %v314 = vld [vmem:[%s276 + $0x58] sm:$0xf]
      %v315 = vld [vmem:[%s276 + $0x5c] sm:$0xf]
      %v316 = vld [vmem:[%s276 + $0x60] sm:$0xf]
      %v317 = vld [vmem:[%s276 + $0x64] sm:$0xf]
      %v318 = vld [vmem:[%s276 + $0x68] sm:$0xf]
      %v319 = vld [vmem:[%s276 + $0x6c] sm:$0xf]
      %v320 = vld [vmem:[%s276 + $0x70] sm:$0xf]
      %v321 = vld [vmem:[%s276 + $0x74] sm:$0xf]
      %v322 = vld [vmem:[%s276 + $0x78] sm:$0xf]
      %v323 = vld [vmem:[%s276 + $0x7c] sm:$0xf]
      %v324 = vld [vmem:[%s276 + $0x80] sm:$0xf]
      %v325 = vld [vmem:[%s276 + $0x84] sm:$0xf]
      %v326 = vld [vmem:[%s276 + $0x88] sm:$0xf]
      %v327 = vld [vmem:[%s276 + $0x8c] sm:$0xf]
      %v328 = vld [vmem:[%s276 + $0x90] sm:$0xf]
      %v329 = vld [vmem:[%s276 + $0x94] sm:$0xf]
      %v330 = vld [vmem:[%s276 + $0x98] sm:$0xf]
      %v331 = vld [vmem:[%s276 + $0x9c] sm:$0xf]
      %v332 = vld [vmem:[%s276 + $0xa0] sm:$0xf]
      %v333 = vld [vmem:[%s276 + $0xa4] sm:$0xf]
      %v334 = vld [vmem:[%s276 + $0xa8] sm:$0xf]
      %v335 = vld [vmem:[%s276 + $0xac] sm:$0xf]
      %v336 = vld [vmem:[%s276 + $0xb0] sm:$0xf]
      %v337 = vld [vmem:[%s276 + $0xb4] sm:$0xf]
      %v338 = vld [vmem:[%s276 + $0xb8] sm:$0xf]
      %v339 = vld [vmem:[%s276 + $0xbc] sm:$0xf]
      %v340 = vld [vmem:[%s276 + $0xc0] sm:$0xf]
      %v341 = vld [vmem:[%s276 + $0xc4] sm:$0xf]
      %v342 = vld [vmem:[%s276 + $0xc8] sm:$0xf]
      %v343 = vld [vmem:[%s276 + $0xcc] sm:$0xf]
      %v344 = vld [vmem:[%s276 + $0xd0] sm:$0xf]
      %v345 = vld [vmem:[%s276 + $0xd4] sm:$0xf]
      %v346 = vld [vmem:[%s276 + $0xd8] sm:$0xf]
      %v347 = vld [vmem:[%s276 + $0xdc] sm:$0xf]
      %v348 = vld [vmem:[%s276 + $0xe0] sm:$0xf]
      %v349 = vld [vmem:[%s276 + $0xe4] sm:$0xf]
      %v350 = vld [vmem:[%s276 + $0xe8] sm:$0xf]
      %v351 = vld [vmem:[%s276 + $0xec] sm:$0xf]
      %v352 = vld [vmem:[%s276 + $0xf0] sm:$0xf]
      %v353 = vld [vmem:[%s276 + $0xf4] sm:$0xf]
      %v354 = vld [vmem:[%s276 + $0xf8] sm:$0xf]
      %v355 = vld [vmem:[%s276 + $0xfc] sm:$0xf]
      %v356 = vunpack.c.l.bf16 %v292
      %v357 = vunpack.c.l.bf16 %v293
      %v358 = vunpack.c.l.bf16 %v294
      %v359 = vunpack.c.l.bf16 %v295
      %v360 = vunpack.c.l.bf16 %v296
      %v361 = vunpack.c.l.bf16 %v297
      %v362 = vunpack.c.l.bf16 %v298
      %v363 = vunpack.c.l.bf16 %v299
      %v364 = vunpack.c.l.bf16 %v300
      %v365 = vunpack.c.l.bf16 %v301
      %v366 = vunpack.c.l.bf16 %v302
      %v367 = vunpack.c.l.bf16 %v303
      %v368 = vunpack.c.l.bf16 %v304
      %v369 = vunpack.c.l.bf16 %v305
      %v370 = vunpack.c.l.bf16 %v306
      %v371 = vunpack.c.l.bf16 %v307
      %v372 = vunpack.c.l.bf16 %v308
      %v373 = vunpack.c.l.bf16 %v309
      %v374 = vunpack.c.l.bf16 %v310
      %v375 = vunpack.c.l.bf16 %v311
      %v376 = vunpack.c.l.bf16 %v312
      %v377 = vunpack.c.l.bf16 %v313
      %v378 = vunpack.c.l.bf16 %v314
      %v379 = vunpack.c.l.bf16 %v315
      %v380 = vunpack.c.l.bf16 %v316
      %v381 = vunpack.c.l.bf16 %v317
      %v382 = vunpack.c.l.bf16 %v318
      %v383 = vunpack.c.l.bf16 %v319
      %v384 = vunpack.c.l.bf16 %v320
      %v385 = vunpack.c.l.bf16 %v321
      %v386 = vunpack.c.l.bf16 %v322
      %v387 = vunpack.c.l.bf16 %v323
      %v388 = vunpack.c.l.bf16 %v324
      %v389 = vunpack.c.l.bf16 %v325
      %v390 = vunpack.c.l.bf16 %v326
      %v391 = vunpack.c.l.bf16 %v327
      %v392 = vunpack.c.l.bf16 %v328
      %v393 = vunpack.c.l.bf16 %v329
      %v394 = vunpack.c.l.bf16 %v330
      %v395 = vunpack.c.l.bf16 %v331
      %v396 = vunpack.c.l.bf16 %v332
      %v397 = vunpack.c.l.bf16 %v333
      %v398 = vunpack.c.l.bf16 %v334
      %v399 = vunpack.c.l.bf16 %v335
      %v400 = vunpack.c.l.bf16 %v336
      %v401 = vunpack.c.l.bf16 %v337
      %v402 = vunpack.c.l.bf16 %v338
      %v403 = vunpack.c.l.bf16 %v339
      %v404 = vunpack.c.l.bf16 %v340
      %v405 = vunpack.c.l.bf16 %v341
      %v406 = vunpack.c.l.bf16 %v342
      %v407 = vunpack.c.l.bf16 %v343
      %v408 = vunpack.c.l.bf16 %v344
      %v409 = vunpack.c.l.bf16 %v345
      %v410 = vunpack.c.l.bf16 %v346
      %v411 = vunpack.c.l.bf16 %v347
      %v412 = vunpack.c.l.bf16 %v348
      %v413 = vunpack.c.l.bf16 %v349
      %v414 = vunpack.c.l.bf16 %v350
      %v415 = vunpack.c.l.bf16 %v351
      %v416 = vunpack.c.l.bf16 %v352
      %v417 = vunpack.c.l.bf16 %v353
      %v418 = vunpack.c.l.bf16 %v354
      %v419 = vunpack.c.l.bf16 %v355
      %v420 = vld [vmem:[%s1] sm:$0x1]
      %v422 = vlaneseq
      %v423 = vshrl.u32 %v422, 7
      %v424 = vsub.s32 0, %v423
      %v425 = vrot.slane %v420, %v424
      %v427 = vmul.f32 %v356, %v425
      %v428 = vmul.f32 %v357, %v425
      %v429 = vmul.f32 %v358, %v425
      %v430 = vmul.f32 %v359, %v425
      %v431 = vmul.f32 %v360, %v425
      %v432 = vmul.f32 %v361, %v425
      %v433 = vmul.f32 %v362, %v425
      %v434 = vmul.f32 %v363, %v425
      %v435 = vmul.f32 %v364, %v425
      %v436 = vmul.f32 %v365, %v425
      %v437 = vmul.f32 %v366, %v425
      %v438 = vmul.f32 %v367, %v425
      %v439 = vmul.f32 %v368, %v425
      %v440 = vmul.f32 %v369, %v425
      %v441 = vmul.f32 %v370, %v425
      %v442 = vmul.f32 %v371, %v425
      %v443 = vmul.f32 %v372, %v425
      %v444 = vmul.f32 %v373, %v425
      %v445 = vmul.f32 %v374, %v425
      %v446 = vmul.f32 %v375, %v425
      %v447 = vmul.f32 %v376, %v425
      %v448 = vmul.f32 %v377, %v425
      %v449 = vmul.f32 %v378, %v425
      %v450 = vmul.f32 %v379, %v425
      %v451 = vmul.f32 %v380, %v425
      %v452 = vmul.f32 %v381, %v425
      %v453 = vmul.f32 %v382, %v425
      %v454 = vmul.f32 %v383, %v425
      %v455 = vmul.f32 %v384, %v425
      %v456 = vmul.f32 %v385, %v425
      %v457 = vmul.f32 %v386, %v425
      %v458 = vmul.f32 %v387, %v425
      %v459 = vmul.f32 %v388, %v425
      %v460 = vmul.f32 %v389, %v425
      %v461 = vmul.f32 %v390, %v425
      %v462 = vmul.f32 %v391, %v425
      %v463 = vmul.f32 %v392, %v425
      %v464 = vmul.f32 %v393, %v425
      %v465 = vmul.f32 %v394, %v425
      %v466 = vmul.f32 %v395, %v425
      %v467 = vmul.f32 %v396, %v425
      %v468 = vmul.f32 %v397, %v425
      %v469 = vmul.f32 %v398, %v425
      %v470 = vmul.f32 %v399, %v425
      %v471 = vmul.f32 %v400, %v425
      %v472 = vmul.f32 %v401, %v425
      %v473 = vmul.f32 %v402, %v425
      %v474 = vmul.f32 %v403, %v425
      %v475 = vmul.f32 %v404, %v425
      %v476 = vmul.f32 %v405, %v425
      %v477 = vmul.f32 %v406, %v425
      %v478 = vmul.f32 %v407, %v425
      %v479 = vmul.f32 %v408, %v425
      %v480 = vmul.f32 %v409, %v425
      %v481 = vmul.f32 %v410, %v425
      %v482 = vmul.f32 %v411, %v425
      %v483 = vmul.f32 %v412, %v425
      %v484 = vmul.f32 %v413, %v425
      %v485 = vmul.f32 %v414, %v425
      %v486 = vmul.f32 %v415, %v425
      %v487 = vmul.f32 %v416, %v425
      %v488 = vmul.f32 %v417, %v425
      %v489 = vmul.f32 %v418, %v425
      %v490 = vmul.f32 %v419, %v425
      %v491 = vld [vmem:[%s2] sm:$0x1]
      %v493 = vlaneseq
      %v494 = vshrl.u32 %v493, 7
      %v495 = vsub.s32 0, %v494
      %v496 = vrot.slane %v491, %v495
      %v498 = vadd.f32 %v427, %v496
      %v499 = vadd.f32 %v428, %v496
      %v500 = vadd.f32 %v429, %v496
      %v501 = vadd.f32 %v430, %v496
      %v502 = vadd.f32 %v431, %v496
      %v503 = vadd.f32 %v432, %v496
      %v504 = vadd.f32 %v433, %v496
      %v505 = vadd.f32 %v434, %v496
      %v506 = vadd.f32 %v435, %v496
      %v507 = vadd.f32 %v436, %v496
      %v508 = vadd.f32 %v437, %v496
      %v509 = vadd.f32 %v438, %v496
      %v510 = vadd.f32 %v439, %v496
      %v511 = vadd.f32 %v440, %v496
      %v512 = vadd.f32 %v441, %v496
      %v513 = vadd.f32 %v442, %v496
      %v514 = vadd.f32 %v443, %v496
      %v515 = vadd.f32 %v444, %v496
      %v516 = vadd.f32 %v445, %v496
      %v517 = vadd.f32 %v446, %v496
      %v518 = vadd.f32 %v447, %v496
      %v519 = vadd.f32 %v448, %v496
      %v520 = vadd.f32 %v449, %v496
      %v521 = vadd.f32 %v450, %v496
      %v522 = vadd.f32 %v451, %v496
      %v523 = vadd.f32 %v452, %v496
      %v524 = vadd.f32 %v453, %v496
      %v525 = vadd.f32 %v454, %v496
      %v526 = vadd.f32 %v455, %v496
      %v527 = vadd.f32 %v456, %v496
      %v528 = vadd.f32 %v457, %v496
      %v529 = vadd.f32 %v458, %v496
      %v530 = vadd.f32 %v459, %v496
      %v531 = vadd.f32 %v460, %v496
      %v532 = vadd.f32 %v461, %v496
      %v533 = vadd.f32 %v462, %v496
      %v534 = vadd.f32 %v463, %v496
      %v535 = vadd.f32 %v464, %v496
      %v536 = vadd.f32 %v465, %v496
      %v537 = vadd.f32 %v466, %v496
      %v538 = vadd.f32 %v467, %v496
      %v539 = vadd.f32 %v468, %v496
      %v540 = vadd.f32 %v469, %v496
      %v541 = vadd.f32 %v470, %v496
      %v542 = vadd.f32 %v471, %v496
      %v543 = vadd.f32 %v472, %v496
      %v544 = vadd.f32 %v473, %v496
      %v545 = vadd.f32 %v474, %v496
      %v546 = vadd.f32 %v475, %v496
      %v547 = vadd.f32 %v476, %v496
      %v548 = vadd.f32 %v477, %v496
      %v549 = vadd.f32 %v478, %v496
      %v550 = vadd.f32 %v479, %v496
      %v551 = vadd.f32 %v480, %v496
      %v552 = vadd.f32 %v481, %v496
      %v553 = vadd.f32 %v482, %v496
      %v554 = vadd.f32 %v483, %v496
      %v555 = vadd.f32 %v484, %v496
      %v556 = vadd.f32 %v485, %v496
      %v557 = vadd.f32 %v486, %v496
      %v558 = vadd.f32 %v487, %v496
      %v559 = vadd.f32 %v488, %v496
      %v560 = vadd.f32 %v489, %v496
      %v561 = vadd.f32 %v490, %v496
      %v562 = vmax.f32 %v498, 0.0
      %v563 = vmax.f32 %v499, 0.0
      %v564 = vmax.f32 %v500, 0.0
      %v565 = vmax.f32 %v501, 0.0
      %v566 = vmax.f32 %v502, 0.0
      %v567 = vmax.f32 %v503, 0.0
      %v568 = vmax.f32 %v504, 0.0
      %v569 = vmax.f32 %v505, 0.0
      %v570 = vmax.f32 %v506, 0.0
      %v571 = vmax.f32 %v507, 0.0
      %v572 = vmax.f32 %v508, 0.0
      %v573 = vmax.f32 %v509, 0.0
      %v574 = vmax.f32 %v510, 0.0
      %v575 = vmax.f32 %v511, 0.0
      %v576 = vmax.f32 %v512, 0.0
      %v577 = vmax.f32 %v513, 0.0
      %v578 = vmax.f32 %v514, 0.0
      %v579 = vmax.f32 %v515, 0.0
      %v580 = vmax.f32 %v516, 0.0
      %v581 = vmax.f32 %v517, 0.0
      %v582 = vmax.f32 %v518, 0.0
      %v583 = vmax.f32 %v519, 0.0
      %v584 = vmax.f32 %v520, 0.0
      %v585 = vmax.f32 %v521, 0.0
      %v586 = vmax.f32 %v522, 0.0
      %v587 = vmax.f32 %v523, 0.0
      %v588 = vmax.f32 %v524, 0.0
      %v589 = vmax.f32 %v525, 0.0
      %v590 = vmax.f32 %v526, 0.0
      %v591 = vmax.f32 %v527, 0.0
      %v592 = vmax.f32 %v528, 0.0
      %v593 = vmax.f32 %v529, 0.0
      %v594 = vmax.f32 %v530, 0.0
      %v595 = vmax.f32 %v531, 0.0
      %v596 = vmax.f32 %v532, 0.0
      %v597 = vmax.f32 %v533, 0.0
      %v598 = vmax.f32 %v534, 0.0
      %v599 = vmax.f32 %v535, 0.0
      %v600 = vmax.f32 %v536, 0.0
      %v601 = vmax.f32 %v537, 0.0
      %v602 = vmax.f32 %v538, 0.0
      %v603 = vmax.f32 %v539, 0.0
      %v604 = vmax.f32 %v540, 0.0
      %v605 = vmax.f32 %v541, 0.0
      %v606 = vmax.f32 %v542, 0.0
      %v607 = vmax.f32 %v543, 0.0
      %v608 = vmax.f32 %v544, 0.0
      %v609 = vmax.f32 %v545, 0.0
      %v610 = vmax.f32 %v546, 0.0
      %v611 = vmax.f32 %v547, 0.0
      %v612 = vmax.f32 %v548, 0.0
      %v613 = vmax.f32 %v549, 0.0
      %v614 = vmax.f32 %v550, 0.0
      %v615 = vmax.f32 %v551, 0.0
      %v616 = vmax.f32 %v552, 0.0
      %v617 = vmax.f32 %v553, 0.0
      %v618 = vmax.f32 %v554, 0.0
      %v619 = vmax.f32 %v555, 0.0
      %v620 = vmax.f32 %v556, 0.0
      %v621 = vmax.f32 %v557, 0.0
      %v622 = vmax.f32 %v558, 0.0
      %v623 = vmax.f32 %v559, 0.0
      %v624 = vmax.f32 %v560, 0.0
      %v625 = vmax.f32 %v561, 0.0
      %v626 = vpack.c.bf16 %v563, %v562
      %v627 = vpack.c.bf16 %v565, %v564
      %v628 = vpack.c.bf16 %v567, %v566
      %v629 = vpack.c.bf16 %v569, %v568
      %v630 = vpack.c.bf16 %v571, %v570
      %v631 = vpack.c.bf16 %v573, %v572
      %v632 = vpack.c.bf16 %v575, %v574
      %v633 = vpack.c.bf16 %v577, %v576
      %v634 = vpack.c.bf16 %v579, %v578
      %v635 = vpack.c.bf16 %v581, %v580
      %v636 = vpack.c.bf16 %v583, %v582
      %v637 = vpack.c.bf16 %v585, %v584
      %v638 = vpack.c.bf16 %v587, %v586
      %v639 = vpack.c.bf16 %v589, %v588
      %v640 = vpack.c.bf16 %v591, %v590
      %v641 = vpack.c.bf16 %v593, %v592
      %v642 = vpack.c.bf16 %v595, %v594
      %v643 = vpack.c.bf16 %v597, %v596
      %v644 = vpack.c.bf16 %v599, %v598
      %v645 = vpack.c.bf16 %v601, %v600
      %v646 = vpack.c.bf16 %v603, %v602
      %v647 = vpack.c.bf16 %v605, %v604
      %v648 = vpack.c.bf16 %v607, %v606
      %v649 = vpack.c.bf16 %v609, %v608
      %v650 = vpack.c.bf16 %v611, %v610
      %v651 = vpack.c.bf16 %v613, %v612
      %v652 = vpack.c.bf16 %v615, %v614
      %v653 = vpack.c.bf16 %v617, %v616
      %v654 = vpack.c.bf16 %v619, %v618
      %v655 = vpack.c.bf16 %v621, %v620
      %v656 = vpack.c.bf16 %v623, %v622
      %v657 = vpack.c.bf16 %v625, %v624
      %v658 = vld [vmem:[%s3] sm:$0xff]
      %v659 = vld [vmem:[%s3 + $0x8] sm:$0xff]
      %v660 = vld [vmem:[%s3 + $0x10] sm:$0xff]
      %v661 = vld [vmem:[%s3 + $0x18] sm:$0xff]
      %v662 = vld [vmem:[%s3 + $0x20] sm:$0xff]
      %v663 = vld [vmem:[%s3 + $0x28] sm:$0xff]
      %v664 = vld [vmem:[%s3 + $0x30] sm:$0xff]
      %v665 = vld [vmem:[%s3 + $0x38] sm:$0xff]
      %v666 = vld [vmem:[%s3 + $0x40] sm:$0xff]
      %v667 = vld [vmem:[%s3 + $0x48] sm:$0xff]
      %v668 = vld [vmem:[%s3 + $0x50] sm:$0xff]
      %v669 = vld [vmem:[%s3 + $0x58] sm:$0xff]
      %v670 = vld [vmem:[%s3 + $0x60] sm:$0xff]
      %v671 = vld [vmem:[%s3 + $0x68] sm:$0xff]
      %v672 = vld [vmem:[%s3 + $0x70] sm:$0xff]
      %v673 = vld [vmem:[%s3 + $0x78] sm:$0xff]
      %v674 = vld [vmem:[%s3 + $0x80] sm:$0xff]
      %v675 = vld [vmem:[%s3 + $0x88] sm:$0xff]
      %v676 = vld [vmem:[%s3 + $0x90] sm:$0xff]
      %v677 = vld [vmem:[%s3 + $0x98] sm:$0xff]
      %v678 = vld [vmem:[%s3 + $0xa0] sm:$0xff]
      %v679 = vld [vmem:[%s3 + $0xa8] sm:$0xff]
      %v680 = vld [vmem:[%s3 + $0xb0] sm:$0xff]
      %v681 = vld [vmem:[%s3 + $0xb8] sm:$0xff]
      %v682 = vld [vmem:[%s3 + $0xc0] sm:$0xff]
      %v683 = vld [vmem:[%s3 + $0xc8] sm:$0xff]
      %v684 = vld [vmem:[%s3 + $0xd0] sm:$0xff]
      %v685 = vld [vmem:[%s3 + $0xd8] sm:$0xff]
      %v686 = vld [vmem:[%s3 + $0xe0] sm:$0xff]
      %v687 = vld [vmem:[%s3 + $0xe8] sm:$0xff]
      %v688 = vld [vmem:[%s3 + $0xf0] sm:$0xff]
      %v689 = vld [vmem:[%s3 + $0xf8] sm:$0xff]
      %v690 = vld [vmem:[%s3 + $0x100] sm:$0xff]
      %v691 = vld [vmem:[%s3 + $0x108] sm:$0xff]
      %v692 = vld [vmem:[%s3 + $0x110] sm:$0xff]
      %v693 = vld [vmem:[%s3 + $0x118] sm:$0xff]
      %v694 = vld [vmem:[%s3 + $0x120] sm:$0xff]
      %v695 = vld [vmem:[%s3 + $0x128] sm:$0xff]
      %v696 = vld [vmem:[%s3 + $0x130] sm:$0xff]
      %v697 = vld [vmem:[%s3 + $0x138] sm:$0xff]
      %v698 = vld [vmem:[%s3 + $0x140] sm:$0xff]
      %v699 = vld [vmem:[%s3 + $0x148] sm:$0xff]
      %v700 = vld [vmem:[%s3 + $0x150] sm:$0xff]
      %v701 = vld [vmem:[%s3 + $0x158] sm:$0xff]
      %v702 = vld [vmem:[%s3 + $0x160] sm:$0xff]
      %v703 = vld [vmem:[%s3 + $0x168] sm:$0xff]
      %v704 = vld [vmem:[%s3 + $0x170] sm:$0xff]
      %v705 = vld [vmem:[%s3 + $0x178] sm:$0xff]
      %v706 = vld [vmem:[%s3 + $0x180] sm:$0xff]
      %v707 = vld [vmem:[%s3 + $0x188] sm:$0xff]
      %v708 = vld [vmem:[%s3 + $0x190] sm:$0xff]
      %v709 = vld [vmem:[%s3 + $0x198] sm:$0xff]
      %v710 = vld [vmem:[%s3 + $0x1a0] sm:$0xff]
      %v711 = vld [vmem:[%s3 + $0x1a8] sm:$0xff]
      %v712 = vld [vmem:[%s3 + $0x1b0] sm:$0xff]
      %v713 = vld [vmem:[%s3 + $0x1b8] sm:$0xff]
      %v714 = vld [vmem:[%s3 + $0x1c0] sm:$0xff]
      %v715 = vld [vmem:[%s3 + $0x1c8] sm:$0xff]
      %v716 = vld [vmem:[%s3 + $0x1d0] sm:$0xff]
      %v717 = vld [vmem:[%s3 + $0x1d8] sm:$0xff]
      %v718 = vld [vmem:[%s3 + $0x1e0] sm:$0xff]
      %v719 = vld [vmem:[%s3 + $0x1e8] sm:$0xff]
      %v720 = vld [vmem:[%s3 + $0x1f0] sm:$0xff]
      %v721 = vld [vmem:[%s3 + $0x1f8] sm:$0xff]
      %v722 = vld [vmem:[%s4] sm:$0xff]
      %v724 = vlaneseq
      %v725 = vshrl.u32 %v724, 7
      %v726 = vsub.s32 0, %v725
      %v727 = vrot.slane %v722, %v726
      %v728 = vlaneseq
      %v729 = vshrl.u32 %v728, 7
      %v730 = vsub.s32 1, %v729
      %v731 = vrot.slane %v722, %v730
      %v732 = vlaneseq
      %v733 = vshrl.u32 %v732, 7
      %v734 = vsub.s32 2, %v733
      %v735 = vrot.slane %v722, %v734
      %v736 = vlaneseq
      %v737 = vshrl.u32 %v736, 7
      %v738 = vsub.s32 3, %v737
      %v739 = vrot.slane %v722, %v738
      %v740 = vlaneseq
      %v741 = vshrl.u32 %v740, 7
      %v742 = vsub.s32 4, %v741
      %v743 = vrot.slane %v722, %v742
      %v744 = vlaneseq
      %v745 = vshrl.u32 %v744, 7
      %v746 = vsub.s32 5, %v745
      %v747 = vrot.slane %v722, %v746
      %v748 = vlaneseq
      %v749 = vshrl.u32 %v748, 7
      %v750 = vsub.s32 6, %v749
      %v751 = vrot.slane %v722, %v750
      %v752 = vlaneseq
      %v753 = vshrl.u32 %v752, 7
      %v754 = vsub.s32 7, %v753
      %v755 = vrot.slane %v722, %v754
      %v828 = vunpack.c.l.b16 %v658
      %v829 = vunpack.c.h.b16 %v658
      %v830 = vunpack.c.l.b16 %v659
      %v831 = vunpack.c.h.b16 %v659
      %v832 = vunpack.c.l.b16 %v660
      %v833 = vunpack.c.h.b16 %v660
      %v834 = vunpack.c.l.b16 %v661
      %v835 = vunpack.c.h.b16 %v661
      %v836 = vunpack.c.l.b16 %v662
      %v837 = vunpack.c.h.b16 %v662
      %v838 = vunpack.c.l.b16 %v663
      %v839 = vunpack.c.h.b16 %v663
      %v840 = vunpack.c.l.b16 %v664
      %v841 = vunpack.c.h.b16 %v664
      %v842 = vunpack.c.l.b16 %v665
      %v843 = vunpack.c.h.b16 %v665
      %v844 = vunpack.c.l.b16 %v666
      %v845 = vunpack.c.h.b16 %v666
      %v846 = vunpack.c.l.b16 %v667
      %v847 = vunpack.c.h.b16 %v667
      %v848 = vunpack.c.l.b16 %v668
      %v849 = vunpack.c.h.b16 %v668
      %v850 = vunpack.c.l.b16 %v669
      %v851 = vunpack.c.h.b16 %v669
      %v852 = vunpack.c.l.b16 %v670
      %v853 = vunpack.c.h.b16 %v670
      %v854 = vunpack.c.l.b16 %v671
      %v855 = vunpack.c.h.b16 %v671
      %v856 = vunpack.c.l.b16 %v672
      %v857 = vunpack.c.h.b16 %v672
      %v858 = vunpack.c.l.b16 %v673
      %v859 = vunpack.c.h.b16 %v673
      %v860 = vunpack.c.l.b16 %v674
      %v861 = vunpack.c.h.b16 %v674
      %v862 = vunpack.c.l.b16 %v675
      %v863 = vunpack.c.h.b16 %v675
      %v864 = vunpack.c.l.b16 %v676
      %v865 = vunpack.c.h.b16 %v676
      %v866 = vunpack.c.l.b16 %v677
      %v867 = vunpack.c.h.b16 %v677
      %v868 = vunpack.c.l.b16 %v678
      %v869 = vunpack.c.h.b16 %v678
      %v870 = vunpack.c.l.b16 %v679
      %v871 = vunpack.c.h.b16 %v679
      %v872 = vunpack.c.l.b16 %v680
      %v873 = vunpack.c.h.b16 %v680
      %v874 = vunpack.c.l.b16 %v681
      %v875 = vunpack.c.h.b16 %v681
      %v876 = vunpack.c.l.b16 %v682
      %v877 = vunpack.c.h.b16 %v682
      %v878 = vunpack.c.l.b16 %v683
      %v879 = vunpack.c.h.b16 %v683
      %v880 = vunpack.c.l.b16 %v684
      %v881 = vunpack.c.h.b16 %v684
      %v882 = vunpack.c.l.b16 %v685
      %v883 = vunpack.c.h.b16 %v685
      %v884 = vunpack.c.l.b16 %v686
      %v885 = vunpack.c.h.b16 %v686
      %v886 = vunpack.c.l.b16 %v687
      %v887 = vunpack.c.h.b16 %v687
      %v888 = vunpack.c.l.b16 %v688
      %v889 = vunpack.c.h.b16 %v688
      %v890 = vunpack.c.l.b16 %v689
      %v891 = vunpack.c.h.b16 %v689
      %v892 = vunpack.c.l.b16 %v690
      %v893 = vunpack.c.h.b16 %v690
      %v894 = vunpack.c.l.b16 %v691
      %v895 = vunpack.c.h.b16 %v691
      %v896 = vunpack.c.l.b16 %v692
      %v897 = vunpack.c.h.b16 %v692
      %v898 = vunpack.c.l.b16 %v693
      %v899 = vunpack.c.h.b16 %v693
      %v900 = vunpack.c.l.b16 %v694
      %v901 = vunpack.c.h.b16 %v694
      %v902 = vunpack.c.l.b16 %v695
      %v903 = vunpack.c.h.b16 %v695
      %v904 = vunpack.c.l.b16 %v696
      %v905 = vunpack.c.h.b16 %v696
      %v906 = vunpack.c.l.b16 %v697
      %v907 = vunpack.c.h.b16 %v697
      %v908 = vunpack.c.l.b16 %v698
      %v909 = vunpack.c.h.b16 %v698
      %v910 = vunpack.c.l.b16 %v699
      %v911 = vunpack.c.h.b16 %v699
      %v912 = vunpack.c.l.b16 %v700
      %v913 = vunpack.c.h.b16 %v700
      %v914 = vunpack.c.l.b16 %v701
      %v915 = vunpack.c.h.b16 %v701
      %v916 = vunpack.c.l.b16 %v702
      %v917 = vunpack.c.h.b16 %v702
      %v918 = vunpack.c.l.b16 %v703
      %v919 = vunpack.c.h.b16 %v703
      %v920 = vunpack.c.l.b16 %v704
      %v921 = vunpack.c.h.b16 %v704
      %v922 = vunpack.c.l.b16 %v705
      %v923 = vunpack.c.h.b16 %v705
      %v924 = vunpack.c.l.b16 %v706
      %v925 = vunpack.c.h.b16 %v706
      %v926 = vunpack.c.l.b16 %v707
      %v927 = vunpack.c.h.b16 %v707
      %v928 = vunpack.c.l.b16 %v708
      %v929 = vunpack.c.h.b16 %v708
      %v930 = vunpack.c.l.b16 %v709
      %v931 = vunpack.c.h.b16 %v709
      %v932 = vunpack.c.l.b16 %v710
      %v933 = vunpack.c.h.b16 %v710
      %v934 = vunpack.c.l.b16 %v711
      %v935 = vunpack.c.h.b16 %v711
      %v936 = vunpack.c.l.b16 %v712
      %v937 = vunpack.c.h.b16 %v712
      %v938 = vunpack.c.l.b16 %v713
      %v939 = vunpack.c.h.b16 %v713
      %v940 = vunpack.c.l.b16 %v714
      %v941 = vunpack.c.h.b16 %v714
      %v942 = vunpack.c.l.b16 %v715
      %v943 = vunpack.c.h.b16 %v715
      %v944 = vunpack.c.l.b16 %v716
      %v945 = vunpack.c.h.b16 %v716
      %v946 = vunpack.c.l.b16 %v717
      %v947 = vunpack.c.h.b16 %v717
      %v948 = vunpack.c.l.b16 %v718
      %v949 = vunpack.c.h.b16 %v718
      %v950 = vunpack.c.l.b16 %v719
      %v951 = vunpack.c.h.b16 %v719
      %v952 = vunpack.c.l.b16 %v720
      %v953 = vunpack.c.h.b16 %v720
      %v954 = vunpack.c.l.b16 %v721
      %v955 = vunpack.c.h.b16 %v721
      %v956 = vpack.c.b16 %v836, %v828
      %v957 = vpack.c.b16 %v837, %v829
      %v958 = vpack.c.b16 %v838, %v830
      %v959 = vpack.c.b16 %v839, %v831
      %v960 = vpack.c.b16 %v840, %v832
      %v961 = vpack.c.b16 %v841, %v833
      %v962 = vpack.c.b16 %v842, %v834
      %v963 = vpack.c.b16 %v843, %v835
      %v964 = vpack.c.b16 %v852, %v844
      %v965 = vpack.c.b16 %v853, %v845
      %v966 = vpack.c.b16 %v854, %v846
      %v967 = vpack.c.b16 %v855, %v847
      %v968 = vpack.c.b16 %v856, %v848
      %v969 = vpack.c.b16 %v857, %v849
      %v970 = vpack.c.b16 %v858, %v850
      %v971 = vpack.c.b16 %v859, %v851
      %v972 = vpack.c.b16 %v868, %v860
      %v973 = vpack.c.b16 %v869, %v861
      %v974 = vpack.c.b16 %v870, %v862
      %v975 = vpack.c.b16 %v871, %v863
      %v976 = vpack.c.b16 %v872, %v864
      %v977 = vpack.c.b16 %v873, %v865
      %v978 = vpack.c.b16 %v874, %v866
      %v979 = vpack.c.b16 %v875, %v867
      %v980 = vpack.c.b16 %v884, %v876
      %v981 = vpack.c.b16 %v885, %v877
      %v982 = vpack.c.b16 %v886, %v878
      %v983 = vpack.c.b16 %v887, %v879
      %v984 = vpack.c.b16 %v888, %v880
      %v985 = vpack.c.b16 %v889, %v881
      %v986 = vpack.c.b16 %v890, %v882
      %v987 = vpack.c.b16 %v891, %v883
      %v988 = vpack.c.b16 %v900, %v892
      %v989 = vpack.c.b16 %v901, %v893
      %v990 = vpack.c.b16 %v902, %v894
      %v991 = vpack.c.b16 %v903, %v895
      %v992 = vpack.c.b16 %v904, %v896
      %v993 = vpack.c.b16 %v905, %v897
      %v994 = vpack.c.b16 %v906, %v898
      %v995 = vpack.c.b16 %v907, %v899
      %v996 = vpack.c.b16 %v916, %v908
      %v997 = vpack.c.b16 %v917, %v909
      %v998 = vpack.c.b16 %v918, %v910
      %v999 = vpack.c.b16 %v919, %v911
      %v1000 = vpack.c.b16 %v920, %v912
      %v1001 = vpack.c.b16 %v921, %v913
      %v1002 = vpack.c.b16 %v922, %v914
      %v1003 = vpack.c.b16 %v923, %v915
      %v1004 = vpack.c.b16 %v932, %v924
      %v1005 = vpack.c.b16 %v933, %v925
      %v1006 = vpack.c.b16 %v934, %v926
      %v1007 = vpack.c.b16 %v935, %v927
      %v1008 = vpack.c.b16 %v936, %v928
      %v1009 = vpack.c.b16 %v937, %v929
      %v1010 = vpack.c.b16 %v938, %v930
      %v1011 = vpack.c.b16 %v939, %v931
      %v1012 = vpack.c.b16 %v948, %v940
      %v1013 = vpack.c.b16 %v949, %v941
      %v1014 = vpack.c.b16 %v950, %v942
      %v1015 = vpack.c.b16 %v951, %v943
      %v1016 = vpack.c.b16 %v952, %v944
      %v1017 = vpack.c.b16 %v953, %v945
      %v1018 = vpack.c.b16 %v954, %v946
      %v1019 = vpack.c.b16 %v955, %v947
      %1084 = vmatprep.subr.bf16.mxu0 %v957
      %1085 = vmatpush1.bf16.msra.mxu0 %v956
      %1086 = vmatprep.subr.bf16.mxu0 %v965
      %1087 = vmatpush1.bf16.msra.mxu0 %v964
      %1088 = vmatprep.subr.bf16.mxu0 %v973
      %1089 = vmatpush1.bf16.msra.mxu0 %v972
      %1090 = vmatprep.subr.bf16.mxu0 %v981
      %1091 = vmatpush1.bf16.msra.mxu0 %v980
      %1092 = vmatprep.subr.bf16.mxu0 %v989
      %1093 = vmatpush1.bf16.msra.mxu0 %v988
      %1094 = vmatprep.subr.bf16.mxu0 %v997
      %1095 = vmatpush1.bf16.msra.mxu0 %v996
      %1096 = vmatprep.subr.bf16.mxu0 %v1005
      %1097 = vmatpush1.bf16.msra.mxu0 %v1004
      %1098 = vmatprep.subr.bf16.mxu0 %v1013
      %1099 = vmatpush1.bf16.msra.mxu0 %v1012
      %1100 = vmatprep.subr.bf16.mxu0 0
      %1101 = vmatpush1.bf16.msra.mxu0 0
      %1102 = vmatprep.subr.bf16.mxu0 0
      %1103 = vmatpush1.bf16.msra.mxu0 0
      %1104 = vmatprep.subr.bf16.mxu0 0
      %1105 = vmatpush1.bf16.msra.mxu0 0
      %1106 = vmatprep.subr.bf16.mxu0 0
      %1107 = vmatpush1.bf16.msra.mxu0 0
      %1108 = vmatprep.subr.bf16.mxu0 0
      %1109 = vmatpush1.bf16.msra.mxu0 0
      %1110 = vmatprep.subr.bf16.mxu0 0
      %1111 = vmatpush1.bf16.msra.mxu0 0
      %1112 = vmatprep.subr.bf16.mxu0 0
      %1113 = vmatpush1.bf16.msra.mxu0 0
      %1114 = vmatprep.subr.bf16.mxu0 0
      %1115 = vmatpush1.bf16.msra.mxu0 0
      %1116 = vmatprep.mubr.bf16.mxu0 0
      %1117 = vmatmul.mubr.bf16.gmra.mrb[0].mxu0 %v626
      %v1118 = vpop.f32.mrb[0].mxu0
      %v1119 = vadd.f32 %v727, %v1118
      %v1120 = vpop.f32.mrb[0].mxu0
      %v1121 = vadd.f32 %v731, %v1120
      %v1122 = vpop.f32.mrb[0].mxu0
      %v1123 = vadd.f32 %v727, %v1122
      %v1124 = vpop.f32.mrb[0].mxu0
      %v1125 = vadd.f32 %v731, %v1124
      %1126 = vmatprep.mubr.bf16.mxu0 0
      %1127 = vmatmul.mubr.bf16.gmra.mrb[0].mxu0 %v627
      %v1128 = vpop.f32.mrb[0].mxu0
      %v1129 = vadd.f32 %v727, %v1128
      %v1130 = vpop.f32.mrb[0].mxu0
      %v1131 = vadd.f32 %v731, %v1130
      %v1132 = vpop.f32.mrb[0].mxu0
      %v1133 = vadd.f32 %v727, %v1132
      %v1134 = vpop.f32.mrb[0].mxu0
      %v1135 = vadd.f32 %v731, %v1134
      %1136 = vmatprep.mubr.bf16.mxu0 0
      %1137 = vmatmul.mubr.bf16.gmra.mrb[0].mxu0 %v628
      %v1138 = vpop.f32.mrb[0].mxu0
      %v1139 = vadd.f32 %v727, %v1138
      %v1140 = vpop.f32.mrb[0].mxu0
      %v1141 = vadd.f32 %v731, %v1140
      %v1142 = vpop.f32.mrb[0].mxu0
      %v1143 = vadd.f32 %v727, %v1142
      %v1144 = vpop.f32.mrb[0].mxu0
      %v1145 = vadd.f32 %v731, %v1144
      %1146 = vmatprep.mubr.bf16.mxu0 0
      %1147 = vmatmul.mubr.bf16.gmra.mrb[0].mxu0 %v629
      %v1148 = vpop.f32.mrb[0].mxu0
      %v1149 = vadd.f32 %v727, %v1148
      %v1150 = vpop.f32.mrb[0].mxu0
      %v1151 = vadd.f32 %v731, %v1150
      %v1152 = vpop.f32.mrb[0].mxu0
      %v1153 = vadd.f32 %v727, %v1152
      %v1154 = vpop.f32.mrb[0].mxu0
      %v1155 = vadd.f32 %v731, %v1154
      %1156 = vmatprep.mubr.bf16.mxu0 0
      %1157 = vmatmul.mubr.bf16.gmra.mrb[0].mxu0 %v630
      %v1158 = vpop.f32.mrb[0].mxu0
      %v1159 = vadd.f32 %v727, %v1158
      %v1160 = vpop.f32.mrb[0].mxu0
      %v1161 = vadd.f32 %v731, %v1160
      %v1162 = vpop.f32.mrb[0].mxu0
      %v1163 = vadd.f32 %v727, %v1162
      %v1164 = vpop.f32.mrb[0].mxu0
      %v1165 = vadd.f32 %v731, %v1164
      %1166 = vmatprep.mubr.bf16.mxu0 0
      %1167 = vmatmul.mubr.bf16.gmra.mrb[0].mxu0 %v631
      %v1168 = vpop.f32.mrb[0].mxu0
      %v1169 = vadd.f32 %v727, %v1168
      %v1170 = vpop.f32.mrb[0].mxu0
      %v1171 = vadd.f32 %v731, %v1170
      %v1172 = vpop.f32.mrb[0].mxu0
      %v1173 = vadd.f32 %v727, %v1172
      %v1174 = vpop.f32.mrb[0].mxu0
      %v1175 = vadd.f32 %v731, %v1174
      %1176 = vmatprep.mubr.bf16.mxu0 0
      %1177 = vmatmul.mubr.bf16.gmra.mrb[0].mxu0 %v632
      %v1178 = vpop.f32.mrb[0].mxu0
      %v1179 = vadd.f32 %v727, %v1178
      %v1180 = vpop.f32.mrb[0].mxu0
      %v1181 = vadd.f32 %v731, %v1180
      %v1182 = vpop.f32.mrb[0].mxu0
      %v1183 = vadd.f32 %v727, %v1182
      %v1184 = vpop.f32.mrb[0].mxu0
      %v1185 = vadd.f32 %v731, %v1184
      %1186 = vmatprep.mubr.bf16.mxu0 0
      %1187 = vmatmul.mubr.bf16.gmra.mrb[0].mxu0 %v633
      %v1188 = vpop.f32.mrb[0].mxu0
      %v1189 = vadd.f32 %v727, %v1188
      %v1190 = vpop.f32.mrb[0].mxu0
      %v1191 = vadd.f32 %v731, %v1190
      %v1192 = vpop.f32.mrb[0].mxu0
      %v1193 = vadd.f32 %v727, %v1192
      %v1194 = vpop.f32.mrb[0].mxu0
      %v1195 = vadd.f32 %v731, %v1194
      %1196 = vmatprep.mubr.bf16.mxu0 0
      %1197 = vmatmul.mubr.bf16.gmra.mrb[0].mxu0 %v634
      %v1198 = vpop.f32.mrb[0].mxu0
      %v1199 = vadd.f32 %v727, %v1198
      %v1200 = vpop.f32.mrb[0].mxu0
      %v1201 = vadd.f32 %v731, %v1200
      %v1202 = vpop.f32.mrb[0].mxu0
      %v1203 = vadd.f32 %v727, %v1202
      %v1204 = vpop.f32.mrb[0].mxu0
      %v1205 = vadd.f32 %v731, %v1204
      %1206 = vmatprep.mubr.bf16.mxu0 0
      %1207 = vmatmul.mubr.bf16.gmra.mrb[0].mxu0 %v635
      %v1208 = vpop.f32.mrb[0].mxu0
      %v1209 = vadd.f32 %v727, %v1208
      %v1210 = vpop.f32.mrb[0].mxu0
      %v1211 = vadd.f32 %v731, %v1210
      %v1212 = vpop.f32.mrb[0].mxu0
      %v1213 = vadd.f32 %v727, %v1212
      %v1214 = vpop.f32.mrb[0].mxu0
      %v1215 = vadd.f32 %v731, %v1214
      %1216 = vmatprep.mubr.bf16.mxu0 0
      %1217 = vmatmul.mubr.bf16.gmra.mrb[0].mxu0 %v636
      %v1218 = vpop.f32.mrb[0].mxu0
      %v1219 = vadd.f32 %v727, %v1218
      %v1220 = vpop.f32.mrb[0].mxu0
      %v1221 = vadd.f32 %v731, %v1220
      %v1222 = vpop.f32.mrb[0].mxu0
      %v1223 = vadd.f32 %v727, %v1222
      %v1224 = vpop.f32.mrb[0].mxu0
      %v1225 = vadd.f32 %v731, %v1224
      %1226 = vmatprep.mubr.bf16.mxu0 0
      %1227 = vmatmul.mubr.bf16.gmra.mrb[0].mxu0 %v637
      %v1228 = vpop.f32.mrb[0].mxu0
      %v1229 = vadd.f32 %v727, %v1228
      %v1230 = vpop.f32.mrb[0].mxu0
      %v1231 = vadd.f32 %v731, %v1230
      %v1232 = vpop.f32.mrb[0].mxu0
      %v1233 = vadd.f32 %v727, %v1232
      %v1234 = vpop.f32.mrb[0].mxu0
      %v1235 = vadd.f32 %v731, %v1234
      %1236 = vmatprep.mubr.bf16.mxu0 0
      %1237 = vmatmul.mubr.bf16.gmra.mrb[0].mxu0 %v638
      %v1238 = vpop.f32.mrb[0].mxu0
      %v1239 = vadd.f32 %v727, %v1238
      %v1240 = vpop.f32.mrb[0].mxu0
      %v1241 = vadd.f32 %v731, %v1240
      %v1242 = vpop.f32.mrb[0].mxu0
      %v1243 = vadd.f32 %v727, %v1242
      %v1244 = vpop.f32.mrb[0].mxu0
      %v1245 = vadd.f32 %v731, %v1244
      %1246 = vmatprep.mubr.bf16.mxu0 0
      %1247 = vmatmul.mubr.bf16.gmra.mrb[0].mxu0 %v639
      %v1248 = vpop.f32.mrb[0].mxu0
      %v1249 = vadd.f32 %v727, %v1248
      %v1250 = vpop.f32.mrb[0].mxu0
      %v1251 = vadd.f32 %v731, %v1250
      %v1252 = vpop.f32.mrb[0].mxu0
      %v1253 = vadd.f32 %v727, %v1252
      %v1254 = vpop.f32.mrb[0].mxu0
      %v1255 = vadd.f32 %v731, %v1254
      %1256 = vmatprep.mubr.bf16.mxu0 0
      %1257 = vmatmul.mubr.bf16.gmra.mrb[0].mxu0 %v640
      %v1258 = vpop.f32.mrb[0].mxu0
      %v1259 = vadd.f32 %v727, %v1258
      %v1260 = vpop.f32.mrb[0].mxu0
      %v1261 = vadd.f32 %v731, %v1260
      %v1262 = vpop.f32.mrb[0].mxu0
      %v1263 = vadd.f32 %v727, %v1262
      %v1264 = vpop.f32.mrb[0].mxu0
      %v1265 = vadd.f32 %v731, %v1264
      %1266 = vmatprep.mubr.bf16.mxu0 0
      %1267 = vmatmul.mubr.bf16.gmra.mrb[0].mxu0 %v641
      %v1268 = vpop.f32.mrb[0].mxu0
      %v1269 = vadd.f32 %v727, %v1268
      %v1270 = vpop.f32.mrb[0].mxu0
      %v1271 = vadd.f32 %v731, %v1270
      %v1272 = vpop.f32.mrb[0].mxu0
      %v1273 = vadd.f32 %v727, %v1272
      %v1274 = vpop.f32.mrb[0].mxu0
      %v1275 = vadd.f32 %v731, %v1274
      %1276 = vmatprep.mubr.bf16.mxu0 0
      %1277 = vmatmul.mubr.bf16.gmra.mrb[0].mxu0 %v642
      %v1278 = vpop.f32.mrb[0].mxu0
      %v1279 = vadd.f32 %v727, %v1278
      %v1280 = vpop.f32.mrb[0].mxu0
      %v1281 = vadd.f32 %v731, %v1280
      %v1282 = vpop.f32.mrb[0].mxu0
      %v1283 = vadd.f32 %v727, %v1282
      %v1284 = vpop.f32.mrb[0].mxu0
      %v1285 = vadd.f32 %v731, %v1284
      %1286 = vmatprep.mubr.bf16.mxu0 0
      %1287 = vmatmul.mubr.bf16.gmra.mrb[0].mxu0 %v643
      %v1288 = vpop.f32.mrb[0].mxu0
      %v1289 = vadd.f32 %v727, %v1288
      %v1290 = vpop.f32.mrb[0].mxu0
      %v1291 = vadd.f32 %v731, %v1290
      %v1292 = vpop.f32.mrb[0].mxu0
      %v1293 = vadd.f32 %v727, %v1292
      %v1294 = vpop.f32.mrb[0].mxu0
      %v1295 = vadd.f32 %v731, %v1294
      %1296 = vmatprep.mubr.bf16.mxu0 0
      %1297 = vmatmul.mubr.bf16.gmra.mrb[0].mxu0 %v644
      %v1298 = vpop.f32.mrb[0].mxu0
      %v1299 = vadd.f32 %v727, %v1298
      %v1300 = vpop.f32.mrb[0].mxu0
      %v1301 = vadd.f32 %v731, %v1300
      %v1302 = vpop.f32.mrb[0].mxu0
      %v1303 = vadd.f32 %v727, %v1302
      %v1304 = vpop.f32.mrb[0].mxu0
      %v1305 = vadd.f32 %v731, %v1304
      %1306 = vmatprep.mubr.bf16.mxu0 0
      %1307 = vmatmul.mubr.bf16.gmra.mrb[0].mxu0 %v645
      %v1308 = vpop.f32.mrb[0].mxu0
      %v1309 = vadd.f32 %v727, %v1308
      %v1310 = vpop.f32.mrb[0].mxu0
      %v1311 = vadd.f32 %v731, %v1310
      %v1312 = vpop.f32.mrb[0].mxu0
      %v1313 = vadd.f32 %v727, %v1312
      %v1314 = vpop.f32.mrb[0].mxu0
      %v1315 = vadd.f32 %v731, %v1314
      %1316 = vmatprep.mubr.bf16.mxu0 0
      %1317 = vmatmul.mubr.bf16.gmra.mrb[0].mxu0 %v646
      %v1318 = vpop.f32.mrb[0].mxu0
      %v1319 = vadd.f32 %v727, %v1318
      %v1320 = vpop.f32.mrb[0].mxu0
      %v1321 = vadd.f32 %v731, %v1320
      %v1322 = vpop.f32.mrb[0].mxu0
      %v1323 = vadd.f32 %v727, %v1322
      %v1324 = vpop.f32.mrb[0].mxu0
      %v1325 = vadd.f32 %v731, %v1324
      %1326 = vmatprep.mubr.bf16.mxu0 0
      %1327 = vmatmul.mubr.bf16.gmra.mrb[0].mxu0 %v647
      %v1328 = vpop.f32.mrb[0].mxu0
      %v1329 = vadd.f32 %v727, %v1328
      %v1330 = vpop.f32.mrb[0].mxu0
      %v1331 = vadd.f32 %v731, %v1330
      %v1332 = vpop.f32.mrb[0].mxu0
      %v1333 = vadd.f32 %v727, %v1332
      %v1334 = vpop.f32.mrb[0].mxu0
      %v1335 = vadd.f32 %v731, %v1334
      %1336 = vmatprep.mubr.bf16.mxu0 0
      %1337 = vmatmul.mubr.bf16.gmra.mrb[0].mxu0 %v648
      %v1338 = vpop.f32.mrb[0].mxu0
      %v1339 = vadd.f32 %v727, %v1338
      %v1340 = vpop.f32.mrb[0].mxu0
      %v1341 = vadd.f32 %v731, %v1340
      %v1342 = vpop.f32.mrb[0].mxu0
      %v1343 = vadd.f32 %v727, %v1342
      %v1344 = vpop.f32.mrb[0].mxu0
      %v1345 = vadd.f32 %v731, %v1344
      %1346 = vmatprep.mubr.bf16.mxu0 0
      %1347 = vmatmul.mubr.bf16.gmra.mrb[0].mxu0 %v649
      %v1348 = vpop.f32.mrb[0].mxu0
      %v1349 = vadd.f32 %v727, %v1348
      %v1350 = vpop.f32.mrb[0].mxu0
      %v1351 = vadd.f32 %v731, %v1350
      %v1352 = vpop.f32.mrb[0].mxu0
      %v1353 = vadd.f32 %v727, %v1352
      %v1354 = vpop.f32.mrb[0].mxu0
      %v1355 = vadd.f32 %v731, %v1354
      %1356 = vmatprep.mubr.bf16.mxu0 0
      %1357 = vmatmul.mubr.bf16.gmra.mrb[0].mxu0 %v650
      %v1358 = vpop.f32.mrb[0].mxu0
      %v1359 = vadd.f32 %v727, %v1358
      %v1360 = vpop.f32.mrb[0].mxu0
      %v1361 = vadd.f32 %v731, %v1360
      %v1362 = vpop.f32.mrb[0].mxu0
      %v1363 = vadd.f32 %v727, %v1362
      %v1364 = vpop.f32.mrb[0].mxu0
      %v1365 = vadd.f32 %v731, %v1364
      %1366 = vmatprep.mubr.bf16.mxu0 0
      %1367 = vmatmul.mubr.bf16.gmra.mrb[0].mxu0 %v651
      %v1368 = vpop.f32.mrb[0].mxu0
      %v1369 = vadd.f32 %v727, %v1368
      %v1370 = vpop.f32.mrb[0].mxu0
      %v1371 = vadd.f32 %v731, %v1370
      %v1372 = vpop.f32.mrb[0].mxu0
      %v1373 = vadd.f32 %v727, %v1372
      %v1374 = vpop.f32.mrb[0].mxu0
      %v1375 = vadd.f32 %v731, %v1374
      %1376 = vmatprep.mubr.bf16.mxu0 0
      %1377 = vmatmul.mubr.bf16.gmra.mrb[0].mxu0 %v652
      %v1378 = vpop.f32.mrb[0].mxu0
      %v1379 = vadd.f32 %v727, %v1378
      %v1380 = vpop.f32.mrb[0].mxu0
      %v1381 = vadd.f32 %v731, %v1380
      %v1382 = vpop.f32.mrb[0].mxu0
      %v1383 = vadd.f32 %v727, %v1382
      %v1384 = vpop.f32.mrb[0].mxu0
      %v1385 = vadd.f32 %v731, %v1384
      %1386 = vmatprep.mubr.bf16.mxu0 0
      %1387 = vmatmul.mubr.bf16.gmra.mrb[0].mxu0 %v653
      %v1388 = vpop.f32.mrb[0].mxu0
      %v1389 = vadd.f32 %v727, %v1388
      %v1390 = vpop.f32.mrb[0].mxu0
      %v1391 = vadd.f32 %v731, %v1390
      %v1392 = vpop.f32.mrb[0].mxu0
      %v1393 = vadd.f32 %v727, %v1392
      %v1394 = vpop.f32.mrb[0].mxu0
      %v1395 = vadd.f32 %v731, %v1394
      %1396 = vmatprep.mubr.bf16.mxu0 0
      %1397 = vmatmul.mubr.bf16.gmra.mrb[0].mxu0 %v654
      %v1398 = vpop.f32.mrb[0].mxu0
      %v1399 = vadd.f32 %v727, %v1398
      %v1400 = vpop.f32.mrb[0].mxu0
      %v1401 = vadd.f32 %v731, %v1400
      %v1402 = vpop.f32.mrb[0].mxu0
      %v1403 = vadd.f32 %v727, %v1402
      %v1404 = vpop.f32.mrb[0].mxu0
      %v1405 = vadd.f32 %v731, %v1404
      %1406 = vmatprep.mubr.bf16.mxu0 0
      %1407 = vmatmul.mubr.bf16.gmra.mrb[0].mxu0 %v655
      %v1408 = vpop.f32.mrb[0].mxu0
      %v1409 = vadd.f32 %v727, %v1408
      %v1410 = vpop.f32.mrb[0].mxu0
      %v1411 = vadd.f32 %v731, %v1410
      %v1412 = vpop.f32.mrb[0].mxu0
      %v1413 = vadd.f32 %v727, %v1412
      %v1414 = vpop.f32.mrb[0].mxu0
      %v1415 = vadd.f32 %v731, %v1414
      %1416 = vmatprep.mubr.bf16.mxu0 0
      %1417 = vmatmul.mubr.bf16.gmra.mrb[0].mxu0 %v656
      %v1418 = vpop.f32.mrb[0].mxu0
      %v1419 = vadd.f32 %v727, %v1418
      %v1420 = vpop.f32.mrb[0].mxu0
      %v1421 = vadd.f32 %v731, %v1420
      %v1422 = vpop.f32.mrb[0].mxu0
      %v1423 = vadd.f32 %v727, %v1422
      %v1424 = vpop.f32.mrb[0].mxu0
      %v1425 = vadd.f32 %v731, %v1424
      %1426 = vmatprep.mubr.bf16.mxu0 0
      %1427 = vmatmul.mubr.bf16.gmra.mrb[0].mxu0 %v657
      %v1428 = vpop.f32.mrb[0].mxu0
      %v1429 = vadd.f32 %v727, %v1428
      %v1430 = vpop.f32.mrb[0].mxu0
      %v1431 = vadd.f32 %v731, %v1430
      %v1432 = vpop.f32.mrb[0].mxu0
      %v1433 = vadd.f32 %v727, %v1432
      %v1434 = vpop.f32.mrb[0].mxu0
      %v1435 = vadd.f32 %v731, %v1434
      %1436 = vdwg.mxu0
      %1437 = vmatprep.subr.bf16.mxu0 %v959
      %1438 = vmatpush1.bf16.msra.mxu0 %v958
      %1439 = vmatprep.subr.bf16.mxu0 %v967
      %1440 = vmatpush1.bf16.msra.mxu0 %v966
      %1441 = vmatprep.subr.bf16.mxu0 %v975
      %1442 = vmatpush1.bf16.msra.mxu0 %v974
      %1443 = vmatprep.subr.bf16.mxu0 %v983
      %1444 = vmatpush1.bf16.msra.mxu0 %v982
      %1445 = vmatprep.subr.bf16.mxu0 %v991
      %1446 = vmatpush1.bf16.msra.mxu0 %v990
      %1447 = vmatprep.subr.bf16.mxu0 %v999
      %1448 = vmatpush1.bf16.msra.mxu0 %v998
      %1449 = vmatprep.subr.bf16.mxu0 %v1007
      %1450 = vmatpush1.bf16.msra.mxu0 %v1006
      %1451 = vmatprep.subr.bf16.mxu0 %v1015
      %1452 = vmatpush1.bf16.msra.mxu0 %v1014
      %1453 = vmatprep.subr.bf16.mxu0 0
      %1454 = vmatpush1.bf16.msra.mxu0 0
      %1455 = vmatprep.subr.bf16.mxu0 0
      %1456 = vmatpush1.bf16.msra.mxu0 0
      %1457 = vmatprep.subr.bf16.mxu0 0
      %1458 = vmatpush1.bf16.msra.mxu0 0
      %1459 = vmatprep.subr.bf16.mxu0 0
      %1460 = vmatpush1.bf16.msra.mxu0 0
      %1461 = vmatprep.subr.bf16.mxu0 0
      %1462 = vmatpush1.bf16.msra.mxu0 0
      %1463 = vmatprep.subr.bf16.mxu0 0
      %1464 = vmatpush1.bf16.msra.mxu0 0
      %1465 = vmatprep.subr.bf16.mxu0 0
      %1466 = vmatpush1.bf16.msra.mxu0 0
      %1467 = vmatprep.subr.bf16.mxu0 0
      %1468 = vmatpush1.bf16.msra.mxu0 0
      %1469 = vmatprep.mubr.bf16.mxu0 0
      %1470 = vmatmul.mubr.bf16.gmra.mrb[0].mxu0 %v626
      %v1471 = vpop.f32.mrb[0].mxu0
      %v1472 = vadd.f32 %v735, %v1471
      %v1473 = vpop.f32.mrb[0].mxu0
      %v1474 = vadd.f32 %v739, %v1473
      %v1475 = vpop.f32.mrb[0].mxu0
      %v1476 = vadd.f32 %v735, %v1475
      %v1477 = vpop.f32.mrb[0].mxu0
      %v1478 = vadd.f32 %v739, %v1477
      %1479 = vmatprep.mubr.bf16.mxu0 0
      %1480 = vmatmul.mubr.bf16.gmra.mrb[0].mxu0 %v627
      %v1481 = vpop.f32.mrb[0].mxu0
      %v1482 = vadd.f32 %v735, %v1481
      %v1483 = vpop.f32.mrb[0].mxu0
      %v1484 = vadd.f32 %v739, %v1483
      %v1485 = vpop.f32.mrb[0].mxu0
      %v1486 = vadd.f32 %v735, %v1485
      %v1487 = vpop.f32.mrb[0].mxu0
      %v1488 = vadd.f32 %v739, %v1487
      %1489 = vmatprep.mubr.bf16.mxu0 0
      %1490 = vmatmul.mubr.bf16.gmra.mrb[0].mxu0 %v628
      %v1491 = vpop.f32.mrb[0].mxu0
      %v1492 = vadd.f32 %v735, %v1491
      %v1493 = vpop.f32.mrb[0].mxu0
      %v1494 = vadd.f32 %v739, %v1493
      %v1495 = vpop.f32.mrb[0].mxu0
      %v1496 = vadd.f32 %v735, %v1495
      %v1497 = vpop.f32.mrb[0].mxu0
      %v1498 = vadd.f32 %v739, %v1497
      %1499 = vmatprep.mubr.bf16.mxu0 0
      %1500 = vmatmul.mubr.bf16.gmra.mrb[0].mxu0 %v629
      %v1501 = vpop.f32.mrb[0].mxu0
      %v1502 = vadd.f32 %v735, %v1501
      %v1503 = vpop.f32.mrb[0].mxu0
      %v1504 = vadd.f32 %v739, %v1503
      %v1505 = vpop.f32.mrb[0].mxu0
      %v1506 = vadd.f32 %v735, %v1505
      %v1507 = vpop.f32.mrb[0].mxu0
      %v1508 = vadd.f32 %v739, %v1507
      %1509 = vmatprep.mubr.bf16.mxu0 0
      %1510 = vmatmul.mubr.bf16.gmra.mrb[0].mxu0 %v630
      %v1511 = vpop.f32.mrb[0].mxu0
      %v1512 = vadd.f32 %v735, %v1511
      %v1513 = vpop.f32.mrb[0].mxu0
      %v1514 = vadd.f32 %v739, %v1513
      %v1515 = vpop.f32.mrb[0].mxu0
      %v1516 = vadd.f32 %v735, %v1515
      %v1517 = vpop.f32.mrb[0].mxu0
      %v1518 = vadd.f32 %v739, %v1517
      %1519 = vmatprep.mubr.bf16.mxu0 0
      %1520 = vmatmul.mubr.bf16.gmra.mrb[0].mxu0 %v631
      %v1521 = vpop.f32.mrb[0].mxu0
      %v1522 = vadd.f32 %v735, %v1521
      %v1523 = vpop.f32.mrb[0].mxu0
      %v1524 = vadd.f32 %v739, %v1523
      %v1525 = vpop.f32.mrb[0].mxu0
      %v1526 = vadd.f32 %v735, %v1525
      %v1527 = vpop.f32.mrb[0].mxu0
      %v1528 = vadd.f32 %v739, %v1527
      %1529 = vmatprep.mubr.bf16.mxu0 0
      %1530 = vmatmul.mubr.bf16.gmra.mrb[0].mxu0 %v632
      %v1531 = vpop.f32.mrb[0].mxu0
      %v1532 = vadd.f32 %v735, %v1531
      %v1533 = vpop.f32.mrb[0].mxu0
      %v1534 = vadd.f32 %v739, %v1533
      %v1535 = vpop.f32.mrb[0].mxu0
      %v1536 = vadd.f32 %v735, %v1535
      %v1537 = vpop.f32.mrb[0].mxu0
      %v1538 = vadd.f32 %v739, %v1537
      %1539 = vmatprep.mubr.bf16.mxu0 0
      %1540 = vmatmul.mubr.bf16.gmra.mrb[0].mxu0 %v633
      %v1541 = vpop.f32.mrb[0].mxu0
      %v1542 = vadd.f32 %v735, %v1541
      %v1543 = vpop.f32.mrb[0].mxu0
      %v1544 = vadd.f32 %v739, %v1543
      %v1545 = vpop.f32.mrb[0].mxu0
      %v1546 = vadd.f32 %v735, %v1545
      %v1547 = vpop.f32.mrb[0].mxu0
      %v1548 = vadd.f32 %v739, %v1547
      %1549 = vmatprep.mubr.bf16.mxu0 0
      %1550 = vmatmul.mubr.bf16.gmra.mrb[0].mxu0 %v634
      %v1551 = vpop.f32.mrb[0].mxu0
      %v1552 = vadd.f32 %v735, %v1551
      %v1553 = vpop.f32.mrb[0].mxu0
      %v1554 = vadd.f32 %v739, %v1553
      %v1555 = vpop.f32.mrb[0].mxu0
      %v1556 = vadd.f32 %v735, %v1555
      %v1557 = vpop.f32.mrb[0].mxu0
      %v1558 = vadd.f32 %v739, %v1557
      %1559 = vmatprep.mubr.bf16.mxu0 0
      %1560 = vmatmul.mubr.bf16.gmra.mrb[0].mxu0 %v635
      %v1561 = vpop.f32.mrb[0].mxu0
      %v1562 = vadd.f32 %v735, %v1561
      %v1563 = vpop.f32.mrb[0].mxu0
      %v1564 = vadd.f32 %v739, %v1563
      %v1565 = vpop.f32.mrb[0].mxu0
      %v1566 = vadd.f32 %v735, %v1565
      %v1567 = vpop.f32.mrb[0].mxu0
      %v1568 = vadd.f32 %v739, %v1567
      %1569 = vmatprep.mubr.bf16.mxu0 0
      %1570 = vmatmul.mubr.bf16.gmra.mrb[0].mxu0 %v636
      %v1571 = vpop.f32.mrb[0].mxu0
      %v1572 = vadd.f32 %v735, %v1571
      %v1573 = vpop.f32.mrb[0].mxu0
      %v1574 = vadd.f32 %v739, %v1573
      %v1575 = vpop.f32.mrb[0].mxu0
      %v1576 = vadd.f32 %v735, %v1575
      %v1577 = vpop.f32.mrb[0].mxu0
      %v1578 = vadd.f32 %v739, %v1577
      %1579 = vmatprep.mubr.bf16.mxu0 0
      %1580 = vmatmul.mubr.bf16.gmra.mrb[0].mxu0 %v637
      %v1581 = vpop.f32.mrb[0].mxu0
      %v1582 = vadd.f32 %v735, %v1581
      %v1583 = vpop.f32.mrb[0].mxu0
      %v1584 = vadd.f32 %v739, %v1583
      %v1585 = vpop.f32.mrb[0].mxu0
      %v1586 = vadd.f32 %v735, %v1585
      %v1587 = vpop.f32.mrb[0].mxu0
      %v1588 = vadd.f32 %v739, %v1587
      %1589 = vmatprep.mubr.bf16.mxu0 0
      %1590 = vmatmul.mubr.bf16.gmra.mrb[0].mxu0 %v638
      %v1591 = vpop.f32.mrb[0].mxu0
      %v1592 = vadd.f32 %v735, %v1591
      %v1593 = vpop.f32.mrb[0].mxu0
      %v1594 = vadd.f32 %v739, %v1593
      %v1595 = vpop.f32.mrb[0].mxu0
      %v1596 = vadd.f32 %v735, %v1595
      %v1597 = vpop.f32.mrb[0].mxu0
      %v1598 = vadd.f32 %v739, %v1597
      %1599 = vmatprep.mubr.bf16.mxu0 0
      %1600 = vmatmul.mubr.bf16.gmra.mrb[0].mxu0 %v639
      %v1601 = vpop.f32.mrb[0].mxu0
      %v1602 = vadd.f32 %v735, %v1601
      %v1603 = vpop.f32.mrb[0].mxu0
      %v1604 = vadd.f32 %v739, %v1603
      %v1605 = vpop.f32.mrb[0].mxu0
      %v1606 = vadd.f32 %v735, %v1605
      %v1607 = vpop.f32.mrb[0].mxu0
      %v1608 = vadd.f32 %v739, %v1607
      %1609 = vmatprep.mubr.bf16.mxu0 0
      %1610 = vmatmul.mubr.bf16.gmra.mrb[0].mxu0 %v640
      %v1611 = vpop.f32.mrb[0].mxu0
      %v1612 = vadd.f32 %v735, %v1611
      %v1613 = vpop.f32.mrb[0].mxu0
      %v1614 = vadd.f32 %v739, %v1613
      %v1615 = vpop.f32.mrb[0].mxu0
      %v1616 = vadd.f32 %v735, %v1615
      %v1617 = vpop.f32.mrb[0].mxu0
      %v1618 = vadd.f32 %v739, %v1617
      %1619 = vmatprep.mubr.bf16.mxu0 0
      %1620 = vmatmul.mubr.bf16.gmra.mrb[0].mxu0 %v641
      %v1621 = vpop.f32.mrb[0].mxu0
      %v1622 = vadd.f32 %v735, %v1621
      %v1623 = vpop.f32.mrb[0].mxu0
      %v1624 = vadd.f32 %v739, %v1623
      %v1625 = vpop.f32.mrb[0].mxu0
      %v1626 = vadd.f32 %v735, %v1625
      %v1627 = vpop.f32.mrb[0].mxu0
      %v1628 = vadd.f32 %v739, %v1627
      %1629 = vmatprep.mubr.bf16.mxu0 0
      %1630 = vmatmul.mubr.bf16.gmra.mrb[0].mxu0 %v642
      %v1631 = vpop.f32.mrb[0].mxu0
      %v1632 = vadd.f32 %v735, %v1631
      %v1633 = vpop.f32.mrb[0].mxu0
      %v1634 = vadd.f32 %v739, %v1633
      %v1635 = vpop.f32.mrb[0].mxu0
      %v1636 = vadd.f32 %v735, %v1635
      %v1637 = vpop.f32.mrb[0].mxu0
      %v1638 = vadd.f32 %v739, %v1637
      %1639 = vmatprep.mubr.bf16.mxu0 0
      %1640 = vmatmul.mubr.bf16.gmra.mrb[0].mxu0 %v643
      %v1641 = vpop.f32.mrb[0].mxu0
      %v1642 = vadd.f32 %v735, %v1641
      %v1643 = vpop.f32.mrb[0].mxu0
      %v1644 = vadd.f32 %v739, %v1643
      %v1645 = vpop.f32.mrb[0].mxu0
      %v1646 = vadd.f32 %v735, %v1645
      %v1647 = vpop.f32.mrb[0].mxu0
      %v1648 = vadd.f32 %v739, %v1647
      %1649 = vmatprep.mubr.bf16.mxu0 0
      %1650 = vmatmul.mubr.bf16.gmra.mrb[0].mxu0 %v644
      %v1651 = vpop.f32.mrb[0].mxu0
      %v1652 = vadd.f32 %v735, %v1651
      %v1653 = vpop.f32.mrb[0].mxu0
      %v1654 = vadd.f32 %v739, %v1653
      %v1655 = vpop.f32.mrb[0].mxu0
      %v1656 = vadd.f32 %v735, %v1655
      %v1657 = vpop.f32.mrb[0].mxu0
      %v1658 = vadd.f32 %v739, %v1657
      %1659 = vmatprep.mubr.bf16.mxu0 0
      %1660 = vmatmul.mubr.bf16.gmra.mrb[0].mxu0 %v645
      %v1661 = vpop.f32.mrb[0].mxu0
      %v1662 = vadd.f32 %v735, %v1661
      %v1663 = vpop.f32.mrb[0].mxu0
      %v1664 = vadd.f32 %v739, %v1663
      %v1665 = vpop.f32.mrb[0].mxu0
      %v1666 = vadd.f32 %v735, %v1665
      %v1667 = vpop.f32.mrb[0].mxu0
      %v1668 = vadd.f32 %v739, %v1667
      %1669 = vmatprep.mubr.bf16.mxu0 0
      %1670 = vmatmul.mubr.bf16.gmra.mrb[0].mxu0 %v646
      %v1671 = vpop.f32.mrb[0].mxu0
      %v1672 = vadd.f32 %v735, %v1671
      %v1673 = vpop.f32.mrb[0].mxu0
      %v1674 = vadd.f32 %v739, %v1673
      %v1675 = vpop.f32.mrb[0].mxu0
      %v1676 = vadd.f32 %v735, %v1675
      %v1677 = vpop.f32.mrb[0].mxu0
      %v1678 = vadd.f32 %v739, %v1677
      %1679 = vmatprep.mubr.bf16.mxu0 0
      %1680 = vmatmul.mubr.bf16.gmra.mrb[0].mxu0 %v647
      %v1681 = vpop.f32.mrb[0].mxu0
      %v1682 = vadd.f32 %v735, %v1681
      %v1683 = vpop.f32.mrb[0].mxu0
      %v1684 = vadd.f32 %v739, %v1683
      %v1685 = vpop.f32.mrb[0].mxu0
      %v1686 = vadd.f32 %v735, %v1685
      %v1687 = vpop.f32.mrb[0].mxu0
      %v1688 = vadd.f32 %v739, %v1687
      %1689 = vmatprep.mubr.bf16.mxu0 0
      %1690 = vmatmul.mubr.bf16.gmra.mrb[0].mxu0 %v648
      %v1691 = vpop.f32.mrb[0].mxu0
      %v1692 = vadd.f32 %v735, %v1691
      %v1693 = vpop.f32.mrb[0].mxu0
      %v1694 = vadd.f32 %v739, %v1693
      %v1695 = vpop.f32.mrb[0].mxu0
      %v1696 = vadd.f32 %v735, %v1695
      %v1697 = vpop.f32.mrb[0].mxu0
      %v1698 = vadd.f32 %v739, %v1697
      %1699 = vmatprep.mubr.bf16.mxu0 0
      %1700 = vmatmul.mubr.bf16.gmra.mrb[0].mxu0 %v649
      %v1701 = vpop.f32.mrb[0].mxu0
      %v1702 = vadd.f32 %v735, %v1701
      %v1703 = vpop.f32.mrb[0].mxu0
      %v1704 = vadd.f32 %v739, %v1703
      %v1705 = vpop.f32.mrb[0].mxu0
      %v1706 = vadd.f32 %v735, %v1705
      %v1707 = vpop.f32.mrb[0].mxu0
      %v1708 = vadd.f32 %v739, %v1707
      %1709 = vmatprep.mubr.bf16.mxu0 0
      %1710 = vmatmul.mubr.bf16.gmra.mrb[0].mxu0 %v650
      %v1711 = vpop.f32.mrb[0].mxu0
      %v1712 = vadd.f32 %v735, %v1711
      %v1713 = vpop.f32.mrb[0].mxu0
      %v1714 = vadd.f32 %v739, %v1713
      %v1715 = vpop.f32.mrb[0].mxu0
      %v1716 = vadd.f32 %v735, %v1715
      %v1717 = vpop.f32.mrb[0].mxu0
      %v1718 = vadd.f32 %v739, %v1717
      %1719 = vmatprep.mubr.bf16.mxu0 0
      %1720 = vmatmul.mubr.bf16.gmra.mrb[0].mxu0 %v651
      %v1721 = vpop.f32.mrb[0].mxu0
      %v1722 = vadd.f32 %v735, %v1721
      %v1723 = vpop.f32.mrb[0].mxu0
      %v1724 = vadd.f32 %v739, %v1723
      %v1725 = vpop.f32.mrb[0].mxu0
      %v1726 = vadd.f32 %v735, %v1725
      %v1727 = vpop.f32.mrb[0].mxu0
      %v1728 = vadd.f32 %v739, %v1727
      %1729 = vmatprep.mubr.bf16.mxu0 0
      %1730 = vmatmul.mubr.bf16.gmra.mrb[0].mxu0 %v652
      %v1731 = vpop.f32.mrb[0].mxu0
      %v1732 = vadd.f32 %v735, %v1731
      %v1733 = vpop.f32.mrb[0].mxu0
      %v1734 = vadd.f32 %v739, %v1733
      %v1735 = vpop.f32.mrb[0].mxu0
      %v1736 = vadd.f32 %v735, %v1735
      %v1737 = vpop.f32.mrb[0].mxu0
      %v1738 = vadd.f32 %v739, %v1737
      %1739 = vmatprep.mubr.bf16.mxu0 0
      %1740 = vmatmul.mubr.bf16.gmra.mrb[0].mxu0 %v653
      %v1741 = vpop.f32.mrb[0].mxu0
      %v1742 = vadd.f32 %v735, %v1741
      %v1743 = vpop.f32.mrb[0].mxu0
      %v1744 = vadd.f32 %v739, %v1743
      %v1745 = vpop.f32.mrb[0].mxu0
      %v1746 = vadd.f32 %v735, %v1745
      %v1747 = vpop.f32.mrb[0].mxu0
      %v1748 = vadd.f32 %v739, %v1747
      %1749 = vmatprep.mubr.bf16.mxu0 0
      %1750 = vmatmul.mubr.bf16.gmra.mrb[0].mxu0 %v654
      %v1751 = vpop.f32.mrb[0].mxu0
      %v1752 = vadd.f32 %v735, %v1751
      %v1753 = vpop.f32.mrb[0].mxu0
      %v1754 = vadd.f32 %v739, %v1753
      %v1755 = vpop.f32.mrb[0].mxu0
      %v1756 = vadd.f32 %v735, %v1755
      %v1757 = vpop.f32.mrb[0].mxu0
      %v1758 = vadd.f32 %v739, %v1757
      %1759 = vmatprep.mubr.bf16.mxu0 0
      %1760 = vmatmul.mubr.bf16.gmra.mrb[0].mxu0 %v655
      %v1761 = vpop.f32.mrb[0].mxu0
      %v1762 = vadd.f32 %v735, %v1761
      %v1763 = vpop.f32.mrb[0].mxu0
      %v1764 = vadd.f32 %v739, %v1763
      %v1765 = vpop.f32.mrb[0].mxu0
      %v1766 = vadd.f32 %v735, %v1765
      %v1767 = vpop.f32.mrb[0].mxu0
      %v1768 = vadd.f32 %v739, %v1767
      %1769 = vmatprep.mubr.bf16.mxu0 0
      %1770 = vmatmul.mubr.bf16.gmra.mrb[0].mxu0 %v656
      %v1771 = vpop.f32.mrb[0].mxu0
      %v1772 = vadd.f32 %v735, %v1771
      %v1773 = vpop.f32.mrb[0].mxu0
      %v1774 = vadd.f32 %v739, %v1773
      %v1775 = vpop.f32.mrb[0].mxu0
      %v1776 = vadd.f32 %v735, %v1775
      %v1777 = vpop.f32.mrb[0].mxu0
      %v1778 = vadd.f32 %v739, %v1777
      %1779 = vmatprep.mubr.bf16.mxu0 0
      %1780 = vmatmul.mubr.bf16.gmra.mrb[0].mxu0 %v657
      %v1781 = vpop.f32.mrb[0].mxu0
      %v1782 = vadd.f32 %v735, %v1781
      %v1783 = vpop.f32.mrb[0].mxu0
      %v1784 = vadd.f32 %v739, %v1783
      %v1785 = vpop.f32.mrb[0].mxu0
      %v1786 = vadd.f32 %v735, %v1785
      %v1787 = vpop.f32.mrb[0].mxu0
      %v1788 = vadd.f32 %v739, %v1787
      %1789 = vdwg.mxu0
      %1790 = vmatprep.subr.bf16.mxu0 %v961
      %1791 = vmatpush1.bf16.msra.mxu0 %v960
      %1792 = vmatprep.subr.bf16.mxu0 %v969
      %1793 = vmatpush1.bf16.msra.mxu0 %v968
      %1794 = vmatprep.subr.bf16.mxu0 %v977
      %1795 = vmatpush1.bf16.msra.mxu0 %v976
      %1796 = vmatprep.subr.bf16.mxu0 %v985
      %1797 = vmatpush1.bf16.msra.mxu0 %v984
      %1798 = vmatprep.subr.bf16.mxu0 %v993
      %1799 = vmatpush1.bf16.msra.mxu0 %v992
      %1800 = vmatprep.subr.bf16.mxu0 %v1001
      %1801 = vmatpush1.bf16.msra.mxu0 %v1000
      %1802 = vmatprep.subr.bf16.mxu0 %v1009
      %1803 = vmatpush1.bf16.msra.mxu0 %v1008
      %1804 = vmatprep.subr.bf16.mxu0 %v1017
      %1805 = vmatpush1.bf16.msra.mxu0 %v1016
      %1806 = vmatprep.subr.bf16.mxu0 0
      %1807 = vmatpush1.bf16.msra.mxu0 0
      %1808 = vmatprep.subr.bf16.mxu0 0
      %1809 = vmatpush1.bf16.msra.mxu0 0
      %1810 = vmatprep.subr.bf16.mxu0 0
      %1811 = vmatpush1.bf16.msra.mxu0 0
      %1812 = vmatprep.subr.bf16.mxu0 0
      %1813 = vmatpush1.bf16.msra.mxu0 0
      %1814 = vmatprep.subr.bf16.mxu0 0
      %1815 = vmatpush1.bf16.msra.mxu0 0
      %1816 = vmatprep.subr.bf16.mxu0 0
      %1817 = vmatpush1.bf16.msra.mxu0 0
      %1818 = vmatprep.subr.bf16.mxu0 0
      %1819 = vmatpush1.bf16.msra.mxu0 0
      %1820 = vmatprep.subr.bf16.mxu0 0
      %1821 = vmatpush1.bf16.msra.mxu0 0
      %1822 = vmatprep.mubr.bf16.mxu0 0
      %1823 = vmatmul.mubr.bf16.gmra.mrb[0].mxu0 %v626
      %v1824 = vpop.f32.mrb[0].mxu0
      %v1825 = vadd.f32 %v743, %v1824
      %v1826 = vpop.f32.mrb[0].mxu0
      %v1827 = vadd.f32 %v747, %v1826
      %v1828 = vpop.f32.mrb[0].mxu0
      %v1829 = vadd.f32 %v743, %v1828
      %v1830 = vpop.f32.mrb[0].mxu0
      %v1831 = vadd.f32 %v747, %v1830
      %1832 = vmatprep.mubr.bf16.mxu0 0
      %1833 = vmatmul.mubr.bf16.gmra.mrb[0].mxu0 %v627
      %v1834 = vpop.f32.mrb[0].mxu0
      %v1835 = vadd.f32 %v743, %v1834
      %v1836 = vpop.f32.mrb[0].mxu0
      %v1837 = vadd.f32 %v747, %v1836
      %v1838 = vpop.f32.mrb[0].mxu0
      %v1839 = vadd.f32 %v743, %v1838
      %v1840 = vpop.f32.mrb[0].mxu0
      %v1841 = vadd.f32 %v747, %v1840
      %1842 = vmatprep.mubr.bf16.mxu0 0
      %1843 = vmatmul.mubr.bf16.gmra.mrb[0].mxu0 %v628
      %v1844 = vpop.f32.mrb[0].mxu0
      %v1845 = vadd.f32 %v743, %v1844
      %v1846 = vpop.f32.mrb[0].mxu0
      %v1847 = vadd.f32 %v747, %v1846
      %v1848 = vpop.f32.mrb[0].mxu0
      %v1849 = vadd.f32 %v743, %v1848
      %v1850 = vpop.f32.mrb[0].mxu0
      %v1851 = vadd.f32 %v747, %v1850
      %1852 = vmatprep.mubr.bf16.mxu0 0
      %1853 = vmatmul.mubr.bf16.gmra.mrb[0].mxu0 %v629
      %v1854 = vpop.f32.mrb[0].mxu0
      %v1855 = vadd.f32 %v743, %v1854
      %v1856 = vpop.f32.mrb[0].mxu0
      %v1857 = vadd.f32 %v747, %v1856
      %v1858 = vpop.f32.mrb[0].mxu0
      %v1859 = vadd.f32 %v743, %v1858
      %v1860 = vpop.f32.mrb[0].mxu0
      %v1861 = vadd.f32 %v747, %v1860
      %1862 = vmatprep.mubr.bf16.mxu0 0
      %1863 = vmatmul.mubr.bf16.gmra.mrb[0].mxu0 %v630
      %v1864 = vpop.f32.mrb[0].mxu0
      %v1865 = vadd.f32 %v743, %v1864
      %v1866 = vpop.f32.mrb[0].mxu0
      %v1867 = vadd.f32 %v747, %v1866
      %v1868 = vpop.f32.mrb[0].mxu0
      %v1869 = vadd.f32 %v743, %v1868
      %v1870 = vpop.f32.mrb[0].mxu0
      %v1871 = vadd.f32 %v747, %v1870
      %1872 = vmatprep.mubr.bf16.mxu0 0
      %1873 = vmatmul.mubr.bf16.gmra.mrb[0].mxu0 %v631
      %v1874 = vpop.f32.mrb[0].mxu0
      %v1875 = vadd.f32 %v743, %v1874
      %v1876 = vpop.f32.mrb[0].mxu0
      %v1877 = vadd.f32 %v747, %v1876
      %v1878 = vpop.f32.mrb[0].mxu0
      %v1879 = vadd.f32 %v743, %v1878
      %v1880 = vpop.f32.mrb[0].mxu0
      %v1881 = vadd.f32 %v747, %v1880
      %1882 = vmatprep.mubr.bf16.mxu0 0
      %1883 = vmatmul.mubr.bf16.gmra.mrb[0].mxu0 %v632
      %v1884 = vpop.f32.mrb[0].mxu0
      %v1885 = vadd.f32 %v743, %v1884
      %v1886 = vpop.f32.mrb[0].mxu0
      %v1887 = vadd.f32 %v747, %v1886
      %v1888 = vpop.f32.mrb[0].mxu0
      %v1889 = vadd.f32 %v743, %v1888
      %v1890 = vpop.f32.mrb[0].mxu0
      %v1891 = vadd.f32 %v747, %v1890
      %1892 = vmatprep.mubr.bf16.mxu0 0
      %1893 = vmatmul.mubr.bf16.gmra.mrb[0].mxu0 %v633
      %v1894 = vpop.f32.mrb[0].mxu0
      %v1895 = vadd.f32 %v743, %v1894
      %v1896 = vpop.f32.mrb[0].mxu0
      %v1897 = vadd.f32 %v747, %v1896
      %v1898 = vpop.f32.mrb[0].mxu0
      %v1899 = vadd.f32 %v743, %v1898
      %v1900 = vpop.f32.mrb[0].mxu0
      %v1901 = vadd.f32 %v747, %v1900
      %1902 = vmatprep.mubr.bf16.mxu0 0
      %1903 = vmatmul.mubr.bf16.gmra.mrb[0].mxu0 %v634
      %v1904 = vpop.f32.mrb[0].mxu0
      %v1905 = vadd.f32 %v743, %v1904
      %v1906 = vpop.f32.mrb[0].mxu0
      %v1907 = vadd.f32 %v747, %v1906
      %v1908 = vpop.f32.mrb[0].mxu0
      %v1909 = vadd.f32 %v743, %v1908
      %v1910 = vpop.f32.mrb[0].mxu0
      %v1911 = vadd.f32 %v747, %v1910
      %1912 = vmatprep.mubr.bf16.mxu0 0
      %1913 = vmatmul.mubr.bf16.gmra.mrb[0].mxu0 %v635
      %v1914 = vpop.f32.mrb[0].mxu0
      %v1915 = vadd.f32 %v743, %v1914
      %v1916 = vpop.f32.mrb[0].mxu0
      %v1917 = vadd.f32 %v747, %v1916
      %v1918 = vpop.f32.mrb[0].mxu0
      %v1919 = vadd.f32 %v743, %v1918
      %v1920 = vpop.f32.mrb[0].mxu0
      %v1921 = vadd.f32 %v747, %v1920
      %1922 = vmatprep.mubr.bf16.mxu0 0
      %1923 = vmatmul.mubr.bf16.gmra.mrb[0].mxu0 %v636
      %v1924 = vpop.f32.mrb[0].mxu0
      %v1925 = vadd.f32 %v743, %v1924
      %v1926 = vpop.f32.mrb[0].mxu0
      %v1927 = vadd.f32 %v747, %v1926
      %v1928 = vpop.f32.mrb[0].mxu0
      %v1929 = vadd.f32 %v743, %v1928
      %v1930 = vpop.f32.mrb[0].mxu0
      %v1931 = vadd.f32 %v747, %v1930
      %1932 = vmatprep.mubr.bf16.mxu0 0
      %1933 = vmatmul.mubr.bf16.gmra.mrb[0].mxu0 %v637
      %v1934 = vpop.f32.mrb[0].mxu0
      %v1935 = vadd.f32 %v743, %v1934
      %v1936 = vpop.f32.mrb[0].mxu0
      %v1937 = vadd.f32 %v747, %v1936
      %v1938 = vpop.f32.mrb[0].mxu0
      %v1939 = vadd.f32 %v743, %v1938
      %v1940 = vpop.f32.mrb[0].mxu0
      %v1941 = vadd.f32 %v747, %v1940
      %1942 = vmatprep.mubr.bf16.mxu0 0
      %1943 = vmatmul.mubr.bf16.gmra.mrb[0].mxu0 %v638
      %v1944 = vpop.f32.mrb[0].mxu0
      %v1945 = vadd.f32 %v743, %v1944
      %v1946 = vpop.f32.mrb[0].mxu0
      %v1947 = vadd.f32 %v747, %v1946
      %v1948 = vpop.f32.mrb[0].mxu0
      %v1949 = vadd.f32 %v743, %v1948
      %v1950 = vpop.f32.mrb[0].mxu0
      %v1951 = vadd.f32 %v747, %v1950
      %1952 = vmatprep.mubr.bf16.mxu0 0
      %1953 = vmatmul.mubr.bf16.gmra.mrb[0].mxu0 %v639
      %v1954 = vpop.f32.mrb[0].mxu0
      %v1955 = vadd.f32 %v743, %v1954
      %v1956 = vpop.f32.mrb[0].mxu0
      %v1957 = vadd.f32 %v747, %v1956
      %v1958 = vpop.f32.mrb[0].mxu0
      %v1959 = vadd.f32 %v743, %v1958
      %v1960 = vpop.f32.mrb[0].mxu0
      %v1961 = vadd.f32 %v747, %v1960
      %1962 = vmatprep.mubr.bf16.mxu0 0
      %1963 = vmatmul.mubr.bf16.gmra.mrb[0].mxu0 %v640
      %v1964 = vpop.f32.mrb[0].mxu0
      %v1965 = vadd.f32 %v743, %v1964
      %v1966 = vpop.f32.mrb[0].mxu0
      %v1967 = vadd.f32 %v747, %v1966
      %v1968 = vpop.f32.mrb[0].mxu0
      %v1969 = vadd.f32 %v743, %v1968
      %v1970 = vpop.f32.mrb[0].mxu0
      %v1971 = vadd.f32 %v747, %v1970
      %1972 = vmatprep.mubr.bf16.mxu0 0
      %1973 = vmatmul.mubr.bf16.gmra.mrb[0].mxu0 %v641
      %v1974 = vpop.f32.mrb[0].mxu0
      %v1975 = vadd.f32 %v743, %v1974
      %v1976 = vpop.f32.mrb[0].mxu0
      %v1977 = vadd.f32 %v747, %v1976
      %v1978 = vpop.f32.mrb[0].mxu0
      %v1979 = vadd.f32 %v743, %v1978
      %v1980 = vpop.f32.mrb[0].mxu0
      %v1981 = vadd.f32 %v747, %v1980
      %1982 = vmatprep.mubr.bf16.mxu0 0
      %1983 = vmatmul.mubr.bf16.gmra.mrb[0].mxu0 %v642
      %v1984 = vpop.f32.mrb[0].mxu0
      %v1985 = vadd.f32 %v743, %v1984
      %v1986 = vpop.f32.mrb[0].mxu0
      %v1987 = vadd.f32 %v747, %v1986
      %v1988 = vpop.f32.mrb[0].mxu0
      %v1989 = vadd.f32 %v743, %v1988
      %v1990 = vpop.f32.mrb[0].mxu0
      %v1991 = vadd.f32 %v747, %v1990
      %1992 = vmatprep.mubr.bf16.mxu0 0
      %1993 = vmatmul.mubr.bf16.gmra.mrb[0].mxu0 %v643
      %v1994 = vpop.f32.mrb[0].mxu0
      %v1995 = vadd.f32 %v743, %v1994
      %v1996 = vpop.f32.mrb[0].mxu0
      %v1997 = vadd.f32 %v747, %v1996
      %v1998 = vpop.f32.mrb[0].mxu0
      %v1999 = vadd.f32 %v743, %v1998
      %v2000 = vpop.f32.mrb[0].mxu0
      %v2001 = vadd.f32 %v747, %v2000
      %2002 = vmatprep.mubr.bf16.mxu0 0
      %2003 = vmatmul.mubr.bf16.gmra.mrb[0].mxu0 %v644
      %v2004 = vpop.f32.mrb[0].mxu0
      %v2005 = vadd.f32 %v743, %v2004
      %v2006 = vpop.f32.mrb[0].mxu0
      %v2007 = vadd.f32 %v747, %v2006
      %v2008 = vpop.f32.mrb[0].mxu0
      %v2009 = vadd.f32 %v743, %v2008
      %v2010 = vpop.f32.mrb[0].mxu0
      %v2011 = vadd.f32 %v747, %v2010
      %2012 = vmatprep.mubr.bf16.mxu0 0
      %2013 = vmatmul.mubr.bf16.gmra.mrb[0].mxu0 %v645
      %v2014 = vpop.f32.mrb[0].mxu0
      %v2015 = vadd.f32 %v743, %v2014
      %v2016 = vpop.f32.mrb[0].mxu0
      %v2017 = vadd.f32 %v747, %v2016
      %v2018 = vpop.f32.mrb[0].mxu0
      %v2019 = vadd.f32 %v743, %v2018
      %v2020 = vpop.f32.mrb[0].mxu0
      %v2021 = vadd.f32 %v747, %v2020
      %2022 = vmatprep.mubr.bf16.mxu0 0
      %2023 = vmatmul.mubr.bf16.gmra.mrb[0].mxu0 %v646
      %v2024 = vpop.f32.mrb[0].mxu0
      %v2025 = vadd.f32 %v743, %v2024
      %v2026 = vpop.f32.mrb[0].mxu0
      %v2027 = vadd.f32 %v747, %v2026
      %v2028 = vpop.f32.mrb[0].mxu0
      %v2029 = vadd.f32 %v743, %v2028
      %v2030 = vpop.f32.mrb[0].mxu0
      %v2031 = vadd.f32 %v747, %v2030
      %2032 = vmatprep.mubr.bf16.mxu0 0
      %2033 = vmatmul.mubr.bf16.gmra.mrb[0].mxu0 %v647
      %v2034 = vpop.f32.mrb[0].mxu0
      %v2035 = vadd.f32 %v743, %v2034
      %v2036 = vpop.f32.mrb[0].mxu0
      %v2037 = vadd.f32 %v747, %v2036
      %v2038 = vpop.f32.mrb[0].mxu0
      %v2039 = vadd.f32 %v743, %v2038
      %v2040 = vpop.f32.mrb[0].mxu0
      %v2041 = vadd.f32 %v747, %v2040
      %2042 = vmatprep.mubr.bf16.mxu0 0
      %2043 = vmatmul.mubr.bf16.gmra.mrb[0].mxu0 %v648
      %v2044 = vpop.f32.mrb[0].mxu0
      %v2045 = vadd.f32 %v743, %v2044
      %v2046 = vpop.f32.mrb[0].mxu0
      %v2047 = vadd.f32 %v747, %v2046
      %v2048 = vpop.f32.mrb[0].mxu0
      %v2049 = vadd.f32 %v743, %v2048
      %v2050 = vpop.f32.mrb[0].mxu0
      %v2051 = vadd.f32 %v747, %v2050
      %2052 = vmatprep.mubr.bf16.mxu0 0
      %2053 = vmatmul.mubr.bf16.gmra.mrb[0].mxu0 %v649
      %v2054 = vpop.f32.mrb[0].mxu0
      %v2055 = vadd.f32 %v743, %v2054
      %v2056 = vpop.f32.mrb[0].mxu0
      %v2057 = vadd.f32 %v747, %v2056
      %v2058 = vpop.f32.mrb[0].mxu0
      %v2059 = vadd.f32 %v743, %v2058
      %v2060 = vpop.f32.mrb[0].mxu0
      %v2061 = vadd.f32 %v747, %v2060
      %2062 = vmatprep.mubr.bf16.mxu0 0
      %2063 = vmatmul.mubr.bf16.gmra.mrb[0].mxu0 %v650
      %v2064 = vpop.f32.mrb[0].mxu0
      %v2065 = vadd.f32 %v743, %v2064
      %v2066 = vpop.f32.mrb[0].mxu0
      %v2067 = vadd.f32 %v747, %v2066
      %v2068 = vpop.f32.mrb[0].mxu0
      %v2069 = vadd.f32 %v743, %v2068
      %v2070 = vpop.f32.mrb[0].mxu0
      %v2071 = vadd.f32 %v747, %v2070
      %2072 = vmatprep.mubr.bf16.mxu0 0
      %2073 = vmatmul.mubr.bf16.gmra.mrb[0].mxu0 %v651
      %v2074 = vpop.f32.mrb[0].mxu0
      %v2075 = vadd.f32 %v743, %v2074
      %v2076 = vpop.f32.mrb[0].mxu0
      %v2077 = vadd.f32 %v747, %v2076
      %v2078 = vpop.f32.mrb[0].mxu0
      %v2079 = vadd.f32 %v743, %v2078
      %v2080 = vpop.f32.mrb[0].mxu0
      %v2081 = vadd.f32 %v747, %v2080
      %2082 = vmatprep.mubr.bf16.mxu0 0
      %2083 = vmatmul.mubr.bf16.gmra.mrb[0].mxu0 %v652
      %v2084 = vpop.f32.mrb[0].mxu0
      %v2085 = vadd.f32 %v743, %v2084
      %v2086 = vpop.f32.mrb[0].mxu0
      %v2087 = vadd.f32 %v747, %v2086
      %v2088 = vpop.f32.mrb[0].mxu0
      %v2089 = vadd.f32 %v743, %v2088
      %v2090 = vpop.f32.mrb[0].mxu0
      %v2091 = vadd.f32 %v747, %v2090
      %2092 = vmatprep.mubr.bf16.mxu0 0
      %2093 = vmatmul.mubr.bf16.gmra.mrb[0].mxu0 %v653
      %v2094 = vpop.f32.mrb[0].mxu0
      %v2095 = vadd.f32 %v743, %v2094
      %v2096 = vpop.f32.mrb[0].mxu0
      %v2097 = vadd.f32 %v747, %v2096
      %v2098 = vpop.f32.mrb[0].mxu0
      %v2099 = vadd.f32 %v743, %v2098
      %v2100 = vpop.f32.mrb[0].mxu0
      %v2101 = vadd.f32 %v747, %v2100
      %2102 = vmatprep.mubr.bf16.mxu0 0
      %2103 = vmatmul.mubr.bf16.gmra.mrb[0].mxu0 %v654
      %v2104 = vpop.f32.mrb[0].mxu0
      %v2105 = vadd.f32 %v743, %v2104
      %v2106 = vpop.f32.mrb[0].mxu0
      %v2107 = vadd.f32 %v747, %v2106
      %v2108 = vpop.f32.mrb[0].mxu0
      %v2109 = vadd.f32 %v743, %v2108
      %v2110 = vpop.f32.mrb[0].mxu0
      %v2111 = vadd.f32 %v747, %v2110
      %2112 = vmatprep.mubr.bf16.mxu0 0
      %2113 = vmatmul.mubr.bf16.gmra.mrb[0].mxu0 %v655
      %v2114 = vpop.f32.mrb[0].mxu0
      %v2115 = vadd.f32 %v743, %v2114
      %v2116 = vpop.f32.mrb[0].mxu0
      %v2117 = vadd.f32 %v747, %v2116
      %v2118 = vpop.f32.mrb[0].mxu0
      %v2119 = vadd.f32 %v743, %v2118
      %v2120 = vpop.f32.mrb[0].mxu0
      %v2121 = vadd.f32 %v747, %v2120
      %2122 = vmatprep.mubr.bf16.mxu0 0
      %2123 = vmatmul.mubr.bf16.gmra.mrb[0].mxu0 %v656
      %v2124 = vpop.f32.mrb[0].mxu0
      %v2125 = vadd.f32 %v743, %v2124
      %v2126 = vpop.f32.mrb[0].mxu0
      %v2127 = vadd.f32 %v747, %v2126
      %v2128 = vpop.f32.mrb[0].mxu0
      %v2129 = vadd.f32 %v743, %v2128
      %v2130 = vpop.f32.mrb[0].mxu0
      %v2131 = vadd.f32 %v747, %v2130
      %2132 = vmatprep.mubr.bf16.mxu0 0
      %2133 = vmatmul.mubr.bf16.gmra.mrb[0].mxu0 %v657
      %v2134 = vpop.f32.mrb[0].mxu0
      %v2135 = vadd.f32 %v743, %v2134
      %v2136 = vpop.f32.mrb[0].mxu0
      %v2137 = vadd.f32 %v747, %v2136
      %v2138 = vpop.f32.mrb[0].mxu0
      %v2139 = vadd.f32 %v743, %v2138
      %v2140 = vpop.f32.mrb[0].mxu0
      %v2141 = vadd.f32 %v747, %v2140
      %2142 = vdwg.mxu0
      %2143 = vmatprep.subr.bf16.mxu0 %v963
      %2144 = vmatpush1.bf16.msra.mxu0 %v962
      %2145 = vmatprep.subr.bf16.mxu0 %v971
      %2146 = vmatpush1.bf16.msra.mxu0 %v970
      %2147 = vmatprep.subr.bf16.mxu0 %v979
      %2148 = vmatpush1.bf16.msra.mxu0 %v978
      %2149 = vmatprep.subr.bf16.mxu0 %v987
      %2150 = vmatpush1.bf16.msra.mxu0 %v986
      %2151 = vmatprep.subr.bf16.mxu0 %v995
      %2152 = vmatpush1.bf16.msra.mxu0 %v994
      %2153 = vmatprep.subr.bf16.mxu0 %v1003
      %2154 = vmatpush1.bf16.msra.mxu0 %v1002
      %2155 = vmatprep.subr.bf16.mxu0 %v1011
      %2156 = vmatpush1.bf16.msra.mxu0 %v1010
      %2157 = vmatprep.subr.bf16.mxu0 %v1019
      %2158 = vmatpush1.bf16.msra.mxu0 %v1018
      %2159 = vmatprep.subr.bf16.mxu0 0
      %2160 = vmatpush1.bf16.msra.mxu0 0
      %2161 = vmatprep.subr.bf16.mxu0 0
      %2162 = vmatpush1.bf16.msra.mxu0 0
      %2163 = vmatprep.subr.bf16.mxu0 0
      %2164 = vmatpush1.bf16.msra.mxu0 0
      %2165 = vmatprep.subr.bf16.mxu0 0
      %2166 = vmatpush1.bf16.msra.mxu0 0
      %2167 = vmatprep.subr.bf16.mxu0 0
      %2168 = vmatpush1.bf16.msra.mxu0 0
      %2169 = vmatprep.subr.bf16.mxu0 0
      %2170 = vmatpush1.bf16.msra.mxu0 0
      %2171 = vmatprep.subr.bf16.mxu0 0
      %2172 = vmatpush1.bf16.msra.mxu0 0
      %2173 = vmatprep.subr.bf16.mxu0 0
      %2174 = vmatpush1.bf16.msra.mxu0 0
      %2175 = vmatprep.mubr.bf16.mxu0 0
      %2176 = vmatmul.mubr.bf16.gmra.mrb[0].mxu0 %v626
      %v2177 = vpop.f32.mrb[0].mxu0
      %v2178 = vadd.f32 %v751, %v2177
      %v2179 = vpop.f32.mrb[0].mxu0
      %v2180 = vadd.f32 %v755, %v2179
      %v2181 = vpop.f32.mrb[0].mxu0
      %v2182 = vadd.f32 %v751, %v2181
      %v2183 = vpop.f32.mrb[0].mxu0
      %v2184 = vadd.f32 %v755, %v2183
      %2185 = vmatprep.mubr.bf16.mxu0 0
      %2186 = vmatmul.mubr.bf16.gmra.mrb[0].mxu0 %v627
      %v2187 = vpop.f32.mrb[0].mxu0
      %v2188 = vadd.f32 %v751, %v2187
      %v2189 = vpop.f32.mrb[0].mxu0
      %v2190 = vadd.f32 %v755, %v2189
      %v2191 = vpop.f32.mrb[0].mxu0
      %v2192 = vadd.f32 %v751, %v2191
      %v2193 = vpop.f32.mrb[0].mxu0
      %v2194 = vadd.f32 %v755, %v2193
      %2195 = vmatprep.mubr.bf16.mxu0 0
      %2196 = vmatmul.mubr.bf16.gmra.mrb[0].mxu0 %v628
      %v2197 = vpop.f32.mrb[0].mxu0
      %v2198 = vadd.f32 %v751, %v2197
      %v2199 = vpop.f32.mrb[0].mxu0
      %v2200 = vadd.f32 %v755, %v2199
      %v2201 = vpop.f32.mrb[0].mxu0
      %v2202 = vadd.f32 %v751, %v2201
      %v2203 = vpop.f32.mrb[0].mxu0
      %v2204 = vadd.f32 %v755, %v2203
      %2205 = vmatprep.mubr.bf16.mxu0 0
      %2206 = vmatmul.mubr.bf16.gmra.mrb[0].mxu0 %v629
      %v2207 = vpop.f32.mrb[0].mxu0
      %v2208 = vadd.f32 %v751, %v2207
      %v2209 = vpop.f32.mrb[0].mxu0
      %v2210 = vadd.f32 %v755, %v2209
      %v2211 = vpop.f32.mrb[0].mxu0
      %v2212 = vadd.f32 %v751, %v2211
      %v2213 = vpop.f32.mrb[0].mxu0
      %v2214 = vadd.f32 %v755, %v2213
      %2215 = vmatprep.mubr.bf16.mxu0 0
      %2216 = vmatmul.mubr.bf16.gmra.mrb[0].mxu0 %v630
      %v2217 = vpop.f32.mrb[0].mxu0
      %v2218 = vadd.f32 %v751, %v2217
      %v2219 = vpop.f32.mrb[0].mxu0
      %v2220 = vadd.f32 %v755, %v2219
      %v2221 = vpop.f32.mrb[0].mxu0
      %v2222 = vadd.f32 %v751, %v2221
      %v2223 = vpop.f32.mrb[0].mxu0
      %v2224 = vadd.f32 %v755, %v2223
      %2225 = vmatprep.mubr.bf16.mxu0 0
      %2226 = vmatmul.mubr.bf16.gmra.mrb[0].mxu0 %v631
      %v2227 = vpop.f32.mrb[0].mxu0
      %v2228 = vadd.f32 %v751, %v2227
      %v2229 = vpop.f32.mrb[0].mxu0
      %v2230 = vadd.f32 %v755, %v2229
      %v2231 = vpop.f32.mrb[0].mxu0
      %v2232 = vadd.f32 %v751, %v2231
      %v2233 = vpop.f32.mrb[0].mxu0
      %v2234 = vadd.f32 %v755, %v2233
      %2235 = vmatprep.mubr.bf16.mxu0 0
      %2236 = vmatmul.mubr.bf16.gmra.mrb[0].mxu0 %v632
      %v2237 = vpop.f32.mrb[0].mxu0
      %v2238 = vadd.f32 %v751, %v2237
      %v2239 = vpop.f32.mrb[0].mxu0
      %v2240 = vadd.f32 %v755, %v2239
      %v2241 = vpop.f32.mrb[0].mxu0
      %v2242 = vadd.f32 %v751, %v2241
      %v2243 = vpop.f32.mrb[0].mxu0
      %v2244 = vadd.f32 %v755, %v2243
      %2245 = vmatprep.mubr.bf16.mxu0 0
      %2246 = vmatmul.mubr.bf16.gmra.mrb[0].mxu0 %v633
      %v2247 = vpop.f32.mrb[0].mxu0
      %v2248 = vadd.f32 %v751, %v2247
      %v2249 = vpop.f32.mrb[0].mxu0
      %v2250 = vadd.f32 %v755, %v2249
      %v2251 = vpop.f32.mrb[0].mxu0
      %v2252 = vadd.f32 %v751, %v2251
      %v2253 = vpop.f32.mrb[0].mxu0
      %v2254 = vadd.f32 %v755, %v2253
      %2255 = vmatprep.mubr.bf16.mxu0 0
      %2256 = vmatmul.mubr.bf16.gmra.mrb[0].mxu0 %v634
      %v2257 = vpop.f32.mrb[0].mxu0
      %v2258 = vadd.f32 %v751, %v2257
      %v2259 = vpop.f32.mrb[0].mxu0
      %v2260 = vadd.f32 %v755, %v2259
      %v2261 = vpop.f32.mrb[0].mxu0
      %v2262 = vadd.f32 %v751, %v2261
      %v2263 = vpop.f32.mrb[0].mxu0
      %v2264 = vadd.f32 %v755, %v2263
      %2265 = vmatprep.mubr.bf16.mxu0 0
      %2266 = vmatmul.mubr.bf16.gmra.mrb[0].mxu0 %v635
      %v2267 = vpop.f32.mrb[0].mxu0
      %v2268 = vadd.f32 %v751, %v2267
      %v2269 = vpop.f32.mrb[0].mxu0
      %v2270 = vadd.f32 %v755, %v2269
      %v2271 = vpop.f32.mrb[0].mxu0
      %v2272 = vadd.f32 %v751, %v2271
      %v2273 = vpop.f32.mrb[0].mxu0
      %v2274 = vadd.f32 %v755, %v2273
      %2275 = vmatprep.mubr.bf16.mxu0 0
      %2276 = vmatmul.mubr.bf16.gmra.mrb[0].mxu0 %v636
      %v2277 = vpop.f32.mrb[0].mxu0
      %v2278 = vadd.f32 %v751, %v2277
      %v2279 = vpop.f32.mrb[0].mxu0
      %v2280 = vadd.f32 %v755, %v2279
      %v2281 = vpop.f32.mrb[0].mxu0
      %v2282 = vadd.f32 %v751, %v2281
      %v2283 = vpop.f32.mrb[0].mxu0
      %v2284 = vadd.f32 %v755, %v2283
      %2285 = vmatprep.mubr.bf16.mxu0 0
      %2286 = vmatmul.mubr.bf16.gmra.mrb[0].mxu0 %v637
      %v2287 = vpop.f32.mrb[0].mxu0
      %v2288 = vadd.f32 %v751, %v2287
      %v2289 = vpop.f32.mrb[0].mxu0
      %v2290 = vadd.f32 %v755, %v2289
      %v2291 = vpop.f32.mrb[0].mxu0
      %v2292 = vadd.f32 %v751, %v2291
      %v2293 = vpop.f32.mrb[0].mxu0
      %v2294 = vadd.f32 %v755, %v2293
      %2295 = vmatprep.mubr.bf16.mxu0 0
      %2296 = vmatmul.mubr.bf16.gmra.mrb[0].mxu0 %v638
      %v2297 = vpop.f32.mrb[0].mxu0
      %v2298 = vadd.f32 %v751, %v2297
      %v2299 = vpop.f32.mrb[0].mxu0
      %v2300 = vadd.f32 %v755, %v2299
      %v2301 = vpop.f32.mrb[0].mxu0
      %v2302 = vadd.f32 %v751, %v2301
      %v2303 = vpop.f32.mrb[0].mxu0
      %v2304 = vadd.f32 %v755, %v2303
      %2305 = vmatprep.mubr.bf16.mxu0 0
      %2306 = vmatmul.mubr.bf16.gmra.mrb[0].mxu0 %v639
      %v2307 = vpop.f32.mrb[0].mxu0
      %v2308 = vadd.f32 %v751, %v2307
      %v2309 = vpop.f32.mrb[0].mxu0
      %v2310 = vadd.f32 %v755, %v2309
      %v2311 = vpop.f32.mrb[0].mxu0
      %v2312 = vadd.f32 %v751, %v2311
      %v2313 = vpop.f32.mrb[0].mxu0
      %v2314 = vadd.f32 %v755, %v2313
      %2315 = vmatprep.mubr.bf16.mxu0 0
      %2316 = vmatmul.mubr.bf16.gmra.mrb[0].mxu0 %v640
      %v2317 = vpop.f32.mrb[0].mxu0
      %v2318 = vadd.f32 %v751, %v2317
      %v2319 = vpop.f32.mrb[0].mxu0
      %v2320 = vadd.f32 %v755, %v2319
      %v2321 = vpop.f32.mrb[0].mxu0
      %v2322 = vadd.f32 %v751, %v2321
      %v2323 = vpop.f32.mrb[0].mxu0
      %v2324 = vadd.f32 %v755, %v2323
      %2325 = vmatprep.mubr.bf16.mxu0 0
      %2326 = vmatmul.mubr.bf16.gmra.mrb[0].mxu0 %v641
      %v2327 = vpop.f32.mrb[0].mxu0
      %v2328 = vadd.f32 %v751, %v2327
      %v2329 = vpop.f32.mrb[0].mxu0
      %v2330 = vadd.f32 %v755, %v2329
      %v2331 = vpop.f32.mrb[0].mxu0
      %v2332 = vadd.f32 %v751, %v2331
      %v2333 = vpop.f32.mrb[0].mxu0
      %v2334 = vadd.f32 %v755, %v2333
      %2335 = vmatprep.mubr.bf16.mxu0 0
      %2336 = vmatmul.mubr.bf16.gmra.mrb[0].mxu0 %v642
      %v2337 = vpop.f32.mrb[0].mxu0
      %v2338 = vadd.f32 %v751, %v2337
      %v2339 = vpop.f32.mrb[0].mxu0
      %v2340 = vadd.f32 %v755, %v2339
      %v2341 = vpop.f32.mrb[0].mxu0
      %v2342 = vadd.f32 %v751, %v2341
      %v2343 = vpop.f32.mrb[0].mxu0
      %v2344 = vadd.f32 %v755, %v2343
      %2345 = vmatprep.mubr.bf16.mxu0 0
      %2346 = vmatmul.mubr.bf16.gmra.mrb[0].mxu0 %v643
      %v2347 = vpop.f32.mrb[0].mxu0
      %v2348 = vadd.f32 %v751, %v2347
      %v2349 = vpop.f32.mrb[0].mxu0
      %v2350 = vadd.f32 %v755, %v2349
      %v2351 = vpop.f32.mrb[0].mxu0
      %v2352 = vadd.f32 %v751, %v2351
      %v2353 = vpop.f32.mrb[0].mxu0
      %v2354 = vadd.f32 %v755, %v2353
      %2355 = vmatprep.mubr.bf16.mxu0 0
      %2356 = vmatmul.mubr.bf16.gmra.mrb[0].mxu0 %v644
      %v2357 = vpop.f32.mrb[0].mxu0
      %v2358 = vadd.f32 %v751, %v2357
      %v2359 = vpop.f32.mrb[0].mxu0
      %v2360 = vadd.f32 %v755, %v2359
      %v2361 = vpop.f32.mrb[0].mxu0
      %v2362 = vadd.f32 %v751, %v2361
      %v2363 = vpop.f32.mrb[0].mxu0
      %v2364 = vadd.f32 %v755, %v2363
      %2365 = vmatprep.mubr.bf16.mxu0 0
      %2366 = vmatmul.mubr.bf16.gmra.mrb[0].mxu0 %v645
      %v2367 = vpop.f32.mrb[0].mxu0
      %v2368 = vadd.f32 %v751, %v2367
      %v2369 = vpop.f32.mrb[0].mxu0
      %v2370 = vadd.f32 %v755, %v2369
      %v2371 = vpop.f32.mrb[0].mxu0
      %v2372 = vadd.f32 %v751, %v2371
      %v2373 = vpop.f32.mrb[0].mxu0
      %v2374 = vadd.f32 %v755, %v2373
      %2375 = vmatprep.mubr.bf16.mxu0 0
      %2376 = vmatmul.mubr.bf16.gmra.mrb[0].mxu0 %v646
      %v2377 = vpop.f32.mrb[0].mxu0
      %v2378 = vadd.f32 %v751, %v2377
      %v2379 = vpop.f32.mrb[0].mxu0
      %v2380 = vadd.f32 %v755, %v2379
      %v2381 = vpop.f32.mrb[0].mxu0
      %v2382 = vadd.f32 %v751, %v2381
      %v2383 = vpop.f32.mrb[0].mxu0
      %v2384 = vadd.f32 %v755, %v2383
      %2385 = vmatprep.mubr.bf16.mxu0 0
      %2386 = vmatmul.mubr.bf16.gmra.mrb[0].mxu0 %v647
      %v2387 = vpop.f32.mrb[0].mxu0
      %v2388 = vadd.f32 %v751, %v2387
      %v2389 = vpop.f32.mrb[0].mxu0
      %v2390 = vadd.f32 %v755, %v2389
      %v2391 = vpop.f32.mrb[0].mxu0
      %v2392 = vadd.f32 %v751, %v2391
      %v2393 = vpop.f32.mrb[0].mxu0
      %v2394 = vadd.f32 %v755, %v2393
      %2395 = vmatprep.mubr.bf16.mxu0 0
      %2396 = vmatmul.mubr.bf16.gmra.mrb[0].mxu0 %v648
      %v2397 = vpop.f32.mrb[0].mxu0
      %v2398 = vadd.f32 %v751, %v2397
      %v2399 = vpop.f32.mrb[0].mxu0
      %v2400 = vadd.f32 %v755, %v2399
      %v2401 = vpop.f32.mrb[0].mxu0
      %v2402 = vadd.f32 %v751, %v2401
      %v2403 = vpop.f32.mrb[0].mxu0
      %v2404 = vadd.f32 %v755, %v2403
      %2405 = vmatprep.mubr.bf16.mxu0 0
      %2406 = vmatmul.mubr.bf16.gmra.mrb[0].mxu0 %v649
      %v2407 = vpop.f32.mrb[0].mxu0
      %v2408 = vadd.f32 %v751, %v2407
      %v2409 = vpop.f32.mrb[0].mxu0
      %v2410 = vadd.f32 %v755, %v2409
      %v2411 = vpop.f32.mrb[0].mxu0
      %v2412 = vadd.f32 %v751, %v2411
      %v2413 = vpop.f32.mrb[0].mxu0
      %v2414 = vadd.f32 %v755, %v2413
      %2415 = vmatprep.mubr.bf16.mxu0 0
      %2416 = vmatmul.mubr.bf16.gmra.mrb[0].mxu0 %v650
      %v2417 = vpop.f32.mrb[0].mxu0
      %v2418 = vadd.f32 %v751, %v2417
      %v2419 = vpop.f32.mrb[0].mxu0
      %v2420 = vadd.f32 %v755, %v2419
      %v2421 = vpop.f32.mrb[0].mxu0
      %v2422 = vadd.f32 %v751, %v2421
      %v2423 = vpop.f32.mrb[0].mxu0
      %v2424 = vadd.f32 %v755, %v2423
      %2425 = vmatprep.mubr.bf16.mxu0 0
      %2426 = vmatmul.mubr.bf16.gmra.mrb[0].mxu0 %v651
      %v2427 = vpop.f32.mrb[0].mxu0
      %v2428 = vadd.f32 %v751, %v2427
      %v2429 = vpop.f32.mrb[0].mxu0
      %v2430 = vadd.f32 %v755, %v2429
      %v2431 = vpop.f32.mrb[0].mxu0
      %v2432 = vadd.f32 %v751, %v2431
      %v2433 = vpop.f32.mrb[0].mxu0
      %v2434 = vadd.f32 %v755, %v2433
      %2435 = vmatprep.mubr.bf16.mxu0 0
      %2436 = vmatmul.mubr.bf16.gmra.mrb[0].mxu0 %v652
      %v2437 = vpop.f32.mrb[0].mxu0
      %v2438 = vadd.f32 %v751, %v2437
      %v2439 = vpop.f32.mrb[0].mxu0
      %v2440 = vadd.f32 %v755, %v2439
      %v2441 = vpop.f32.mrb[0].mxu0
      %v2442 = vadd.f32 %v751, %v2441
      %v2443 = vpop.f32.mrb[0].mxu0
      %v2444 = vadd.f32 %v755, %v2443
      %2445 = vmatprep.mubr.bf16.mxu0 0
      %2446 = vmatmul.mubr.bf16.gmra.mrb[0].mxu0 %v653
      %v2447 = vpop.f32.mrb[0].mxu0
      %v2448 = vadd.f32 %v751, %v2447
      %v2449 = vpop.f32.mrb[0].mxu0
      %v2450 = vadd.f32 %v755, %v2449
      %v2451 = vpop.f32.mrb[0].mxu0
      %v2452 = vadd.f32 %v751, %v2451
      %v2453 = vpop.f32.mrb[0].mxu0
      %v2454 = vadd.f32 %v755, %v2453
      %2455 = vmatprep.mubr.bf16.mxu0 0
      %2456 = vmatmul.mubr.bf16.gmra.mrb[0].mxu0 %v654
      %v2457 = vpop.f32.mrb[0].mxu0
      %v2458 = vadd.f32 %v751, %v2457
      %v2459 = vpop.f32.mrb[0].mxu0
      %v2460 = vadd.f32 %v755, %v2459
      %v2461 = vpop.f32.mrb[0].mxu0
      %v2462 = vadd.f32 %v751, %v2461
      %v2463 = vpop.f32.mrb[0].mxu0
      %v2464 = vadd.f32 %v755, %v2463
      %2465 = vmatprep.mubr.bf16.mxu0 0
      %2466 = vmatmul.mubr.bf16.gmra.mrb[0].mxu0 %v655
      %v2467 = vpop.f32.mrb[0].mxu0
      %v2468 = vadd.f32 %v751, %v2467
      %v2469 = vpop.f32.mrb[0].mxu0
      %v2470 = vadd.f32 %v755, %v2469
      %v2471 = vpop.f32.mrb[0].mxu0
      %v2472 = vadd.f32 %v751, %v2471
      %v2473 = vpop.f32.mrb[0].mxu0
      %v2474 = vadd.f32 %v755, %v2473
      %2475 = vmatprep.mubr.bf16.mxu0 0
      %2476 = vmatmul.mubr.bf16.gmra.mrb[0].mxu0 %v656
      %v2477 = vpop.f32.mrb[0].mxu0
      %v2478 = vadd.f32 %v751, %v2477
      %v2479 = vpop.f32.mrb[0].mxu0
      %v2480 = vadd.f32 %v755, %v2479
      %v2481 = vpop.f32.mrb[0].mxu0
      %v2482 = vadd.f32 %v751, %v2481
      %v2483 = vpop.f32.mrb[0].mxu0
      %v2484 = vadd.f32 %v755, %v2483
      %2485 = vmatprep.mubr.bf16.mxu0 0
      %2486 = vmatmul.mubr.bf16.gmra.mrb[0].mxu0 %v657
      %v2487 = vpop.f32.mrb[0].mxu0
      %v2488 = vadd.f32 %v751, %v2487
      %v2489 = vpop.f32.mrb[0].mxu0
      %v2490 = vadd.f32 %v755, %v2489
      %v2491 = vpop.f32.mrb[0].mxu0
      %v2492 = vadd.f32 %v751, %v2491
      %v2493 = vpop.f32.mrb[0].mxu0
      %v2494 = vadd.f32 %v755, %v2493
      %2495 = vdwg.mxu0
      %v2496 = vadd.f32 %v1119, %v1123
      %v2497 = vadd.f32 %v2496, %v1129
      %v2498 = vadd.f32 %v2497, %v1133
      %v2499 = vadd.f32 %v2498, %v1139
      %v2500 = vadd.f32 %v2499, %v1143
      %v2501 = vadd.f32 %v2500, %v1149
      %v2502 = vadd.f32 %v2501, %v1153
      %v2503 = vadd.f32 %v2502, %v1159
      %v2504 = vadd.f32 %v2503, %v1163
      %v2505 = vadd.f32 %v2504, %v1169
      %v2506 = vadd.f32 %v2505, %v1173
      %v2507 = vadd.f32 %v2506, %v1179
      %v2508 = vadd.f32 %v2507, %v1183
      %v2509 = vadd.f32 %v2508, %v1189
      %v2510 = vadd.f32 %v2509, %v1193
      %v2511 = vadd.f32 %v2510, %v1199
      %v2512 = vadd.f32 %v2511, %v1203
      %v2513 = vadd.f32 %v2512, %v1209
      %v2514 = vadd.f32 %v2513, %v1213
      %v2515 = vadd.f32 %v2514, %v1219
      %v2516 = vadd.f32 %v2515, %v1223
      %v2517 = vadd.f32 %v2516, %v1229
      %v2518 = vadd.f32 %v2517, %v1233
      %v2519 = vadd.f32 %v2518, %v1239
      %v2520 = vadd.f32 %v2519, %v1243
      %v2521 = vadd.f32 %v2520, %v1249
      %v2522 = vadd.f32 %v2521, %v1253
      %v2523 = vadd.f32 %v2522, %v1259
      %v2524 = vadd.f32 %v2523, %v1263
      %v2525 = vadd.f32 %v2524, %v1269
      %v2526 = vadd.f32 %v2525, %v1273
      %v2527 = vadd.f32 %v2526, %v1279
      %v2528 = vadd.f32 %v2527, %v1283
      %v2529 = vadd.f32 %v2528, %v1289
      %v2530 = vadd.f32 %v2529, %v1293
      %v2531 = vadd.f32 %v2530, %v1299
      %v2532 = vadd.f32 %v2531, %v1303
      %v2533 = vadd.f32 %v2532, %v1309
      %v2534 = vadd.f32 %v2533, %v1313
      %v2535 = vadd.f32 %v2534, %v1319
      %v2536 = vadd.f32 %v2535, %v1323
      %v2537 = vadd.f32 %v2536, %v1329
      %v2538 = vadd.f32 %v2537, %v1333
      %v2539 = vadd.f32 %v2538, %v1339
      %v2540 = vadd.f32 %v2539, %v1343
      %v2541 = vadd.f32 %v2540, %v1349
      %v2542 = vadd.f32 %v2541, %v1353
      %v2543 = vadd.f32 %v2542, %v1359
      %v2544 = vadd.f32 %v2543, %v1363
      %v2545 = vadd.f32 %v2544, %v1369
      %v2546 = vadd.f32 %v2545, %v1373
      %v2547 = vadd.f32 %v2546, %v1379
      %v2548 = vadd.f32 %v2547, %v1383
      %v2549 = vadd.f32 %v2548, %v1389
      %v2550 = vadd.f32 %v2549, %v1393
      %v2551 = vadd.f32 %v2550, %v1399
      %v2552 = vadd.f32 %v2551, %v1403
      %v2553 = vadd.f32 %v2552, %v1409
      %v2554 = vadd.f32 %v2553, %v1413
      %v2555 = vadd.f32 %v2554, %v1419
      %v2556 = vadd.f32 %v2555, %v1423
      %v2557 = vadd.f32 %v2556, %v1429
      %v2558 = vadd.f32 %v2557, %v1433
      %v2559 = vrot.slane %v2558, 4
      %v2560 = vadd.f32 %v2558, %v2559
      %v2561 = vrot.slane %v2560, 2
      %v2562 = vadd.f32 %v2560, %v2561
      %v2563 = vrot.slane %v2562, 1
      %v2564 = vadd.f32 %v2562, %v2563
      %v2565 = vadd.f32 %v1121, %v1125
      %v2566 = vadd.f32 %v2565, %v1131
      %v2567 = vadd.f32 %v2566, %v1135
      %v2568 = vadd.f32 %v2567, %v1141
      %v2569 = vadd.f32 %v2568, %v1145
      %v2570 = vadd.f32 %v2569, %v1151
      %v2571 = vadd.f32 %v2570, %v1155
      %v2572 = vadd.f32 %v2571, %v1161
      %v2573 = vadd.f32 %v2572, %v1165
      %v2574 = vadd.f32 %v2573, %v1171
      %v2575 = vadd.f32 %v2574, %v1175
      %v2576 = vadd.f32 %v2575, %v1181
      %v2577 = vadd.f32 %v2576, %v1185
      %v2578 = vadd.f32 %v2577, %v1191
      %v2579 = vadd.f32 %v2578, %v1195
      %v2580 = vadd.f32 %v2579, %v1201
      %v2581 = vadd.f32 %v2580, %v1205
      %v2582 = vadd.f32 %v2581, %v1211
      %v2583 = vadd.f32 %v2582, %v1215
      %v2584 = vadd.f32 %v2583, %v1221
      %v2585 = vadd.f32 %v2584, %v1225
      %v2586 = vadd.f32 %v2585, %v1231
      %v2587 = vadd.f32 %v2586, %v1235
      %v2588 = vadd.f32 %v2587, %v1241
      %v2589 = vadd.f32 %v2588, %v1245
      %v2590 = vadd.f32 %v2589, %v1251
      %v2591 = vadd.f32 %v2590, %v1255
      %v2592 = vadd.f32 %v2591, %v1261
      %v2593 = vadd.f32 %v2592, %v1265
      %v2594 = vadd.f32 %v2593, %v1271
      %v2595 = vadd.f32 %v2594, %v1275
      %v2596 = vadd.f32 %v2595, %v1281
      %v2597 = vadd.f32 %v2596, %v1285
      %v2598 = vadd.f32 %v2597, %v1291
      %v2599 = vadd.f32 %v2598, %v1295
      %v2600 = vadd.f32 %v2599, %v1301
      %v2601 = vadd.f32 %v2600, %v1305
      %v2602 = vadd.f32 %v2601, %v1311
      %v2603 = vadd.f32 %v2602, %v1315
      %v2604 = vadd.f32 %v2603, %v1321
      %v2605 = vadd.f32 %v2604, %v1325
      %v2606 = vadd.f32 %v2605, %v1331
      %v2607 = vadd.f32 %v2606, %v1335
      %v2608 = vadd.f32 %v2607, %v1341
      %v2609 = vadd.f32 %v2608, %v1345
      %v2610 = vadd.f32 %v2609, %v1351
      %v2611 = vadd.f32 %v2610, %v1355
      %v2612 = vadd.f32 %v2611, %v1361
      %v2613 = vadd.f32 %v2612, %v1365
      %v2614 = vadd.f32 %v2613, %v1371
      %v2615 = vadd.f32 %v2614, %v1375
      %v2616 = vadd.f32 %v2615, %v1381
      %v2617 = vadd.f32 %v2616, %v1385
      %v2618 = vadd.f32 %v2617, %v1391
      %v2619 = vadd.f32 %v2618, %v1395
      %v2620 = vadd.f32 %v2619, %v1401
      %v2621 = vadd.f32 %v2620, %v1405
      %v2622 = vadd.f32 %v2621, %v1411
      %v2623 = vadd.f32 %v2622, %v1415
      %v2624 = vadd.f32 %v2623, %v1421
      %v2625 = vadd.f32 %v2624, %v1425
      %v2626 = vadd.f32 %v2625, %v1431
      %v2627 = vadd.f32 %v2626, %v1435
      %v2628 = vrot.slane %v2627, 4
      %v2629 = vadd.f32 %v2627, %v2628
      %v2630 = vrot.slane %v2629, 2
      %v2631 = vadd.f32 %v2629, %v2630
      %v2632 = vrot.slane %v2631, 1
      %v2633 = vadd.f32 %v2631, %v2632
      %v2634 = vadd.f32 %v1472, %v1476
      %v2635 = vadd.f32 %v2634, %v1482
      %v2636 = vadd.f32 %v2635, %v1486
      %v2637 = vadd.f32 %v2636, %v1492
      %v2638 = vadd.f32 %v2637, %v1496
      %v2639 = vadd.f32 %v2638, %v1502
      %v2640 = vadd.f32 %v2639, %v1506
      %v2641 = vadd.f32 %v2640, %v1512
      %v2642 = vadd.f32 %v2641, %v1516
      %v2643 = vadd.f32 %v2642, %v1522
      %v2644 = vadd.f32 %v2643, %v1526
      %v2645 = vadd.f32 %v2644, %v1532
      %v2646 = vadd.f32 %v2645, %v1536
      %v2647 = vadd.f32 %v2646, %v1542
      %v2648 = vadd.f32 %v2647, %v1546
      %v2649 = vadd.f32 %v2648, %v1552
      %v2650 = vadd.f32 %v2649, %v1556
      %v2651 = vadd.f32 %v2650, %v1562
      %v2652 = vadd.f32 %v2651, %v1566
      %v2653 = vadd.f32 %v2652, %v1572
      %v2654 = vadd.f32 %v2653, %v1576
      %v2655 = vadd.f32 %v2654, %v1582
      %v2656 = vadd.f32 %v2655, %v1586
      %v2657 = vadd.f32 %v2656, %v1592
      %v2658 = vadd.f32 %v2657, %v1596
      %v2659 = vadd.f32 %v2658, %v1602
      %v2660 = vadd.f32 %v2659, %v1606
      %v2661 = vadd.f32 %v2660, %v1612
      %v2662 = vadd.f32 %v2661, %v1616
      %v2663 = vadd.f32 %v2662, %v1622
      %v2664 = vadd.f32 %v2663, %v1626
      %v2665 = vadd.f32 %v2664, %v1632
      %v2666 = vadd.f32 %v2665, %v1636
      %v2667 = vadd.f32 %v2666, %v1642
      %v2668 = vadd.f32 %v2667, %v1646
      %v2669 = vadd.f32 %v2668, %v1652
      %v2670 = vadd.f32 %v2669, %v1656
      %v2671 = vadd.f32 %v2670, %v1662
      %v2672 = vadd.f32 %v2671, %v1666
      %v2673 = vadd.f32 %v2672, %v1672
      %v2674 = vadd.f32 %v2673, %v1676
      %v2675 = vadd.f32 %v2674, %v1682
      %v2676 = vadd.f32 %v2675, %v1686
      %v2677 = vadd.f32 %v2676, %v1692
      %v2678 = vadd.f32 %v2677, %v1696
      %v2679 = vadd.f32 %v2678, %v1702
      %v2680 = vadd.f32 %v2679, %v1706
      %v2681 = vadd.f32 %v2680, %v1712
      %v2682 = vadd.f32 %v2681, %v1716
      %v2683 = vadd.f32 %v2682, %v1722
      %v2684 = vadd.f32 %v2683, %v1726
      %v2685 = vadd.f32 %v2684, %v1732
      %v2686 = vadd.f32 %v2685, %v1736
      %v2687 = vadd.f32 %v2686, %v1742
      %v2688 = vadd.f32 %v2687, %v1746
      %v2689 = vadd.f32 %v2688, %v1752
      %v2690 = vadd.f32 %v2689, %v1756
      %v2691 = vadd.f32 %v2690, %v1762
      %v2692 = vadd.f32 %v2691, %v1766
      %v2693 = vadd.f32 %v2692, %v1772
      %v2694 = vadd.f32 %v2693, %v1776
      %v2695 = vadd.f32 %v2694, %v1782
      %v2696 = vadd.f32 %v2695, %v1786
      %v2697 = vrot.slane %v2696, 4
      %v2698 = vadd.f32 %v2696, %v2697
      %v2699 = vrot.slane %v2698, 2
      %v2700 = vadd.f32 %v2698, %v2699
      %v2701 = vrot.slane %v2700, 1
      %v2702 = vadd.f32 %v2700, %v2701
      %v2703 = vadd.f32 %v1474, %v1478
      %v2704 = vadd.f32 %v2703, %v1484
      %v2705 = vadd.f32 %v2704, %v1488
      %v2706 = vadd.f32 %v2705, %v1494
      %v2707 = vadd.f32 %v2706, %v1498
      %v2708 = vadd.f32 %v2707, %v1504
      %v2709 = vadd.f32 %v2708, %v1508
      %v2710 = vadd.f32 %v2709, %v1514
      %v2711 = vadd.f32 %v2710, %v1518
      %v2712 = vadd.f32 %v2711, %v1524
      %v2713 = vadd.f32 %v2712, %v1528
      %v2714 = vadd.f32 %v2713, %v1534
      %v2715 = vadd.f32 %v2714, %v1538
      %v2716 = vadd.f32 %v2715, %v1544
      %v2717 = vadd.f32 %v2716, %v1548
      %v2718 = vadd.f32 %v2717, %v1554
      %v2719 = vadd.f32 %v2718, %v1558
      %v2720 = vadd.f32 %v2719, %v1564
      %v2721 = vadd.f32 %v2720, %v1568
      %v2722 = vadd.f32 %v2721, %v1574
      %v2723 = vadd.f32 %v2722, %v1578
      %v2724 = vadd.f32 %v2723, %v1584
      %v2725 = vadd.f32 %v2724, %v1588
      %v2726 = vadd.f32 %v2725, %v1594
      %v2727 = vadd.f32 %v2726, %v1598
      %v2728 = vadd.f32 %v2727, %v1604
      %v2729 = vadd.f32 %v2728, %v1608
      %v2730 = vadd.f32 %v2729, %v1614
      %v2731 = vadd.f32 %v2730, %v1618
      %v2732 = vadd.f32 %v2731, %v1624
      %v2733 = vadd.f32 %v2732, %v1628
      %v2734 = vadd.f32 %v2733, %v1634
      %v2735 = vadd.f32 %v2734, %v1638
      %v2736 = vadd.f32 %v2735, %v1644
      %v2737 = vadd.f32 %v2736, %v1648
      %v2738 = vadd.f32 %v2737, %v1654
      %v2739 = vadd.f32 %v2738, %v1658
      %v2740 = vadd.f32 %v2739, %v1664
      %v2741 = vadd.f32 %v2740, %v1668
      %v2742 = vadd.f32 %v2741, %v1674
      %v2743 = vadd.f32 %v2742, %v1678
      %v2744 = vadd.f32 %v2743, %v1684
      %v2745 = vadd.f32 %v2744, %v1688
      %v2746 = vadd.f32 %v2745, %v1694
      %v2747 = vadd.f32 %v2746, %v1698
      %v2748 = vadd.f32 %v2747, %v1704
      %v2749 = vadd.f32 %v2748, %v1708
      %v2750 = vadd.f32 %v2749, %v1714
      %v2751 = vadd.f32 %v2750, %v1718
      %v2752 = vadd.f32 %v2751, %v1724
      %v2753 = vadd.f32 %v2752, %v1728
      %v2754 = vadd.f32 %v2753, %v1734
      %v2755 = vadd.f32 %v2754, %v1738
      %v2756 = vadd.f32 %v2755, %v1744
      %v2757 = vadd.f32 %v2756, %v1748
      %v2758 = vadd.f32 %v2757, %v1754
      %v2759 = vadd.f32 %v2758, %v1758
      %v2760 = vadd.f32 %v2759, %v1764
      %v2761 = vadd.f32 %v2760, %v1768
      %v2762 = vadd.f32 %v2761, %v1774
      %v2763 = vadd.f32 %v2762, %v1778
      %v2764 = vadd.f32 %v2763, %v1784
      %v2765 = vadd.f32 %v2764, %v1788
      %v2766 = vrot.slane %v2765, 4
      %v2767 = vadd.f32 %v2765, %v2766
      %v2768 = vrot.slane %v2767, 2
      %v2769 = vadd.f32 %v2767, %v2768
      %v2770 = vrot.slane %v2769, 1
      %v2771 = vadd.f32 %v2769, %v2770
      %v2772 = vadd.f32 %v1825, %v1829
      %v2773 = vadd.f32 %v2772, %v1835
      %v2774 = vadd.f32 %v2773, %v1839
      %v2775 = vadd.f32 %v2774, %v1845
      %v2776 = vadd.f32 %v2775, %v1849
      %v2777 = vadd.f32 %v2776, %v1855
      %v2778 = vadd.f32 %v2777, %v1859
      %v2779 = vadd.f32 %v2778, %v1865
      %v2780 = vadd.f32 %v2779, %v1869
      %v2781 = vadd.f32 %v2780, %v1875
      %v2782 = vadd.f32 %v2781, %v1879
      %v2783 = vadd.f32 %v2782, %v1885
      %v2784 = vadd.f32 %v2783, %v1889
      %v2785 = vadd.f32 %v2784, %v1895
      %v2786 = vadd.f32 %v2785, %v1899
      %v2787 = vadd.f32 %v2786, %v1905
      %v2788 = vadd.f32 %v2787, %v1909
      %v2789 = vadd.f32 %v2788, %v1915
      %v2790 = vadd.f32 %v2789, %v1919
      %v2791 = vadd.f32 %v2790, %v1925
      %v2792 = vadd.f32 %v2791, %v1929
      %v2793 = vadd.f32 %v2792, %v1935
      %v2794 = vadd.f32 %v2793, %v1939
      %v2795 = vadd.f32 %v2794, %v1945
      %v2796 = vadd.f32 %v2795, %v1949
      %v2797 = vadd.f32 %v2796, %v1955
      %v2798 = vadd.f32 %v2797, %v1959
      %v2799 = vadd.f32 %v2798, %v1965
      %v2800 = vadd.f32 %v2799, %v1969
      %v2801 = vadd.f32 %v2800, %v1975
      %v2802 = vadd.f32 %v2801, %v1979
      %v2803 = vadd.f32 %v2802, %v1985
      %v2804 = vadd.f32 %v2803, %v1989
      %v2805 = vadd.f32 %v2804, %v1995
      %v2806 = vadd.f32 %v2805, %v1999
      %v2807 = vadd.f32 %v2806, %v2005
      %v2808 = vadd.f32 %v2807, %v2009
      %v2809 = vadd.f32 %v2808, %v2015
      %v2810 = vadd.f32 %v2809, %v2019
      %v2811 = vadd.f32 %v2810, %v2025
      %v2812 = vadd.f32 %v2811, %v2029
      %v2813 = vadd.f32 %v2812, %v2035
      %v2814 = vadd.f32 %v2813, %v2039
      %v2815 = vadd.f32 %v2814, %v2045
      %v2816 = vadd.f32 %v2815, %v2049
      %v2817 = vadd.f32 %v2816, %v2055
      %v2818 = vadd.f32 %v2817, %v2059
      %v2819 = vadd.f32 %v2818, %v2065
      %v2820 = vadd.f32 %v2819, %v2069
      %v2821 = vadd.f32 %v2820, %v2075
      %v2822 = vadd.f32 %v2821, %v2079
      %v2823 = vadd.f32 %v2822, %v2085
      %v2824 = vadd.f32 %v2823, %v2089
      %v2825 = vadd.f32 %v2824, %v2095
      %v2826 = vadd.f32 %v2825, %v2099
      %v2827 = vadd.f32 %v2826, %v2105
      %v2828 = vadd.f32 %v2827, %v2109
      %v2829 = vadd.f32 %v2828, %v2115
      %v2830 = vadd.f32 %v2829, %v2119
      %v2831 = vadd.f32 %v2830, %v2125
      %v2832 = vadd.f32 %v2831, %v2129
      %v2833 = vadd.f32 %v2832, %v2135
      %v2834 = vadd.f32 %v2833, %v2139
      %v2835 = vrot.slane %v2834, 4
      %v2836 = vadd.f32 %v2834, %v2835
      %v2837 = vrot.slane %v2836, 2
      %v2838 = vadd.f32 %v2836, %v2837
      %v2839 = vrot.slane %v2838, 1
      %v2840 = vadd.f32 %v2838, %v2839
      %v2841 = vadd.f32 %v1827, %v1831
      %v2842 = vadd.f32 %v2841, %v1837
      %v2843 = vadd.f32 %v2842, %v1841
      %v2844 = vadd.f32 %v2843, %v1847
      %v2845 = vadd.f32 %v2844, %v1851
      %v2846 = vadd.f32 %v2845, %v1857
      %v2847 = vadd.f32 %v2846, %v1861
      %v2848 = vadd.f32 %v2847, %v1867
      %v2849 = vadd.f32 %v2848, %v1871
      %v2850 = vadd.f32 %v2849, %v1877
      %v2851 = vadd.f32 %v2850, %v1881
      %v2852 = vadd.f32 %v2851, %v1887
      %v2853 = vadd.f32 %v2852, %v1891
      %v2854 = vadd.f32 %v2853, %v1897
      %v2855 = vadd.f32 %v2854, %v1901
      %v2856 = vadd.f32 %v2855, %v1907
      %v2857 = vadd.f32 %v2856, %v1911
      %v2858 = vadd.f32 %v2857, %v1917
      %v2859 = vadd.f32 %v2858, %v1921
      %v2860 = vadd.f32 %v2859, %v1927
      %v2861 = vadd.f32 %v2860, %v1931
      %v2862 = vadd.f32 %v2861, %v1937
      %v2863 = vadd.f32 %v2862, %v1941
      %v2864 = vadd.f32 %v2863, %v1947
      %v2865 = vadd.f32 %v2864, %v1951
      %v2866 = vadd.f32 %v2865, %v1957
      %v2867 = vadd.f32 %v2866, %v1961
      %v2868 = vadd.f32 %v2867, %v1967
      %v2869 = vadd.f32 %v2868, %v1971
      %v2870 = vadd.f32 %v2869, %v1977
      %v2871 = vadd.f32 %v2870, %v1981
      %v2872 = vadd.f32 %v2871, %v1987
      %v2873 = vadd.f32 %v2872, %v1991
      %v2874 = vadd.f32 %v2873, %v1997
      %v2875 = vadd.f32 %v2874, %v2001
      %v2876 = vadd.f32 %v2875, %v2007
      %v2877 = vadd.f32 %v2876, %v2011
      %v2878 = vadd.f32 %v2877, %v2017
      %v2879 = vadd.f32 %v2878, %v2021
      %v2880 = vadd.f32 %v2879, %v2027
      %v2881 = vadd.f32 %v2880, %v2031
      %v2882 = vadd.f32 %v2881, %v2037
      %v2883 = vadd.f32 %v2882, %v2041
      %v2884 = vadd.f32 %v2883, %v2047
      %v2885 = vadd.f32 %v2884, %v2051
      %v2886 = vadd.f32 %v2885, %v2057
      %v2887 = vadd.f32 %v2886, %v2061
      %v2888 = vadd.f32 %v2887, %v2067
      %v2889 = vadd.f32 %v2888, %v2071
      %v2890 = vadd.f32 %v2889, %v2077
      %v2891 = vadd.f32 %v2890, %v2081
      %v2892 = vadd.f32 %v2891, %v2087
      %v2893 = vadd.f32 %v2892, %v2091
      %v2894 = vadd.f32 %v2893, %v2097
      %v2895 = vadd.f32 %v2894, %v2101
      %v2896 = vadd.f32 %v2895, %v2107
      %v2897 = vadd.f32 %v2896, %v2111
      %v2898 = vadd.f32 %v2897, %v2117
      %v2899 = vadd.f32 %v2898, %v2121
      %v2900 = vadd.f32 %v2899, %v2127
      %v2901 = vadd.f32 %v2900, %v2131
      %v2902 = vadd.f32 %v2901, %v2137
      %v2903 = vadd.f32 %v2902, %v2141
      %v2904 = vrot.slane %v2903, 4
      %v2905 = vadd.f32 %v2903, %v2904
      %v2906 = vrot.slane %v2905, 2
      %v2907 = vadd.f32 %v2905, %v2906
      %v2908 = vrot.slane %v2907, 1
      %v2909 = vadd.f32 %v2907, %v2908
      %v2910 = vadd.f32 %v2178, %v2182
      %v2911 = vadd.f32 %v2910, %v2188
      %v2912 = vadd.f32 %v2911, %v2192
      %v2913 = vadd.f32 %v2912, %v2198
      %v2914 = vadd.f32 %v2913, %v2202
      %v2915 = vadd.f32 %v2914, %v2208
      %v2916 = vadd.f32 %v2915, %v2212
      %v2917 = vadd.f32 %v2916, %v2218
      %v2918 = vadd.f32 %v2917, %v2222
      %v2919 = vadd.f32 %v2918, %v2228
      %v2920 = vadd.f32 %v2919, %v2232
      %v2921 = vadd.f32 %v2920, %v2238
      %v2922 = vadd.f32 %v2921, %v2242
      %v2923 = vadd.f32 %v2922, %v2248
      %v2924 = vadd.f32 %v2923, %v2252
      %v2925 = vadd.f32 %v2924, %v2258
      %v2926 = vadd.f32 %v2925, %v2262
      %v2927 = vadd.f32 %v2926, %v2268
      %v2928 = vadd.f32 %v2927, %v2272
      %v2929 = vadd.f32 %v2928, %v2278
      %v2930 = vadd.f32 %v2929, %v2282
      %v2931 = vadd.f32 %v2930, %v2288
      %v2932 = vadd.f32 %v2931, %v2292
      %v2933 = vadd.f32 %v2932, %v2298
      %v2934 = vadd.f32 %v2933, %v2302
      %v2935 = vadd.f32 %v2934, %v2308
      %v2936 = vadd.f32 %v2935, %v2312
      %v2937 = vadd.f32 %v2936, %v2318
      %v2938 = vadd.f32 %v2937, %v2322
      %v2939 = vadd.f32 %v2938, %v2328
      %v2940 = vadd.f32 %v2939, %v2332
      %v2941 = vadd.f32 %v2940, %v2338
      %v2942 = vadd.f32 %v2941, %v2342
      %v2943 = vadd.f32 %v2942, %v2348
      %v2944 = vadd.f32 %v2943, %v2352
      %v2945 = vadd.f32 %v2944, %v2358
      %v2946 = vadd.f32 %v2945, %v2362
      %v2947 = vadd.f32 %v2946, %v2368
      %v2948 = vadd.f32 %v2947, %v2372
      %v2949 = vadd.f32 %v2948, %v2378
      %v2950 = vadd.f32 %v2949, %v2382
      %v2951 = vadd.f32 %v2950, %v2388
      %v2952 = vadd.f32 %v2951, %v2392
      %v2953 = vadd.f32 %v2952, %v2398
      %v2954 = vadd.f32 %v2953, %v2402
      %v2955 = vadd.f32 %v2954, %v2408
      %v2956 = vadd.f32 %v2955, %v2412
      %v2957 = vadd.f32 %v2956, %v2418
      %v2958 = vadd.f32 %v2957, %v2422
      %v2959 = vadd.f32 %v2958, %v2428
      %v2960 = vadd.f32 %v2959, %v2432
      %v2961 = vadd.f32 %v2960, %v2438
      %v2962 = vadd.f32 %v2961, %v2442
      %v2963 = vadd.f32 %v2962, %v2448
      %v2964 = vadd.f32 %v2963, %v2452
      %v2965 = vadd.f32 %v2964, %v2458
      %v2966 = vadd.f32 %v2965, %v2462
      %v2967 = vadd.f32 %v2966, %v2468
      %v2968 = vadd.f32 %v2967, %v2472
      %v2969 = vadd.f32 %v2968, %v2478
      %v2970 = vadd.f32 %v2969, %v2482
      %v2971 = vadd.f32 %v2970, %v2488
      %v2972 = vadd.f32 %v2971, %v2492
      %v2973 = vrot.slane %v2972, 4
      %v2974 = vadd.f32 %v2972, %v2973
      %v2975 = vrot.slane %v2974, 2
      %v2976 = vadd.f32 %v2974, %v2975
      %v2977 = vrot.slane %v2976, 1
      %v2978 = vadd.f32 %v2976, %v2977
      %v2979 = vadd.f32 %v2180, %v2184
      %v2980 = vadd.f32 %v2979, %v2190
      %v2981 = vadd.f32 %v2980, %v2194
      %v2982 = vadd.f32 %v2981, %v2200
      %v2983 = vadd.f32 %v2982, %v2204
      %v2984 = vadd.f32 %v2983, %v2210
      %v2985 = vadd.f32 %v2984, %v2214
      %v2986 = vadd.f32 %v2985, %v2220
      %v2987 = vadd.f32 %v2986, %v2224
      %v2988 = vadd.f32 %v2987, %v2230
      %v2989 = vadd.f32 %v2988, %v2234
      %v2990 = vadd.f32 %v2989, %v2240
      %v2991 = vadd.f32 %v2990, %v2244
      %v2992 = vadd.f32 %v2991, %v2250
      %v2993 = vadd.f32 %v2992, %v2254
      %v2994 = vadd.f32 %v2993, %v2260
      %v2995 = vadd.f32 %v2994, %v2264
      %v2996 = vadd.f32 %v2995, %v2270
      %v2997 = vadd.f32 %v2996, %v2274
      %v2998 = vadd.f32 %v2997, %v2280
      %v2999 = vadd.f32 %v2998, %v2284
      %v3000 = vadd.f32 %v2999, %v2290
      %v3001 = vadd.f32 %v3000, %v2294
      %v3002 = vadd.f32 %v3001, %v2300
      %v3003 = vadd.f32 %v3002, %v2304
      %v3004 = vadd.f32 %v3003, %v2310
      %v3005 = vadd.f32 %v3004, %v2314
      %v3006 = vadd.f32 %v3005, %v2320
      %v3007 = vadd.f32 %v3006, %v2324
      %v3008 = vadd.f32 %v3007, %v2330
      %v3009 = vadd.f32 %v3008, %v2334
      %v3010 = vadd.f32 %v3009, %v2340
      %v3011 = vadd.f32 %v3010, %v2344
      %v3012 = vadd.f32 %v3011, %v2350
      %v3013 = vadd.f32 %v3012, %v2354
      %v3014 = vadd.f32 %v3013, %v2360
      %v3015 = vadd.f32 %v3014, %v2364
      %v3016 = vadd.f32 %v3015, %v2370
      %v3017 = vadd.f32 %v3016, %v2374
      %v3018 = vadd.f32 %v3017, %v2380
      %v3019 = vadd.f32 %v3018, %v2384
      %v3020 = vadd.f32 %v3019, %v2390
      %v3021 = vadd.f32 %v3020, %v2394
      %v3022 = vadd.f32 %v3021, %v2400
      %v3023 = vadd.f32 %v3022, %v2404
      %v3024 = vadd.f32 %v3023, %v2410
      %v3025 = vadd.f32 %v3024, %v2414
      %v3026 = vadd.f32 %v3025, %v2420
      %v3027 = vadd.f32 %v3026, %v2424
      %v3028 = vadd.f32 %v3027, %v2430
      %v3029 = vadd.f32 %v3028, %v2434
      %v3030 = vadd.f32 %v3029, %v2440
      %v3031 = vadd.f32 %v3030, %v2444
      %v3032 = vadd.f32 %v3031, %v2450
      %v3033 = vadd.f32 %v3032, %v2454
      %v3034 = vadd.f32 %v3033, %v2460
      %v3035 = vadd.f32 %v3034, %v2464
      %v3036 = vadd.f32 %v3035, %v2470
      %v3037 = vadd.f32 %v3036, %v2474
      %v3038 = vadd.f32 %v3037, %v2480
      %v3039 = vadd.f32 %v3038, %v2484
      %v3040 = vadd.f32 %v3039, %v2490
      %v3041 = vadd.f32 %v3040, %v2494
      %v3042 = vrot.slane %v3041, 4
      %v3043 = vadd.f32 %v3041, %v3042
      %v3044 = vrot.slane %v3043, 2
      %v3045 = vadd.f32 %v3043, %v3044
      %v3046 = vrot.slane %v3045, 1
      %v3047 = vadd.f32 %v3045, %v3046
      %v3048 = vmul.f32 %v1119, %v1119
      %v3049 = vmul.f32 %v1121, %v1121
      %v3050 = vmul.f32 %v1472, %v1472
      %v3051 = vmul.f32 %v1474, %v1474
      %v3052 = vmul.f32 %v1825, %v1825
      %v3053 = vmul.f32 %v1827, %v1827
      %v3054 = vmul.f32 %v2178, %v2178
      %v3055 = vmul.f32 %v2180, %v2180
      %v3056 = vmul.f32 %v1123, %v1123
      %v3057 = vmul.f32 %v1125, %v1125
      %v3058 = vmul.f32 %v1476, %v1476
      %v3059 = vmul.f32 %v1478, %v1478
      %v3060 = vmul.f32 %v1829, %v1829
      %v3061 = vmul.f32 %v1831, %v1831
      %v3062 = vmul.f32 %v2182, %v2182
      %v3063 = vmul.f32 %v2184, %v2184
      %v3064 = vmul.f32 %v1129, %v1129
      %v3065 = vmul.f32 %v1131, %v1131
      %v3066 = vmul.f32 %v1482, %v1482
      %v3067 = vmul.f32 %v1484, %v1484
      %v3068 = vmul.f32 %v1835, %v1835
      %v3069 = vmul.f32 %v1837, %v1837
      %v3070 = vmul.f32 %v2188, %v2188
      %v3071 = vmul.f32 %v2190, %v2190
      %v3072 = vmul.f32 %v1133, %v1133
      %v3073 = vmul.f32 %v1135, %v1135
      %v3074 = vmul.f32 %v1486, %v1486
      %v3075 = vmul.f32 %v1488, %v1488
      %v3076 = vmul.f32 %v1839, %v1839
      %v3077 = vmul.f32 %v1841, %v1841
      %v3078 = vmul.f32 %v2192, %v2192
      %v3079 = vmul.f32 %v2194, %v2194
      %v3080 = vmul.f32 %v1139, %v1139
      %v3081 = vmul.f32 %v1141, %v1141
      %v3082 = vmul.f32 %v1492, %v1492
      %v3083 = vmul.f32 %v1494, %v1494
      %v3084 = vmul.f32 %v1845, %v1845
      %v3085 = vmul.f32 %v1847, %v1847
      %v3086 = vmul.f32 %v2198, %v2198
      %v3087 = vmul.f32 %v2200, %v2200
      %v3088 = vmul.f32 %v1143, %v1143
      %v3089 = vmul.f32 %v1145, %v1145
      %v3090 = vmul.f32 %v1496, %v1496
      %v3091 = vmul.f32 %v1498, %v1498
      %v3092 = vmul.f32 %v1849, %v1849
      %v3093 = vmul.f32 %v1851, %v1851
      %v3094 = vmul.f32 %v2202, %v2202
      %v3095 = vmul.f32 %v2204, %v2204
      %v3096 = vmul.f32 %v1149, %v1149
      %v3097 = vmul.f32 %v1151, %v1151
      %v3098 = vmul.f32 %v1502, %v1502
      %v3099 = vmul.f32 %v1504, %v1504
      %v3100 = vmul.f32 %v1855, %v1855
      %v3101 = vmul.f32 %v1857, %v1857
      %v3102 = vmul.f32 %v2208, %v2208
      %v3103 = vmul.f32 %v2210, %v2210
      %v3104 = vmul.f32 %v1153, %v1153
      %v3105 = vmul.f32 %v1155, %v1155
      %v3106 = vmul.f32 %v1506, %v1506
      %v3107 = vmul.f32 %v1508, %v1508
      %v3108 = vmul.f32 %v1859, %v1859
      %v3109 = vmul.f32 %v1861, %v1861
      %v3110 = vmul.f32 %v2212, %v2212
      %v3111 = vmul.f32 %v2214, %v2214
      %v3112 = vmul.f32 %v1159, %v1159
      %v3113 = vmul.f32 %v1161, %v1161
      %v3114 = vmul.f32 %v1512, %v1512
      %v3115 = vmul.f32 %v1514, %v1514
      %v3116 = vmul.f32 %v1865, %v1865
      %v3117 = vmul.f32 %v1867, %v1867
      %v3118 = vmul.f32 %v2218, %v2218
      %v3119 = vmul.f32 %v2220, %v2220
      %v3120 = vmul.f32 %v1163, %v1163
      %v3121 = vmul.f32 %v1165, %v1165
      %v3122 = vmul.f32 %v1516, %v1516
      %v3123 = vmul.f32 %v1518, %v1518
      %v3124 = vmul.f32 %v1869, %v1869
      %v3125 = vmul.f32 %v1871, %v1871
      %v3126 = vmul.f32 %v2222, %v2222
      %v3127 = vmul.f32 %v2224, %v2224
      %v3128 = vmul.f32 %v1169, %v1169
      %v3129 = vmul.f32 %v1171, %v1171
      %v3130 = vmul.f32 %v1522, %v1522
      %v3131 = vmul.f32 %v1524, %v1524
      %v3132 = vmul.f32 %v1875, %v1875
      %v3133 = vmul.f32 %v1877, %v1877
      %v3134 = vmul.f32 %v2228, %v2228
      %v3135 = vmul.f32 %v2230, %v2230
      %v3136 = vmul.f32 %v1173, %v1173
      %v3137 = vmul.f32 %v1175, %v1175
      %v3138 = vmul.f32 %v1526, %v1526
      %v3139 = vmul.f32 %v1528, %v1528
      %v3140 = vmul.f32 %v1879, %v1879
      %v3141 = vmul.f32 %v1881, %v1881
      %v3142 = vmul.f32 %v2232, %v2232
      %v3143 = vmul.f32 %v2234, %v2234
      %v3144 = vmul.f32 %v1179, %v1179
      %v3145 = vmul.f32 %v1181, %v1181
      %v3146 = vmul.f32 %v1532, %v1532
      %v3147 = vmul.f32 %v1534, %v1534
      %v3148 = vmul.f32 %v1885, %v1885
      %v3149 = vmul.f32 %v1887, %v1887
      %v3150 = vmul.f32 %v2238, %v2238
      %v3151 = vmul.f32 %v2240, %v2240
      %v3152 = vmul.f32 %v1183, %v1183
      %v3153 = vmul.f32 %v1185, %v1185
      %v3154 = vmul.f32 %v1536, %v1536
      %v3155 = vmul.f32 %v1538, %v1538
      %v3156 = vmul.f32 %v1889, %v1889
      %v3157 = vmul.f32 %v1891, %v1891
      %v3158 = vmul.f32 %v2242, %v2242
      %v3159 = vmul.f32 %v2244, %v2244
      %v3160 = vmul.f32 %v1189, %v1189
      %v3161 = vmul.f32 %v1191, %v1191
      %v3162 = vmul.f32 %v1542, %v1542
      %v3163 = vmul.f32 %v1544, %v1544
      %v3164 = vmul.f32 %v1895, %v1895
      %v3165 = vmul.f32 %v1897, %v1897
      %v3166 = vmul.f32 %v2248, %v2248
      %v3167 = vmul.f32 %v2250, %v2250
      %v3168 = vmul.f32 %v1193, %v1193
      %v3169 = vmul.f32 %v1195, %v1195
      %v3170 = vmul.f32 %v1546, %v1546
      %v3171 = vmul.f32 %v1548, %v1548
      %v3172 = vmul.f32 %v1899, %v1899
      %v3173 = vmul.f32 %v1901, %v1901
      %v3174 = vmul.f32 %v2252, %v2252
      %v3175 = vmul.f32 %v2254, %v2254
      %v3176 = vmul.f32 %v1199, %v1199
      %v3177 = vmul.f32 %v1201, %v1201
      %v3178 = vmul.f32 %v1552, %v1552
      %v3179 = vmul.f32 %v1554, %v1554
      %v3180 = vmul.f32 %v1905, %v1905
      %v3181 = vmul.f32 %v1907, %v1907
      %v3182 = vmul.f32 %v2258, %v2258
      %v3183 = vmul.f32 %v2260, %v2260
      %v3184 = vmul.f32 %v1203, %v1203
      %v3185 = vmul.f32 %v1205, %v1205
      %v3186 = vmul.f32 %v1556, %v1556
      %v3187 = vmul.f32 %v1558, %v1558
      %v3188 = vmul.f32 %v1909, %v1909
      %v3189 = vmul.f32 %v1911, %v1911
      %v3190 = vmul.f32 %v2262, %v2262
      %v3191 = vmul.f32 %v2264, %v2264
      %v3192 = vmul.f32 %v1209, %v1209
      %v3193 = vmul.f32 %v1211, %v1211
      %v3194 = vmul.f32 %v1562, %v1562
      %v3195 = vmul.f32 %v1564, %v1564
      %v3196 = vmul.f32 %v1915, %v1915
      %v3197 = vmul.f32 %v1917, %v1917
      %v3198 = vmul.f32 %v2268, %v2268
      %v3199 = vmul.f32 %v2270, %v2270
      %v3200 = vmul.f32 %v1213, %v1213
      %v3201 = vmul.f32 %v1215, %v1215
      %v3202 = vmul.f32 %v1566, %v1566
      %v3203 = vmul.f32 %v1568, %v1568
      %v3204 = vmul.f32 %v1919, %v1919
      %v3205 = vmul.f32 %v1921, %v1921
      %v3206 = vmul.f32 %v2272, %v2272
      %v3207 = vmul.f32 %v2274, %v2274
      %v3208 = vmul.f32 %v1219, %v1219
      %v3209 = vmul.f32 %v1221, %v1221
      %v3210 = vmul.f32 %v1572, %v1572
      %v3211 = vmul.f32 %v1574, %v1574
      %v3212 = vmul.f32 %v1925, %v1925
      %v3213 = vmul.f32 %v1927, %v1927
      %v3214 = vmul.f32 %v2278, %v2278
      %v3215 = vmul.f32 %v2280, %v2280
      %v3216 = vmul.f32 %v1223, %v1223
      %v3217 = vmul.f32 %v1225, %v1225
      %v3218 = vmul.f32 %v1576, %v1576
      %v3219 = vmul.f32 %v1578, %v1578
      %v3220 = vmul.f32 %v1929, %v1929
      %v3221 = vmul.f32 %v1931, %v1931
      %v3222 = vmul.f32 %v2282, %v2282
      %v3223 = vmul.f32 %v2284, %v2284
      %v3224 = vmul.f32 %v1229, %v1229
      %v3225 = vmul.f32 %v1231, %v1231
      %v3226 = vmul.f32 %v1582, %v1582
      %v3227 = vmul.f32 %v1584, %v1584
      %v3228 = vmul.f32 %v1935, %v1935
      %v3229 = vmul.f32 %v1937, %v1937
      %v3230 = vmul.f32 %v2288, %v2288
      %v3231 = vmul.f32 %v2290, %v2290
      %v3232 = vmul.f32 %v1233, %v1233
      %v3233 = vmul.f32 %v1235, %v1235
      %v3234 = vmul.f32 %v1586, %v1586
      %v3235 = vmul.f32 %v1588, %v1588
      %v3236 = vmul.f32 %v1939, %v1939
      %v3237 = vmul.f32 %v1941, %v1941
      %v3238 = vmul.f32 %v2292, %v2292
      %v3239 = vmul.f32 %v2294, %v2294
      %v3240 = vmul.f32 %v1239, %v1239
      %v3241 = vmul.f32 %v1241, %v1241
      %v3242 = vmul.f32 %v1592, %v1592
      %v3243 = vmul.f32 %v1594, %v1594
      %v3244 = vmul.f32 %v1945, %v1945
      %v3245 = vmul.f32 %v1947, %v1947
      %v3246 = vmul.f32 %v2298, %v2298
      %v3247 = vmul.f32 %v2300, %v2300
      %v3248 = vmul.f32 %v1243, %v1243
      %v3249 = vmul.f32 %v1245, %v1245
      %v3250 = vmul.f32 %v1596, %v1596
      %v3251 = vmul.f32 %v1598, %v1598
      %v3252 = vmul.f32 %v1949, %v1949
      %v3253 = vmul.f32 %v1951, %v1951
      %v3254 = vmul.f32 %v2302, %v2302
      %v3255 = vmul.f32 %v2304, %v2304
      %v3256 = vmul.f32 %v1249, %v1249
      %v3257 = vmul.f32 %v1251, %v1251
      %v3258 = vmul.f32 %v1602, %v1602
      %v3259 = vmul.f32 %v1604, %v1604
      %v3260 = vmul.f32 %v1955, %v1955
      %v3261 = vmul.f32 %v1957, %v1957
      %v3262 = vmul.f32 %v2308, %v2308
      %v3263 = vmul.f32 %v2310, %v2310
      %v3264 = vmul.f32 %v1253, %v1253
      %v3265 = vmul.f32 %v1255, %v1255
      %v3266 = vmul.f32 %v1606, %v1606
      %v3267 = vmul.f32 %v1608, %v1608
      %v3268 = vmul.f32 %v1959, %v1959
      %v3269 = vmul.f32 %v1961, %v1961
      %v3270 = vmul.f32 %v2312, %v2312
      %v3271 = vmul.f32 %v2314, %v2314
      %v3272 = vmul.f32 %v1259, %v1259
      %v3273 = vmul.f32 %v1261, %v1261
      %v3274 = vmul.f32 %v1612, %v1612
      %v3275 = vmul.f32 %v1614, %v1614
      %v3276 = vmul.f32 %v1965, %v1965
      %v3277 = vmul.f32 %v1967, %v1967
      %v3278 = vmul.f32 %v2318, %v2318
      %v3279 = vmul.f32 %v2320, %v2320
      %v3280 = vmul.f32 %v1263, %v1263
      %v3281 = vmul.f32 %v1265, %v1265
      %v3282 = vmul.f32 %v1616, %v1616
      %v3283 = vmul.f32 %v1618, %v1618
      %v3284 = vmul.f32 %v1969, %v1969
      %v3285 = vmul.f32 %v1971, %v1971
      %v3286 = vmul.f32 %v2322, %v2322
      %v3287 = vmul.f32 %v2324, %v2324
      %v3288 = vmul.f32 %v1269, %v1269
      %v3289 = vmul.f32 %v1271, %v1271
      %v3290 = vmul.f32 %v1622, %v1622
      %v3291 = vmul.f32 %v1624, %v1624
      %v3292 = vmul.f32 %v1975, %v1975
      %v3293 = vmul.f32 %v1977, %v1977
      %v3294 = vmul.f32 %v2328, %v2328
      %v3295 = vmul.f32 %v2330, %v2330
      %v3296 = vmul.f32 %v1273, %v1273
      %v3297 = vmul.f32 %v1275, %v1275
      %v3298 = vmul.f32 %v1626, %v1626
      %v3299 = vmul.f32 %v1628, %v1628
      %v3300 = vmul.f32 %v1979, %v1979
      %v3301 = vmul.f32 %v1981, %v1981
      %v3302 = vmul.f32 %v2332, %v2332
      %v3303 = vmul.f32 %v2334, %v2334
      %v3304 = vmul.f32 %v1279, %v1279
      %v3305 = vmul.f32 %v1281, %v1281
      %v3306 = vmul.f32 %v1632, %v1632
      %v3307 = vmul.f32 %v1634, %v1634
      %v3308 = vmul.f32 %v1985, %v1985
      %v3309 = vmul.f32 %v1987, %v1987
      %v3310 = vmul.f32 %v2338, %v2338
      %v3311 = vmul.f32 %v2340, %v2340
      %v3312 = vmul.f32 %v1283, %v1283
      %v3313 = vmul.f32 %v1285, %v1285
      %v3314 = vmul.f32 %v1636, %v1636
      %v3315 = vmul.f32 %v1638, %v1638
      %v3316 = vmul.f32 %v1989, %v1989
      %v3317 = vmul.f32 %v1991, %v1991
      %v3318 = vmul.f32 %v2342, %v2342
      %v3319 = vmul.f32 %v2344, %v2344
      %v3320 = vmul.f32 %v1289, %v1289
      %v3321 = vmul.f32 %v1291, %v1291
      %v3322 = vmul.f32 %v1642, %v1642
      %v3323 = vmul.f32 %v1644, %v1644
      %v3324 = vmul.f32 %v1995, %v1995
      %v3325 = vmul.f32 %v1997, %v1997
      %v3326 = vmul.f32 %v2348, %v2348
      %v3327 = vmul.f32 %v2350, %v2350
      %v3328 = vmul.f32 %v1293, %v1293
      %v3329 = vmul.f32 %v1295, %v1295
      %v3330 = vmul.f32 %v1646, %v1646
      %v3331 = vmul.f32 %v1648, %v1648
      %v3332 = vmul.f32 %v1999, %v1999
      %v3333 = vmul.f32 %v2001, %v2001
      %v3334 = vmul.f32 %v2352, %v2352
      %v3335 = vmul.f32 %v2354, %v2354
      %v3336 = vmul.f32 %v1299, %v1299
      %v3337 = vmul.f32 %v1301, %v1301
      %v3338 = vmul.f32 %v1652, %v1652
      %v3339 = vmul.f32 %v1654, %v1654
      %v3340 = vmul.f32 %v2005, %v2005
      %v3341 = vmul.f32 %v2007, %v2007
      %v3342 = vmul.f32 %v2358, %v2358
      %v3343 = vmul.f32 %v2360, %v2360
      %v3344 = vmul.f32 %v1303, %v1303
      %v3345 = vmul.f32 %v1305, %v1305
      %v3346 = vmul.f32 %v1656, %v1656
      %v3347 = vmul.f32 %v1658, %v1658
      %v3348 = vmul.f32 %v2009, %v2009
      %v3349 = vmul.f32 %v2011, %v2011
      %v3350 = vmul.f32 %v2362, %v2362
      %v3351 = vmul.f32 %v2364, %v2364
      %v3352 = vmul.f32 %v1309, %v1309
      %v3353 = vmul.f32 %v1311, %v1311
      %v3354 = vmul.f32 %v1662, %v1662
      %v3355 = vmul.f32 %v1664, %v1664
      %v3356 = vmul.f32 %v2015, %v2015
      %v3357 = vmul.f32 %v2017, %v2017
      %v3358 = vmul.f32 %v2368, %v2368
      %v3359 = vmul.f32 %v2370, %v2370
      %v3360 = vmul.f32 %v1313, %v1313
      %v3361 = vmul.f32 %v1315, %v1315
      %v3362 = vmul.f32 %v1666, %v1666
      %v3363 = vmul.f32 %v1668, %v1668
      %v3364 = vmul.f32 %v2019, %v2019
      %v3365 = vmul.f32 %v2021, %v2021
      %v3366 = vmul.f32 %v2372, %v2372
      %v3367 = vmul.f32 %v2374, %v2374
      %v3368 = vmul.f32 %v1319, %v1319
      %v3369 = vmul.f32 %v1321, %v1321
      %v3370 = vmul.f32 %v1672, %v1672
      %v3371 = vmul.f32 %v1674, %v1674
      %v3372 = vmul.f32 %v2025, %v2025
      %v3373 = vmul.f32 %v2027, %v2027
      %v3374 = vmul.f32 %v2378, %v2378
      %v3375 = vmul.f32 %v2380, %v2380
      %v3376 = vmul.f32 %v1323, %v1323
      %v3377 = vmul.f32 %v1325, %v1325
      %v3378 = vmul.f32 %v1676, %v1676
      %v3379 = vmul.f32 %v1678, %v1678
      %v3380 = vmul.f32 %v2029, %v2029
      %v3381 = vmul.f32 %v2031, %v2031
      %v3382 = vmul.f32 %v2382, %v2382
      %v3383 = vmul.f32 %v2384, %v2384
      %v3384 = vmul.f32 %v1329, %v1329
      %v3385 = vmul.f32 %v1331, %v1331
      %v3386 = vmul.f32 %v1682, %v1682
      %v3387 = vmul.f32 %v1684, %v1684
      %v3388 = vmul.f32 %v2035, %v2035
      %v3389 = vmul.f32 %v2037, %v2037
      %v3390 = vmul.f32 %v2388, %v2388
      %v3391 = vmul.f32 %v2390, %v2390
      %v3392 = vmul.f32 %v1333, %v1333
      %v3393 = vmul.f32 %v1335, %v1335
      %v3394 = vmul.f32 %v1686, %v1686
      %v3395 = vmul.f32 %v1688, %v1688
      %v3396 = vmul.f32 %v2039, %v2039
      %v3397 = vmul.f32 %v2041, %v2041
      %v3398 = vmul.f32 %v2392, %v2392
      %v3399 = vmul.f32 %v2394, %v2394
      %v3400 = vmul.f32 %v1339, %v1339
      %v3401 = vmul.f32 %v1341, %v1341
      %v3402 = vmul.f32 %v1692, %v1692
      %v3403 = vmul.f32 %v1694, %v1694
      %v3404 = vmul.f32 %v2045, %v2045
      %v3405 = vmul.f32 %v2047, %v2047
      %v3406 = vmul.f32 %v2398, %v2398
      %v3407 = vmul.f32 %v2400, %v2400
      %v3408 = vmul.f32 %v1343, %v1343
      %v3409 = vmul.f32 %v1345, %v1345
      %v3410 = vmul.f32 %v1696, %v1696
      %v3411 = vmul.f32 %v1698, %v1698
      %v3412 = vmul.f32 %v2049, %v2049
      %v3413 = vmul.f32 %v2051, %v2051
      %v3414 = vmul.f32 %v2402, %v2402
      %v3415 = vmul.f32 %v2404, %v2404
      %v3416 = vmul.f32 %v1349, %v1349
      %v3417 = vmul.f32 %v1351, %v1351
      %v3418 = vmul.f32 %v1702, %v1702
      %v3419 = vmul.f32 %v1704, %v1704
      %v3420 = vmul.f32 %v2055, %v2055
      %v3421 = vmul.f32 %v2057, %v2057
      %v3422 = vmul.f32 %v2408, %v2408
      %v3423 = vmul.f32 %v2410, %v2410
      %v3424 = vmul.f32 %v1353, %v1353
      %v3425 = vmul.f32 %v1355, %v1355
      %v3426 = vmul.f32 %v1706, %v1706
      %v3427 = vmul.f32 %v1708, %v1708
      %v3428 = vmul.f32 %v2059, %v2059
      %v3429 = vmul.f32 %v2061, %v2061
      %v3430 = vmul.f32 %v2412, %v2412
      %v3431 = vmul.f32 %v2414, %v2414
      %v3432 = vmul.f32 %v1359, %v1359
      %v3433 = vmul.f32 %v1361, %v1361
      %v3434 = vmul.f32 %v1712, %v1712
      %v3435 = vmul.f32 %v1714, %v1714
      %v3436 = vmul.f32 %v2065, %v2065
      %v3437 = vmul.f32 %v2067, %v2067
      %v3438 = vmul.f32 %v2418, %v2418
      %v3439 = vmul.f32 %v2420, %v2420
      %v3440 = vmul.f32 %v1363, %v1363
      %v3441 = vmul.f32 %v1365, %v1365
      %v3442 = vmul.f32 %v1716, %v1716
      %v3443 = vmul.f32 %v1718, %v1718
      %v3444 = vmul.f32 %v2069, %v2069
      %v3445 = vmul.f32 %v2071, %v2071
      %v3446 = vmul.f32 %v2422, %v2422
      %v3447 = vmul.f32 %v2424, %v2424
      %v3448 = vmul.f32 %v1369, %v1369
      %v3449 = vmul.f32 %v1371, %v1371
      %v3450 = vmul.f32 %v1722, %v1722
      %v3451 = vmul.f32 %v1724, %v1724
      %v3452 = vmul.f32 %v2075, %v2075
      %v3453 = vmul.f32 %v2077, %v2077
      %v3454 = vmul.f32 %v2428, %v2428
      %v3455 = vmul.f32 %v2430, %v2430
      %v3456 = vmul.f32 %v1373, %v1373
      %v3457 = vmul.f32 %v1375, %v1375
      %v3458 = vmul.f32 %v1726, %v1726
      %v3459 = vmul.f32 %v1728, %v1728
      %v3460 = vmul.f32 %v2079, %v2079
      %v3461 = vmul.f32 %v2081, %v2081
      %v3462 = vmul.f32 %v2432, %v2432
      %v3463 = vmul.f32 %v2434, %v2434
      %v3464 = vmul.f32 %v1379, %v1379
      %v3465 = vmul.f32 %v1381, %v1381
      %v3466 = vmul.f32 %v1732, %v1732
      %v3467 = vmul.f32 %v1734, %v1734
      %v3468 = vmul.f32 %v2085, %v2085
      %v3469 = vmul.f32 %v2087, %v2087
      %v3470 = vmul.f32 %v2438, %v2438
      %v3471 = vmul.f32 %v2440, %v2440
      %v3472 = vmul.f32 %v1383, %v1383
      %v3473 = vmul.f32 %v1385, %v1385
      %v3474 = vmul.f32 %v1736, %v1736
      %v3475 = vmul.f32 %v1738, %v1738
      %v3476 = vmul.f32 %v2089, %v2089
      %v3477 = vmul.f32 %v2091, %v2091
      %v3478 = vmul.f32 %v2442, %v2442
      %v3479 = vmul.f32 %v2444, %v2444
      %v3480 = vmul.f32 %v1389, %v1389
      %v3481 = vmul.f32 %v1391, %v1391
      %v3482 = vmul.f32 %v1742, %v1742
      %v3483 = vmul.f32 %v1744, %v1744
      %v3484 = vmul.f32 %v2095, %v2095
      %v3485 = vmul.f32 %v2097, %v2097
      %v3486 = vmul.f32 %v2448, %v2448
      %v3487 = vmul.f32 %v2450, %v2450
      %v3488 = vmul.f32 %v1393, %v1393
      %v3489 = vmul.f32 %v1395, %v1395
      %v3490 = vmul.f32 %v1746, %v1746
      %v3491 = vmul.f32 %v1748, %v1748
      %v3492 = vmul.f32 %v2099, %v2099
      %v3493 = vmul.f32 %v2101, %v2101
      %v3494 = vmul.f32 %v2452, %v2452
      %v3495 = vmul.f32 %v2454, %v2454
      %v3496 = vmul.f32 %v1399, %v1399
      %v3497 = vmul.f32 %v1401, %v1401
      %v3498 = vmul.f32 %v1752, %v1752
      %v3499 = vmul.f32 %v1754, %v1754
      %v3500 = vmul.f32 %v2105, %v2105
      %v3501 = vmul.f32 %v2107, %v2107
      %v3502 = vmul.f32 %v2458, %v2458
      %v3503 = vmul.f32 %v2460, %v2460
      %v3504 = vmul.f32 %v1403, %v1403
      %v3505 = vmul.f32 %v1405, %v1405
      %v3506 = vmul.f32 %v1756, %v1756
      %v3507 = vmul.f32 %v1758, %v1758
      %v3508 = vmul.f32 %v2109, %v2109
      %v3509 = vmul.f32 %v2111, %v2111
      %v3510 = vmul.f32 %v2462, %v2462
      %v3511 = vmul.f32 %v2464, %v2464
      %v3512 = vmul.f32 %v1409, %v1409
      %v3513 = vmul.f32 %v1411, %v1411
      %v3514 = vmul.f32 %v1762, %v1762
      %v3515 = vmul.f32 %v1764, %v1764
      %v3516 = vmul.f32 %v2115, %v2115
      %v3517 = vmul.f32 %v2117, %v2117
      %v3518 = vmul.f32 %v2468, %v2468
      %v3519 = vmul.f32 %v2470, %v2470
      %v3520 = vmul.f32 %v1413, %v1413
      %v3521 = vmul.f32 %v1415, %v1415
      %v3522 = vmul.f32 %v1766, %v1766
      %v3523 = vmul.f32 %v1768, %v1768
      %v3524 = vmul.f32 %v2119, %v2119
      %v3525 = vmul.f32 %v2121, %v2121
      %v3526 = vmul.f32 %v2472, %v2472
      %v3527 = vmul.f32 %v2474, %v2474
      %v3528 = vmul.f32 %v1419, %v1419
      %v3529 = vmul.f32 %v1421, %v1421
      %v3530 = vmul.f32 %v1772, %v1772
      %v3531 = vmul.f32 %v1774, %v1774
      %v3532 = vmul.f32 %v2125, %v2125
      %v3533 = vmul.f32 %v2127, %v2127
      %v3534 = vmul.f32 %v2478, %v2478
      %v3535 = vmul.f32 %v2480, %v2480
      %v3536 = vmul.f32 %v1423, %v1423
      %v3537 = vmul.f32 %v1425, %v1425
      %v3538 = vmul.f32 %v1776, %v1776
      %v3539 = vmul.f32 %v1778, %v1778
      %v3540 = vmul.f32 %v2129, %v2129
      %v3541 = vmul.f32 %v2131, %v2131
      %v3542 = vmul.f32 %v2482, %v2482
      %v3543 = vmul.f32 %v2484, %v2484
      %v3544 = vmul.f32 %v1429, %v1429
      %v3545 = vmul.f32 %v1431, %v1431
      %v3546 = vmul.f32 %v1782, %v1782
      %v3547 = vmul.f32 %v1784, %v1784
      %v3548 = vmul.f32 %v2135, %v2135
      %v3549 = vmul.f32 %v2137, %v2137
      %v3550 = vmul.f32 %v2488, %v2488
      %v3551 = vmul.f32 %v2490, %v2490
      %v3552 = vmul.f32 %v1433, %v1433
      %v3553 = vmul.f32 %v1435, %v1435
      %v3554 = vmul.f32 %v1786, %v1786
      %v3555 = vmul.f32 %v1788, %v1788
      %v3556 = vmul.f32 %v2139, %v2139
      %v3557 = vmul.f32 %v2141, %v2141
      %v3558 = vmul.f32 %v2492, %v2492
      %v3559 = vmul.f32 %v2494, %v2494
      %v3560 = vadd.f32 %v3048, %v3056
      %v3561 = vadd.f32 %v3560, %v3064
      %v3562 = vadd.f32 %v3561, %v3072
      %v3563 = vadd.f32 %v3562, %v3080
      %v3564 = vadd.f32 %v3563, %v3088
      %v3565 = vadd.f32 %v3564, %v3096
      %v3566 = vadd.f32 %v3565, %v3104
      %v3567 = vadd.f32 %v3566, %v3112
      %v3568 = vadd.f32 %v3567, %v3120
      %v3569 = vadd.f32 %v3568, %v3128
      %v3570 = vadd.f32 %v3569, %v3136
      %v3571 = vadd.f32 %v3570, %v3144
      %v3572 = vadd.f32 %v3571, %v3152
      %v3573 = vadd.f32 %v3572, %v3160
      %v3574 = vadd.f32 %v3573, %v3168
      %v3575 = vadd.f32 %v3574, %v3176
      %v3576 = vadd.f32 %v3575, %v3184
      %v3577 = vadd.f32 %v3576, %v3192
      %v3578 = vadd.f32 %v3577, %v3200
      %v3579 = vadd.f32 %v3578, %v3208
      %v3580 = vadd.f32 %v3579, %v3216
      %v3581 = vadd.f32 %v3580, %v3224
      %v3582 = vadd.f32 %v3581, %v3232
      %v3583 = vadd.f32 %v3582, %v3240
      %v3584 = vadd.f32 %v3583, %v3248
      %v3585 = vadd.f32 %v3584, %v3256
      %v3586 = vadd.f32 %v3585, %v3264
      %v3587 = vadd.f32 %v3586, %v3272
      %v3588 = vadd.f32 %v3587, %v3280
      %v3589 = vadd.f32 %v3588, %v3288
      %v3590 = vadd.f32 %v3589, %v3296
      %v3591 = vadd.f32 %v3590, %v3304
      %v3592 = vadd.f32 %v3591, %v3312
      %v3593 = vadd.f32 %v3592, %v3320
      %v3594 = vadd.f32 %v3593, %v3328
      %v3595 = vadd.f32 %v3594, %v3336
      %v3596 = vadd.f32 %v3595, %v3344
      %v3597 = vadd.f32 %v3596, %v3352
      %v3598 = vadd.f32 %v3597, %v3360
      %v3599 = vadd.f32 %v3598, %v3368
      %v3600 = vadd.f32 %v3599, %v3376
      %v3601 = vadd.f32 %v3600, %v3384
      %v3602 = vadd.f32 %v3601, %v3392
      %v3603 = vadd.f32 %v3602, %v3400
      %v3604 = vadd.f32 %v3603, %v3408
      %v3605 = vadd.f32 %v3604, %v3416
      %v3606 = vadd.f32 %v3605, %v3424
      %v3607 = vadd.f32 %v3606, %v3432
      %v3608 = vadd.f32 %v3607, %v3440
      %v3609 = vadd.f32 %v3608, %v3448
      %v3610 = vadd.f32 %v3609, %v3456
      %v3611 = vadd.f32 %v3610, %v3464
      %v3612 = vadd.f32 %v3611, %v3472
      %v3613 = vadd.f32 %v3612, %v3480
      %v3614 = vadd.f32 %v3613, %v3488
      %v3615 = vadd.f32 %v3614, %v3496
      %v3616 = vadd.f32 %v3615, %v3504
      %v3617 = vadd.f32 %v3616, %v3512
      %v3618 = vadd.f32 %v3617, %v3520
      %v3619 = vadd.f32 %v3618, %v3528
      %v3620 = vadd.f32 %v3619, %v3536
      %v3621 = vadd.f32 %v3620, %v3544
      %v3622 = vadd.f32 %v3621, %v3552
      %v3623 = vrot.slane %v3622, 4
      %v3624 = vadd.f32 %v3622, %v3623
      %v3625 = vrot.slane %v3624, 2
      %v3626 = vadd.f32 %v3624, %v3625
      %v3627 = vrot.slane %v3626, 1
      %v3628 = vadd.f32 %v3626, %v3627
      %v3629 = vadd.f32 %v3049, %v3057
      %v3630 = vadd.f32 %v3629, %v3065
      %v3631 = vadd.f32 %v3630, %v3073
      %v3632 = vadd.f32 %v3631, %v3081
      %v3633 = vadd.f32 %v3632, %v3089
      %v3634 = vadd.f32 %v3633, %v3097
      %v3635 = vadd.f32 %v3634, %v3105
      %v3636 = vadd.f32 %v3635, %v3113
      %v3637 = vadd.f32 %v3636, %v3121
      %v3638 = vadd.f32 %v3637, %v3129
      %v3639 = vadd.f32 %v3638, %v3137
      %v3640 = vadd.f32 %v3639, %v3145
      %v3641 = vadd.f32 %v3640, %v3153
      %v3642 = vadd.f32 %v3641, %v3161
      %v3643 = vadd.f32 %v3642, %v3169
      %v3644 = vadd.f32 %v3643, %v3177
      %v3645 = vadd.f32 %v3644, %v3185
      %v3646 = vadd.f32 %v3645, %v3193
      %v3647 = vadd.f32 %v3646, %v3201
      %v3648 = vadd.f32 %v3647, %v3209
      %v3649 = vadd.f32 %v3648, %v3217
      %v3650 = vadd.f32 %v3649, %v3225
      %v3651 = vadd.f32 %v3650, %v3233
      %v3652 = vadd.f32 %v3651, %v3241
      %v3653 = vadd.f32 %v3652, %v3249
      %v3654 = vadd.f32 %v3653, %v3257
      %v3655 = vadd.f32 %v3654, %v3265
      %v3656 = vadd.f32 %v3655, %v3273
      %v3657 = vadd.f32 %v3656, %v3281
      %v3658 = vadd.f32 %v3657, %v3289
      %v3659 = vadd.f32 %v3658, %v3297
      %v3660 = vadd.f32 %v3659, %v3305
      %v3661 = vadd.f32 %v3660, %v3313
      %v3662 = vadd.f32 %v3661, %v3321
      %v3663 = vadd.f32 %v3662, %v3329
      %v3664 = vadd.f32 %v3663, %v3337
      %v3665 = vadd.f32 %v3664, %v3345
      %v3666 = vadd.f32 %v3665, %v3353
      %v3667 = vadd.f32 %v3666, %v3361
      %v3668 = vadd.f32 %v3667, %v3369
      %v3669 = vadd.f32 %v3668, %v3377
      %v3670 = vadd.f32 %v3669, %v3385
      %v3671 = vadd.f32 %v3670, %v3393
      %v3672 = vadd.f32 %v3671, %v3401
      %v3673 = vadd.f32 %v3672, %v3409
      %v3674 = vadd.f32 %v3673, %v3417
      %v3675 = vadd.f32 %v3674, %v3425
      %v3676 = vadd.f32 %v3675, %v3433
      %v3677 = vadd.f32 %v3676, %v3441
      %v3678 = vadd.f32 %v3677, %v3449
      %v3679 = vadd.f32 %v3678, %v3457
      %v3680 = vadd.f32 %v3679, %v3465
      %v3681 = vadd.f32 %v3680, %v3473
      %v3682 = vadd.f32 %v3681, %v3481
      %v3683 = vadd.f32 %v3682, %v3489
      %v3684 = vadd.f32 %v3683, %v3497
      %v3685 = vadd.f32 %v3684, %v3505
      %v3686 = vadd.f32 %v3685, %v3513
      %v3687 = vadd.f32 %v3686, %v3521
      %v3688 = vadd.f32 %v3687, %v3529
      %v3689 = vadd.f32 %v3688, %v3537
      %v3690 = vadd.f32 %v3689, %v3545
      %v3691 = vadd.f32 %v3690, %v3553
      %v3692 = vrot.slane %v3691, 4
      %v3693 = vadd.f32 %v3691, %v3692
      %v3694 = vrot.slane %v3693, 2
      %v3695 = vadd.f32 %v3693, %v3694
      %v3696 = vrot.slane %v3695, 1
      %v3697 = vadd.f32 %v3695, %v3696
      %v3698 = vadd.f32 %v3050, %v3058
      %v3699 = vadd.f32 %v3698, %v3066
      %v3700 = vadd.f32 %v3699, %v3074
      %v3701 = vadd.f32 %v3700, %v3082
      %v3702 = vadd.f32 %v3701, %v3090
      %v3703 = vadd.f32 %v3702, %v3098
      %v3704 = vadd.f32 %v3703, %v3106
      %v3705 = vadd.f32 %v3704, %v3114
      %v3706 = vadd.f32 %v3705, %v3122
      %v3707 = vadd.f32 %v3706, %v3130
      %v3708 = vadd.f32 %v3707, %v3138
      %v3709 = vadd.f32 %v3708, %v3146
      %v3710 = vadd.f32 %v3709, %v3154
      %v3711 = vadd.f32 %v3710, %v3162
      %v3712 = vadd.f32 %v3711, %v3170
      %v3713 = vadd.f32 %v3712, %v3178
      %v3714 = vadd.f32 %v3713, %v3186
      %v3715 = vadd.f32 %v3714, %v3194
      %v3716 = vadd.f32 %v3715, %v3202
      %v3717 = vadd.f32 %v3716, %v3210
      %v3718 = vadd.f32 %v3717, %v3218
      %v3719 = vadd.f32 %v3718, %v3226
      %v3720 = vadd.f32 %v3719, %v3234
      %v3721 = vadd.f32 %v3720, %v3242
      %v3722 = vadd.f32 %v3721, %v3250
      %v3723 = vadd.f32 %v3722, %v3258
      %v3724 = vadd.f32 %v3723, %v3266
      %v3725 = vadd.f32 %v3724, %v3274
      %v3726 = vadd.f32 %v3725, %v3282
      %v3727 = vadd.f32 %v3726, %v3290
      %v3728 = vadd.f32 %v3727, %v3298
      %v3729 = vadd.f32 %v3728, %v3306
      %v3730 = vadd.f32 %v3729, %v3314
      %v3731 = vadd.f32 %v3730, %v3322
      %v3732 = vadd.f32 %v3731, %v3330
      %v3733 = vadd.f32 %v3732, %v3338
      %v3734 = vadd.f32 %v3733, %v3346
      %v3735 = vadd.f32 %v3734, %v3354
      %v3736 = vadd.f32 %v3735, %v3362
      %v3737 = vadd.f32 %v3736, %v3370
      %v3738 = vadd.f32 %v3737, %v3378
      %v3739 = vadd.f32 %v3738, %v3386
      %v3740 = vadd.f32 %v3739, %v3394
      %v3741 = vadd.f32 %v3740, %v3402
      %v3742 = vadd.f32 %v3741, %v3410
      %v3743 = vadd.f32 %v3742, %v3418
      %v3744 = vadd.f32 %v3743, %v3426
      %v3745 = vadd.f32 %v3744, %v3434
      %v3746 = vadd.f32 %v3745, %v3442
      %v3747 = vadd.f32 %v3746, %v3450
      %v3748 = vadd.f32 %v3747, %v3458
      %v3749 = vadd.f32 %v3748, %v3466
      %v3750 = vadd.f32 %v3749, %v3474
      %v3751 = vadd.f32 %v3750, %v3482
      %v3752 = vadd.f32 %v3751, %v3490
      %v3753 = vadd.f32 %v3752, %v3498
      %v3754 = vadd.f32 %v3753, %v3506
      %v3755 = vadd.f32 %v3754, %v3514
      %v3756 = vadd.f32 %v3755, %v3522
      %v3757 = vadd.f32 %v3756, %v3530
      %v3758 = vadd.f32 %v3757, %v3538
      %v3759 = vadd.f32 %v3758, %v3546
      %v3760 = vadd.f32 %v3759, %v3554
      %v3761 = vrot.slane %v3760, 4
      %v3762 = vadd.f32 %v3760, %v3761
      %v3763 = vrot.slane %v3762, 2
      %v3764 = vadd.f32 %v3762, %v3763
      %v3765 = vrot.slane %v3764, 1
      %v3766 = vadd.f32 %v3764, %v3765
      %v3767 = vadd.f32 %v3051, %v3059
      %v3768 = vadd.f32 %v3767, %v3067
      %v3769 = vadd.f32 %v3768, %v3075
      %v3770 = vadd.f32 %v3769, %v3083
      %v3771 = vadd.f32 %v3770, %v3091
      %v3772 = vadd.f32 %v3771, %v3099
      %v3773 = vadd.f32 %v3772, %v3107
      %v3774 = vadd.f32 %v3773, %v3115
      %v3775 = vadd.f32 %v3774, %v3123
      %v3776 = vadd.f32 %v3775, %v3131
      %v3777 = vadd.f32 %v3776, %v3139
      %v3778 = vadd.f32 %v3777, %v3147
      %v3779 = vadd.f32 %v3778, %v3155
      %v3780 = vadd.f32 %v3779, %v3163
      %v3781 = vadd.f32 %v3780, %v3171
      %v3782 = vadd.f32 %v3781, %v3179
      %v3783 = vadd.f32 %v3782, %v3187
      %v3784 = vadd.f32 %v3783, %v3195
      %v3785 = vadd.f32 %v3784, %v3203
      %v3786 = vadd.f32 %v3785, %v3211
      %v3787 = vadd.f32 %v3786, %v3219
      %v3788 = vadd.f32 %v3787, %v3227
      %v3789 = vadd.f32 %v3788, %v3235
      %v3790 = vadd.f32 %v3789, %v3243
      %v3791 = vadd.f32 %v3790, %v3251
      %v3792 = vadd.f32 %v3791, %v3259
      %v3793 = vadd.f32 %v3792, %v3267
      %v3794 = vadd.f32 %v3793, %v3275
      %v3795 = vadd.f32 %v3794, %v3283
      %v3796 = vadd.f32 %v3795, %v3291
      %v3797 = vadd.f32 %v3796, %v3299
      %v3798 = vadd.f32 %v3797, %v3307
      %v3799 = vadd.f32 %v3798, %v3315
      %v3800 = vadd.f32 %v3799, %v3323
      %v3801 = vadd.f32 %v3800, %v3331
      %v3802 = vadd.f32 %v3801, %v3339
      %v3803 = vadd.f32 %v3802, %v3347
      %v3804 = vadd.f32 %v3803, %v3355
      %v3805 = vadd.f32 %v3804, %v3363
      %v3806 = vadd.f32 %v3805, %v3371
      %v3807 = vadd.f32 %v3806, %v3379
      %v3808 = vadd.f32 %v3807, %v3387
      %v3809 = vadd.f32 %v3808, %v3395
      %v3810 = vadd.f32 %v3809, %v3403
      %v3811 = vadd.f32 %v3810, %v3411
      %v3812 = vadd.f32 %v3811, %v3419
      %v3813 = vadd.f32 %v3812, %v3427
      %v3814 = vadd.f32 %v3813, %v3435
      %v3815 = vadd.f32 %v3814, %v3443
      %v3816 = vadd.f32 %v3815, %v3451
      %v3817 = vadd.f32 %v3816, %v3459
      %v3818 = vadd.f32 %v3817, %v3467
      %v3819 = vadd.f32 %v3818, %v3475
      %v3820 = vadd.f32 %v3819, %v3483
      %v3821 = vadd.f32 %v3820, %v3491
      %v3822 = vadd.f32 %v3821, %v3499
      %v3823 = vadd.f32 %v3822, %v3507
      %v3824 = vadd.f32 %v3823, %v3515
      %v3825 = vadd.f32 %v3824, %v3523
      %v3826 = vadd.f32 %v3825, %v3531
      %v3827 = vadd.f32 %v3826, %v3539
      %v3828 = vadd.f32 %v3827, %v3547
      %v3829 = vadd.f32 %v3828, %v3555
      %v3830 = vrot.slane %v3829, 4
      %v3831 = vadd.f32 %v3829, %v3830
      %v3832 = vrot.slane %v3831, 2
      %v3833 = vadd.f32 %v3831, %v3832
      %v3834 = vrot.slane %v3833, 1
      %v3835 = vadd.f32 %v3833, %v3834
      %v3836 = vadd.f32 %v3052, %v3060
      %v3837 = vadd.f32 %v3836, %v3068
      %v3838 = vadd.f32 %v3837, %v3076
      %v3839 = vadd.f32 %v3838, %v3084
      %v3840 = vadd.f32 %v3839, %v3092
      %v3841 = vadd.f32 %v3840, %v3100
      %v3842 = vadd.f32 %v3841, %v3108
      %v3843 = vadd.f32 %v3842, %v3116
      %v3844 = vadd.f32 %v3843, %v3124
      %v3845 = vadd.f32 %v3844, %v3132
      %v3846 = vadd.f32 %v3845, %v3140
      %v3847 = vadd.f32 %v3846, %v3148
      %v3848 = vadd.f32 %v3847, %v3156
      %v3849 = vadd.f32 %v3848, %v3164
      %v3850 = vadd.f32 %v3849, %v3172
      %v3851 = vadd.f32 %v3850, %v3180
      %v3852 = vadd.f32 %v3851, %v3188
      %v3853 = vadd.f32 %v3852, %v3196
      %v3854 = vadd.f32 %v3853, %v3204
      %v3855 = vadd.f32 %v3854, %v3212
      %v3856 = vadd.f32 %v3855, %v3220
      %v3857 = vadd.f32 %v3856, %v3228
      %v3858 = vadd.f32 %v3857, %v3236
      %v3859 = vadd.f32 %v3858, %v3244
      %v3860 = vadd.f32 %v3859, %v3252
      %v3861 = vadd.f32 %v3860, %v3260
      %v3862 = vadd.f32 %v3861, %v3268
      %v3863 = vadd.f32 %v3862, %v3276
      %v3864 = vadd.f32 %v3863, %v3284
      %v3865 = vadd.f32 %v3864, %v3292
      %v3866 = vadd.f32 %v3865, %v3300
      %v3867 = vadd.f32 %v3866, %v3308
      %v3868 = vadd.f32 %v3867, %v3316
      %v3869 = vadd.f32 %v3868, %v3324
      %v3870 = vadd.f32 %v3869, %v3332
      %v3871 = vadd.f32 %v3870, %v3340
      %v3872 = vadd.f32 %v3871, %v3348
      %v3873 = vadd.f32 %v3872, %v3356
      %v3874 = vadd.f32 %v3873, %v3364
      %v3875 = vadd.f32 %v3874, %v3372
      %v3876 = vadd.f32 %v3875, %v3380
      %v3877 = vadd.f32 %v3876, %v3388
      %v3878 = vadd.f32 %v3877, %v3396
      %v3879 = vadd.f32 %v3878, %v3404
      %v3880 = vadd.f32 %v3879, %v3412
      %v3881 = vadd.f32 %v3880, %v3420
      %v3882 = vadd.f32 %v3881, %v3428
      %v3883 = vadd.f32 %v3882, %v3436
      %v3884 = vadd.f32 %v3883, %v3444
      %v3885 = vadd.f32 %v3884, %v3452
      %v3886 = vadd.f32 %v3885, %v3460
      %v3887 = vadd.f32 %v3886, %v3468
      %v3888 = vadd.f32 %v3887, %v3476
      %v3889 = vadd.f32 %v3888, %v3484
      %v3890 = vadd.f32 %v3889, %v3492
      %v3891 = vadd.f32 %v3890, %v3500
      %v3892 = vadd.f32 %v3891, %v3508
      %v3893 = vadd.f32 %v3892, %v3516
      %v3894 = vadd.f32 %v3893, %v3524
      %v3895 = vadd.f32 %v3894, %v3532
      %v3896 = vadd.f32 %v3895, %v3540
      %v3897 = vadd.f32 %v3896, %v3548
      %v3898 = vadd.f32 %v3897, %v3556
      %v3899 = vrot.slane %v3898, 4
      %v3900 = vadd.f32 %v3898, %v3899
      %v3901 = vrot.slane %v3900, 2
      %v3902 = vadd.f32 %v3900, %v3901
      %v3903 = vrot.slane %v3902, 1
      %v3904 = vadd.f32 %v3902, %v3903
      %v3905 = vadd.f32 %v3053, %v3061
      %v3906 = vadd.f32 %v3905, %v3069
      %v3907 = vadd.f32 %v3906, %v3077
      %v3908 = vadd.f32 %v3907, %v3085
      %v3909 = vadd.f32 %v3908, %v3093
      %v3910 = vadd.f32 %v3909, %v3101
      %v3911 = vadd.f32 %v3910, %v3109
      %v3912 = vadd.f32 %v3911, %v3117
      %v3913 = vadd.f32 %v3912, %v3125
      %v3914 = vadd.f32 %v3913, %v3133
      %v3915 = vadd.f32 %v3914, %v3141
      %v3916 = vadd.f32 %v3915, %v3149
      %v3917 = vadd.f32 %v3916, %v3157
      %v3918 = vadd.f32 %v3917, %v3165
      %v3919 = vadd.f32 %v3918, %v3173
      %v3920 = vadd.f32 %v3919, %v3181
      %v3921 = vadd.f32 %v3920, %v3189
      %v3922 = vadd.f32 %v3921, %v3197
      %v3923 = vadd.f32 %v3922, %v3205
      %v3924 = vadd.f32 %v3923, %v3213
      %v3925 = vadd.f32 %v3924, %v3221
      %v3926 = vadd.f32 %v3925, %v3229
      %v3927 = vadd.f32 %v3926, %v3237
      %v3928 = vadd.f32 %v3927, %v3245
      %v3929 = vadd.f32 %v3928, %v3253
      %v3930 = vadd.f32 %v3929, %v3261
      %v3931 = vadd.f32 %v3930, %v3269
      %v3932 = vadd.f32 %v3931, %v3277
      %v3933 = vadd.f32 %v3932, %v3285
      %v3934 = vadd.f32 %v3933, %v3293
      %v3935 = vadd.f32 %v3934, %v3301
      %v3936 = vadd.f32 %v3935, %v3309
      %v3937 = vadd.f32 %v3936, %v3317
      %v3938 = vadd.f32 %v3937, %v3325
      %v3939 = vadd.f32 %v3938, %v3333
      %v3940 = vadd.f32 %v3939, %v3341
      %v3941 = vadd.f32 %v3940, %v3349
      %v3942 = vadd.f32 %v3941, %v3357
      %v3943 = vadd.f32 %v3942, %v3365
      %v3944 = vadd.f32 %v3943, %v3373
      %v3945 = vadd.f32 %v3944, %v3381
      %v3946 = vadd.f32 %v3945, %v3389
      %v3947 = vadd.f32 %v3946, %v3397
      %v3948 = vadd.f32 %v3947, %v3405
      %v3949 = vadd.f32 %v3948, %v3413
      %v3950 = vadd.f32 %v3949, %v3421
      %v3951 = vadd.f32 %v3950, %v3429
      %v3952 = vadd.f32 %v3951, %v3437
      %v3953 = vadd.f32 %v3952, %v3445
      %v3954 = vadd.f32 %v3953, %v3453
      %v3955 = vadd.f32 %v3954, %v3461
      %v3956 = vadd.f32 %v3955, %v3469
      %v3957 = vadd.f32 %v3956, %v3477
      %v3958 = vadd.f32 %v3957, %v3485
      %v3959 = vadd.f32 %v3958, %v3493
      %v3960 = vadd.f32 %v3959, %v3501
      %v3961 = vadd.f32 %v3960, %v3509
      %v3962 = vadd.f32 %v3961, %v3517
      %v3963 = vadd.f32 %v3962, %v3525
      %v3964 = vadd.f32 %v3963, %v3533
      %v3965 = vadd.f32 %v3964, %v3541
      %v3966 = vadd.f32 %v3965, %v3549
      %v3967 = vadd.f32 %v3966, %v3557
      %v3968 = vrot.slane %v3967, 4
      %v3969 = vadd.f32 %v3967, %v3968
      %v3970 = vrot.slane %v3969, 2
      %v3971 = vadd.f32 %v3969, %v3970
      %v3972 = vrot.slane %v3971, 1
      %v3973 = vadd.f32 %v3971, %v3972
      %v3974 = vadd.f32 %v3054, %v3062
      %v3975 = vadd.f32 %v3974, %v3070
      %v3976 = vadd.f32 %v3975, %v3078
      %v3977 = vadd.f32 %v3976, %v3086
      %v3978 = vadd.f32 %v3977, %v3094
      %v3979 = vadd.f32 %v3978, %v3102
      %v3980 = vadd.f32 %v3979, %v3110
      %v3981 = vadd.f32 %v3980, %v3118
      %v3982 = vadd.f32 %v3981, %v3126
      %v3983 = vadd.f32 %v3982, %v3134
      %v3984 = vadd.f32 %v3983, %v3142
      %v3985 = vadd.f32 %v3984, %v3150
      %v3986 = vadd.f32 %v3985, %v3158
      %v3987 = vadd.f32 %v3986, %v3166
      %v3988 = vadd.f32 %v3987, %v3174
      %v3989 = vadd.f32 %v3988, %v3182
      %v3990 = vadd.f32 %v3989, %v3190
      %v3991 = vadd.f32 %v3990, %v3198
      %v3992 = vadd.f32 %v3991, %v3206
      %v3993 = vadd.f32 %v3992, %v3214
      %v3994 = vadd.f32 %v3993, %v3222
      %v3995 = vadd.f32 %v3994, %v3230
      %v3996 = vadd.f32 %v3995, %v3238
      %v3997 = vadd.f32 %v3996, %v3246
      %v3998 = vadd.f32 %v3997, %v3254
      %v3999 = vadd.f32 %v3998, %v3262
      %v4000 = vadd.f32 %v3999, %v3270
      %v4001 = vadd.f32 %v4000, %v3278
      %v4002 = vadd.f32 %v4001, %v3286
      %v4003 = vadd.f32 %v4002, %v3294
      %v4004 = vadd.f32 %v4003, %v3302
      %v4005 = vadd.f32 %v4004, %v3310
      %v4006 = vadd.f32 %v4005, %v3318
      %v4007 = vadd.f32 %v4006, %v3326
      %v4008 = vadd.f32 %v4007, %v3334
      %v4009 = vadd.f32 %v4008, %v3342
      %v4010 = vadd.f32 %v4009, %v3350
      %v4011 = vadd.f32 %v4010, %v3358
      %v4012 = vadd.f32 %v4011, %v3366
      %v4013 = vadd.f32 %v4012, %v3374
      %v4014 = vadd.f32 %v4013, %v3382
      %v4015 = vadd.f32 %v4014, %v3390
      %v4016 = vadd.f32 %v4015, %v3398
      %v4017 = vadd.f32 %v4016, %v3406
      %v4018 = vadd.f32 %v4017, %v3414
      %v4019 = vadd.f32 %v4018, %v3422
      %v4020 = vadd.f32 %v4019, %v3430
      %v4021 = vadd.f32 %v4020, %v3438
      %v4022 = vadd.f32 %v4021, %v3446
      %v4023 = vadd.f32 %v4022, %v3454
      %v4024 = vadd.f32 %v4023, %v3462
      %v4025 = vadd.f32 %v4024, %v3470
      %v4026 = vadd.f32 %v4025, %v3478
      %v4027 = vadd.f32 %v4026, %v3486
      %v4028 = vadd.f32 %v4027, %v3494
      %v4029 = vadd.f32 %v4028, %v3502
      %v4030 = vadd.f32 %v4029, %v3510
      %v4031 = vadd.f32 %v4030, %v3518
      %v4032 = vadd.f32 %v4031, %v3526
      %v4033 = vadd.f32 %v4032, %v3534
      %v4034 = vadd.f32 %v4033, %v3542
      %v4035 = vadd.f32 %v4034, %v3550
      %v4036 = vadd.f32 %v4035, %v3558
      %v4037 = vrot.slane %v4036, 4
      %v4038 = vadd.f32 %v4036, %v4037
      %v4039 = vrot.slane %v4038, 2
      %v4040 = vadd.f32 %v4038, %v4039
      %v4041 = vrot.slane %v4040, 1
      %v4042 = vadd.f32 %v4040, %v4041
      %v4043 = vadd.f32 %v3055, %v3063
      %v4044 = vadd.f32 %v4043, %v3071
      %v4045 = vadd.f32 %v4044, %v3079
      %v4046 = vadd.f32 %v4045, %v3087
      %v4047 = vadd.f32 %v4046, %v3095
      %v4048 = vadd.f32 %v4047, %v3103
      %v4049 = vadd.f32 %v4048, %v3111
      %v4050 = vadd.f32 %v4049, %v3119
      %v4051 = vadd.f32 %v4050, %v3127
      %v4052 = vadd.f32 %v4051, %v3135
      %v4053 = vadd.f32 %v4052, %v3143
      %v4054 = vadd.f32 %v4053, %v3151
      %v4055 = vadd.f32 %v4054, %v3159
      %v4056 = vadd.f32 %v4055, %v3167
      %v4057 = vadd.f32 %v4056, %v3175
      %v4058 = vadd.f32 %v4057, %v3183
      %v4059 = vadd.f32 %v4058, %v3191
      %v4060 = vadd.f32 %v4059, %v3199
      %v4061 = vadd.f32 %v4060, %v3207
      %v4062 = vadd.f32 %v4061, %v3215
      %v4063 = vadd.f32 %v4062, %v3223
      %v4064 = vadd.f32 %v4063, %v3231
      %v4065 = vadd.f32 %v4064, %v3239
      %v4066 = vadd.f32 %v4065, %v3247
      %v4067 = vadd.f32 %v4066, %v3255
      %v4068 = vadd.f32 %v4067, %v3263
      %v4069 = vadd.f32 %v4068, %v3271
      %v4070 = vadd.f32 %v4069, %v3279
      %v4071 = vadd.f32 %v4070, %v3287
      %v4072 = vadd.f32 %v4071, %v3295
      %v4073 = vadd.f32 %v4072, %v3303
      %v4074 = vadd.f32 %v4073, %v3311
      %v4075 = vadd.f32 %v4074, %v3319
      %v4076 = vadd.f32 %v4075, %v3327
      %v4077 = vadd.f32 %v4076, %v3335
      %v4078 = vadd.f32 %v4077, %v3343
      %v4079 = vadd.f32 %v4078, %v3351
      %v4080 = vadd.f32 %v4079, %v3359
      %v4081 = vadd.f32 %v4080, %v3367
      %v4082 = vadd.f32 %v4081, %v3375
      %v4083 = vadd.f32 %v4082, %v3383
      %v4084 = vadd.f32 %v4083, %v3391
      %v4085 = vadd.f32 %v4084, %v3399
      %v4086 = vadd.f32 %v4085, %v3407
      %v4087 = vadd.f32 %v4086, %v3415
      %v4088 = vadd.f32 %v4087, %v3423
      %v4089 = vadd.f32 %v4088, %v3431
      %v4090 = vadd.f32 %v4089, %v3439
      %v4091 = vadd.f32 %v4090, %v3447
      %v4092 = vadd.f32 %v4091, %v3455
      %v4093 = vadd.f32 %v4092, %v3463
      %v4094 = vadd.f32 %v4093, %v3471
      %v4095 = vadd.f32 %v4094, %v3479
      %v4096 = vadd.f32 %v4095, %v3487
      %v4097 = vadd.f32 %v4096, %v3495
      %v4098 = vadd.f32 %v4097, %v3503
      %v4099 = vadd.f32 %v4098, %v3511
      %v4100 = vadd.f32 %v4099, %v3519
      %v4101 = vadd.f32 %v4100, %v3527
      %v4102 = vadd.f32 %v4101, %v3535
      %v4103 = vadd.f32 %v4102, %v3543
      %v4104 = vadd.f32 %v4103, %v3551
      %v4105 = vadd.f32 %v4104, %v3559
      %v4106 = vrot.slane %v4105, 4
      %v4107 = vadd.f32 %v4105, %v4106
      %v4108 = vrot.slane %v4107, 2
      %v4109 = vadd.f32 %v4107, %v4108
      %v4110 = vrot.slane %v4109, 1
      %v4111 = vadd.f32 %v4109, %v4110
      %vm4112 = vcmask 1040384
      %v4113 = vsel %vm4112, %v2564, %v3628
      %v4114 = vsel %vm4112, %v2633, %v3697
      %v4115 = vsel %vm4112, %v2702, %v3766
      %v4116 = vsel %vm4112, %v2771, %v3835
      %v4117 = vsel %vm4112, %v2840, %v3904
      %v4118 = vsel %vm4112, %v2909, %v3973
      %v4119 = vsel %vm4112, %v2978, %v4042
      %v4120 = vsel %vm4112, %v3047, %v4111
      %v4129 = vcombine.low %v4113, %v4114
      %v4130 = vcombine.low %v4115, %v4116
      %v4132 = vunpack.c.l.s4 1983009808
      %v4133 = vunpack.c.0.s8 %v4132
      %v4134 = vlaneseq
      %v4135 = vshrl.u32 %v4134, 7
      %v4136 = vsub.s32 %v4133, %v4135
      %v4137 = vrot.slane %v4129, %v4136
      %v4139 = vunpack.c.l.s4 1983009808
      %v4140 = vunpack.c.0.s8 %v4139
      %v4141 = vlaneseq
      %v4142 = vshrl.u32 %v4141, 7
      %v4143 = vsub.s32 %v4140, %v4142
      %v4144 = vrot.slane %v4130, %v4143
      %v4145 = vcombine.low %v4137, %v4144
      %v4146 = vcombine.low %v4117, %v4118
      %v4147 = vcombine.low %v4119, %v4120
      %v4149 = vunpack.c.l.s4 1983009808
      %v4150 = vunpack.c.0.s8 %v4149
      %v4151 = vlaneseq
      %v4152 = vshrl.u32 %v4151, 7
      %v4153 = vsub.s32 %v4150, %v4152
      %v4154 = vrot.slane %v4146, %v4153
      %v4156 = vunpack.c.l.s4 1983009808
      %v4157 = vunpack.c.0.s8 %v4156
      %v4158 = vlaneseq
      %v4159 = vshrl.u32 %v4158, 7
      %v4160 = vsub.s32 %v4157, %v4159
      %v4161 = vrot.slane %v4147, %v4160
      %v4162 = vcombine.low %v4154, %v4161
      %4165 = vst [vmem:[%s284] sm:$0xff] %v4145
      %4166 = vst [vmem:[%s284 + $0x8] sm:$0xff] %v4162
      %v4167 = vmax.f32 %v1119, %v1123
      %v4168 = vmax.f32 %v4167, %v1129
      %v4169 = vmax.f32 %v4168, %v1133
      %v4170 = vmax.f32 %v4169, %v1139
      %v4171 = vmax.f32 %v4170, %v1143
      %v4172 = vmax.f32 %v4171, %v1149
      %v4173 = vmax.f32 %v4172, %v1153
      %v4174 = vmax.f32 %v4173, %v1159
      %v4175 = vmax.f32 %v4174, %v1163
      %v4176 = vmax.f32 %v4175, %v1169
      %v4177 = vmax.f32 %v4176, %v1173
      %v4178 = vmax.f32 %v4177, %v1179
      %v4179 = vmax.f32 %v4178, %v1183
      %v4180 = vmax.f32 %v4179, %v1189
      %v4181 = vmax.f32 %v4180, %v1193
      %v4182 = vmax.f32 %v4181, %v1199
      %v4183 = vmax.f32 %v4182, %v1203
      %v4184 = vmax.f32 %v4183, %v1209
      %v4185 = vmax.f32 %v4184, %v1213
      %v4186 = vmax.f32 %v4185, %v1219
      %v4187 = vmax.f32 %v4186, %v1223
      %v4188 = vmax.f32 %v4187, %v1229
      %v4189 = vmax.f32 %v4188, %v1233
      %v4190 = vmax.f32 %v4189, %v1239
      %v4191 = vmax.f32 %v4190, %v1243
      %v4192 = vmax.f32 %v4191, %v1249
      %v4193 = vmax.f32 %v4192, %v1253
      %v4194 = vmax.f32 %v4193, %v1259
      %v4195 = vmax.f32 %v4194, %v1263
      %v4196 = vmax.f32 %v4195, %v1269
      %v4197 = vmax.f32 %v4196, %v1273
      %v4198 = vmax.f32 %v4197, %v1279
      %v4199 = vmax.f32 %v4198, %v1283
      %v4200 = vmax.f32 %v4199, %v1289
      %v4201 = vmax.f32 %v4200, %v1293
      %v4202 = vmax.f32 %v4201, %v1299
      %v4203 = vmax.f32 %v4202, %v1303
      %v4204 = vmax.f32 %v4203, %v1309
      %v4205 = vmax.f32 %v4204, %v1313
      %v4206 = vmax.f32 %v4205, %v1319
      %v4207 = vmax.f32 %v4206, %v1323
      %v4208 = vmax.f32 %v4207, %v1329
      %v4209 = vmax.f32 %v4208, %v1333
      %v4210 = vmax.f32 %v4209, %v1339
      %v4211 = vmax.f32 %v4210, %v1343
      %v4212 = vmax.f32 %v4211, %v1349
      %v4213 = vmax.f32 %v4212, %v1353
      %v4214 = vmax.f32 %v4213, %v1359
      %v4215 = vmax.f32 %v4214, %v1363
      %v4216 = vmax.f32 %v4215, %v1369
      %v4217 = vmax.f32 %v4216, %v1373
      %v4218 = vmax.f32 %v4217, %v1379
      %v4219 = vmax.f32 %v4218, %v1383
      %v4220 = vmax.f32 %v4219, %v1389
      %v4221 = vmax.f32 %v4220, %v1393
      %v4222 = vmax.f32 %v4221, %v1399
      %v4223 = vmax.f32 %v4222, %v1403
      %v4224 = vmax.f32 %v4223, %v1409
      %v4225 = vmax.f32 %v4224, %v1413
      %v4226 = vmax.f32 %v4225, %v1419
      %v4227 = vmax.f32 %v4226, %v1423
      %v4228 = vmax.f32 %v4227, %v1429
      %v4229 = vmax.f32 %v4228, %v1433
      %v4230 = vrot.slane %v4229, 4
      %v4231 = vmax.f32 %v4229, %v4230
      %v4232 = vrot.slane %v4231, 2
      %v4233 = vmax.f32 %v4231, %v4232
      %v4234 = vrot.slane %v4233, 1
      %v4235 = vmax.f32 %v4233, %v4234
      %v4236 = vmax.f32 %v1121, %v1125
      %v4237 = vmax.f32 %v4236, %v1131
      %v4238 = vmax.f32 %v4237, %v1135
      %v4239 = vmax.f32 %v4238, %v1141
      %v4240 = vmax.f32 %v4239, %v1145
      %v4241 = vmax.f32 %v4240, %v1151
      %v4242 = vmax.f32 %v4241, %v1155
      %v4243 = vmax.f32 %v4242, %v1161
      %v4244 = vmax.f32 %v4243, %v1165
      %v4245 = vmax.f32 %v4244, %v1171
      %v4246 = vmax.f32 %v4245, %v1175
      %v4247 = vmax.f32 %v4246, %v1181
      %v4248 = vmax.f32 %v4247, %v1185
      %v4249 = vmax.f32 %v4248, %v1191
      %v4250 = vmax.f32 %v4249, %v1195
      %v4251 = vmax.f32 %v4250, %v1201
      %v4252 = vmax.f32 %v4251, %v1205
      %v4253 = vmax.f32 %v4252, %v1211
      %v4254 = vmax.f32 %v4253, %v1215
      %v4255 = vmax.f32 %v4254, %v1221
      %v4256 = vmax.f32 %v4255, %v1225
      %v4257 = vmax.f32 %v4256, %v1231
      %v4258 = vmax.f32 %v4257, %v1235
      %v4259 = vmax.f32 %v4258, %v1241
      %v4260 = vmax.f32 %v4259, %v1245
      %v4261 = vmax.f32 %v4260, %v1251
      %v4262 = vmax.f32 %v4261, %v1255
      %v4263 = vmax.f32 %v4262, %v1261
      %v4264 = vmax.f32 %v4263, %v1265
      %v4265 = vmax.f32 %v4264, %v1271
      %v4266 = vmax.f32 %v4265, %v1275
      %v4267 = vmax.f32 %v4266, %v1281
      %v4268 = vmax.f32 %v4267, %v1285
      %v4269 = vmax.f32 %v4268, %v1291
      %v4270 = vmax.f32 %v4269, %v1295
      %v4271 = vmax.f32 %v4270, %v1301
      %v4272 = vmax.f32 %v4271, %v1305
      %v4273 = vmax.f32 %v4272, %v1311
      %v4274 = vmax.f32 %v4273, %v1315
      %v4275 = vmax.f32 %v4274, %v1321
      %v4276 = vmax.f32 %v4275, %v1325
      %v4277 = vmax.f32 %v4276, %v1331
      %v4278 = vmax.f32 %v4277, %v1335
      %v4279 = vmax.f32 %v4278, %v1341
      %v4280 = vmax.f32 %v4279, %v1345
      %v4281 = vmax.f32 %v4280, %v1351
      %v4282 = vmax.f32 %v4281, %v1355
      %v4283 = vmax.f32 %v4282, %v1361
      %v4284 = vmax.f32 %v4283, %v1365
      %v4285 = vmax.f32 %v4284, %v1371
      %v4286 = vmax.f32 %v4285, %v1375
      %v4287 = vmax.f32 %v4286, %v1381
      %v4288 = vmax.f32 %v4287, %v1385
      %v4289 = vmax.f32 %v4288, %v1391
      %v4290 = vmax.f32 %v4289, %v1395
      %v4291 = vmax.f32 %v4290, %v1401
      %v4292 = vmax.f32 %v4291, %v1405
      %v4293 = vmax.f32 %v4292, %v1411
      %v4294 = vmax.f32 %v4293, %v1415
      %v4295 = vmax.f32 %v4294, %v1421
      %v4296 = vmax.f32 %v4295, %v1425
      %v4297 = vmax.f32 %v4296, %v1431
      %v4298 = vmax.f32 %v4297, %v1435
      %v4299 = vrot.slane %v4298, 4
      %v4300 = vmax.f32 %v4298, %v4299
      %v4301 = vrot.slane %v4300, 2
      %v4302 = vmax.f32 %v4300, %v4301
      %v4303 = vrot.slane %v4302, 1
      %v4304 = vmax.f32 %v4302, %v4303
      %v4305 = vmax.f32 %v1472, %v1476
      %v4306 = vmax.f32 %v4305, %v1482
      %v4307 = vmax.f32 %v4306, %v1486
      %v4308 = vmax.f32 %v4307, %v1492
      %v4309 = vmax.f32 %v4308, %v1496
      %v4310 = vmax.f32 %v4309, %v1502
      %v4311 = vmax.f32 %v4310, %v1506
      %v4312 = vmax.f32 %v4311, %v1512
      %v4313 = vmax.f32 %v4312, %v1516
      %v4314 = vmax.f32 %v4313, %v1522
      %v4315 = vmax.f32 %v4314, %v1526
      %v4316 = vmax.f32 %v4315, %v1532
      %v4317 = vmax.f32 %v4316, %v1536
      %v4318 = vmax.f32 %v4317, %v1542
      %v4319 = vmax.f32 %v4318, %v1546
      %v4320 = vmax.f32 %v4319, %v1552
      %v4321 = vmax.f32 %v4320, %v1556
      %v4322 = vmax.f32 %v4321, %v1562
      %v4323 = vmax.f32 %v4322, %v1566
      %v4324 = vmax.f32 %v4323, %v1572
      %v4325 = vmax.f32 %v4324, %v1576
      %v4326 = vmax.f32 %v4325, %v1582
      %v4327 = vmax.f32 %v4326, %v1586
      %v4328 = vmax.f32 %v4327, %v1592
      %v4329 = vmax.f32 %v4328, %v1596
      %v4330 = vmax.f32 %v4329, %v1602
      %v4331 = vmax.f32 %v4330, %v1606
      %v4332 = vmax.f32 %v4331, %v1612
      %v4333 = vmax.f32 %v4332, %v1616
      %v4334 = vmax.f32 %v4333, %v1622
      %v4335 = vmax.f32 %v4334, %v1626
      %v4336 = vmax.f32 %v4335, %v1632
      %v4337 = vmax.f32 %v4336, %v1636
      %v4338 = vmax.f32 %v4337, %v1642
      %v4339 = vmax.f32 %v4338, %v1646
      %v4340 = vmax.f32 %v4339, %v1652
      %v4341 = vmax.f32 %v4340, %v1656
      %v4342 = vmax.f32 %v4341, %v1662
      %v4343 = vmax.f32 %v4342, %v1666
      %v4344 = vmax.f32 %v4343, %v1672
      %v4345 = vmax.f32 %v4344, %v1676
      %v4346 = vmax.f32 %v4345, %v1682
      %v4347 = vmax.f32 %v4346, %v1686
      %v4348 = vmax.f32 %v4347, %v1692
      %v4349 = vmax.f32 %v4348, %v1696
      %v4350 = vmax.f32 %v4349, %v1702
      %v4351 = vmax.f32 %v4350, %v1706
      %v4352 = vmax.f32 %v4351, %v1712
      %v4353 = vmax.f32 %v4352, %v1716
      %v4354 = vmax.f32 %v4353, %v1722
      %v4355 = vmax.f32 %v4354, %v1726
      %v4356 = vmax.f32 %v4355, %v1732
      %v4357 = vmax.f32 %v4356, %v1736
      %v4358 = vmax.f32 %v4357, %v1742
      %v4359 = vmax.f32 %v4358, %v1746
      %v4360 = vmax.f32 %v4359, %v1752
      %v4361 = vmax.f32 %v4360, %v1756
      %v4362 = vmax.f32 %v4361, %v1762
      %v4363 = vmax.f32 %v4362, %v1766
      %v4364 = vmax.f32 %v4363, %v1772
      %v4365 = vmax.f32 %v4364, %v1776
      %v4366 = vmax.f32 %v4365, %v1782
      %v4367 = vmax.f32 %v4366, %v1786
      %v4368 = vrot.slane %v4367, 4
      %v4369 = vmax.f32 %v4367, %v4368
      %v4370 = vrot.slane %v4369, 2
      %v4371 = vmax.f32 %v4369, %v4370
      %v4372 = vrot.slane %v4371, 1
      %v4373 = vmax.f32 %v4371, %v4372
      %v4374 = vmax.f32 %v1474, %v1478
      %v4375 = vmax.f32 %v4374, %v1484
      %v4376 = vmax.f32 %v4375, %v1488
      %v4377 = vmax.f32 %v4376, %v1494
      %v4378 = vmax.f32 %v4377, %v1498
      %v4379 = vmax.f32 %v4378, %v1504
      %v4380 = vmax.f32 %v4379, %v1508
      %v4381 = vmax.f32 %v4380, %v1514
      %v4382 = vmax.f32 %v4381, %v1518
      %v4383 = vmax.f32 %v4382, %v1524
      %v4384 = vmax.f32 %v4383, %v1528
      %v4385 = vmax.f32 %v4384, %v1534
      %v4386 = vmax.f32 %v4385, %v1538
      %v4387 = vmax.f32 %v4386, %v1544
      %v4388 = vmax.f32 %v4387, %v1548
      %v4389 = vmax.f32 %v4388, %v1554
      %v4390 = vmax.f32 %v4389, %v1558
      %v4391 = vmax.f32 %v4390, %v1564
      %v4392 = vmax.f32 %v4391, %v1568
      %v4393 = vmax.f32 %v4392, %v1574
      %v4394 = vmax.f32 %v4393, %v1578
      %v4395 = vmax.f32 %v4394, %v1584
      %v4396 = vmax.f32 %v4395, %v1588
      %v4397 = vmax.f32 %v4396, %v1594
      %v4398 = vmax.f32 %v4397, %v1598
      %v4399 = vmax.f32 %v4398, %v1604
      %v4400 = vmax.f32 %v4399, %v1608
      %v4401 = vmax.f32 %v4400, %v1614
      %v4402 = vmax.f32 %v4401, %v1618
      %v4403 = vmax.f32 %v4402, %v1624
      %v4404 = vmax.f32 %v4403, %v1628
      %v4405 = vmax.f32 %v4404, %v1634
      %v4406 = vmax.f32 %v4405, %v1638
      %v4407 = vmax.f32 %v4406, %v1644
      %v4408 = vmax.f32 %v4407, %v1648
      %v4409 = vmax.f32 %v4408, %v1654
      %v4410 = vmax.f32 %v4409, %v1658
      %v4411 = vmax.f32 %v4410, %v1664
      %v4412 = vmax.f32 %v4411, %v1668
      %v4413 = vmax.f32 %v4412, %v1674
      %v4414 = vmax.f32 %v4413, %v1678
      %v4415 = vmax.f32 %v4414, %v1684
      %v4416 = vmax.f32 %v4415, %v1688
      %v4417 = vmax.f32 %v4416, %v1694
      %v4418 = vmax.f32 %v4417, %v1698
      %v4419 = vmax.f32 %v4418, %v1704
      %v4420 = vmax.f32 %v4419, %v1708
      %v4421 = vmax.f32 %v4420, %v1714
      %v4422 = vmax.f32 %v4421, %v1718
      %v4423 = vmax.f32 %v4422, %v1724
      %v4424 = vmax.f32 %v4423, %v1728
      %v4425 = vmax.f32 %v4424, %v1734
      %v4426 = vmax.f32 %v4425, %v1738
      %v4427 = vmax.f32 %v4426, %v1744
      %v4428 = vmax.f32 %v4427, %v1748
      %v4429 = vmax.f32 %v4428, %v1754
      %v4430 = vmax.f32 %v4429, %v1758
      %v4431 = vmax.f32 %v4430, %v1764
      %v4432 = vmax.f32 %v4431, %v1768
      %v4433 = vmax.f32 %v4432, %v1774
      %v4434 = vmax.f32 %v4433, %v1778
      %v4435 = vmax.f32 %v4434, %v1784
      %v4436 = vmax.f32 %v4435, %v1788
      %v4437 = vrot.slane %v4436, 4
      %v4438 = vmax.f32 %v4436, %v4437
      %v4439 = vrot.slane %v4438, 2
      %v4440 = vmax.f32 %v4438, %v4439
      %v4441 = vrot.slane %v4440, 1
      %v4442 = vmax.f32 %v4440, %v4441
      %v4443 = vmax.f32 %v1825, %v1829
      %v4444 = vmax.f32 %v4443, %v1835
      %v4445 = vmax.f32 %v4444, %v1839
      %v4446 = vmax.f32 %v4445, %v1845
      %v4447 = vmax.f32 %v4446, %v1849
      %v4448 = vmax.f32 %v4447, %v1855
      %v4449 = vmax.f32 %v4448, %v1859
      %v4450 = vmax.f32 %v4449, %v1865
      %v4451 = vmax.f32 %v4450, %v1869
      %v4452 = vmax.f32 %v4451, %v1875
      %v4453 = vmax.f32 %v4452, %v1879
      %v4454 = vmax.f32 %v4453, %v1885
      %v4455 = vmax.f32 %v4454, %v1889
      %v4456 = vmax.f32 %v4455, %v1895
      %v4457 = vmax.f32 %v4456, %v1899
      %v4458 = vmax.f32 %v4457, %v1905
      %v4459 = vmax.f32 %v4458, %v1909
      %v4460 = vmax.f32 %v4459, %v1915
      %v4461 = vmax.f32 %v4460, %v1919
      %v4462 = vmax.f32 %v4461, %v1925
      %v4463 = vmax.f32 %v4462, %v1929
      %v4464 = vmax.f32 %v4463, %v1935
      %v4465 = vmax.f32 %v4464, %v1939
      %v4466 = vmax.f32 %v4465, %v1945
      %v4467 = vmax.f32 %v4466, %v1949
      %v4468 = vmax.f32 %v4467, %v1955
      %v4469 = vmax.f32 %v4468, %v1959
      %v4470 = vmax.f32 %v4469, %v1965
      %v4471 = vmax.f32 %v4470, %v1969
      %v4472 = vmax.f32 %v4471, %v1975
      %v4473 = vmax.f32 %v4472, %v1979
      %v4474 = vmax.f32 %v4473, %v1985
      %v4475 = vmax.f32 %v4474, %v1989
      %v4476 = vmax.f32 %v4475, %v1995
      %v4477 = vmax.f32 %v4476, %v1999
      %v4478 = vmax.f32 %v4477, %v2005
      %v4479 = vmax.f32 %v4478, %v2009
      %v4480 = vmax.f32 %v4479, %v2015
      %v4481 = vmax.f32 %v4480, %v2019
      %v4482 = vmax.f32 %v4481, %v2025
      %v4483 = vmax.f32 %v4482, %v2029
      %v4484 = vmax.f32 %v4483, %v2035
      %v4485 = vmax.f32 %v4484, %v2039
      %v4486 = vmax.f32 %v4485, %v2045
      %v4487 = vmax.f32 %v4486, %v2049
      %v4488 = vmax.f32 %v4487, %v2055
      %v4489 = vmax.f32 %v4488, %v2059
      %v4490 = vmax.f32 %v4489, %v2065
      %v4491 = vmax.f32 %v4490, %v2069
      %v4492 = vmax.f32 %v4491, %v2075
      %v4493 = vmax.f32 %v4492, %v2079
      %v4494 = vmax.f32 %v4493, %v2085
      %v4495 = vmax.f32 %v4494, %v2089
      %v4496 = vmax.f32 %v4495, %v2095
      %v4497 = vmax.f32 %v4496, %v2099
      %v4498 = vmax.f32 %v4497, %v2105
      %v4499 = vmax.f32 %v4498, %v2109
      %v4500 = vmax.f32 %v4499, %v2115
      %v4501 = vmax.f32 %v4500, %v2119
      %v4502 = vmax.f32 %v4501, %v2125
      %v4503 = vmax.f32 %v4502, %v2129
      %v4504 = vmax.f32 %v4503, %v2135
      %v4505 = vmax.f32 %v4504, %v2139
      %v4506 = vrot.slane %v4505, 4
      %v4507 = vmax.f32 %v4505, %v4506
      %v4508 = vrot.slane %v4507, 2
      %v4509 = vmax.f32 %v4507, %v4508
      %v4510 = vrot.slane %v4509, 1
      %v4511 = vmax.f32 %v4509, %v4510
      %v4512 = vmax.f32 %v1827, %v1831
      %v4513 = vmax.f32 %v4512, %v1837
      %v4514 = vmax.f32 %v4513, %v1841
      %v4515 = vmax.f32 %v4514, %v1847
      %v4516 = vmax.f32 %v4515, %v1851
      %v4517 = vmax.f32 %v4516, %v1857
      %v4518 = vmax.f32 %v4517, %v1861
      %v4519 = vmax.f32 %v4518, %v1867
      %v4520 = vmax.f32 %v4519, %v1871
      %v4521 = vmax.f32 %v4520, %v1877
      %v4522 = vmax.f32 %v4521, %v1881
      %v4523 = vmax.f32 %v4522, %v1887
      %v4524 = vmax.f32 %v4523, %v1891
      %v4525 = vmax.f32 %v4524, %v1897
      %v4526 = vmax.f32 %v4525, %v1901
      %v4527 = vmax.f32 %v4526, %v1907
      %v4528 = vmax.f32 %v4527, %v1911
      %v4529 = vmax.f32 %v4528, %v1917
      %v4530 = vmax.f32 %v4529, %v1921
      %v4531 = vmax.f32 %v4530, %v1927
      %v4532 = vmax.f32 %v4531, %v1931
      %v4533 = vmax.f32 %v4532, %v1937
      %v4534 = vmax.f32 %v4533, %v1941
      %v4535 = vmax.f32 %v4534, %v1947
      %v4536 = vmax.f32 %v4535, %v1951
      %v4537 = vmax.f32 %v4536, %v1957
      %v4538 = vmax.f32 %v4537, %v1961
      %v4539 = vmax.f32 %v4538, %v1967
      %v4540 = vmax.f32 %v4539, %v1971
      %v4541 = vmax.f32 %v4540, %v1977
      %v4542 = vmax.f32 %v4541, %v1981
      %v4543 = vmax.f32 %v4542, %v1987
      %v4544 = vmax.f32 %v4543, %v1991
      %v4545 = vmax.f32 %v4544, %v1997
      %v4546 = vmax.f32 %v4545, %v2001
      %v4547 = vmax.f32 %v4546, %v2007
      %v4548 = vmax.f32 %v4547, %v2011
      %v4549 = vmax.f32 %v4548, %v2017
      %v4550 = vmax.f32 %v4549, %v2021
      %v4551 = vmax.f32 %v4550, %v2027
      %v4552 = vmax.f32 %v4551, %v2031
      %v4553 = vmax.f32 %v4552, %v2037
      %v4554 = vmax.f32 %v4553, %v2041
      %v4555 = vmax.f32 %v4554, %v2047
      %v4556 = vmax.f32 %v4555, %v2051
      %v4557 = vmax.f32 %v4556, %v2057
      %v4558 = vmax.f32 %v4557, %v2061
      %v4559 = vmax.f32 %v4558, %v2067
      %v4560 = vmax.f32 %v4559, %v2071
      %v4561 = vmax.f32 %v4560, %v2077
      %v4562 = vmax.f32 %v4561, %v2081
      %v4563 = vmax.f32 %v4562, %v2087
      %v4564 = vmax.f32 %v4563, %v2091
      %v4565 = vmax.f32 %v4564, %v2097
      %v4566 = vmax.f32 %v4565, %v2101
      %v4567 = vmax.f32 %v4566, %v2107
      %v4568 = vmax.f32 %v4567, %v2111
      %v4569 = vmax.f32 %v4568, %v2117
      %v4570 = vmax.f32 %v4569, %v2121
      %v4571 = vmax.f32 %v4570, %v2127
      %v4572 = vmax.f32 %v4571, %v2131
      %v4573 = vmax.f32 %v4572, %v2137
      %v4574 = vmax.f32 %v4573, %v2141
      %v4575 = vrot.slane %v4574, 4
      %v4576 = vmax.f32 %v4574, %v4575
      %v4577 = vrot.slane %v4576, 2
      %v4578 = vmax.f32 %v4576, %v4577
      %v4579 = vrot.slane %v4578, 1
      %v4580 = vmax.f32 %v4578, %v4579
      %v4581 = vmax.f32 %v2178, %v2182
      %v4582 = vmax.f32 %v4581, %v2188
      %v4583 = vmax.f32 %v4582, %v2192
      %v4584 = vmax.f32 %v4583, %v2198
      %v4585 = vmax.f32 %v4584, %v2202
      %v4586 = vmax.f32 %v4585, %v2208
      %v4587 = vmax.f32 %v4586, %v2212
      %v4588 = vmax.f32 %v4587, %v2218
      %v4589 = vmax.f32 %v4588, %v2222
      %v4590 = vmax.f32 %v4589, %v2228
      %v4591 = vmax.f32 %v4590, %v2232
      %v4592 = vmax.f32 %v4591, %v2238
      %v4593 = vmax.f32 %v4592, %v2242
      %v4594 = vmax.f32 %v4593, %v2248
      %v4595 = vmax.f32 %v4594, %v2252
      %v4596 = vmax.f32 %v4595, %v2258
      %v4597 = vmax.f32 %v4596, %v2262
      %v4598 = vmax.f32 %v4597, %v2268
      %v4599 = vmax.f32 %v4598, %v2272
      %v4600 = vmax.f32 %v4599, %v2278
      %v4601 = vmax.f32 %v4600, %v2282
      %v4602 = vmax.f32 %v4601, %v2288
      %v4603 = vmax.f32 %v4602, %v2292
      %v4604 = vmax.f32 %v4603, %v2298
      %v4605 = vmax.f32 %v4604, %v2302
      %v4606 = vmax.f32 %v4605, %v2308
      %v4607 = vmax.f32 %v4606, %v2312
      %v4608 = vmax.f32 %v4607, %v2318
      %v4609 = vmax.f32 %v4608, %v2322
      %v4610 = vmax.f32 %v4609, %v2328
      %v4611 = vmax.f32 %v4610, %v2332
      %v4612 = vmax.f32 %v4611, %v2338
      %v4613 = vmax.f32 %v4612, %v2342
      %v4614 = vmax.f32 %v4613, %v2348
      %v4615 = vmax.f32 %v4614, %v2352
      %v4616 = vmax.f32 %v4615, %v2358
      %v4617 = vmax.f32 %v4616, %v2362
      %v4618 = vmax.f32 %v4617, %v2368
      %v4619 = vmax.f32 %v4618, %v2372
      %v4620 = vmax.f32 %v4619, %v2378
      %v4621 = vmax.f32 %v4620, %v2382
      %v4622 = vmax.f32 %v4621, %v2388
      %v4623 = vmax.f32 %v4622, %v2392
      %v4624 = vmax.f32 %v4623, %v2398
      %v4625 = vmax.f32 %v4624, %v2402
      %v4626 = vmax.f32 %v4625, %v2408
      %v4627 = vmax.f32 %v4626, %v2412
      %v4628 = vmax.f32 %v4627, %v2418
      %v4629 = vmax.f32 %v4628, %v2422
      %v4630 = vmax.f32 %v4629, %v2428
      %v4631 = vmax.f32 %v4630, %v2432
      %v4632 = vmax.f32 %v4631, %v2438
      %v4633 = vmax.f32 %v4632, %v2442
      %v4634 = vmax.f32 %v4633, %v2448
      %v4635 = vmax.f32 %v4634, %v2452
      %v4636 = vmax.f32 %v4635, %v2458
      %v4637 = vmax.f32 %v4636, %v2462
      %v4638 = vmax.f32 %v4637, %v2468
      %v4639 = vmax.f32 %v4638, %v2472
      %v4640 = vmax.f32 %v4639, %v2478
      %v4641 = vmax.f32 %v4640, %v2482
      %v4642 = vmax.f32 %v4641, %v2488
      %v4643 = vmax.f32 %v4642, %v2492
      %v4644 = vrot.slane %v4643, 4
      %v4645 = vmax.f32 %v4643, %v4644
      %v4646 = vrot.slane %v4645, 2
      %v4647 = vmax.f32 %v4645, %v4646
      %v4648 = vrot.slane %v4647, 1
      %v4649 = vmax.f32 %v4647, %v4648
      %v4650 = vmax.f32 %v2180, %v2184
      %v4651 = vmax.f32 %v4650, %v2190
      %v4652 = vmax.f32 %v4651, %v2194
      %v4653 = vmax.f32 %v4652, %v2200
      %v4654 = vmax.f32 %v4653, %v2204
      %v4655 = vmax.f32 %v4654, %v2210
      %v4656 = vmax.f32 %v4655, %v2214
      %v4657 = vmax.f32 %v4656, %v2220
      %v4658 = vmax.f32 %v4657, %v2224
      %v4659 = vmax.f32 %v4658, %v2230
      %v4660 = vmax.f32 %v4659, %v2234
      %v4661 = vmax.f32 %v4660, %v2240
      %v4662 = vmax.f32 %v4661, %v2244
      %v4663 = vmax.f32 %v4662, %v2250
      %v4664 = vmax.f32 %v4663, %v2254
      %v4665 = vmax.f32 %v4664, %v2260
      %v4666 = vmax.f32 %v4665, %v2264
      %v4667 = vmax.f32 %v4666, %v2270
      %v4668 = vmax.f32 %v4667, %v2274
      %v4669 = vmax.f32 %v4668, %v2280
      %v4670 = vmax.f32 %v4669, %v2284
      %v4671 = vmax.f32 %v4670, %v2290
      %v4672 = vmax.f32 %v4671, %v2294
      %v4673 = vmax.f32 %v4672, %v2300
      %v4674 = vmax.f32 %v4673, %v2304
      %v4675 = vmax.f32 %v4674, %v2310
      %v4676 = vmax.f32 %v4675, %v2314
      %v4677 = vmax.f32 %v4676, %v2320
      %v4678 = vmax.f32 %v4677, %v2324
      %v4679 = vmax.f32 %v4678, %v2330
      %v4680 = vmax.f32 %v4679, %v2334
      %v4681 = vmax.f32 %v4680, %v2340
      %v4682 = vmax.f32 %v4681, %v2344
      %v4683 = vmax.f32 %v4682, %v2350
      %v4684 = vmax.f32 %v4683, %v2354
      %v4685 = vmax.f32 %v4684, %v2360
      %v4686 = vmax.f32 %v4685, %v2364
      %v4687 = vmax.f32 %v4686, %v2370
      %v4688 = vmax.f32 %v4687, %v2374
      %v4689 = vmax.f32 %v4688, %v2380
      %v4690 = vmax.f32 %v4689, %v2384
      %v4691 = vmax.f32 %v4690, %v2390
      %v4692 = vmax.f32 %v4691, %v2394
      %v4693 = vmax.f32 %v4692, %v2400
      %v4694 = vmax.f32 %v4693, %v2404
      %v4695 = vmax.f32 %v4694, %v2410
      %v4696 = vmax.f32 %v4695, %v2414
      %v4697 = vmax.f32 %v4696, %v2420
      %v4698 = vmax.f32 %v4697, %v2424
      %v4699 = vmax.f32 %v4698, %v2430
      %v4700 = vmax.f32 %v4699, %v2434
      %v4701 = vmax.f32 %v4700, %v2440
      %v4702 = vmax.f32 %v4701, %v2444
      %v4703 = vmax.f32 %v4702, %v2450
      %v4704 = vmax.f32 %v4703, %v2454
      %v4705 = vmax.f32 %v4704, %v2460
      %v4706 = vmax.f32 %v4705, %v2464
      %v4707 = vmax.f32 %v4706, %v2470
      %v4708 = vmax.f32 %v4707, %v2474
      %v4709 = vmax.f32 %v4708, %v2480
      %v4710 = vmax.f32 %v4709, %v2484
      %v4711 = vmax.f32 %v4710, %v2490
      %v4712 = vmax.f32 %v4711, %v2494
      %v4713 = vrot.slane %v4712, 4
      %v4714 = vmax.f32 %v4712, %v4713
      %v4715 = vrot.slane %v4714, 2
      %v4716 = vmax.f32 %v4714, %v4715
      %v4717 = vrot.slane %v4716, 1
      %v4718 = vmax.f32 %v4716, %v4717
      %v4719 = vmin.f32 %v1119, %v1123
      %v4720 = vmin.f32 %v4719, %v1129
      %v4721 = vmin.f32 %v4720, %v1133
      %v4722 = vmin.f32 %v4721, %v1139
      %v4723 = vmin.f32 %v4722, %v1143
      %v4724 = vmin.f32 %v4723, %v1149
      %v4725 = vmin.f32 %v4724, %v1153
      %v4726 = vmin.f32 %v4725, %v1159
      %v4727 = vmin.f32 %v4726, %v1163
      %v4728 = vmin.f32 %v4727, %v1169
      %v4729 = vmin.f32 %v4728, %v1173
      %v4730 = vmin.f32 %v4729, %v1179
      %v4731 = vmin.f32 %v4730, %v1183
      %v4732 = vmin.f32 %v4731, %v1189
      %v4733 = vmin.f32 %v4732, %v1193
      %v4734 = vmin.f32 %v4733, %v1199
      %v4735 = vmin.f32 %v4734, %v1203
      %v4736 = vmin.f32 %v4735, %v1209
      %v4737 = vmin.f32 %v4736, %v1213
      %v4738 = vmin.f32 %v4737, %v1219
      %v4739 = vmin.f32 %v4738, %v1223
      %v4740 = vmin.f32 %v4739, %v1229
      %v4741 = vmin.f32 %v4740, %v1233
      %v4742 = vmin.f32 %v4741, %v1239
      %v4743 = vmin.f32 %v4742, %v1243
      %v4744 = vmin.f32 %v4743, %v1249
      %v4745 = vmin.f32 %v4744, %v1253
      %v4746 = vmin.f32 %v4745, %v1259
      %v4747 = vmin.f32 %v4746, %v1263
      %v4748 = vmin.f32 %v4747, %v1269
      %v4749 = vmin.f32 %v4748, %v1273
      %v4750 = vmin.f32 %v4749, %v1279
      %v4751 = vmin.f32 %v4750, %v1283
      %v4752 = vmin.f32 %v4751, %v1289
      %v4753 = vmin.f32 %v4752, %v1293
      %v4754 = vmin.f32 %v4753, %v1299
      %v4755 = vmin.f32 %v4754, %v1303
      %v4756 = vmin.f32 %v4755, %v1309
      %v4757 = vmin.f32 %v4756, %v1313
      %v4758 = vmin.f32 %v4757, %v1319
      %v4759 = vmin.f32 %v4758, %v1323
      %v4760 = vmin.f32 %v4759, %v1329
      %v4761 = vmin.f32 %v4760, %v1333
      %v4762 = vmin.f32 %v4761, %v1339
      %v4763 = vmin.f32 %v4762, %v1343
      %v4764 = vmin.f32 %v4763, %v1349
      %v4765 = vmin.f32 %v4764, %v1353
      %v4766 = vmin.f32 %v4765, %v1359
      %v4767 = vmin.f32 %v4766, %v1363
      %v4768 = vmin.f32 %v4767, %v1369
      %v4769 = vmin.f32 %v4768, %v1373
      %v4770 = vmin.f32 %v4769, %v1379
      %v4771 = vmin.f32 %v4770, %v1383
      %v4772 = vmin.f32 %v4771, %v1389
      %v4773 = vmin.f32 %v4772, %v1393
      %v4774 = vmin.f32 %v4773, %v1399
      %v4775 = vmin.f32 %v4774, %v1403
      %v4776 = vmin.f32 %v4775, %v1409
      %v4777 = vmin.f32 %v4776, %v1413
      %v4778 = vmin.f32 %v4777, %v1419
      %v4779 = vmin.f32 %v4778, %v1423
      %v4780 = vmin.f32 %v4779, %v1429
      %v4781 = vmin.f32 %v4780, %v1433
      %v4782 = vrot.slane %v4781, 4
      %v4783 = vmin.f32 %v4781, %v4782
      %v4784 = vrot.slane %v4783, 2
      %v4785 = vmin.f32 %v4783, %v4784
      %v4786 = vrot.slane %v4785, 1
      %v4787 = vmin.f32 %v4785, %v4786
      %v4788 = vmin.f32 %v1121, %v1125
      %v4789 = vmin.f32 %v4788, %v1131
      %v4790 = vmin.f32 %v4789, %v1135
      %v4791 = vmin.f32 %v4790, %v1141
      %v4792 = vmin.f32 %v4791, %v1145
      %v4793 = vmin.f32 %v4792, %v1151
      %v4794 = vmin.f32 %v4793, %v1155
      %v4795 = vmin.f32 %v4794, %v1161
      %v4796 = vmin.f32 %v4795, %v1165
      %v4797 = vmin.f32 %v4796, %v1171
      %v4798 = vmin.f32 %v4797, %v1175
      %v4799 = vmin.f32 %v4798, %v1181
      %v4800 = vmin.f32 %v4799, %v1185
      %v4801 = vmin.f32 %v4800, %v1191
      %v4802 = vmin.f32 %v4801, %v1195
      %v4803 = vmin.f32 %v4802, %v1201
      %v4804 = vmin.f32 %v4803, %v1205
      %v4805 = vmin.f32 %v4804, %v1211
      %v4806 = vmin.f32 %v4805, %v1215
      %v4807 = vmin.f32 %v4806, %v1221
      %v4808 = vmin.f32 %v4807, %v1225
      %v4809 = vmin.f32 %v4808, %v1231
      %v4810 = vmin.f32 %v4809, %v1235
      %v4811 = vmin.f32 %v4810, %v1241
      %v4812 = vmin.f32 %v4811, %v1245
      %v4813 = vmin.f32 %v4812, %v1251
      %v4814 = vmin.f32 %v4813, %v1255
      %v4815 = vmin.f32 %v4814, %v1261
      %v4816 = vmin.f32 %v4815, %v1265
      %v4817 = vmin.f32 %v4816, %v1271
      %v4818 = vmin.f32 %v4817, %v1275
      %v4819 = vmin.f32 %v4818, %v1281
      %v4820 = vmin.f32 %v4819, %v1285
      %v4821 = vmin.f32 %v4820, %v1291
      %v4822 = vmin.f32 %v4821, %v1295
      %v4823 = vmin.f32 %v4822, %v1301
      %v4824 = vmin.f32 %v4823, %v1305
      %v4825 = vmin.f32 %v4824, %v1311
      %v4826 = vmin.f32 %v4825, %v1315
      %v4827 = vmin.f32 %v4826, %v1321
      %v4828 = vmin.f32 %v4827, %v1325
      %v4829 = vmin.f32 %v4828, %v1331
      %v4830 = vmin.f32 %v4829, %v1335
      %v4831 = vmin.f32 %v4830, %v1341
      %v4832 = vmin.f32 %v4831, %v1345
      %v4833 = vmin.f32 %v4832, %v1351
      %v4834 = vmin.f32 %v4833, %v1355
      %v4835 = vmin.f32 %v4834, %v1361
      %v4836 = vmin.f32 %v4835, %v1365
      %v4837 = vmin.f32 %v4836, %v1371
      %v4838 = vmin.f32 %v4837, %v1375
      %v4839 = vmin.f32 %v4838, %v1381
      %v4840 = vmin.f32 %v4839, %v1385
      %v4841 = vmin.f32 %v4840, %v1391
      %v4842 = vmin.f32 %v4841, %v1395
      %v4843 = vmin.f32 %v4842, %v1401
      %v4844 = vmin.f32 %v4843, %v1405
      %v4845 = vmin.f32 %v4844, %v1411
      %v4846 = vmin.f32 %v4845, %v1415
      %v4847 = vmin.f32 %v4846, %v1421
      %v4848 = vmin.f32 %v4847, %v1425
      %v4849 = vmin.f32 %v4848, %v1431
      %v4850 = vmin.f32 %v4849, %v1435
      %v4851 = vrot.slane %v4850, 4
      %v4852 = vmin.f32 %v4850, %v4851
      %v4853 = vrot.slane %v4852, 2
      %v4854 = vmin.f32 %v4852, %v4853
      %v4855 = vrot.slane %v4854, 1
      %v4856 = vmin.f32 %v4854, %v4855
      %v4857 = vmin.f32 %v1472, %v1476
      %v4858 = vmin.f32 %v4857, %v1482
      %v4859 = vmin.f32 %v4858, %v1486
      %v4860 = vmin.f32 %v4859, %v1492
      %v4861 = vmin.f32 %v4860, %v1496
      %v4862 = vmin.f32 %v4861, %v1502
      %v4863 = vmin.f32 %v4862, %v1506
      %v4864 = vmin.f32 %v4863, %v1512
      %v4865 = vmin.f32 %v4864, %v1516
      %v4866 = vmin.f32 %v4865, %v1522
      %v4867 = vmin.f32 %v4866, %v1526
      %v4868 = vmin.f32 %v4867, %v1532
      %v4869 = vmin.f32 %v4868, %v1536
      %v4870 = vmin.f32 %v4869, %v1542
      %v4871 = vmin.f32 %v4870, %v1546
      %v4872 = vmin.f32 %v4871, %v1552
      %v4873 = vmin.f32 %v4872, %v1556
      %v4874 = vmin.f32 %v4873, %v1562
      %v4875 = vmin.f32 %v4874, %v1566
      %v4876 = vmin.f32 %v4875, %v1572
      %v4877 = vmin.f32 %v4876, %v1576
      %v4878 = vmin.f32 %v4877, %v1582
      %v4879 = vmin.f32 %v4878, %v1586
      %v4880 = vmin.f32 %v4879, %v1592
      %v4881 = vmin.f32 %v4880, %v1596
      %v4882 = vmin.f32 %v4881, %v1602
      %v4883 = vmin.f32 %v4882, %v1606
      %v4884 = vmin.f32 %v4883, %v1612
      %v4885 = vmin.f32 %v4884, %v1616
      %v4886 = vmin.f32 %v4885, %v1622
      %v4887 = vmin.f32 %v4886, %v1626
      %v4888 = vmin.f32 %v4887, %v1632
      %v4889 = vmin.f32 %v4888, %v1636
      %v4890 = vmin.f32 %v4889, %v1642
      %v4891 = vmin.f32 %v4890, %v1646
      %v4892 = vmin.f32 %v4891, %v1652
      %v4893 = vmin.f32 %v4892, %v1656
      %v4894 = vmin.f32 %v4893, %v1662
      %v4895 = vmin.f32 %v4894, %v1666
      %v4896 = vmin.f32 %v4895, %v1672
      %v4897 = vmin.f32 %v4896, %v1676
      %v4898 = vmin.f32 %v4897, %v1682
      %v4899 = vmin.f32 %v4898, %v1686
      %v4900 = vmin.f32 %v4899, %v1692
      %v4901 = vmin.f32 %v4900, %v1696
      %v4902 = vmin.f32 %v4901, %v1702
      %v4903 = vmin.f32 %v4902, %v1706
      %v4904 = vmin.f32 %v4903, %v1712
      %v4905 = vmin.f32 %v4904, %v1716
      %v4906 = vmin.f32 %v4905, %v1722
      %v4907 = vmin.f32 %v4906, %v1726
      %v4908 = vmin.f32 %v4907, %v1732
      %v4909 = vmin.f32 %v4908, %v1736
      %v4910 = vmin.f32 %v4909, %v1742
      %v4911 = vmin.f32 %v4910, %v1746
      %v4912 = vmin.f32 %v4911, %v1752
      %v4913 = vmin.f32 %v4912, %v1756
      %v4914 = vmin.f32 %v4913, %v1762
      %v4915 = vmin.f32 %v4914, %v1766
      %v4916 = vmin.f32 %v4915, %v1772
      %v4917 = vmin.f32 %v4916, %v1776
      %v4918 = vmin.f32 %v4917, %v1782
      %v4919 = vmin.f32 %v4918, %v1786
      %v4920 = vrot.slane %v4919, 4
      %v4921 = vmin.f32 %v4919, %v4920
      %v4922 = vrot.slane %v4921, 2
      %v4923 = vmin.f32 %v4921, %v4922
      %v4924 = vrot.slane %v4923, 1
      %v4925 = vmin.f32 %v4923, %v4924
      %v4926 = vmin.f32 %v1474, %v1478
      %v4927 = vmin.f32 %v4926, %v1484
      %v4928 = vmin.f32 %v4927, %v1488
      %v4929 = vmin.f32 %v4928, %v1494
      %v4930 = vmin.f32 %v4929, %v1498
      %v4931 = vmin.f32 %v4930, %v1504
      %v4932 = vmin.f32 %v4931, %v1508
      %v4933 = vmin.f32 %v4932, %v1514
      %v4934 = vmin.f32 %v4933, %v1518
      %v4935 = vmin.f32 %v4934, %v1524
      %v4936 = vmin.f32 %v4935, %v1528
      %v4937 = vmin.f32 %v4936, %v1534
      %v4938 = vmin.f32 %v4937, %v1538
      %v4939 = vmin.f32 %v4938, %v1544
      %v4940 = vmin.f32 %v4939, %v1548
      %v4941 = vmin.f32 %v4940, %v1554
      %v4942 = vmin.f32 %v4941, %v1558
      %v4943 = vmin.f32 %v4942, %v1564
      %v4944 = vmin.f32 %v4943, %v1568
      %v4945 = vmin.f32 %v4944, %v1574
      %v4946 = vmin.f32 %v4945, %v1578
      %v4947 = vmin.f32 %v4946, %v1584
      %v4948 = vmin.f32 %v4947, %v1588
      %v4949 = vmin.f32 %v4948, %v1594
      %v4950 = vmin.f32 %v4949, %v1598
      %v4951 = vmin.f32 %v4950, %v1604
      %v4952 = vmin.f32 %v4951, %v1608
      %v4953 = vmin.f32 %v4952, %v1614
      %v4954 = vmin.f32 %v4953, %v1618
      %v4955 = vmin.f32 %v4954, %v1624
      %v4956 = vmin.f32 %v4955, %v1628
      %v4957 = vmin.f32 %v4956, %v1634
      %v4958 = vmin.f32 %v4957, %v1638
      %v4959 = vmin.f32 %v4958, %v1644
      %v4960 = vmin.f32 %v4959, %v1648
      %v4961 = vmin.f32 %v4960, %v1654
      %v4962 = vmin.f32 %v4961, %v1658
      %v4963 = vmin.f32 %v4962, %v1664
      %v4964 = vmin.f32 %v4963, %v1668
      %v4965 = vmin.f32 %v4964, %v1674
      %v4966 = vmin.f32 %v4965, %v1678
      %v4967 = vmin.f32 %v4966, %v1684
      %v4968 = vmin.f32 %v4967, %v1688
      %v4969 = vmin.f32 %v4968, %v1694
      %v4970 = vmin.f32 %v4969, %v1698
      %v4971 = vmin.f32 %v4970, %v1704
      %v4972 = vmin.f32 %v4971, %v1708
      %v4973 = vmin.f32 %v4972, %v1714
      %v4974 = vmin.f32 %v4973, %v1718
      %v4975 = vmin.f32 %v4974, %v1724
      %v4976 = vmin.f32 %v4975, %v1728
      %v4977 = vmin.f32 %v4976, %v1734
      %v4978 = vmin.f32 %v4977, %v1738
      %v4979 = vmin.f32 %v4978, %v1744
      %v4980 = vmin.f32 %v4979, %v1748
      %v4981 = vmin.f32 %v4980, %v1754
      %v4982 = vmin.f32 %v4981, %v1758
      %v4983 = vmin.f32 %v4982, %v1764
      %v4984 = vmin.f32 %v4983, %v1768
      %v4985 = vmin.f32 %v4984, %v1774
      %v4986 = vmin.f32 %v4985, %v1778
      %v4987 = vmin.f32 %v4986, %v1784
      %v4988 = vmin.f32 %v4987, %v1788
      %v4989 = vrot.slane %v4988, 4
      %v4990 = vmin.f32 %v4988, %v4989
      %v4991 = vrot.slane %v4990, 2
      %v4992 = vmin.f32 %v4990, %v4991
      %v4993 = vrot.slane %v4992, 1
      %v4994 = vmin.f32 %v4992, %v4993
      %v4995 = vmin.f32 %v1825, %v1829
      %v4996 = vmin.f32 %v4995, %v1835
      %v4997 = vmin.f32 %v4996, %v1839
      %v4998 = vmin.f32 %v4997, %v1845
      %v4999 = vmin.f32 %v4998, %v1849
      %v5000 = vmin.f32 %v4999, %v1855
      %v5001 = vmin.f32 %v5000, %v1859
      %v5002 = vmin.f32 %v5001, %v1865
      %v5003 = vmin.f32 %v5002, %v1869
      %v5004 = vmin.f32 %v5003, %v1875
      %v5005 = vmin.f32 %v5004, %v1879
      %v5006 = vmin.f32 %v5005, %v1885
      %v5007 = vmin.f32 %v5006, %v1889
      %v5008 = vmin.f32 %v5007, %v1895
      %v5009 = vmin.f32 %v5008, %v1899
      %v5010 = vmin.f32 %v5009, %v1905
      %v5011 = vmin.f32 %v5010, %v1909
      %v5012 = vmin.f32 %v5011, %v1915
      %v5013 = vmin.f32 %v5012, %v1919
      %v5014 = vmin.f32 %v5013, %v1925
      %v5015 = vmin.f32 %v5014, %v1929
      %v5016 = vmin.f32 %v5015, %v1935
      %v5017 = vmin.f32 %v5016, %v1939
      %v5018 = vmin.f32 %v5017, %v1945
      %v5019 = vmin.f32 %v5018, %v1949
      %v5020 = vmin.f32 %v5019, %v1955
      %v5021 = vmin.f32 %v5020, %v1959
      %v5022 = vmin.f32 %v5021, %v1965
      %v5023 = vmin.f32 %v5022, %v1969
      %v5024 = vmin.f32 %v5023, %v1975
      %v5025 = vmin.f32 %v5024, %v1979
      %v5026 = vmin.f32 %v5025, %v1985
      %v5027 = vmin.f32 %v5026, %v1989
      %v5028 = vmin.f32 %v5027, %v1995
      %v5029 = vmin.f32 %v5028, %v1999
      %v5030 = vmin.f32 %v5029, %v2005
      %v5031 = vmin.f32 %v5030, %v2009
      %v5032 = vmin.f32 %v5031, %v2015
      %v5033 = vmin.f32 %v5032, %v2019
      %v5034 = vmin.f32 %v5033, %v2025
      %v5035 = vmin.f32 %v5034, %v2029
      %v5036 = vmin.f32 %v5035, %v2035
      %v5037 = vmin.f32 %v5036, %v2039
      %v5038 = vmin.f32 %v5037, %v2045
      %v5039 = vmin.f32 %v5038, %v2049
      %v5040 = vmin.f32 %v5039, %v2055
      %v5041 = vmin.f32 %v5040, %v2059
      %v5042 = vmin.f32 %v5041, %v2065
      %v5043 = vmin.f32 %v5042, %v2069
      %v5044 = vmin.f32 %v5043, %v2075
      %v5045 = vmin.f32 %v5044, %v2079
      %v5046 = vmin.f32 %v5045, %v2085
      %v5047 = vmin.f32 %v5046, %v2089
      %v5048 = vmin.f32 %v5047, %v2095
      %v5049 = vmin.f32 %v5048, %v2099
      %v5050 = vmin.f32 %v5049, %v2105
      %v5051 = vmin.f32 %v5050, %v2109
      %v5052 = vmin.f32 %v5051, %v2115
      %v5053 = vmin.f32 %v5052, %v2119
      %v5054 = vmin.f32 %v5053, %v2125
      %v5055 = vmin.f32 %v5054, %v2129
      %v5056 = vmin.f32 %v5055, %v2135
      %v5057 = vmin.f32 %v5056, %v2139
      %v5058 = vrot.slane %v5057, 4
      %v5059 = vmin.f32 %v5057, %v5058
      %v5060 = vrot.slane %v5059, 2
      %v5061 = vmin.f32 %v5059, %v5060
      %v5062 = vrot.slane %v5061, 1
      %v5063 = vmin.f32 %v5061, %v5062
      %v5064 = vmin.f32 %v1827, %v1831
      %v5065 = vmin.f32 %v5064, %v1837
      %v5066 = vmin.f32 %v5065, %v1841
      %v5067 = vmin.f32 %v5066, %v1847
      %v5068 = vmin.f32 %v5067, %v1851
      %v5069 = vmin.f32 %v5068, %v1857
      %v5070 = vmin.f32 %v5069, %v1861
      %v5071 = vmin.f32 %v5070, %v1867
      %v5072 = vmin.f32 %v5071, %v1871
      %v5073 = vmin.f32 %v5072, %v1877
      %v5074 = vmin.f32 %v5073, %v1881
      %v5075 = vmin.f32 %v5074, %v1887
      %v5076 = vmin.f32 %v5075, %v1891
      %v5077 = vmin.f32 %v5076, %v1897
      %v5078 = vmin.f32 %v5077, %v1901
      %v5079 = vmin.f32 %v5078, %v1907
      %v5080 = vmin.f32 %v5079, %v1911
      %v5081 = vmin.f32 %v5080, %v1917
      %v5082 = vmin.f32 %v5081, %v1921
      %v5083 = vmin.f32 %v5082, %v1927
      %v5084 = vmin.f32 %v5083, %v1931
      %v5085 = vmin.f32 %v5084, %v1937
      %v5086 = vmin.f32 %v5085, %v1941
      %v5087 = vmin.f32 %v5086, %v1947
      %v5088 = vmin.f32 %v5087, %v1951
      %v5089 = vmin.f32 %v5088, %v1957
      %v5090 = vmin.f32 %v5089, %v1961
      %v5091 = vmin.f32 %v5090, %v1967
      %v5092 = vmin.f32 %v5091, %v1971
      %v5093 = vmin.f32 %v5092, %v1977
      %v5094 = vmin.f32 %v5093, %v1981
      %v5095 = vmin.f32 %v5094, %v1987
      %v5096 = vmin.f32 %v5095, %v1991
      %v5097 = vmin.f32 %v5096, %v1997
      %v5098 = vmin.f32 %v5097, %v2001
      %v5099 = vmin.f32 %v5098, %v2007
      %v5100 = vmin.f32 %v5099, %v2011
      %v5101 = vmin.f32 %v5100, %v2017
      %v5102 = vmin.f32 %v5101, %v2021
      %v5103 = vmin.f32 %v5102, %v2027
      %v5104 = vmin.f32 %v5103, %v2031
      %v5105 = vmin.f32 %v5104, %v2037
      %v5106 = vmin.f32 %v5105, %v2041
      %v5107 = vmin.f32 %v5106, %v2047
      %v5108 = vmin.f32 %v5107, %v2051
      %v5109 = vmin.f32 %v5108, %v2057
      %v5110 = vmin.f32 %v5109, %v2061
      %v5111 = vmin.f32 %v5110, %v2067
      %v5112 = vmin.f32 %v5111, %v2071
      %v5113 = vmin.f32 %v5112, %v2077
      %v5114 = vmin.f32 %v5113, %v2081
      %v5115 = vmin.f32 %v5114, %v2087
      %v5116 = vmin.f32 %v5115, %v2091
      %v5117 = vmin.f32 %v5116, %v2097
      %v5118 = vmin.f32 %v5117, %v2101
      %v5119 = vmin.f32 %v5118, %v2107
      %v5120 = vmin.f32 %v5119, %v2111
      %v5121 = vmin.f32 %v5120, %v2117
      %v5122 = vmin.f32 %v5121, %v2121
      %v5123 = vmin.f32 %v5122, %v2127
      %v5124 = vmin.f32 %v5123, %v2131
      %v5125 = vmin.f32 %v5124, %v2137
      %v5126 = vmin.f32 %v5125, %v2141
      %v5127 = vrot.slane %v5126, 4
      %v5128 = vmin.f32 %v5126, %v5127
      %v5129 = vrot.slane %v5128, 2
      %v5130 = vmin.f32 %v5128, %v5129
      %v5131 = vrot.slane %v5130, 1
      %v5132 = vmin.f32 %v5130, %v5131
      %v5133 = vmin.f32 %v2178, %v2182
      %v5134 = vmin.f32 %v5133, %v2188
      %v5135 = vmin.f32 %v5134, %v2192
      %v5136 = vmin.f32 %v5135, %v2198
      %v5137 = vmin.f32 %v5136, %v2202
      %v5138 = vmin.f32 %v5137, %v2208
      %v5139 = vmin.f32 %v5138, %v2212
      %v5140 = vmin.f32 %v5139, %v2218
      %v5141 = vmin.f32 %v5140, %v2222
      %v5142 = vmin.f32 %v5141, %v2228
      %v5143 = vmin.f32 %v5142, %v2232
      %v5144 = vmin.f32 %v5143, %v2238
      %v5145 = vmin.f32 %v5144, %v2242
      %v5146 = vmin.f32 %v5145, %v2248
      %v5147 = vmin.f32 %v5146, %v2252
      %v5148 = vmin.f32 %v5147, %v2258
      %v5149 = vmin.f32 %v5148, %v2262
      %v5150 = vmin.f32 %v5149, %v2268
      %v5151 = vmin.f32 %v5150, %v2272
      %v5152 = vmin.f32 %v5151, %v2278
      %v5153 = vmin.f32 %v5152, %v2282
      %v5154 = vmin.f32 %v5153, %v2288
      %v5155 = vmin.f32 %v5154, %v2292
      %v5156 = vmin.f32 %v5155, %v2298
      %v5157 = vmin.f32 %v5156, %v2302
      %v5158 = vmin.f32 %v5157, %v2308
      %v5159 = vmin.f32 %v5158, %v2312
      %v5160 = vmin.f32 %v5159, %v2318
      %v5161 = vmin.f32 %v5160, %v2322
      %v5162 = vmin.f32 %v5161, %v2328
      %v5163 = vmin.f32 %v5162, %v2332
      %v5164 = vmin.f32 %v5163, %v2338
      %v5165 = vmin.f32 %v5164, %v2342
      %v5166 = vmin.f32 %v5165, %v2348
      %v5167 = vmin.f32 %v5166, %v2352
      %v5168 = vmin.f32 %v5167, %v2358
      %v5169 = vmin.f32 %v5168, %v2362
      %v5170 = vmin.f32 %v5169, %v2368
      %v5171 = vmin.f32 %v5170, %v2372
      %v5172 = vmin.f32 %v5171, %v2378
      %v5173 = vmin.f32 %v5172, %v2382
      %v5174 = vmin.f32 %v5173, %v2388
      %v5175 = vmin.f32 %v5174, %v2392
      %v5176 = vmin.f32 %v5175, %v2398
      %v5177 = vmin.f32 %v5176, %v2402
      %v5178 = vmin.f32 %v5177, %v2408
      %v5179 = vmin.f32 %v5178, %v2412
      %v5180 = vmin.f32 %v5179, %v2418
      %v5181 = vmin.f32 %v5180, %v2422
      %v5182 = vmin.f32 %v5181, %v2428
      %v5183 = vmin.f32 %v5182, %v2432
      %v5184 = vmin.f32 %v5183, %v2438
      %v5185 = vmin.f32 %v5184, %v2442
      %v5186 = vmin.f32 %v5185, %v2448
      %v5187 = vmin.f32 %v5186, %v2452
      %v5188 = vmin.f32 %v5187, %v2458
      %v5189 = vmin.f32 %v5188, %v2462
      %v5190 = vmin.f32 %v5189, %v2468
      %v5191 = vmin.f32 %v5190, %v2472
      %v5192 = vmin.f32 %v5191, %v2478
      %v5193 = vmin.f32 %v5192, %v2482
      %v5194 = vmin.f32 %v5193, %v2488
      %v5195 = vmin.f32 %v5194, %v2492
      %v5196 = vrot.slane %v5195, 4
      %v5197 = vmin.f32 %v5195, %v5196
      %v5198 = vrot.slane %v5197, 2
      %v5199 = vmin.f32 %v5197, %v5198
      %v5200 = vrot.slane %v5199, 1
      %v5201 = vmin.f32 %v5199, %v5200
      %v5202 = vmin.f32 %v2180, %v2184
      %v5203 = vmin.f32 %v5202, %v2190
      %v5204 = vmin.f32 %v5203, %v2194
      %v5205 = vmin.f32 %v5204, %v2200
      %v5206 = vmin.f32 %v5205, %v2204
      %v5207 = vmin.f32 %v5206, %v2210
      %v5208 = vmin.f32 %v5207, %v2214
      %v5209 = vmin.f32 %v5208, %v2220
      %v5210 = vmin.f32 %v5209, %v2224
      %v5211 = vmin.f32 %v5210, %v2230
      %v5212 = vmin.f32 %v5211, %v2234
      %v5213 = vmin.f32 %v5212, %v2240
      %v5214 = vmin.f32 %v5213, %v2244
      %v5215 = vmin.f32 %v5214, %v2250
      %v5216 = vmin.f32 %v5215, %v2254
      %v5217 = vmin.f32 %v5216, %v2260
      %v5218 = vmin.f32 %v5217, %v2264
      %v5219 = vmin.f32 %v5218, %v2270
      %v5220 = vmin.f32 %v5219, %v2274
      %v5221 = vmin.f32 %v5220, %v2280
      %v5222 = vmin.f32 %v5221, %v2284
      %v5223 = vmin.f32 %v5222, %v2290
      %v5224 = vmin.f32 %v5223, %v2294
      %v5225 = vmin.f32 %v5224, %v2300
      %v5226 = vmin.f32 %v5225, %v2304
      %v5227 = vmin.f32 %v5226, %v2310
      %v5228 = vmin.f32 %v5227, %v2314
      %v5229 = vmin.f32 %v5228, %v2320
      %v5230 = vmin.f32 %v5229, %v2324
      %v5231 = vmin.f32 %v5230, %v2330
      %v5232 = vmin.f32 %v5231, %v2334
      %v5233 = vmin.f32 %v5232, %v2340
      %v5234 = vmin.f32 %v5233, %v2344
      %v5235 = vmin.f32 %v5234, %v2350
      %v5236 = vmin.f32 %v5235, %v2354
      %v5237 = vmin.f32 %v5236, %v2360
      %v5238 = vmin.f32 %v5237, %v2364
      %v5239 = vmin.f32 %v5238, %v2370
      %v5240 = vmin.f32 %v5239, %v2374
      %v5241 = vmin.f32 %v5240, %v2380
      %v5242 = vmin.f32 %v5241, %v2384
      %v5243 = vmin.f32 %v5242, %v2390
      %v5244 = vmin.f32 %v5243, %v2394
      %v5245 = vmin.f32 %v5244, %v2400
      %v5246 = vmin.f32 %v5245, %v2404
      %v5247 = vmin.f32 %v5246, %v2410
      %v5248 = vmin.f32 %v5247, %v2414
      %v5249 = vmin.f32 %v5248, %v2420
      %v5250 = vmin.f32 %v5249, %v2424
      %v5251 = vmin.f32 %v5250, %v2430
      %v5252 = vmin.f32 %v5251, %v2434
      %v5253 = vmin.f32 %v5252, %v2440
      %v5254 = vmin.f32 %v5253, %v2444
      %v5255 = vmin.f32 %v5254, %v2450
      %v5256 = vmin.f32 %v5255, %v2454
      %v5257 = vmin.f32 %v5256, %v2460
      %v5258 = vmin.f32 %v5257, %v2464
      %v5259 = vmin.f32 %v5258, %v2470
      %v5260 = vmin.f32 %v5259, %v2474
      %v5261 = vmin.f32 %v5260, %v2480
      %v5262 = vmin.f32 %v5261, %v2484
      %v5263 = vmin.f32 %v5262, %v2490
      %v5264 = vmin.f32 %v5263, %v2494
      %v5265 = vrot.slane %v5264, 4
      %v5266 = vmin.f32 %v5264, %v5265
      %v5267 = vrot.slane %v5266, 2
      %v5268 = vmin.f32 %v5266, %v5267
      %v5269 = vrot.slane %v5268, 1
      %v5270 = vmin.f32 %v5268, %v5269
      %p5271 = scmp.eq.s32.totalorder %s23, 0
      // Predicated region
      $region41: #{tnet_forward.6} parent=39 // pred_check
        %p5272 = pneg %p5271
      $region42: #{tnet_forward.6} parent=39 // pred_check_branch
        %5274 = sbr.rel (%p5272) target = $region44
      $region43: #{tnet_forward.6} parent=39 // pred_region
        %v5283 = vcombine.low %v4235, %v4304
        %v5284 = vcombine.low %v4373, %v4442
        %v5285 = vcombine.low %v4511, %v4580
        %v5286 = vcombine.low %v4649, %v4718
        %v5288 = vunpack.c.l.s4 1966171168
        %v5289 = vunpack.c.0.s8 %v5288
        %v5290 = vlaneseq
        %v5291 = vshrl.u32 %v5290, 7
        %v5292 = vsub.s32 %v5289, %v5291
        %v5293 = vrot.slane %v5283, %v5292
        %v5295 = vunpack.c.l.s4 1966171168
        %v5296 = vunpack.c.0.s8 %v5295
        %v5297 = vlaneseq
        %v5298 = vshrl.u32 %v5297, 7
        %v5299 = vsub.s32 %v5296, %v5298
        %v5300 = vrot.slane %v5284, %v5299
        %v5302 = vunpack.c.l.s4 1966171168
        %v5303 = vunpack.c.0.s8 %v5302
        %v5304 = vlaneseq
        %v5305 = vshrl.u32 %v5304, 7
        %v5306 = vsub.s32 %v5303, %v5305
        %v5307 = vrot.slane %v5285, %v5306
        %v5309 = vunpack.c.l.s4 1966171168
        %v5310 = vunpack.c.0.s8 %v5309
        %v5311 = vlaneseq
        %v5312 = vshrl.u32 %v5311, 7
        %v5313 = vsub.s32 %v5310, %v5312
        %v5314 = vrot.slane %v5286, %v5313
        %v5315 = vcombine.low %v5293, %v5300
        %v5316 = vcombine.low %v5307, %v5314
        %v5318 = vunpack.c.l.s4 1966171168
        %v5319 = vunpack.c.0.s8 %v5318
        %v5320 = vlaneseq
        %v5321 = vshrl.u32 %v5320, 7
        %v5322 = vsub.s32 %v5319, %v5321
        %v5323 = vrot.slane %v5315, %v5322
        %v5325 = vunpack.c.l.s4 1966171168
        %v5326 = vunpack.c.0.s8 %v5325
        %v5327 = vlaneseq
        %v5328 = vshrl.u32 %v5327, 7
        %v5329 = vsub.s32 %v5326, %v5328
        %v5330 = vrot.slane %v5316, %v5329
        %v5331 = vcombine.low %v5323, %v5330
        %5333 = vst [vmem:[#allocation2] sm:$0xff] %v5331
        %v5342 = vcombine.low %v4787, %v4856
        %v5343 = vcombine.low %v4925, %v4994
        %v5344 = vcombine.low %v5063, %v5132
        %v5345 = vcombine.low %v5201, %v5270
        %v5347 = vunpack.c.l.s4 1966171168
        %v5348 = vunpack.c.0.s8 %v5347
        %v5349 = vlaneseq
        %v5350 = vshrl.u32 %v5349, 7
        %v5351 = vsub.s32 %v5348, %v5350
        %v5352 = vrot.slane %v5342, %v5351
        %v5354 = vunpack.c.l.s4 1966171168
        %v5355 = vunpack.c.0.s8 %v5354
        %v5356 = vlaneseq
        %v5357 = vshrl.u32 %v5356, 7
        %v5358 = vsub.s32 %v5355, %v5357
        %v5359 = vrot.slane %v5343, %v5358
        %v5361 = vunpack.c.l.s4 1966171168
        %v5362 = vunpack.c.0.s8 %v5361
        %v5363 = vlaneseq
        %v5364 = vshrl.u32 %v5363, 7
        %v5365 = vsub.s32 %v5362, %v5364
        %v5366 = vrot.slane %v5344, %v5365
        %v5368 = vunpack.c.l.s4 1966171168
        %v5369 = vunpack.c.0.s8 %v5368
        %v5370 = vlaneseq
        %v5371 = vshrl.u32 %v5370, 7
        %v5372 = vsub.s32 %v5369, %v5371
        %v5373 = vrot.slane %v5345, %v5372
        %v5374 = vcombine.low %v5352, %v5359
        %v5375 = vcombine.low %v5366, %v5373
        %v5377 = vunpack.c.l.s4 1966171168
        %v5378 = vunpack.c.0.s8 %v5377
        %v5379 = vlaneseq
        %v5380 = vshrl.u32 %v5379, 7
        %v5381 = vsub.s32 %v5378, %v5380
        %v5382 = vrot.slane %v5374, %v5381
        %v5384 = vunpack.c.l.s4 1966171168
        %v5385 = vunpack.c.0.s8 %v5384
        %v5386 = vlaneseq
        %v5387 = vshrl.u32 %v5386, 7
        %v5388 = vsub.s32 %v5385, %v5387
        %v5389 = vrot.slane %v5375, %v5388
        %v5390 = vcombine.low %v5382, %v5389
        %5392 = vst [vmem:[#allocation3] sm:$0xff] %v5390
      $region44: #{tnet_forward.6} parent=39 // pred_fallthru
        _
      %p5393 = scmp.gt.s32.totalorder %s23, 0
      // Predicated region
      $region45: #{tnet_forward.6} parent=39 // pred_check
        %p5394 = pneg %p5393
      $region46: #{tnet_forward.6} parent=39 // pred_check_branch
        %5396 = sbr.rel (%p5394) target = $region48
      $region47: #{tnet_forward.6} parent=39 // pred_region
        %v5397 = vld [vmem:[#allocation2] sm:$0xff]
        %v5406 = vcombine.low %v4235, %v4304
        %v5407 = vcombine.low %v4373, %v4442
        %v5408 = vcombine.low %v4511, %v4580
        %v5409 = vcombine.low %v4649, %v4718
        %v5411 = vunpack.c.l.s4 1966171168
        %v5412 = vunpack.c.0.s8 %v5411
        %v5413 = vlaneseq
        %v5414 = vshrl.u32 %v5413, 7
        %v5415 = vsub.s32 %v5412, %v5414
        %v5416 = vrot.slane %v5406, %v5415
        %v5418 = vunpack.c.l.s4 1966171168
        %v5419 = vunpack.c.0.s8 %v5418
        %v5420 = vlaneseq
        %v5421 = vshrl.u32 %v5420, 7
        %v5422 = vsub.s32 %v5419, %v5421
        %v5423 = vrot.slane %v5407, %v5422
        %v5425 = vunpack.c.l.s4 1966171168
        %v5426 = vunpack.c.0.s8 %v5425
        %v5427 = vlaneseq
        %v5428 = vshrl.u32 %v5427, 7
        %v5429 = vsub.s32 %v5426, %v5428
        %v5430 = vrot.slane %v5408, %v5429
        %v5432 = vunpack.c.l.s4 1966171168
        %v5433 = vunpack.c.0.s8 %v5432
        %v5434 = vlaneseq
        %v5435 = vshrl.u32 %v5434, 7
        %v5436 = vsub.s32 %v5433, %v5435
        %v5437 = vrot.slane %v5409, %v5436
        %v5438 = vcombine.low %v5416, %v5423
        %v5439 = vcombine.low %v5430, %v5437
        %v5441 = vunpack.c.l.s4 1966171168
        %v5442 = vunpack.c.0.s8 %v5441
        %v5443 = vlaneseq
        %v5444 = vshrl.u32 %v5443, 7
        %v5445 = vsub.s32 %v5442, %v5444
        %v5446 = vrot.slane %v5438, %v5445
        %v5448 = vunpack.c.l.s4 1966171168
        %v5449 = vunpack.c.0.s8 %v5448
        %v5450 = vlaneseq
        %v5451 = vshrl.u32 %v5450, 7
        %v5452 = vsub.s32 %v5449, %v5451
        %v5453 = vrot.slane %v5439, %v5452
        %v5454 = vcombine.low %v5446, %v5453
        %v5456 = vmax.f32 %v5397, %v5454
        %5457 = vst [vmem:[#allocation2] sm:$0xff] %v5456
        %v5458 = vld [vmem:[#allocation3] sm:$0xff]
        %v5467 = vcombine.low %v4787, %v4856
        %v5468 = vcombine.low %v4925, %v4994
        %v5469 = vcombine.low %v5063, %v5132
        %v5470 = vcombine.low %v5201, %v5270
        %v5472 = vunpack.c.l.s4 1966171168
        %v5473 = vunpack.c.0.s8 %v5472
        %v5474 = vlaneseq
        %v5475 = vshrl.u32 %v5474, 7
        %v5476 = vsub.s32 %v5473, %v5475
        %v5477 = vrot.slane %v5467, %v5476
        %v5479 = vunpack.c.l.s4 1966171168
        %v5480 = vunpack.c.0.s8 %v5479
        %v5481 = vlaneseq
        %v5482 = vshrl.u32 %v5481, 7
        %v5483 = vsub.s32 %v5480, %v5482
        %v5484 = vrot.slane %v5468, %v5483
        %v5486 = vunpack.c.l.s4 1966171168
        %v5487 = vunpack.c.0.s8 %v5486
        %v5488 = vlaneseq
        %v5489 = vshrl.u32 %v5488, 7
        %v5490 = vsub.s32 %v5487, %v5489
        %v5491 = vrot.slane %v5469, %v5490
        %v5493 = vunpack.c.l.s4 1966171168
        %v5494 = vunpack.c.0.s8 %v5493
        %v5495 = vlaneseq
        %v5496 = vshrl.u32 %v5495, 7
        %v5497 = vsub.s32 %v5494, %v5496
        %v5498 = vrot.slane %v5470, %v5497
        %v5499 = vcombine.low %v5477, %v5484
        %v5500 = vcombine.low %v5491, %v5498
        %v5502 = vunpack.c.l.s4 1966171168
        %v5503 = vunpack.c.0.s8 %v5502
        %v5504 = vlaneseq
        %v5505 = vshrl.u32 %v5504, 7
        %v5506 = vsub.s32 %v5503, %v5505
        %v5507 = vrot.slane %v5499, %v5506
        %v5509 = vunpack.c.l.s4 1966171168
        %v5510 = vunpack.c.0.s8 %v5509
        %v5511 = vlaneseq
        %v5512 = vshrl.u32 %v5511, 7
        %v5513 = vsub.s32 %v5510, %v5512
        %v5514 = vrot.slane %v5500, %v5513
        %v5515 = vcombine.low %v5507, %v5514
        %v5517 = vmin.f32 %v5458, %v5515
        %5518 = vst [vmem:[#allocation3] sm:$0xff] %v5517
      $region48: #{tnet_forward.6} parent=39 // pred_fallthru
        _
      // Predicated region
      $region49: #{tnet_forward.6} parent=39 // pred_check
        %p5519 = pneg %p5271
      $region50: #{tnet_forward.6} parent=39 // pred_check_branch
        %5521 = sbr.rel (%p5519) target = $region52
      $region51: #{tnet_forward.6} parent=39 // pred_region
        %v5522 = vld [vmem:[#allocation2] sm:$0xff]
        %v5523 = vld [vmem:[#allocation3] sm:$0xff]
        %v5525 = vlaneseq
        %v5526 = vshrl.u32 %v5525, 7
        %v5527 = vsub.s32 0, %v5526
        %v5528 = vrot.slane %v5522, %v5527
        %v5529 = vlaneseq
        %v5530 = vshrl.u32 %v5529, 7
        %v5531 = vsub.s32 1, %v5530
        %v5532 = vrot.slane %v5522, %v5531
        %v5533 = vlaneseq
        %v5534 = vshrl.u32 %v5533, 7
        %v5535 = vsub.s32 2, %v5534
        %v5536 = vrot.slane %v5522, %v5535
        %v5537 = vlaneseq
        %v5538 = vshrl.u32 %v5537, 7
        %v5539 = vsub.s32 3, %v5538
        %v5540 = vrot.slane %v5522, %v5539
        %v5541 = vlaneseq
        %v5542 = vshrl.u32 %v5541, 7
        %v5543 = vsub.s32 4, %v5542
        %v5544 = vrot.slane %v5522, %v5543
        %v5545 = vlaneseq
        %v5546 = vshrl.u32 %v5545, 7
        %v5547 = vsub.s32 5, %v5546
        %v5548 = vrot.slane %v5522, %v5547
        %v5549 = vlaneseq
        %v5550 = vshrl.u32 %v5549, 7
        %v5551 = vsub.s32 6, %v5550
        %v5552 = vrot.slane %v5522, %v5551
        %v5553 = vlaneseq
        %v5554 = vshrl.u32 %v5553, 7
        %v5555 = vsub.s32 7, %v5554
        %v5556 = vrot.slane %v5522, %v5555
        %v5566 = vlaneseq
        %v5567 = vshrl.u32 %v5566, 7
        %v5568 = vsub.s32 0, %v5567
        %v5569 = vrot.slane %v5523, %v5568
        %v5570 = vlaneseq
        %v5571 = vshrl.u32 %v5570, 7
        %v5572 = vsub.s32 1, %v5571
        %v5573 = vrot.slane %v5523, %v5572
        %v5574 = vlaneseq
        %v5575 = vshrl.u32 %v5574, 7
        %v5576 = vsub.s32 2, %v5575
        %v5577 = vrot.slane %v5523, %v5576
        %v5578 = vlaneseq
        %v5579 = vshrl.u32 %v5578, 7
        %v5580 = vsub.s32 3, %v5579
        %v5581 = vrot.slane %v5523, %v5580
        %v5582 = vlaneseq
        %v5583 = vshrl.u32 %v5582, 7
        %v5584 = vsub.s32 4, %v5583
        %v5585 = vrot.slane %v5523, %v5584
        %v5586 = vlaneseq
        %v5587 = vshrl.u32 %v5586, 7
        %v5588 = vsub.s32 5, %v5587
        %v5589 = vrot.slane %v5523, %v5588
        %v5590 = vlaneseq
        %v5591 = vshrl.u32 %v5590, 7
        %v5592 = vsub.s32 6, %v5591
        %v5593 = vrot.slane %v5523, %v5592
        %v5594 = vlaneseq
        %v5595 = vshrl.u32 %v5594, 7
        %v5596 = vsub.s32 7, %v5595
        %v5597 = vrot.slane %v5523, %v5596
        %v5606 = vsel %vm4112, %v5528, %v5569
        %v5607 = vsel %vm4112, %v5532, %v5573
        %v5608 = vsel %vm4112, %v5536, %v5577
        %v5609 = vsel %vm4112, %v5540, %v5581
        %v5610 = vsel %vm4112, %v5544, %v5585
        %v5611 = vsel %vm4112, %v5548, %v5589
        %v5612 = vsel %vm4112, %v5552, %v5593
        %v5613 = vsel %vm4112, %v5556, %v5597
        %v5622 = vcombine.low %v5606, %v5607
        %v5623 = vcombine.low %v5608, %v5609
        %v5625 = vunpack.c.l.s4 1983009808
        %v5626 = vunpack.c.0.s8 %v5625
        %v5627 = vlaneseq
        %v5628 = vshrl.u32 %v5627, 7
        %v5629 = vsub.s32 %v5626, %v5628
        %v5630 = vrot.slane %v5622, %v5629
        %v5632 = vunpack.c.l.s4 1983009808
        %v5633 = vunpack.c.0.s8 %v5632
        %v5634 = vlaneseq
        %v5635 = vshrl.u32 %v5634, 7
        %v5636 = vsub.s32 %v5633, %v5635
        %v5637 = vrot.slane %v5623, %v5636
        %v5638 = vcombine.low %v5630, %v5637
        %v5639 = vcombine.low %v5610, %v5611
        %v5640 = vcombine.low %v5612, %v5613
        %v5642 = vunpack.c.l.s4 1983009808
        %v5643 = vunpack.c.0.s8 %v5642
        %v5644 = vlaneseq
        %v5645 = vshrl.u32 %v5644, 7
        %v5646 = vsub.s32 %v5643, %v5645
        %v5647 = vrot.slane %v5639, %v5646
        %v5649 = vunpack.c.l.s4 1983009808
        %v5650 = vunpack.c.0.s8 %v5649
        %v5651 = vlaneseq
        %v5652 = vshrl.u32 %v5651, 7
        %v5653 = vsub.s32 %v5650, %v5652
        %v5654 = vrot.slane %v5640, %v5653
        %v5655 = vcombine.low %v5647, %v5654
        %5658 = vst [vmem:[%s290] sm:$0xff] %v5638
        %5659 = vst [vmem:[%s290 + $0x8] sm:$0xff] %v5655
      $region52: #{tnet_forward.6} parent=39 // pred_fallthru
        _
      %s5660 = sadd.s32 %s22, %s23
      %p5661 = scmp.lt.s32.totalorder %s5660, 3
      %s5662 = scalar_select %p5661, %s5660, 3
      %s5663 = smul.addr %s5662, 8
      %s5664 = smul.addr %s5663, 2
      %s5665 = scalar_lea.vmem %s5, %s5664
      %p5666 = scmp.lt.s32.totalorder %s22, 3
      %s5667 = scalar_select %p5666, %s22, 3
      %s5668 = smul.addr %s5667, 8
      %s5669 = smul.addr %s5668, 2
      %s5670 = scalar_lea.vmem %s6, %s5669
      // Predicated region
      $region53: #{tnet_forward.6} parent=39 // pred_check
        %p5671 = pneg %p162
      $region54: #{tnet_forward.6} parent=39 // pred_check_branch
        %5673 = sbr.rel (%p5671) target = $region56
      $region55: #{tnet_forward.6} parent=39 // pred_region
        %s5674 = sadd.s32 %s22, %s23
      $region56: #{tnet_forward.6} parent=39 // pred_fallthru
        _
      // Predicated region
      $region57: #{tnet_forward.6} parent=39 // pred_check
        %p5675 = pneg %p188
      $region58: #{tnet_forward.6} parent=39 // pred_check_branch
        %5677 = sbr.rel (%p5675) target = $region60
      $region59: #{tnet_forward.6} parent=39 // pred_region
        _
      $region60: #{tnet_forward.6} parent=39 // pred_fallthru
        _
    $region40: #{tnet_forward.6} parent=5 // pred_fallthru
      _
    %p5678 = scmp.le.s32.totalorder 2, %s13
    // Predicated region
    $region61: #{tnet_forward.6} parent=5 // pred_check
      %p5679 = pneg %p5678
    $region62: #{tnet_forward.6} parent=5 // pred_check_branch
      %5681 = sbr.rel (%p5679) target = $region64
    $region63: #{tnet_forward.6} parent=5 // pred_region
      %s5682 = ssub.s32 %s13, 2
      // Predicated region
      $region65: #{tnet_forward.6} parent=63 // pred_check
        %p5683 = pneg %p168
      $region66: #{tnet_forward.6} parent=63 // pred_check_branch
        %5685 = sbr.rel (%p5683) target = $region68
      $region67: #{tnet_forward.6} parent=63 // pred_region
        %s5686 = sadd.s32 %s24, %s25
        %p5687 = scmp.lt.s32.totalorder %s5686, 3
        %s5688 = scalar_select %p5687, %s5686, 3
        %s5689 = smul.addr %s5688, 8
        %s5690 = smul.addr %s5689, 2
        %s5691 = scalar_lea.vmem %s5, %s5690
      $region68: #{tnet_forward.6} parent=63 // pred_fallthru
        _
      // Predicated region
      $region69: #{tnet_forward.6} parent=63 // pred_check
        %p5692 = pneg %p194
      $region70: #{tnet_forward.6} parent=63 // pred_check_branch
        %5694 = sbr.rel (%p5692) target = $region72
      $region71: #{tnet_forward.6} parent=63 // pred_region
        %p5695 = scmp.lt.s32.totalorder %s24, 3
        %s5696 = scalar_select %p5695, %s24, 3
        %s5697 = smul.addr %s5696, 8
        %s5698 = smul.addr %s5697, 2
        %s5699 = scalar_lea.vmem %s6, %s5698
      $region72: #{tnet_forward.6} parent=63 // pred_fallthru
        _
    $region64: #{tnet_forward.6} parent=5 // pred_fallthru
      _
  $region6: #{tnet_forward.6} parent=0 // loop_footer
    %s17 = sadd.s32 1, %s13
  $region7: #{tnet_forward.6} parent=0 // loop_footer_branch
    %12 = sbr.rel target = $region3
  $region8: #{tnet_forward.6} parent=0 // loop_exit
    _

// kernel: tnet_forward.7
$region0: #{tnet_forward.7}
  #allocation0 [shape = 'u32[]', space=smem, size = 0x4, offset = 0x4, fixed_abs, tag = 'smem constant byte address 0x4 - core index']
  #allocation1 [shape = 'u32[144,128]{1,0:T(1,128)}', space=vmem, size = 0x12000, scoped, tag = 'internal scratch']
  %s0 = inlined_call_operand.vmem [shape: f32[4,1024], index: 0, kind: input, shape index: {}]
  %s1 = inlined_call_operand.vmem [shape: bf16[1024,512], index: 1, kind: input, shape index: {}]
  %s2 = inlined_call_operand.vmem [shape: f32[1,512], index: 2, kind: input, shape index: {}]
  %s3 = inlined_call_operand.vmem [shape: f32[1,512], index: 3, kind: input, shape index: {}]
  %s4 = inlined_call_operand.vmem [shape: f32[1,512], index: 4, kind: input, shape index: {}]
  %s5 = inlined_call_operand.vmem [shape: bf16[512,256], index: 5, kind: input, shape index: {}]
  %s6 = inlined_call_operand.vmem [shape: f32[1,256], index: 6, kind: input, shape index: {}]
  %s7 = inlined_call_operand.vmem [shape: f32[1,256], index: 7, kind: input, shape index: {}]
  %s8 = inlined_call_operand.vmem [shape: f32[1,256], index: 8, kind: input, shape index: {}]
  %s9 = inlined_call_operand.vmem [shape: bf16[256,128], index: 9, kind: input, shape index: {}]
  %s10 = inlined_call_operand.vmem [shape: f32[1,128], index: 10, kind: input, shape index: {}]
  %s11 = inlined_call_operand.vmem [shape: f32[4,128], index: 11, kind: output, shape index: {}]
  %s12 = sld [smem:[#allocation0]]
  $region54: #{tnet_forward.7} parent=0
    _
  %s14 = ssub.s32 1, %s12
  %s15 = scalar_select 0, %s14, %s12
  // Predicated region
  $region2: #{tnet_forward.7} parent=0 // pred_check
    _
  $region3: #{tnet_forward.7} parent=0 // pred_check_branch
    %17 = sbr.rel (0) target = $region5
  $region4: #{tnet_forward.7} parent=0 // pred_region
    _
  $region5: #{tnet_forward.7} parent=0 // pred_fallthru
    _
  // Predicated region
  $region6: #{tnet_forward.7} parent=0 // pred_check
    _
  $region7: #{tnet_forward.7} parent=0 // pred_check_branch
    %19 = sbr.rel (0) target = $region9
  $region8: #{tnet_forward.7} parent=0 // pred_region
    _
  $region9: #{tnet_forward.7} parent=0 // pred_fallthru
    _
  // Predicated region
  $region10: #{tnet_forward.7} parent=0 // pred_check
    _
  $region11: #{tnet_forward.7} parent=0 // pred_check_branch
    %21 = sbr.rel (0) target = $region13
  $region12: #{tnet_forward.7} parent=0 // pred_region
    _
  $region13: #{tnet_forward.7} parent=0 // pred_fallthru
    _
  // Predicated region
  $region14: #{tnet_forward.7} parent=0 // pred_check
    _
  $region15: #{tnet_forward.7} parent=0 // pred_check_branch
    %23 = sbr.rel (0) target = $region17
  $region16: #{tnet_forward.7} parent=0 // pred_region
    _
  $region17: #{tnet_forward.7} parent=0 // pred_fallthru
    _
  // Predicated region
  $region18: #{tnet_forward.7} parent=0 // pred_check
    _
  $region19: #{tnet_forward.7} parent=0 // pred_check_branch
    %25 = sbr.rel (0) target = $region21
  $region20: #{tnet_forward.7} parent=0 // pred_region
    _
  $region21: #{tnet_forward.7} parent=0 // pred_fallthru
    _
  // Predicated region
  $region22: #{tnet_forward.7} parent=0 // pred_check
    _
  $region23: #{tnet_forward.7} parent=0 // pred_check_branch
    %27 = sbr.rel (0) target = $region25
  $region24: #{tnet_forward.7} parent=0 // pred_region
    _
  $region25: #{tnet_forward.7} parent=0 // pred_fallthru
    _
  // Predicated region
  $region26: #{tnet_forward.7} parent=0 // pred_check
    _
  $region27: #{tnet_forward.7} parent=0 // pred_check_branch
    %29 = sbr.rel (0) target = $region29
  $region28: #{tnet_forward.7} parent=0 // pred_region
    _
  $region29: #{tnet_forward.7} parent=0 // pred_fallthru
    _
  // Predicated region
  $region30: #{tnet_forward.7} parent=0 // pred_check
    _
  $region31: #{tnet_forward.7} parent=0 // pred_check_branch
    %31 = sbr.rel (0) target = $region33
  $region32: #{tnet_forward.7} parent=0 // pred_region
    _
  $region33: #{tnet_forward.7} parent=0 // pred_fallthru
    _
  // Predicated region
  $region34: #{tnet_forward.7} parent=0 // pred_check
    _
  $region35: #{tnet_forward.7} parent=0 // pred_check_branch
    %33 = sbr.rel (0) target = $region37
  $region36: #{tnet_forward.7} parent=0 // pred_region
    _
  $region37: #{tnet_forward.7} parent=0 // pred_fallthru
    _
  // Predicated region
  $region38: #{tnet_forward.7} parent=0 // pred_check
    _
  $region39: #{tnet_forward.7} parent=0 // pred_check_branch
    %35 = sbr.rel (0) target = $region41
  $region40: #{tnet_forward.7} parent=0 // pred_region
    _
  $region41: #{tnet_forward.7} parent=0 // pred_fallthru
    _
  // Predicated region
  $region42: #{tnet_forward.7} parent=0 // pred_check
    _
  $region43: #{tnet_forward.7} parent=0 // pred_check_branch
    %37 = sbr.rel (0) target = $region45
  $region44: #{tnet_forward.7} parent=0 // pred_region
    _
  $region45: #{tnet_forward.7} parent=0 // pred_fallthru
    _
  %v39 = vld [vmem:[%s0] sm:$0xff]
  %v40 = vld [vmem:[%s0 + $0x8] sm:$0xff]
  %v41 = vld [vmem:[%s0 + $0x10] sm:$0xff]
  %v42 = vld [vmem:[%s0 + $0x18] sm:$0xff]
  %v47 = vcombine.high %v39, %v39
  %v48 = vcombine.high %v40, %v40
  %v49 = vcombine.high %v41, %v41
  %v50 = vcombine.high %v42, %v42
  %v55 = vpack.c.bf16 %v39, %v39
  %v56 = vpack.c.bf16 %v47, %v47
  %v57 = vpack.c.bf16 %v40, %v40
  %v58 = vpack.c.bf16 %v48, %v48
  %v59 = vpack.c.bf16 %v41, %v41
  %v60 = vpack.c.bf16 %v49, %v49
  %v61 = vpack.c.bf16 %v42, %v42
  %v62 = vpack.c.bf16 %v50, %v50
  %v63 = vld [vmem:[%s1] sm:$0xff]
  %v64 = vld [vmem:[%s1 + $0x8] sm:$0xff]
  %v65 = vld [vmem:[%s1 + $0x10] sm:$0xff]
  %v66 = vld [vmem:[%s1 + $0x18] sm:$0xff]
  %v67 = vld [vmem:[%s1 + $0x20] sm:$0xff]
  %v68 = vld [vmem:[%s1 + $0x28] sm:$0xff]
  %v69 = vld [vmem:[%s1 + $0x30] sm:$0xff]
  %v70 = vld [vmem:[%s1 + $0x38] sm:$0xff]
  %v71 = vld [vmem:[%s1 + $0x40] sm:$0xff]
  %v72 = vld [vmem:[%s1 + $0x48] sm:$0xff]
  %v73 = vld [vmem:[%s1 + $0x50] sm:$0xff]
  %v74 = vld [vmem:[%s1 + $0x58] sm:$0xff]
  %v75 = vld [vmem:[%s1 + $0x60] sm:$0xff]
  %v76 = vld [vmem:[%s1 + $0x68] sm:$0xff]
  %v77 = vld [vmem:[%s1 + $0x70] sm:$0xff]
  %v78 = vld [vmem:[%s1 + $0x78] sm:$0xff]
  %v79 = vld [vmem:[%s1 + $0x80] sm:$0xff]
  %v80 = vld [vmem:[%s1 + $0x88] sm:$0xff]
  %v81 = vld [vmem:[%s1 + $0x90] sm:$0xff]
  %v82 = vld [vmem:[%s1 + $0x98] sm:$0xff]
  %v83 = vld [vmem:[%s1 + $0xa0] sm:$0xff]
  %v84 = vld [vmem:[%s1 + $0xa8] sm:$0xff]
  %v85 = vld [vmem:[%s1 + $0xb0] sm:$0xff]
  %v86 = vld [vmem:[%s1 + $0xb8] sm:$0xff]
  %v87 = vld [vmem:[%s1 + $0xc0] sm:$0xff]
  %v88 = vld [vmem:[%s1 + $0xc8] sm:$0xff]
  %v89 = vld [vmem:[%s1 + $0xd0] sm:$0xff]
  %v90 = vld [vmem:[%s1 + $0xd8] sm:$0xff]
  %v91 = vld [vmem:[%s1 + $0xe0] sm:$0xff]
  %v92 = vld [vmem:[%s1 + $0xe8] sm:$0xff]
  %v93 = vld [vmem:[%s1 + $0xf0] sm:$0xff]
  %v94 = vld [vmem:[%s1 + $0xf8] sm:$0xff]
  %v95 = vld [vmem:[%s1 + $0x100] sm:$0xff]
  %v96 = vld [vmem:[%s1 + $0x108] sm:$0xff]
  %v97 = vld [vmem:[%s1 + $0x110] sm:$0xff]
  %v98 = vld [vmem:[%s1 + $0x118] sm:$0xff]
  %v99 = vld [vmem:[%s1 + $0x120] sm:$0xff]
  %v100 = vld [vmem:[%s1 + $0x128] sm:$0xff]
  %v101 = vld [vmem:[%s1 + $0x130] sm:$0xff]
  %v102 = vld [vmem:[%s1 + $0x138] sm:$0xff]
  %v103 = vld [vmem:[%s1 + $0x140] sm:$0xff]
  %v104 = vld [vmem:[%s1 + $0x148] sm:$0xff]
  %v105 = vld [vmem:[%s1 + $0x150] sm:$0xff]
  %v106 = vld [vmem:[%s1 + $0x158] sm:$0xff]
  %v107 = vld [vmem:[%s1 + $0x160] sm:$0xff]
  %v108 = vld [vmem:[%s1 + $0x168] sm:$0xff]
  %v109 = vld [vmem:[%s1 + $0x170] sm:$0xff]
  %v110 = vld [vmem:[%s1 + $0x178] sm:$0xff]
  %v111 = vld [vmem:[%s1 + $0x180] sm:$0xff]
  %v112 = vld [vmem:[%s1 + $0x188] sm:$0xff]
  %v113 = vld [vmem:[%s1 + $0x190] sm:$0xff]
  %v114 = vld [vmem:[%s1 + $0x198] sm:$0xff]
  %v115 = vld [vmem:[%s1 + $0x1a0] sm:$0xff]
  %v116 = vld [vmem:[%s1 + $0x1a8] sm:$0xff]
  %v117 = vld [vmem:[%s1 + $0x1b0] sm:$0xff]
  %v118 = vld [vmem:[%s1 + $0x1b8] sm:$0xff]
  %v119 = vld [vmem:[%s1 + $0x1c0] sm:$0xff]
  %v120 = vld [vmem:[%s1 + $0x1c8] sm:$0xff]
  %v121 = vld [vmem:[%s1 + $0x1d0] sm:$0xff]
  %v122 = vld [vmem:[%s1 + $0x1d8] sm:$0xff]
  %v123 = vld [vmem:[%s1 + $0x1e0] sm:$0xff]
  %v124 = vld [vmem:[%s1 + $0x1e8] sm:$0xff]
  %v125 = vld [vmem:[%s1 + $0x1f0] sm:$0xff]
  %v126 = vld [vmem:[%s1 + $0x1f8] sm:$0xff]
  %v127 = vld [vmem:[%s1 + $0x200] sm:$0xff]
  %v128 = vld [vmem:[%s1 + $0x208] sm:$0xff]
  %v129 = vld [vmem:[%s1 + $0x210] sm:$0xff]
  %v130 = vld [vmem:[%s1 + $0x218] sm:$0xff]
  %v131 = vld [vmem:[%s1 + $0x220] sm:$0xff]
  %v132 = vld [vmem:[%s1 + $0x228] sm:$0xff]
  %v133 = vld [vmem:[%s1 + $0x230] sm:$0xff]
  %v134 = vld [vmem:[%s1 + $0x238] sm:$0xff]
  %v135 = vld [vmem:[%s1 + $0x240] sm:$0xff]
  %v136 = vld [vmem:[%s1 + $0x248] sm:$0xff]
  %v137 = vld [vmem:[%s1 + $0x250] sm:$0xff]
  %v138 = vld [vmem:[%s1 + $0x258] sm:$0xff]
  %v139 = vld [vmem:[%s1 + $0x260] sm:$0xff]
  %v140 = vld [vmem:[%s1 + $0x268] sm:$0xff]
  %v141 = vld [vmem:[%s1 + $0x270] sm:$0xff]
  %v142 = vld [vmem:[%s1 + $0x278] sm:$0xff]
  %v143 = vld [vmem:[%s1 + $0x280] sm:$0xff]
  %v144 = vld [vmem:[%s1 + $0x288] sm:$0xff]
  %v145 = vld [vmem:[%s1 + $0x290] sm:$0xff]
  %v146 = vld [vmem:[%s1 + $0x298] sm:$0xff]
  %v147 = vld [vmem:[%s1 + $0x2a0] sm:$0xff]
  %v148 = vld [vmem:[%s1 + $0x2a8] sm:$0xff]
  %v149 = vld [vmem:[%s1 + $0x2b0] sm:$0xff]
  %v150 = vld [vmem:[%s1 + $0x2b8] sm:$0xff]
  %v151 = vld [vmem:[%s1 + $0x2c0] sm:$0xff]
  %v152 = vld [vmem:[%s1 + $0x2c8] sm:$0xff]
  %v153 = vld [vmem:[%s1 + $0x2d0] sm:$0xff]
  %v154 = vld [vmem:[%s1 + $0x2d8] sm:$0xff]
  %v155 = vld [vmem:[%s1 + $0x2e0] sm:$0xff]
  %v156 = vld [vmem:[%s1 + $0x2e8] sm:$0xff]
  %v157 = vld [vmem:[%s1 + $0x2f0] sm:$0xff]
  %v158 = vld [vmem:[%s1 + $0x2f8] sm:$0xff]
  %v159 = vld [vmem:[%s1 + $0x300] sm:$0xff]
  %v160 = vld [vmem:[%s1 + $0x308] sm:$0xff]
  %v161 = vld [vmem:[%s1 + $0x310] sm:$0xff]
  %v162 = vld [vmem:[%s1 + $0x318] sm:$0xff]
  %v163 = vld [vmem:[%s1 + $0x320] sm:$0xff]
  %v164 = vld [vmem:[%s1 + $0x328] sm:$0xff]
  %v165 = vld [vmem:[%s1 + $0x330] sm:$0xff]
  %v166 = vld [vmem:[%s1 + $0x338] sm:$0xff]
  %v167 = vld [vmem:[%s1 + $0x340] sm:$0xff]
  %v168 = vld [vmem:[%s1 + $0x348] sm:$0xff]
  %v169 = vld [vmem:[%s1 + $0x350] sm:$0xff]
  %v170 = vld [vmem:[%s1 + $0x358] sm:$0xff]
  %v171 = vld [vmem:[%s1 + $0x360] sm:$0xff]
  %v172 = vld [vmem:[%s1 + $0x368] sm:$0xff]
  %v173 = vld [vmem:[%s1 + $0x370] sm:$0xff]
  %v174 = vld [vmem:[%s1 + $0x378] sm:$0xff]
  %v175 = vld [vmem:[%s1 + $0x380] sm:$0xff]
  %v176 = vld [vmem:[%s1 + $0x388] sm:$0xff]
  %v177 = vld [vmem:[%s1 + $0x390] sm:$0xff]
  %v178 = vld [vmem:[%s1 + $0x398] sm:$0xff]
  %v179 = vld [vmem:[%s1 + $0x3a0] sm:$0xff]
  %v180 = vld [vmem:[%s1 + $0x3a8] sm:$0xff]
  %v181 = vld [vmem:[%s1 + $0x3b0] sm:$0xff]
  %v182 = vld [vmem:[%s1 + $0x3b8] sm:$0xff]
  %v183 = vld [vmem:[%s1 + $0x3c0] sm:$0xff]
  %v184 = vld [vmem:[%s1 + $0x3c8] sm:$0xff]
  %v185 = vld [vmem:[%s1 + $0x3d0] sm:$0xff]
  %v186 = vld [vmem:[%s1 + $0x3d8] sm:$0xff]
  %v187 = vld [vmem:[%s1 + $0x3e0] sm:$0xff]
  %v188 = vld [vmem:[%s1 + $0x3e8] sm:$0xff]
  %v189 = vld [vmem:[%s1 + $0x3f0] sm:$0xff]
  %v190 = vld [vmem:[%s1 + $0x3f8] sm:$0xff]
  %v191 = vld [vmem:[%s1 + $0x400] sm:$0xff]
  %v192 = vld [vmem:[%s1 + $0x408] sm:$0xff]
  %v193 = vld [vmem:[%s1 + $0x410] sm:$0xff]
  %v194 = vld [vmem:[%s1 + $0x418] sm:$0xff]
  %v195 = vld [vmem:[%s1 + $0x420] sm:$0xff]
  %v196 = vld [vmem:[%s1 + $0x428] sm:$0xff]
  %v197 = vld [vmem:[%s1 + $0x430] sm:$0xff]
  %v198 = vld [vmem:[%s1 + $0x438] sm:$0xff]
  %v199 = vld [vmem:[%s1 + $0x440] sm:$0xff]
  %v200 = vld [vmem:[%s1 + $0x448] sm:$0xff]
  %v201 = vld [vmem:[%s1 + $0x450] sm:$0xff]
  %v202 = vld [vmem:[%s1 + $0x458] sm:$0xff]
  %v203 = vld [vmem:[%s1 + $0x460] sm:$0xff]
  %v204 = vld [vmem:[%s1 + $0x468] sm:$0xff]
  %v205 = vld [vmem:[%s1 + $0x470] sm:$0xff]
  %v206 = vld [vmem:[%s1 + $0x478] sm:$0xff]
  %v207 = vld [vmem:[%s1 + $0x480] sm:$0xff]
  %v208 = vld [vmem:[%s1 + $0x488] sm:$0xff]
  %v209 = vld [vmem:[%s1 + $0x490] sm:$0xff]
  %v210 = vld [vmem:[%s1 + $0x498] sm:$0xff]
  %v211 = vld [vmem:[%s1 + $0x4a0] sm:$0xff]
  %v212 = vld [vmem:[%s1 + $0x4a8] sm:$0xff]
  %v213 = vld [vmem:[%s1 + $0x4b0] sm:$0xff]
  %v214 = vld [vmem:[%s1 + $0x4b8] sm:$0xff]
  %v215 = vld [vmem:[%s1 + $0x4c0] sm:$0xff]
  %v216 = vld [vmem:[%s1 + $0x4c8] sm:$0xff]
  %v217 = vld [vmem:[%s1 + $0x4d0] sm:$0xff]
  %v218 = vld [vmem:[%s1 + $0x4d8] sm:$0xff]
  %v219 = vld [vmem:[%s1 + $0x4e0] sm:$0xff]
  %v220 = vld [vmem:[%s1 + $0x4e8] sm:$0xff]
  %v221 = vld [vmem:[%s1 + $0x4f0] sm:$0xff]
  %v222 = vld [vmem:[%s1 + $0x4f8] sm:$0xff]
  %v223 = vld [vmem:[%s1 + $0x500] sm:$0xff]
  %v224 = vld [vmem:[%s1 + $0x508] sm:$0xff]
  %v225 = vld [vmem:[%s1 + $0x510] sm:$0xff]
  %v226 = vld [vmem:[%s1 + $0x518] sm:$0xff]
  %v227 = vld [vmem:[%s1 + $0x520] sm:$0xff]
  %v228 = vld [vmem:[%s1 + $0x528] sm:$0xff]
  %v229 = vld [vmem:[%s1 + $0x530] sm:$0xff]
  %v230 = vld [vmem:[%s1 + $0x538] sm:$0xff]
  %v231 = vld [vmem:[%s1 + $0x540] sm:$0xff]
  %v232 = vld [vmem:[%s1 + $0x548] sm:$0xff]
  %v233 = vld [vmem:[%s1 + $0x550] sm:$0xff]
  %v234 = vld [vmem:[%s1 + $0x558] sm:$0xff]
  %v235 = vld [vmem:[%s1 + $0x560] sm:$0xff]
  %v236 = vld [vmem:[%s1 + $0x568] sm:$0xff]
  %v237 = vld [vmem:[%s1 + $0x570] sm:$0xff]
  %v238 = vld [vmem:[%s1 + $0x578] sm:$0xff]
  %v239 = vld [vmem:[%s1 + $0x580] sm:$0xff]
  %v240 = vld [vmem:[%s1 + $0x588] sm:$0xff]
  %v241 = vld [vmem:[%s1 + $0x590] sm:$0xff]
  %v242 = vld [vmem:[%s1 + $0x598] sm:$0xff]
  %v243 = vld [vmem:[%s1 + $0x5a0] sm:$0xff]
  %v244 = vld [vmem:[%s1 + $0x5a8] sm:$0xff]
  %v245 = vld [vmem:[%s1 + $0x5b0] sm:$0xff]
  %v246 = vld [vmem:[%s1 + $0x5b8] sm:$0xff]
  %v247 = vld [vmem:[%s1 + $0x5c0] sm:$0xff]
  %v248 = vld [vmem:[%s1 + $0x5c8] sm:$0xff]
  %v249 = vld [vmem:[%s1 + $0x5d0] sm:$0xff]
  %v250 = vld [vmem:[%s1 + $0x5d8] sm:$0xff]
  %v251 = vld [vmem:[%s1 + $0x5e0] sm:$0xff]
  %v252 = vld [vmem:[%s1 + $0x5e8] sm:$0xff]
  %v253 = vld [vmem:[%s1 + $0x5f0] sm:$0xff]
  %v254 = vld [vmem:[%s1 + $0x5f8] sm:$0xff]
  %v255 = vld [vmem:[%s1 + $0x600] sm:$0xff]
  %v256 = vld [vmem:[%s1 + $0x608] sm:$0xff]
  %v257 = vld [vmem:[%s1 + $0x610] sm:$0xff]
  %v258 = vld [vmem:[%s1 + $0x618] sm:$0xff]
  %v259 = vld [vmem:[%s1 + $0x620] sm:$0xff]
  %v260 = vld [vmem:[%s1 + $0x628] sm:$0xff]
  %v261 = vld [vmem:[%s1 + $0x630] sm:$0xff]
  %v262 = vld [vmem:[%s1 + $0x638] sm:$0xff]
  %v263 = vld [vmem:[%s1 + $0x640] sm:$0xff]
  %v264 = vld [vmem:[%s1 + $0x648] sm:$0xff]
  %v265 = vld [vmem:[%s1 + $0x650] sm:$0xff]
  %v266 = vld [vmem:[%s1 + $0x658] sm:$0xff]
  %v267 = vld [vmem:[%s1 + $0x660] sm:$0xff]
  %v268 = vld [vmem:[%s1 + $0x668] sm:$0xff]
  %v269 = vld [vmem:[%s1 + $0x670] sm:$0xff]
  %v270 = vld [vmem:[%s1 + $0x678] sm:$0xff]
  %v271 = vld [vmem:[%s1 + $0x680] sm:$0xff]
  %v272 = vld [vmem:[%s1 + $0x688] sm:$0xff]
  %v273 = vld [vmem:[%s1 + $0x690] sm:$0xff]
  %v274 = vld [vmem:[%s1 + $0x698] sm:$0xff]
  %v275 = vld [vmem:[%s1 + $0x6a0] sm:$0xff]
  %v276 = vld [vmem:[%s1 + $0x6a8] sm:$0xff]
  %v277 = vld [vmem:[%s1 + $0x6b0] sm:$0xff]
  %v278 = vld [vmem:[%s1 + $0x6b8] sm:$0xff]
  %v279 = vld [vmem:[%s1 + $0x6c0] sm:$0xff]
  %v280 = vld [vmem:[%s1 + $0x6c8] sm:$0xff]
  %v281 = vld [vmem:[%s1 + $0x6d0] sm:$0xff]
  %v282 = vld [vmem:[%s1 + $0x6d8] sm:$0xff]
  %v283 = vld [vmem:[%s1 + $0x6e0] sm:$0xff]
  %v284 = vld [vmem:[%s1 + $0x6e8] sm:$0xff]
  %v285 = vld [vmem:[%s1 + $0x6f0] sm:$0xff]
  %v286 = vld [vmem:[%s1 + $0x6f8] sm:$0xff]
  %v287 = vld [vmem:[%s1 + $0x700] sm:$0xff]
  %v288 = vld [vmem:[%s1 + $0x708] sm:$0xff]
  %v289 = vld [vmem:[%s1 + $0x710] sm:$0xff]
  %v290 = vld [vmem:[%s1 + $0x718] sm:$0xff]
  %v291 = vld [vmem:[%s1 + $0x720] sm:$0xff]
  %v292 = vld [vmem:[%s1 + $0x728] sm:$0xff]
  %v293 = vld [vmem:[%s1 + $0x730] sm:$0xff]
  %v294 = vld [vmem:[%s1 + $0x738] sm:$0xff]
  %v295 = vld [vmem:[%s1 + $0x740] sm:$0xff]
  %v296 = vld [vmem:[%s1 + $0x748] sm:$0xff]
  %v297 = vld [vmem:[%s1 + $0x750] sm:$0xff]
  %v298 = vld [vmem:[%s1 + $0x758] sm:$0xff]
  %v299 = vld [vmem:[%s1 + $0x760] sm:$0xff]
  %v300 = vld [vmem:[%s1 + $0x768] sm:$0xff]
  %v301 = vld [vmem:[%s1 + $0x770] sm:$0xff]
  %v302 = vld [vmem:[%s1 + $0x778] sm:$0xff]
  %v303 = vld [vmem:[%s1 + $0x780] sm:$0xff]
  %v304 = vld [vmem:[%s1 + $0x788] sm:$0xff]
  %v305 = vld [vmem:[%s1 + $0x790] sm:$0xff]
  %v306 = vld [vmem:[%s1 + $0x798] sm:$0xff]
  %v307 = vld [vmem:[%s1 + $0x7a0] sm:$0xff]
  %v308 = vld [vmem:[%s1 + $0x7a8] sm:$0xff]
  %v309 = vld [vmem:[%s1 + $0x7b0] sm:$0xff]
  %v310 = vld [vmem:[%s1 + $0x7b8] sm:$0xff]
  %v311 = vld [vmem:[%s1 + $0x7c0] sm:$0xff]
  %v312 = vld [vmem:[%s1 + $0x7c8] sm:$0xff]
  %v313 = vld [vmem:[%s1 + $0x7d0] sm:$0xff]
  %v314 = vld [vmem:[%s1 + $0x7d8] sm:$0xff]
  %v315 = vld [vmem:[%s1 + $0x7e0] sm:$0xff]
  %v316 = vld [vmem:[%s1 + $0x7e8] sm:$0xff]
  %v317 = vld [vmem:[%s1 + $0x7f0] sm:$0xff]
  %v318 = vld [vmem:[%s1 + $0x7f8] sm:$0xff]
  %v319 = vld [vmem:[%s2] sm:$0xf]
  %v321 = vlaneseq
  %v322 = vshrl.u32 %v321, 7
  %v323 = vsub.s32 0, %v322
  %v324 = vrot.slane %v319, %v323
  %v325 = vlaneseq
  %v326 = vshrl.u32 %v325, 7
  %v327 = vsub.s32 1, %v326
  %v328 = vrot.slane %v319, %v327
  %v329 = vlaneseq
  %v330 = vshrl.u32 %v329, 7
  %v331 = vsub.s32 2, %v330
  %v332 = vrot.slane %v319, %v331
  %v333 = vlaneseq
  %v334 = vshrl.u32 %v333, 7
  %v335 = vsub.s32 3, %v334
  %v336 = vrot.slane %v319, %v335
  %v597 = vunpack.c.l.b16 %v63
  %v598 = vunpack.c.h.b16 %v63
  %v599 = vunpack.c.l.b16 %v64
  %v600 = vunpack.c.h.b16 %v64
  %v601 = vunpack.c.l.b16 %v65
  %v602 = vunpack.c.h.b16 %v65
  %v603 = vunpack.c.l.b16 %v66
  %v604 = vunpack.c.h.b16 %v66
  %v605 = vunpack.c.l.b16 %v67
  %v606 = vunpack.c.h.b16 %v67
  %v607 = vunpack.c.l.b16 %v68
  %v608 = vunpack.c.h.b16 %v68
  %v609 = vunpack.c.l.b16 %v69
  %v610 = vunpack.c.h.b16 %v69
  %v611 = vunpack.c.l.b16 %v70
  %v612 = vunpack.c.h.b16 %v70
  %v613 = vunpack.c.l.b16 %v71
  %v614 = vunpack.c.h.b16 %v71
  %v615 = vunpack.c.l.b16 %v72
  %v616 = vunpack.c.h.b16 %v72
  %v617 = vunpack.c.l.b16 %v73
  %v618 = vunpack.c.h.b16 %v73
  %v619 = vunpack.c.l.b16 %v74
  %v620 = vunpack.c.h.b16 %v74
  %v621 = vunpack.c.l.b16 %v75
  %v622 = vunpack.c.h.b16 %v75
  %v623 = vunpack.c.l.b16 %v76
  %v624 = vunpack.c.h.b16 %v76
  %v625 = vunpack.c.l.b16 %v77
  %v626 = vunpack.c.h.b16 %v77
  %v627 = vunpack.c.l.b16 %v78
  %v628 = vunpack.c.h.b16 %v78
  %v629 = vunpack.c.l.b16 %v79
  %v630 = vunpack.c.h.b16 %v79
  %v631 = vunpack.c.l.b16 %v80
  %v632 = vunpack.c.h.b16 %v80
  %v633 = vunpack.c.l.b16 %v81
  %v634 = vunpack.c.h.b16 %v81
  %v635 = vunpack.c.l.b16 %v82
  %v636 = vunpack.c.h.b16 %v82
  %v637 = vunpack.c.l.b16 %v83
  %v638 = vunpack.c.h.b16 %v83
  %v639 = vunpack.c.l.b16 %v84
  %v640 = vunpack.c.h.b16 %v84
  %v641 = vunpack.c.l.b16 %v85
  %v642 = vunpack.c.h.b16 %v85
  %v643 = vunpack.c.l.b16 %v86
  %v644 = vunpack.c.h.b16 %v86
  %v645 = vunpack.c.l.b16 %v87
  %v646 = vunpack.c.h.b16 %v87
  %v647 = vunpack.c.l.b16 %v88
  %v648 = vunpack.c.h.b16 %v88
  %v649 = vunpack.c.l.b16 %v89
  %v650 = vunpack.c.h.b16 %v89
  %v651 = vunpack.c.l.b16 %v90
  %v652 = vunpack.c.h.b16 %v90
  %v653 = vunpack.c.l.b16 %v91
  %v654 = vunpack.c.h.b16 %v91
  %v655 = vunpack.c.l.b16 %v92
  %v656 = vunpack.c.h.b16 %v92
  %v657 = vunpack.c.l.b16 %v93
  %v658 = vunpack.c.h.b16 %v93
  %v659 = vunpack.c.l.b16 %v94
  %v660 = vunpack.c.h.b16 %v94
  %v661 = vunpack.c.l.b16 %v95
  %v662 = vunpack.c.h.b16 %v95
  %v663 = vunpack.c.l.b16 %v96
  %v664 = vunpack.c.h.b16 %v96
  %v665 = vunpack.c.l.b16 %v97
  %v666 = vunpack.c.h.b16 %v97
  %v667 = vunpack.c.l.b16 %v98
  %v668 = vunpack.c.h.b16 %v98
  %v669 = vunpack.c.l.b16 %v99
  %v670 = vunpack.c.h.b16 %v99
  %v671 = vunpack.c.l.b16 %v100
  %v672 = vunpack.c.h.b16 %v100
  %v673 = vunpack.c.l.b16 %v101
  %v674 = vunpack.c.h.b16 %v101
  %v675 = vunpack.c.l.b16 %v102
  %v676 = vunpack.c.h.b16 %v102
  %v677 = vunpack.c.l.b16 %v103
  %v678 = vunpack.c.h.b16 %v103
  %v679 = vunpack.c.l.b16 %v104
  %v680 = vunpack.c.h.b16 %v104
  %v681 = vunpack.c.l.b16 %v105
  %v682 = vunpack.c.h.b16 %v105
  %v683 = vunpack.c.l.b16 %v106
  %v684 = vunpack.c.h.b16 %v106
  %v685 = vunpack.c.l.b16 %v107
  %v686 = vunpack.c.h.b16 %v107
  %v687 = vunpack.c.l.b16 %v108
  %v688 = vunpack.c.h.b16 %v108
  %v689 = vunpack.c.l.b16 %v109
  %v690 = vunpack.c.h.b16 %v109
  %v691 = vunpack.c.l.b16 %v110
  %v692 = vunpack.c.h.b16 %v110
  %v693 = vunpack.c.l.b16 %v111
  %v694 = vunpack.c.h.b16 %v111
  %v695 = vunpack.c.l.b16 %v112
  %v696 = vunpack.c.h.b16 %v112
  %v697 = vunpack.c.l.b16 %v113
  %v698 = vunpack.c.h.b16 %v113
  %v699 = vunpack.c.l.b16 %v114
  %v700 = vunpack.c.h.b16 %v114
  %v701 = vunpack.c.l.b16 %v115
  %v702 = vunpack.c.h.b16 %v115
  %v703 = vunpack.c.l.b16 %v116
  %v704 = vunpack.c.h.b16 %v116
  %v705 = vunpack.c.l.b16 %v117
  %v706 = vunpack.c.h.b16 %v117
  %v707 = vunpack.c.l.b16 %v118
  %v708 = vunpack.c.h.b16 %v118
  %v709 = vunpack.c.l.b16 %v119
  %v710 = vunpack.c.h.b16 %v119
  %v711 = vunpack.c.l.b16 %v120
  %v712 = vunpack.c.h.b16 %v120
  %v713 = vunpack.c.l.b16 %v121
  %v714 = vunpack.c.h.b16 %v121
  %v715 = vunpack.c.l.b16 %v122
  %v716 = vunpack.c.h.b16 %v122
  %v717 = vunpack.c.l.b16 %v123
  %v718 = vunpack.c.h.b16 %v123
  %v719 = vunpack.c.l.b16 %v124
  %v720 = vunpack.c.h.b16 %v124
  %v721 = vunpack.c.l.b16 %v125
  %v722 = vunpack.c.h.b16 %v125
  %v723 = vunpack.c.l.b16 %v126
  %v724 = vunpack.c.h.b16 %v126
  %v725 = vunpack.c.l.b16 %v127
  %v726 = vunpack.c.h.b16 %v127
  %v727 = vunpack.c.l.b16 %v128
  %v728 = vunpack.c.h.b16 %v128
  %v729 = vunpack.c.l.b16 %v129
  %v730 = vunpack.c.h.b16 %v129
  %v731 = vunpack.c.l.b16 %v130
  %v732 = vunpack.c.h.b16 %v130
  %v733 = vunpack.c.l.b16 %v131
  %v734 = vunpack.c.h.b16 %v131
  %v735 = vunpack.c.l.b16 %v132
  %v736 = vunpack.c.h.b16 %v132
  %v737 = vunpack.c.l.b16 %v133
  %v738 = vunpack.c.h.b16 %v133
  %v739 = vunpack.c.l.b16 %v134
  %v740 = vunpack.c.h.b16 %v134
  %v741 = vunpack.c.l.b16 %v135
  %v742 = vunpack.c.h.b16 %v135
  %v743 = vunpack.c.l.b16 %v136
  %v744 = vunpack.c.h.b16 %v136
  %v745 = vunpack.c.l.b16 %v137
  %v746 = vunpack.c.h.b16 %v137
  %v747 = vunpack.c.l.b16 %v138
  %v748 = vunpack.c.h.b16 %v138
  %v749 = vunpack.c.l.b16 %v139
  %v750 = vunpack.c.h.b16 %v139
  %v751 = vunpack.c.l.b16 %v140
  %v752 = vunpack.c.h.b16 %v140
  %v753 = vunpack.c.l.b16 %v141
  %v754 = vunpack.c.h.b16 %v141
  %v755 = vunpack.c.l.b16 %v142
  %v756 = vunpack.c.h.b16 %v142
  %v757 = vunpack.c.l.b16 %v143
  %v758 = vunpack.c.h.b16 %v143
  %v759 = vunpack.c.l.b16 %v144
  %v760 = vunpack.c.h.b16 %v144
  %v761 = vunpack.c.l.b16 %v145
  %v762 = vunpack.c.h.b16 %v145
  %v763 = vunpack.c.l.b16 %v146
  %v764 = vunpack.c.h.b16 %v146
  %v765 = vunpack.c.l.b16 %v147
  %v766 = vunpack.c.h.b16 %v147
  %v767 = vunpack.c.l.b16 %v148
  %v768 = vunpack.c.h.b16 %v148
  %v769 = vunpack.c.l.b16 %v149
  %v770 = vunpack.c.h.b16 %v149
  %v771 = vunpack.c.l.b16 %v150
  %v772 = vunpack.c.h.b16 %v150
  %v773 = vunpack.c.l.b16 %v151
  %v774 = vunpack.c.h.b16 %v151
  %v775 = vunpack.c.l.b16 %v152
  %v776 = vunpack.c.h.b16 %v152
  %v777 = vunpack.c.l.b16 %v153
  %v778 = vunpack.c.h.b16 %v153
  %v779 = vunpack.c.l.b16 %v154
  %v780 = vunpack.c.h.b16 %v154
  %v781 = vunpack.c.l.b16 %v155
  %v782 = vunpack.c.h.b16 %v155
  %v783 = vunpack.c.l.b16 %v156
  %v784 = vunpack.c.h.b16 %v156
  %v785 = vunpack.c.l.b16 %v157
  %v786 = vunpack.c.h.b16 %v157
  %v787 = vunpack.c.l.b16 %v158
  %v788 = vunpack.c.h.b16 %v158
  %v789 = vunpack.c.l.b16 %v159
  %v790 = vunpack.c.h.b16 %v159
  %v791 = vunpack.c.l.b16 %v160
  %v792 = vunpack.c.h.b16 %v160
  %v793 = vunpack.c.l.b16 %v161
  %v794 = vunpack.c.h.b16 %v161
  %v795 = vunpack.c.l.b16 %v162
  %v796 = vunpack.c.h.b16 %v162
  %v797 = vunpack.c.l.b16 %v163
  %v798 = vunpack.c.h.b16 %v163
  %v799 = vunpack.c.l.b16 %v164
  %v800 = vunpack.c.h.b16 %v164
  %v801 = vunpack.c.l.b16 %v165
  %v802 = vunpack.c.h.b16 %v165
  %v803 = vunpack.c.l.b16 %v166
  %v804 = vunpack.c.h.b16 %v166
  %v805 = vunpack.c.l.b16 %v167
  %v806 = vunpack.c.h.b16 %v167
  %v807 = vunpack.c.l.b16 %v168
  %v808 = vunpack.c.h.b16 %v168
  %v809 = vunpack.c.l.b16 %v169
  %v810 = vunpack.c.h.b16 %v169
  %v811 = vunpack.c.l.b16 %v170
  %v812 = vunpack.c.h.b16 %v170
  %v813 = vunpack.c.l.b16 %v171
  %v814 = vunpack.c.h.b16 %v171
  %v815 = vunpack.c.l.b16 %v172
  %v816 = vunpack.c.h.b16 %v172
  %v817 = vunpack.c.l.b16 %v173
  %v818 = vunpack.c.h.b16 %v173
  %v819 = vunpack.c.l.b16 %v174
  %v820 = vunpack.c.h.b16 %v174
  %v821 = vunpack.c.l.b16 %v175
  %v822 = vunpack.c.h.b16 %v175
  %v823 = vunpack.c.l.b16 %v176
  %v824 = vunpack.c.h.b16 %v176
  %v825 = vunpack.c.l.b16 %v177
  %v826 = vunpack.c.h.b16 %v177
  %v827 = vunpack.c.l.b16 %v178
  %v828 = vunpack.c.h.b16 %v178
  %v829 = vunpack.c.l.b16 %v179
  %v830 = vunpack.c.h.b16 %v179
  %v831 = vunpack.c.l.b16 %v180
  %v832 = vunpack.c.h.b16 %v180
  %v833 = vunpack.c.l.b16 %v181
  %v834 = vunpack.c.h.b16 %v181
  %v835 = vunpack.c.l.b16 %v182
  %v836 = vunpack.c.h.b16 %v182
  %v837 = vunpack.c.l.b16 %v183
  %v838 = vunpack.c.h.b16 %v183
  %v839 = vunpack.c.l.b16 %v184
  %v840 = vunpack.c.h.b16 %v184
  %v841 = vunpack.c.l.b16 %v185
  %v842 = vunpack.c.h.b16 %v185
  %v843 = vunpack.c.l.b16 %v186
  %v844 = vunpack.c.h.b16 %v186
  %v845 = vunpack.c.l.b16 %v187
  %v846 = vunpack.c.h.b16 %v187
  %v847 = vunpack.c.l.b16 %v188
  %v848 = vunpack.c.h.b16 %v188
  %v849 = vunpack.c.l.b16 %v189
  %v850 = vunpack.c.h.b16 %v189
  %v851 = vunpack.c.l.b16 %v190
  %v852 = vunpack.c.h.b16 %v190
  %v853 = vunpack.c.l.b16 %v191
  %v854 = vunpack.c.h.b16 %v191
  %v855 = vunpack.c.l.b16 %v192
  %v856 = vunpack.c.h.b16 %v192
  %v857 = vunpack.c.l.b16 %v193
  %v858 = vunpack.c.h.b16 %v193
  %v859 = vunpack.c.l.b16 %v194
  %v860 = vunpack.c.h.b16 %v194
  %v861 = vunpack.c.l.b16 %v195
  %v862 = vunpack.c.h.b16 %v195
  %v863 = vunpack.c.l.b16 %v196
  %v864 = vunpack.c.h.b16 %v196
  %v865 = vunpack.c.l.b16 %v197
  %v866 = vunpack.c.h.b16 %v197
  %v867 = vunpack.c.l.b16 %v198
  %v868 = vunpack.c.h.b16 %v198
  %v869 = vunpack.c.l.b16 %v199
  %v870 = vunpack.c.h.b16 %v199
  %v871 = vunpack.c.l.b16 %v200
  %v872 = vunpack.c.h.b16 %v200
  %v873 = vunpack.c.l.b16 %v201
  %v874 = vunpack.c.h.b16 %v201
  %v875 = vunpack.c.l.b16 %v202
  %v876 = vunpack.c.h.b16 %v202
  %v877 = vunpack.c.l.b16 %v203
  %v878 = vunpack.c.h.b16 %v203
  %v879 = vunpack.c.l.b16 %v204
  %v880 = vunpack.c.h.b16 %v204
  %v881 = vunpack.c.l.b16 %v205
  %v882 = vunpack.c.h.b16 %v205
  %v883 = vunpack.c.l.b16 %v206
  %v884 = vunpack.c.h.b16 %v206
  %v885 = vunpack.c.l.b16 %v207
  %v886 = vunpack.c.h.b16 %v207
  %v887 = vunpack.c.l.b16 %v208
  %v888 = vunpack.c.h.b16 %v208
  %v889 = vunpack.c.l.b16 %v209
  %v890 = vunpack.c.h.b16 %v209
  %v891 = vunpack.c.l.b16 %v210
  %v892 = vunpack.c.h.b16 %v210
  %v893 = vunpack.c.l.b16 %v211
  %v894 = vunpack.c.h.b16 %v211
  %v895 = vunpack.c.l.b16 %v212
  %v896 = vunpack.c.h.b16 %v212
  %v897 = vunpack.c.l.b16 %v213
  %v898 = vunpack.c.h.b16 %v213
  %v899 = vunpack.c.l.b16 %v214
  %v900 = vunpack.c.h.b16 %v214
  %v901 = vunpack.c.l.b16 %v215
  %v902 = vunpack.c.h.b16 %v215
  %v903 = vunpack.c.l.b16 %v216
  %v904 = vunpack.c.h.b16 %v216
  %v905 = vunpack.c.l.b16 %v217
  %v906 = vunpack.c.h.b16 %v217
  %v907 = vunpack.c.l.b16 %v218
  %v908 = vunpack.c.h.b16 %v218
  %v909 = vunpack.c.l.b16 %v219
  %v910 = vunpack.c.h.b16 %v219
  %v911 = vunpack.c.l.b16 %v220
  %v912 = vunpack.c.h.b16 %v220
  %v913 = vunpack.c.l.b16 %v221
  %v914 = vunpack.c.h.b16 %v221
  %v915 = vunpack.c.l.b16 %v222
  %v916 = vunpack.c.h.b16 %v222
  %v917 = vunpack.c.l.b16 %v223
  %v918 = vunpack.c.h.b16 %v223
  %v919 = vunpack.c.l.b16 %v224
  %v920 = vunpack.c.h.b16 %v224
  %v921 = vunpack.c.l.b16 %v225
  %v922 = vunpack.c.h.b16 %v225
  %v923 = vunpack.c.l.b16 %v226
  %v924 = vunpack.c.h.b16 %v226
  %v925 = vunpack.c.l.b16 %v227
  %v926 = vunpack.c.h.b16 %v227
  %v927 = vunpack.c.l.b16 %v228
  %v928 = vunpack.c.h.b16 %v228
  %v929 = vunpack.c.l.b16 %v229
  %v930 = vunpack.c.h.b16 %v229
  %v931 = vunpack.c.l.b16 %v230
  %v932 = vunpack.c.h.b16 %v230
  %v933 = vunpack.c.l.b16 %v231
  %v934 = vunpack.c.h.b16 %v231
  %v935 = vunpack.c.l.b16 %v232
  %v936 = vunpack.c.h.b16 %v232
  %v937 = vunpack.c.l.b16 %v233
  %v938 = vunpack.c.h.b16 %v233
  %v939 = vunpack.c.l.b16 %v234
  %v940 = vunpack.c.h.b16 %v234
  %v941 = vunpack.c.l.b16 %v235
  %v942 = vunpack.c.h.b16 %v235
  %v943 = vunpack.c.l.b16 %v236
  %v944 = vunpack.c.h.b16 %v236
  %v945 = vunpack.c.l.b16 %v237
  %v946 = vunpack.c.h.b16 %v237
  %v947 = vunpack.c.l.b16 %v238
  %v948 = vunpack.c.h.b16 %v238
  %v949 = vunpack.c.l.b16 %v239
  %v950 = vunpack.c.h.b16 %v239
  %v951 = vunpack.c.l.b16 %v240
  %v952 = vunpack.c.h.b16 %v240
  %v953 = vunpack.c.l.b16 %v241
  %v954 = vunpack.c.h.b16 %v241
  %v955 = vunpack.c.l.b16 %v242
  %v956 = vunpack.c.h.b16 %v242
  %v957 = vunpack.c.l.b16 %v243
  %v958 = vunpack.c.h.b16 %v243
  %v959 = vunpack.c.l.b16 %v244
  %v960 = vunpack.c.h.b16 %v244
  %v961 = vunpack.c.l.b16 %v245
  %v962 = vunpack.c.h.b16 %v245
  %v963 = vunpack.c.l.b16 %v246
  %v964 = vunpack.c.h.b16 %v246
  %v965 = vunpack.c.l.b16 %v247
  %v966 = vunpack.c.h.b16 %v247
  %v967 = vunpack.c.l.b16 %v248
  %v968 = vunpack.c.h.b16 %v248
  %v969 = vunpack.c.l.b16 %v249
  %v970 = vunpack.c.h.b16 %v249
  %v971 = vunpack.c.l.b16 %v250
  %v972 = vunpack.c.h.b16 %v250
  %v973 = vunpack.c.l.b16 %v251
  %v974 = vunpack.c.h.b16 %v251
  %v975 = vunpack.c.l.b16 %v252
  %v976 = vunpack.c.h.b16 %v252
  %v977 = vunpack.c.l.b16 %v253
  %v978 = vunpack.c.h.b16 %v253
  %v979 = vunpack.c.l.b16 %v254
  %v980 = vunpack.c.h.b16 %v254
  %v981 = vunpack.c.l.b16 %v255
  %v982 = vunpack.c.h.b16 %v255
  %v983 = vunpack.c.l.b16 %v256
  %v984 = vunpack.c.h.b16 %v256
  %v985 = vunpack.c.l.b16 %v257
  %v986 = vunpack.c.h.b16 %v257
  %v987 = vunpack.c.l.b16 %v258
  %v988 = vunpack.c.h.b16 %v258
  %v989 = vunpack.c.l.b16 %v259
  %v990 = vunpack.c.h.b16 %v259
  %v991 = vunpack.c.l.b16 %v260
  %v992 = vunpack.c.h.b16 %v260
  %v993 = vunpack.c.l.b16 %v261
  %v994 = vunpack.c.h.b16 %v261
  %v995 = vunpack.c.l.b16 %v262
  %v996 = vunpack.c.h.b16 %v262
  %v997 = vunpack.c.l.b16 %v263
  %v998 = vunpack.c.h.b16 %v263
  %v999 = vunpack.c.l.b16 %v264
  %v1000 = vunpack.c.h.b16 %v264
  %v1001 = vunpack.c.l.b16 %v265
  %v1002 = vunpack.c.h.b16 %v265
  %v1003 = vunpack.c.l.b16 %v266
  %v1004 = vunpack.c.h.b16 %v266
  %v1005 = vunpack.c.l.b16 %v267
  %v1006 = vunpack.c.h.b16 %v267
  %v1007 = vunpack.c.l.b16 %v268
  %v1008 = vunpack.c.h.b16 %v268
  %v1009 = vunpack.c.l.b16 %v269
  %v1010 = vunpack.c.h.b16 %v269
  %v1011 = vunpack.c.l.b16 %v270
  %v1012 = vunpack.c.h.b16 %v270
  %v1013 = vunpack.c.l.b16 %v271
  %v1014 = vunpack.c.h.b16 %v271
  %v1015 = vunpack.c.l.b16 %v272
  %v1016 = vunpack.c.h.b16 %v272
  %v1017 = vunpack.c.l.b16 %v273
  %v1018 = vunpack.c.h.b16 %v273
  %v1019 = vunpack.c.l.b16 %v274
  %v1020 = vunpack.c.h.b16 %v274
  %v1021 = vunpack.c.l.b16 %v275
  %v1022 = vunpack.c.h.b16 %v275
  %v1023 = vunpack.c.l.b16 %v276
  %v1024 = vunpack.c.h.b16 %v276
  %v1025 = vunpack.c.l.b16 %v277
  %v1026 = vunpack.c.h.b16 %v277
  %v1027 = vunpack.c.l.b16 %v278
  %v1028 = vunpack.c.h.b16 %v278
  %v1029 = vunpack.c.l.b16 %v279
  %v1030 = vunpack.c.h.b16 %v279
  %v1031 = vunpack.c.l.b16 %v280
  %v1032 = vunpack.c.h.b16 %v280
  %v1033 = vunpack.c.l.b16 %v281
  %v1034 = vunpack.c.h.b16 %v281
  %v1035 = vunpack.c.l.b16 %v282
  %v1036 = vunpack.c.h.b16 %v282
  %v1037 = vunpack.c.l.b16 %v283
  %v1038 = vunpack.c.h.b16 %v283
  %v1039 = vunpack.c.l.b16 %v284
  %v1040 = vunpack.c.h.b16 %v284
  %v1041 = vunpack.c.l.b16 %v285
  %v1042 = vunpack.c.h.b16 %v285
  %v1043 = vunpack.c.l.b16 %v286
  %v1044 = vunpack.c.h.b16 %v286
  %v1045 = vunpack.c.l.b16 %v287
  %v1046 = vunpack.c.h.b16 %v287
  %v1047 = vunpack.c.l.b16 %v288
  %v1048 = vunpack.c.h.b16 %v288
  %v1049 = vunpack.c.l.b16 %v289
  %v1050 = vunpack.c.h.b16 %v289
  %v1051 = vunpack.c.l.b16 %v290
  %v1052 = vunpack.c.h.b16 %v290
  %v1053 = vunpack.c.l.b16 %v291
  %v1054 = vunpack.c.h.b16 %v291
  %v1055 = vunpack.c.l.b16 %v292
  %v1056 = vunpack.c.h.b16 %v292
  %v1057 = vunpack.c.l.b16 %v293
  %v1058 = vunpack.c.h.b16 %v293
  %v1059 = vunpack.c.l.b16 %v294
  %v1060 = vunpack.c.h.b16 %v294
  %v1061 = vunpack.c.l.b16 %v295
  %v1062 = vunpack.c.h.b16 %v295
  %v1063 = vunpack.c.l.b16 %v296
  %v1064 = vunpack.c.h.b16 %v296
  %v1065 = vunpack.c.l.b16 %v297
  %v1066 = vunpack.c.h.b16 %v297
  %v1067 = vunpack.c.l.b16 %v298
  %v1068 = vunpack.c.h.b16 %v298
  %v1069 = vunpack.c.l.b16 %v299
  %v1070 = vunpack.c.h.b16 %v299
  %v1071 = vunpack.c.l.b16 %v300
  %v1072 = vunpack.c.h.b16 %v300
  %v1073 = vunpack.c.l.b16 %v301
  %v1074 = vunpack.c.h.b16 %v301
  %v1075 = vunpack.c.l.b16 %v302
  %v1076 = vunpack.c.h.b16 %v302
  %v1077 = vunpack.c.l.b16 %v303
  %v1078 = vunpack.c.h.b16 %v303
  %v1079 = vunpack.c.l.b16 %v304
  %v1080 = vunpack.c.h.b16 %v304
  %v1081 = vunpack.c.l.b16 %v305
  %v1082 = vunpack.c.h.b16 %v305
  %v1083 = vunpack.c.l.b16 %v306
  %v1084 = vunpack.c.h.b16 %v306
  %v1085 = vunpack.c.l.b16 %v307
  %v1086 = vunpack.c.h.b16 %v307
  %v1087 = vunpack.c.l.b16 %v308
  %v1088 = vunpack.c.h.b16 %v308
  %v1089 = vunpack.c.l.b16 %v309
  %v1090 = vunpack.c.h.b16 %v309
  %v1091 = vunpack.c.l.b16 %v310
  %v1092 = vunpack.c.h.b16 %v310
  %v1093 = vunpack.c.l.b16 %v311
  %v1094 = vunpack.c.h.b16 %v311
  %v1095 = vunpack.c.l.b16 %v312
  %v1096 = vunpack.c.h.b16 %v312
  %v1097 = vunpack.c.l.b16 %v313
  %v1098 = vunpack.c.h.b16 %v313
  %v1099 = vunpack.c.l.b16 %v314
  %v1100 = vunpack.c.h.b16 %v314
  %v1101 = vunpack.c.l.b16 %v315
  %v1102 = vunpack.c.h.b16 %v315
  %v1103 = vunpack.c.l.b16 %v316
  %v1104 = vunpack.c.h.b16 %v316
  %v1105 = vunpack.c.l.b16 %v317
  %v1106 = vunpack.c.h.b16 %v317
  %v1107 = vunpack.c.l.b16 %v318
  %v1108 = vunpack.c.h.b16 %v318
  %v1109 = vpack.c.b16 %v601, %v597
  %v1110 = vpack.c.b16 %v602, %v598
  %v1111 = vpack.c.b16 %v603, %v599
  %v1112 = vpack.c.b16 %v604, %v600
  %v1113 = vpack.c.b16 %v609, %v605
  %v1114 = vpack.c.b16 %v610, %v606
  %v1115 = vpack.c.b16 %v611, %v607
  %v1116 = vpack.c.b16 %v612, %v608
  %v1117 = vpack.c.b16 %v617, %v613
  %v1118 = vpack.c.b16 %v618, %v614
  %v1119 = vpack.c.b16 %v619, %v615
  %v1120 = vpack.c.b16 %v620, %v616
  %v1121 = vpack.c.b16 %v625, %v621
  %v1122 = vpack.c.b16 %v626, %v622
  %v1123 = vpack.c.b16 %v627, %v623
  %v1124 = vpack.c.b16 %v628, %v624
  %v1125 = vpack.c.b16 %v633, %v629
  %v1126 = vpack.c.b16 %v634, %v630
  %v1127 = vpack.c.b16 %v635, %v631
  %v1128 = vpack.c.b16 %v636, %v632
  %v1129 = vpack.c.b16 %v641, %v637
  %v1130 = vpack.c.b16 %v642, %v638
  %v1131 = vpack.c.b16 %v643, %v639
  %v1132 = vpack.c.b16 %v644, %v640
  %v1133 = vpack.c.b16 %v649, %v645
  %v1134 = vpack.c.b16 %v650, %v646
  %v1135 = vpack.c.b16 %v651, %v647
  %v1136 = vpack.c.b16 %v652, %v648
  %v1137 = vpack.c.b16 %v657, %v653
  %v1138 = vpack.c.b16 %v658, %v654
  %v1139 = vpack.c.b16 %v659, %v655
  %v1140 = vpack.c.b16 %v660, %v656
  %v1141 = vpack.c.b16 %v665, %v661
  %v1142 = vpack.c.b16 %v666, %v662
  %v1143 = vpack.c.b16 %v667, %v663
  %v1144 = vpack.c.b16 %v668, %v664
  %v1145 = vpack.c.b16 %v673, %v669
  %v1146 = vpack.c.b16 %v674, %v670
  %v1147 = vpack.c.b16 %v675, %v671
  %v1148 = vpack.c.b16 %v676, %v672
  %v1149 = vpack.c.b16 %v681, %v677
  %v1150 = vpack.c.b16 %v682, %v678
  %v1151 = vpack.c.b16 %v683, %v679
  %v1152 = vpack.c.b16 %v684, %v680
  %v1153 = vpack.c.b16 %v689, %v685
  %v1154 = vpack.c.b16 %v690, %v686
  %v1155 = vpack.c.b16 %v691, %v687
  %v1156 = vpack.c.b16 %v692, %v688
  %v1157 = vpack.c.b16 %v697, %v693
  %v1158 = vpack.c.b16 %v698, %v694
  %v1159 = vpack.c.b16 %v699, %v695
  %v1160 = vpack.c.b16 %v700, %v696
  %v1161 = vpack.c.b16 %v705, %v701
  %v1162 = vpack.c.b16 %v706, %v702
  %v1163 = vpack.c.b16 %v707, %v703
  %v1164 = vpack.c.b16 %v708, %v704
  %v1165 = vpack.c.b16 %v713, %v709
  %v1166 = vpack.c.b16 %v714, %v710
  %v1167 = vpack.c.b16 %v715, %v711
  %v1168 = vpack.c.b16 %v716, %v712
  %v1169 = vpack.c.b16 %v721, %v717
  %v1170 = vpack.c.b16 %v722, %v718
  %v1171 = vpack.c.b16 %v723, %v719
  %v1172 = vpack.c.b16 %v724, %v720
  %v1173 = vpack.c.b16 %v729, %v725
  %v1174 = vpack.c.b16 %v730, %v726
  %v1175 = vpack.c.b16 %v731, %v727
  %v1176 = vpack.c.b16 %v732, %v728
  %v1177 = vpack.c.b16 %v737, %v733
  %v1178 = vpack.c.b16 %v738, %v734
  %v1179 = vpack.c.b16 %v739, %v735
  %v1180 = vpack.c.b16 %v740, %v736
  %v1181 = vpack.c.b16 %v745, %v741
  %v1182 = vpack.c.b16 %v746, %v742
  %v1183 = vpack.c.b16 %v747, %v743
  %v1184 = vpack.c.b16 %v748, %v744
  %v1185 = vpack.c.b16 %v753, %v749
  %v1186 = vpack.c.b16 %v754, %v750
  %v1187 = vpack.c.b16 %v755, %v751
  %v1188 = vpack.c.b16 %v756, %v752
  %v1189 = vpack.c.b16 %v761, %v757
  %v1190 = vpack.c.b16 %v762, %v758
  %v1191 = vpack.c.b16 %v763, %v759
  %v1192 = vpack.c.b16 %v764, %v760
  %v1193 = vpack.c.b16 %v769, %v765
  %v1194 = vpack.c.b16 %v770, %v766
  %v1195 = vpack.c.b16 %v771, %v767
  %v1196 = vpack.c.b16 %v772, %v768
  %v1197 = vpack.c.b16 %v777, %v773
  %v1198 = vpack.c.b16 %v778, %v774
  %v1199 = vpack.c.b16 %v779, %v775
  %v1200 = vpack.c.b16 %v780, %v776
  %v1201 = vpack.c.b16 %v785, %v781
  %v1202 = vpack.c.b16 %v786, %v782
  %v1203 = vpack.c.b16 %v787, %v783
  %v1204 = vpack.c.b16 %v788, %v784
  %v1205 = vpack.c.b16 %v793, %v789
  %v1206 = vpack.c.b16 %v794, %v790
  %v1207 = vpack.c.b16 %v795, %v791
  %v1208 = vpack.c.b16 %v796, %v792
  %v1209 = vpack.c.b16 %v801, %v797
  %v1210 = vpack.c.b16 %v802, %v798
  %v1211 = vpack.c.b16 %v803, %v799
  %v1212 = vpack.c.b16 %v804, %v800
  %v1213 = vpack.c.b16 %v809, %v805
  %v1214 = vpack.c.b16 %v810, %v806
  %v1215 = vpack.c.b16 %v811, %v807
  %v1216 = vpack.c.b16 %v812, %v808
  %v1217 = vpack.c.b16 %v817, %v813
  %v1218 = vpack.c.b16 %v818, %v814
  %v1219 = vpack.c.b16 %v819, %v815
  %v1220 = vpack.c.b16 %v820, %v816
  %v1221 = vpack.c.b16 %v825, %v821
  %v1222 = vpack.c.b16 %v826, %v822
  %v1223 = vpack.c.b16 %v827, %v823
  %v1224 = vpack.c.b16 %v828, %v824
  %v1225 = vpack.c.b16 %v833, %v829
  %v1226 = vpack.c.b16 %v834, %v830
  %v1227 = vpack.c.b16 %v835, %v831
  %v1228 = vpack.c.b16 %v836, %v832
  %v1229 = vpack.c.b16 %v841, %v837
  %v1230 = vpack.c.b16 %v842, %v838
  %v1231 = vpack.c.b16 %v843, %v839
  %v1232 = vpack.c.b16 %v844, %v840
  %v1233 = vpack.c.b16 %v849, %v845
  %v1234 = vpack.c.b16 %v850, %v846
  %v1235 = vpack.c.b16 %v851, %v847
  %v1236 = vpack.c.b16 %v852, %v848
  %v1237 = vpack.c.b16 %v857, %v853
  %v1238 = vpack.c.b16 %v858, %v854
  %v1239 = vpack.c.b16 %v859, %v855
  %v1240 = vpack.c.b16 %v860, %v856
  %v1241 = vpack.c.b16 %v865, %v861
  %v1242 = vpack.c.b16 %v866, %v862
  %v1243 = vpack.c.b16 %v867, %v863
  %v1244 = vpack.c.b16 %v868, %v864
  %v1245 = vpack.c.b16 %v873, %v869
  %v1246 = vpack.c.b16 %v874, %v870
  %v1247 = vpack.c.b16 %v875, %v871
  %v1248 = vpack.c.b16 %v876, %v872
  %v1249 = vpack.c.b16 %v881, %v877
  %v1250 = vpack.c.b16 %v882, %v878
  %v1251 = vpack.c.b16 %v883, %v879
  %v1252 = vpack.c.b16 %v884, %v880
  %v1253 = vpack.c.b16 %v889, %v885
  %v1254 = vpack.c.b16 %v890, %v886
  %v1255 = vpack.c.b16 %v891, %v887
  %v1256 = vpack.c.b16 %v892, %v888
  %v1257 = vpack.c.b16 %v897, %v893
  %v1258 = vpack.c.b16 %v898, %v894
  %v1259 = vpack.c.b16 %v899, %v895
  %v1260 = vpack.c.b16 %v900, %v896
  %v1261 = vpack.c.b16 %v905, %v901
  %v1262 = vpack.c.b16 %v906, %v902
  %v1263 = vpack.c.b16 %v907, %v903
  %v1264 = vpack.c.b16 %v908, %v904
  %v1265 = vpack.c.b16 %v913, %v909
  %v1266 = vpack.c.b16 %v914, %v910
  %v1267 = vpack.c.b16 %v915, %v911
  %v1268 = vpack.c.b16 %v916, %v912
  %v1269 = vpack.c.b16 %v921, %v917
  %v1270 = vpack.c.b16 %v922, %v918
  %v1271 = vpack.c.b16 %v923, %v919
  %v1272 = vpack.c.b16 %v924, %v920
  %v1273 = vpack.c.b16 %v929, %v925
  %v1274 = vpack.c.b16 %v930, %v926
  %v1275 = vpack.c.b16 %v931, %v927
  %v1276 = vpack.c.b16 %v932, %v928
  %v1277 = vpack.c.b16 %v937, %v933
  %v1278 = vpack.c.b16 %v938, %v934
  %v1279 = vpack.c.b16 %v939, %v935
  %v1280 = vpack.c.b16 %v940, %v936
  %v1281 = vpack.c.b16 %v945, %v941
  %v1282 = vpack.c.b16 %v946, %v942
  %v1283 = vpack.c.b16 %v947, %v943
  %v1284 = vpack.c.b16 %v948, %v944
  %v1285 = vpack.c.b16 %v953, %v949
  %v1286 = vpack.c.b16 %v954, %v950
  %v1287 = vpack.c.b16 %v955, %v951
  %v1288 = vpack.c.b16 %v956, %v952
  %v1289 = vpack.c.b16 %v961, %v957
  %v1290 = vpack.c.b16 %v962, %v958
  %v1291 = vpack.c.b16 %v963, %v959
  %v1292 = vpack.c.b16 %v964, %v960
  %v1293 = vpack.c.b16 %v969, %v965
  %v1294 = vpack.c.b16 %v970, %v966
  %v1295 = vpack.c.b16 %v971, %v967
  %v1296 = vpack.c.b16 %v972, %v968
  %v1297 = vpack.c.b16 %v977, %v973
  %v1298 = vpack.c.b16 %v978, %v974
  %v1299 = vpack.c.b16 %v979, %v975
  %v1300 = vpack.c.b16 %v980, %v976
  %v1301 = vpack.c.b16 %v985, %v981
  %v1302 = vpack.c.b16 %v986, %v982
  %v1303 = vpack.c.b16 %v987, %v983
  %v1304 = vpack.c.b16 %v988, %v984
  %v1305 = vpack.c.b16 %v993, %v989
  %v1306 = vpack.c.b16 %v994, %v990
  %v1307 = vpack.c.b16 %v995, %v991
  %v1308 = vpack.c.b16 %v996, %v992
  %v1309 = vpack.c.b16 %v1001, %v997
  %v1310 = vpack.c.b16 %v1002, %v998
  %v1311 = vpack.c.b16 %v1003, %v999
  %v1312 = vpack.c.b16 %v1004, %v1000
  %v1313 = vpack.c.b16 %v1009, %v1005
  %v1314 = vpack.c.b16 %v1010, %v1006
  %v1315 = vpack.c.b16 %v1011, %v1007
  %v1316 = vpack.c.b16 %v1012, %v1008
  %v1317 = vpack.c.b16 %v1017, %v1013
  %v1318 = vpack.c.b16 %v1018, %v1014
  %v1319 = vpack.c.b16 %v1019, %v1015
  %v1320 = vpack.c.b16 %v1020, %v1016
  %v1321 = vpack.c.b16 %v1025, %v1021
  %v1322 = vpack.c.b16 %v1026, %v1022
  %v1323 = vpack.c.b16 %v1027, %v1023
  %v1324 = vpack.c.b16 %v1028, %v1024
  %v1325 = vpack.c.b16 %v1033, %v1029
  %v1326 = vpack.c.b16 %v1034, %v1030
  %v1327 = vpack.c.b16 %v1035, %v1031
  %v1328 = vpack.c.b16 %v1036, %v1032
  %v1329 = vpack.c.b16 %v1041, %v1037
  %v1330 = vpack.c.b16 %v1042, %v1038
  %v1331 = vpack.c.b16 %v1043, %v1039
  %v1332 = vpack.c.b16 %v1044, %v1040
  %v1333 = vpack.c.b16 %v1049, %v1045
  %v1334 = vpack.c.b16 %v1050, %v1046
  %v1335 = vpack.c.b16 %v1051, %v1047
  %v1336 = vpack.c.b16 %v1052, %v1048
  %v1337 = vpack.c.b16 %v1057, %v1053
  %v1338 = vpack.c.b16 %v1058, %v1054
  %v1339 = vpack.c.b16 %v1059, %v1055
  %v1340 = vpack.c.b16 %v1060, %v1056
  %v1341 = vpack.c.b16 %v1065, %v1061
  %v1342 = vpack.c.b16 %v1066, %v1062
  %v1343 = vpack.c.b16 %v1067, %v1063
  %v1344 = vpack.c.b16 %v1068, %v1064
  %v1345 = vpack.c.b16 %v1073, %v1069
  %v1346 = vpack.c.b16 %v1074, %v1070
  %v1347 = vpack.c.b16 %v1075, %v1071
  %v1348 = vpack.c.b16 %v1076, %v1072
  %v1349 = vpack.c.b16 %v1081, %v1077
  %v1350 = vpack.c.b16 %v1082, %v1078
  %v1351 = vpack.c.b16 %v1083, %v1079
  %v1352 = vpack.c.b16 %v1084, %v1080
  %v1353 = vpack.c.b16 %v1089, %v1085
  %v1354 = vpack.c.b16 %v1090, %v1086
  %v1355 = vpack.c.b16 %v1091, %v1087
  %v1356 = vpack.c.b16 %v1092, %v1088
  %v1357 = vpack.c.b16 %v1097, %v1093
  %v1358 = vpack.c.b16 %v1098, %v1094
  %v1359 = vpack.c.b16 %v1099, %v1095
  %v1360 = vpack.c.b16 %v1100, %v1096
  %v1361 = vpack.c.b16 %v1105, %v1101
  %v1362 = vpack.c.b16 %v1106, %v1102
  %v1363 = vpack.c.b16 %v1107, %v1103
  %v1364 = vpack.c.b16 %v1108, %v1104
  %1621 = vmatprep.subr.bf16.mxu0 %v1110
  %1622 = vmatpush1.bf16.msra.mxu0 %v1109
  %1623 = vmatprep.subr.bf16.mxu0 %v1114
  %1624 = vmatpush1.bf16.msra.mxu0 %v1113
  %1625 = vmatprep.subr.bf16.mxu0 %v1118
  %1626 = vmatpush1.bf16.msra.mxu0 %v1117
  %1627 = vmatprep.subr.bf16.mxu0 %v1122
  %1628 = vmatpush1.bf16.msra.mxu0 %v1121
  %1629 = vmatprep.subr.bf16.mxu0 %v1126
  %1630 = vmatpush1.bf16.msra.mxu0 %v1125
  %1631 = vmatprep.subr.bf16.mxu0 %v1130
  %1632 = vmatpush1.bf16.msra.mxu0 %v1129
  %1633 = vmatprep.subr.bf16.mxu0 %v1134
  %1634 = vmatpush1.bf16.msra.mxu0 %v1133
  %1635 = vmatprep.subr.bf16.mxu0 %v1138
  %1636 = vmatpush1.bf16.msra.mxu0 %v1137
  %1637 = vmatprep.subr.bf16.mxu0 %v1142
  %1638 = vmatpush1.bf16.msra.mxu0 %v1141
  %1639 = vmatprep.subr.bf16.mxu0 %v1146
  %1640 = vmatpush1.bf16.msra.mxu0 %v1145
  %1641 = vmatprep.subr.bf16.mxu0 %v1150
  %1642 = vmatpush1.bf16.msra.mxu0 %v1149
  %1643 = vmatprep.subr.bf16.mxu0 %v1154
  %1644 = vmatpush1.bf16.msra.mxu0 %v1153
  %1645 = vmatprep.subr.bf16.mxu0 %v1158
  %1646 = vmatpush1.bf16.msra.mxu0 %v1157
  %1647 = vmatprep.subr.bf16.mxu0 %v1162
  %1648 = vmatpush1.bf16.msra.mxu0 %v1161
  %1649 = vmatprep.subr.bf16.mxu0 %v1166
  %1650 = vmatpush1.bf16.msra.mxu0 %v1165
  %1651 = vmatprep.subr.bf16.mxu0 %v1170
  %1652 = vmatpush1.bf16.msra.mxu0 %v1169
  %1653 = vmatprep.mubr.bf16.mxu0 %v56
  %1654 = vmatmul.mubr.bf16.gmra.mrb[0].mxu0 %v55
  %v1655 = vpop.f32.mrb[0].mxu0
  %v1656 = vadd.f32 %v324, %v1655
  %v1657 = vpop.f32.mrb[0].mxu0
  %v1658 = vadd.f32 %v328, %v1657
  %v1659 = vpop.f32.mrb[0].mxu0
  %v1660 = vpop.f32.mrb[0].mxu0
  %1661 = vdwg.mxu0
  %1662 = vmatprep.subr.bf16.mxu0 %v1174
  %1663 = vmatpush1.bf16.msra.mxu0 %v1173
  %1664 = vmatprep.subr.bf16.mxu0 %v1178
  %1665 = vmatpush1.bf16.msra.mxu0 %v1177
  %1666 = vmatprep.subr.bf16.mxu0 %v1182
  %1667 = vmatpush1.bf16.msra.mxu0 %v1181
  %1668 = vmatprep.subr.bf16.mxu0 %v1186
  %1669 = vmatpush1.bf16.msra.mxu0 %v1185
  %1670 = vmatprep.subr.bf16.mxu0 %v1190
  %1671 = vmatpush1.bf16.msra.mxu0 %v1189
  %1672 = vmatprep.subr.bf16.mxu0 %v1194
  %1673 = vmatpush1.bf16.msra.mxu0 %v1193
  %1674 = vmatprep.subr.bf16.mxu0 %v1198
  %1675 = vmatpush1.bf16.msra.mxu0 %v1197
  %1676 = vmatprep.subr.bf16.mxu0 %v1202
  %1677 = vmatpush1.bf16.msra.mxu0 %v1201
  %1678 = vmatprep.subr.bf16.mxu0 %v1206
  %1679 = vmatpush1.bf16.msra.mxu0 %v1205
  %1680 = vmatprep.subr.bf16.mxu0 %v1210
  %1681 = vmatpush1.bf16.msra.mxu0 %v1209
  %1682 = vmatprep.subr.bf16.mxu0 %v1214
  %1683 = vmatpush1.bf16.msra.mxu0 %v1213
  %1684 = vmatprep.subr.bf16.mxu0 %v1218
  %1685 = vmatpush1.bf16.msra.mxu0 %v1217
  %1686 = vmatprep.subr.bf16.mxu0 %v1222
  %1687 = vmatpush1.bf16.msra.mxu0 %v1221
  %1688 = vmatprep.subr.bf16.mxu0 %v1226
  %1689 = vmatpush1.bf16.msra.mxu0 %v1225
  %1690 = vmatprep.subr.bf16.mxu0 %v1230
  %1691 = vmatpush1.bf16.msra.mxu0 %v1229
  %1692 = vmatprep.subr.bf16.mxu0 %v1234
  %1693 = vmatpush1.bf16.msra.mxu0 %v1233
  %1694 = vmatprep.mubr.bf16.mxu0 %v58
  %1695 = vmatmul.mubr.bf16.gmra.mrb[0].mxu0 %v57
  %v1696 = vpop.f32.mrb[0].mxu0
  %v1697 = vadd.f32 %v1656, %v1696
  %v1698 = vpop.f32.mrb[0].mxu0
  %v1699 = vadd.f32 %v1658, %v1698
  %v1700 = vpop.f32.mrb[0].mxu0
  %v1701 = vpop.f32.mrb[0].mxu0
  %1702 = vdwg.mxu0
  %1703 = vmatprep.subr.bf16.mxu0 %v1238
  %1704 = vmatpush1.bf16.msra.mxu0 %v1237
  %1705 = vmatprep.subr.bf16.mxu0 %v1242
  %1706 = vmatpush1.bf16.msra.mxu0 %v1241
  %1707 = vmatprep.subr.bf16.mxu0 %v1246
  %1708 = vmatpush1.bf16.msra.mxu0 %v1245
  %1709 = vmatprep.subr.bf16.mxu0 %v1250
  %1710 = vmatpush1.bf16.msra.mxu0 %v1249
  %1711 = vmatprep.subr.bf16.mxu0 %v1254
  %1712 = vmatpush1.bf16.msra.mxu0 %v1253
  %1713 = vmatprep.subr.bf16.mxu0 %v1258
  %1714 = vmatpush1.bf16.msra.mxu0 %v1257
  %1715 = vmatprep.subr.bf16.mxu0 %v1262
  %1716 = vmatpush1.bf16.msra.mxu0 %v1261
  %1717 = vmatprep.subr.bf16.mxu0 %v1266
  %1718 = vmatpush1.bf16.msra.mxu0 %v1265
  %1719 = vmatprep.subr.bf16.mxu0 %v1270
  %1720 = vmatpush1.bf16.msra.mxu0 %v1269
  %1721 = vmatprep.subr.bf16.mxu0 %v1274
  %1722 = vmatpush1.bf16.msra.mxu0 %v1273
  %1723 = vmatprep.subr.bf16.mxu0 %v1278
  %1724 = vmatpush1.bf16.msra.mxu0 %v1277
  %1725 = vmatprep.subr.bf16.mxu0 %v1282
  %1726 = vmatpush1.bf16.msra.mxu0 %v1281
  %1727 = vmatprep.subr.bf16.mxu0 %v1286
  %1728 = vmatpush1.bf16.msra.mxu0 %v1285
  %1729 = vmatprep.subr.bf16.mxu0 %v1290
  %1730 = vmatpush1.bf16.msra.mxu0 %v1289
  %1731 = vmatprep.subr.bf16.mxu0 %v1294
  %1732 = vmatpush1.bf16.msra.mxu0 %v1293
  %1733 = vmatprep.subr.bf16.mxu0 %v1298
  %1734 = vmatpush1.bf16.msra.mxu0 %v1297
  %1735 = vmatprep.mubr.bf16.mxu0 %v60
  %1736 = vmatmul.mubr.bf16.gmra.mrb[0].mxu0 %v59
  %v1737 = vpop.f32.mrb[0].mxu0
  %v1738 = vadd.f32 %v1697, %v1737
  %v1739 = vpop.f32.mrb[0].mxu0
  %v1740 = vadd.f32 %v1699, %v1739
  %v1741 = vpop.f32.mrb[0].mxu0
  %v1742 = vpop.f32.mrb[0].mxu0
  %1743 = vdwg.mxu0
  %1744 = vmatprep.subr.bf16.mxu0 %v1302
  %1745 = vmatpush1.bf16.msra.mxu0 %v1301
  %1746 = vmatprep.subr.bf16.mxu0 %v1306
  %1747 = vmatpush1.bf16.msra.mxu0 %v1305
  %1748 = vmatprep.subr.bf16.mxu0 %v1310
  %1749 = vmatpush1.bf16.msra.mxu0 %v1309
  %1750 = vmatprep.subr.bf16.mxu0 %v1314
  %1751 = vmatpush1.bf16.msra.mxu0 %v1313
  %1752 = vmatprep.subr.bf16.mxu0 %v1318
  %1753 = vmatpush1.bf16.msra.mxu0 %v1317
  %1754 = vmatprep.subr.bf16.mxu0 %v1322
  %1755 = vmatpush1.bf16.msra.mxu0 %v1321
  %1756 = vmatprep.subr.bf16.mxu0 %v1326
  %1757 = vmatpush1.bf16.msra.mxu0 %v1325
  %1758 = vmatprep.subr.bf16.mxu0 %v1330
  %1759 = vmatpush1.bf16.msra.mxu0 %v1329
  %1760 = vmatprep.subr.bf16.mxu0 %v1334
  %1761 = vmatpush1.bf16.msra.mxu0 %v1333
  %1762 = vmatprep.subr.bf16.mxu0 %v1338
  %1763 = vmatpush1.bf16.msra.mxu0 %v1337
  %1764 = vmatprep.subr.bf16.mxu0 %v1342
  %1765 = vmatpush1.bf16.msra.mxu0 %v1341
  %1766 = vmatprep.subr.bf16.mxu0 %v1346
  %1767 = vmatpush1.bf16.msra.mxu0 %v1345
  %1768 = vmatprep.subr.bf16.mxu0 %v1350
  %1769 = vmatpush1.bf16.msra.mxu0 %v1349
  %1770 = vmatprep.subr.bf16.mxu0 %v1354
  %1771 = vmatpush1.bf16.msra.mxu0 %v1353
  %1772 = vmatprep.subr.bf16.mxu0 %v1358
  %1773 = vmatpush1.bf16.msra.mxu0 %v1357
  %1774 = vmatprep.subr.bf16.mxu0 %v1362
  %1775 = vmatpush1.bf16.msra.mxu0 %v1361
  %1776 = vmatprep.mubr.bf16.mxu0 %v62
  %1777 = vmatmul.mubr.bf16.gmra.mrb[0].mxu0 %v61
  %v1778 = vpop.f32.mrb[0].mxu0
  %v1779 = vadd.f32 %v1738, %v1778
  %v1780 = vpop.f32.mrb[0].mxu0
  %v1781 = vadd.f32 %v1740, %v1780
  %v1782 = vpop.f32.mrb[0].mxu0
  %v1783 = vpop.f32.mrb[0].mxu0
  %1784 = vdwg.mxu0
  %1785 = vmatprep.subr.bf16.mxu0 %v1112
  %1786 = vmatpush1.bf16.msra.mxu0 %v1111
  %1787 = vmatprep.subr.bf16.mxu0 %v1116
  %1788 = vmatpush1.bf16.msra.mxu0 %v1115
  %1789 = vmatprep.subr.bf16.mxu0 %v1120
  %1790 = vmatpush1.bf16.msra.mxu0 %v1119
  %1791 = vmatprep.subr.bf16.mxu0 %v1124
  %1792 = vmatpush1.bf16.msra.mxu0 %v1123
  %1793 = vmatprep.subr.bf16.mxu0 %v1128
  %1794 = vmatpush1.bf16.msra.mxu0 %v1127
  %1795 = vmatprep.subr.bf16.mxu0 %v1132
  %1796 = vmatpush1.bf16.msra.mxu0 %v1131
  %1797 = vmatprep.subr.bf16.mxu0 %v1136
  %1798 = vmatpush1.bf16.msra.mxu0 %v1135
  %1799 = vmatprep.subr.bf16.mxu0 %v1140
  %1800 = vmatpush1.bf16.msra.mxu0 %v1139
  %1801 = vmatprep.subr.bf16.mxu0 %v1144
  %1802 = vmatpush1.bf16.msra.mxu0 %v1143
  %1803 = vmatprep.subr.bf16.mxu0 %v1148
  %1804 = vmatpush1.bf16.msra.mxu0 %v1147
  %1805 = vmatprep.subr.bf16.mxu0 %v1152
  %1806 = vmatpush1.bf16.msra.mxu0 %v1151
  %1807 = vmatprep.subr.bf16.mxu0 %v1156
  %1808 = vmatpush1.bf16.msra.mxu0 %v1155
  %1809 = vmatprep.subr.bf16.mxu0 %v1160
  %1810 = vmatpush1.bf16.msra.mxu0 %v1159
  %1811 = vmatprep.subr.bf16.mxu0 %v1164
  %1812 = vmatpush1.bf16.msra.mxu0 %v1163
  %1813 = vmatprep.subr.bf16.mxu0 %v1168
  %1814 = vmatpush1.bf16.msra.mxu0 %v1167
  %1815 = vmatprep.subr.bf16.mxu0 %v1172
  %1816 = vmatpush1.bf16.msra.mxu0 %v1171
  %1817 = vmatprep.mubr.bf16.mxu0 %v56
  %1818 = vmatmul.mubr.bf16.gmra.mrb[0].mxu0 %v55
  %v1819 = vpop.f32.mrb[0].mxu0
  %v1820 = vadd.f32 %v332, %v1819
  %v1821 = vpop.f32.mrb[0].mxu0
  %v1822 = vadd.f32 %v336, %v1821
  %v1823 = vpop.f32.mrb[0].mxu0
  %v1824 = vpop.f32.mrb[0].mxu0
  %1825 = vdwg.mxu0
  %1826 = vmatprep.subr.bf16.mxu0 %v1176
  %1827 = vmatpush1.bf16.msra.mxu0 %v1175
  %1828 = vmatprep.subr.bf16.mxu0 %v1180
  %1829 = vmatpush1.bf16.msra.mxu0 %v1179
  %1830 = vmatprep.subr.bf16.mxu0 %v1184
  %1831 = vmatpush1.bf16.msra.mxu0 %v1183
  %1832 = vmatprep.subr.bf16.mxu0 %v1188
  %1833 = vmatpush1.bf16.msra.mxu0 %v1187
  %1834 = vmatprep.subr.bf16.mxu0 %v1192
  %1835 = vmatpush1.bf16.msra.mxu0 %v1191
  %1836 = vmatprep.subr.bf16.mxu0 %v1196
  %1837 = vmatpush1.bf16.msra.mxu0 %v1195
  %1838 = vmatprep.subr.bf16.mxu0 %v1200
  %1839 = vmatpush1.bf16.msra.mxu0 %v1199
  %1840 = vmatprep.subr.bf16.mxu0 %v1204
  %1841 = vmatpush1.bf16.msra.mxu0 %v1203
  %1842 = vmatprep.subr.bf16.mxu0 %v1208
  %1843 = vmatpush1.bf16.msra.mxu0 %v1207
  %1844 = vmatprep.subr.bf16.mxu0 %v1212
  %1845 = vmatpush1.bf16.msra.mxu0 %v1211
  %1846 = vmatprep.subr.bf16.mxu0 %v1216
  %1847 = vmatpush1.bf16.msra.mxu0 %v1215
  %1848 = vmatprep.subr.bf16.mxu0 %v1220
  %1849 = vmatpush1.bf16.msra.mxu0 %v1219
  %1850 = vmatprep.subr.bf16.mxu0 %v1224
  %1851 = vmatpush1.bf16.msra.mxu0 %v1223
  %1852 = vmatprep.subr.bf16.mxu0 %v1228
  %1853 = vmatpush1.bf16.msra.mxu0 %v1227
  %1854 = vmatprep.subr.bf16.mxu0 %v1232
  %1855 = vmatpush1.bf16.msra.mxu0 %v1231
  %1856 = vmatprep.subr.bf16.mxu0 %v1236
  %1857 = vmatpush1.bf16.msra.mxu0 %v1235
  %1858 = vmatprep.mubr.bf16.mxu0 %v58
  %1859 = vmatmul.mubr.bf16.gmra.mrb[0].mxu0 %v57
  %v1860 = vpop.f32.mrb[0].mxu0
  %v1861 = vadd.f32 %v1820, %v1860
  %v1862 = vpop.f32.mrb[0].mxu0
  %v1863 = vadd.f32 %v1822, %v1862
  %v1864 = vpop.f32.mrb[0].mxu0
  %v1865 = vpop.f32.mrb[0].mxu0
  %1866 = vdwg.mxu0
  %1867 = vmatprep.subr.bf16.mxu0 %v1240
  %1868 = vmatpush1.bf16.msra.mxu0 %v1239
  %1869 = vmatprep.subr.bf16.mxu0 %v1244
  %1870 = vmatpush1.bf16.msra.mxu0 %v1243
  %1871 = vmatprep.subr.bf16.mxu0 %v1248
  %1872 = vmatpush1.bf16.msra.mxu0 %v1247
  %1873 = vmatprep.subr.bf16.mxu0 %v1252
  %1874 = vmatpush1.bf16.msra.mxu0 %v1251
  %1875 = vmatprep.subr.bf16.mxu0 %v1256
  %1876 = vmatpush1.bf16.msra.mxu0 %v1255
  %1877 = vmatprep.subr.bf16.mxu0 %v1260
  %1878 = vmatpush1.bf16.msra.mxu0 %v1259
  %1879 = vmatprep.subr.bf16.mxu0 %v1264
  %1880 = vmatpush1.bf16.msra.mxu0 %v1263
  %1881 = vmatprep.subr.bf16.mxu0 %v1268
  %1882 = vmatpush1.bf16.msra.mxu0 %v1267
  %1883 = vmatprep.subr.bf16.mxu0 %v1272
  %1884 = vmatpush1.bf16.msra.mxu0 %v1271
  %1885 = vmatprep.subr.bf16.mxu0 %v1276
  %1886 = vmatpush1.bf16.msra.mxu0 %v1275
  %1887 = vmatprep.subr.bf16.mxu0 %v1280
  %1888 = vmatpush1.bf16.msra.mxu0 %v1279
  %1889 = vmatprep.subr.bf16.mxu0 %v1284
  %1890 = vmatpush1.bf16.msra.mxu0 %v1283
  %1891 = vmatprep.subr.bf16.mxu0 %v1288
  %1892 = vmatpush1.bf16.msra.mxu0 %v1287
  %1893 = vmatprep.subr.bf16.mxu0 %v1292
  %1894 = vmatpush1.bf16.msra.mxu0 %v1291
  %1895 = vmatprep.subr.bf16.mxu0 %v1296
  %1896 = vmatpush1.bf16.msra.mxu0 %v1295
  %1897 = vmatprep.subr.bf16.mxu0 %v1300
  %1898 = vmatpush1.bf16.msra.mxu0 %v1299
  %1899 = vmatprep.mubr.bf16.mxu0 %v60
  %1900 = vmatmul.mubr.bf16.gmra.mrb[0].mxu0 %v59
  %v1901 = vpop.f32.mrb[0].mxu0
  %v1902 = vadd.f32 %v1861, %v1901
  %v1903 = vpop.f32.mrb[0].mxu0
  %v1904 = vadd.f32 %v1863, %v1903
  %v1905 = vpop.f32.mrb[0].mxu0
  %v1906 = vpop.f32.mrb[0].mxu0
  %1907 = vdwg.mxu0
  %1908 = vmatprep.subr.bf16.mxu0 %v1304
  %1909 = vmatpush1.bf16.msra.mxu0 %v1303
  %1910 = vmatprep.subr.bf16.mxu0 %v1308
  %1911 = vmatpush1.bf16.msra.mxu0 %v1307
  %1912 = vmatprep.subr.bf16.mxu0 %v1312
  %1913 = vmatpush1.bf16.msra.mxu0 %v1311
  %1914 = vmatprep.subr.bf16.mxu0 %v1316
  %1915 = vmatpush1.bf16.msra.mxu0 %v1315
  %1916 = vmatprep.subr.bf16.mxu0 %v1320
  %1917 = vmatpush1.bf16.msra.mxu0 %v1319
  %1918 = vmatprep.subr.bf16.mxu0 %v1324
  %1919 = vmatpush1.bf16.msra.mxu0 %v1323
  %1920 = vmatprep.subr.bf16.mxu0 %v1328
  %1921 = vmatpush1.bf16.msra.mxu0 %v1327
  %1922 = vmatprep.subr.bf16.mxu0 %v1332
  %1923 = vmatpush1.bf16.msra.mxu0 %v1331
  %1924 = vmatprep.subr.bf16.mxu0 %v1336
  %1925 = vmatpush1.bf16.msra.mxu0 %v1335
  %1926 = vmatprep.subr.bf16.mxu0 %v1340
  %1927 = vmatpush1.bf16.msra.mxu0 %v1339
  %1928 = vmatprep.subr.bf16.mxu0 %v1344
  %1929 = vmatpush1.bf16.msra.mxu0 %v1343
  %1930 = vmatprep.subr.bf16.mxu0 %v1348
  %1931 = vmatpush1.bf16.msra.mxu0 %v1347
  %1932 = vmatprep.subr.bf16.mxu0 %v1352
  %1933 = vmatpush1.bf16.msra.mxu0 %v1351
  %1934 = vmatprep.subr.bf16.mxu0 %v1356
  %1935 = vmatpush1.bf16.msra.mxu0 %v1355
  %1936 = vmatprep.subr.bf16.mxu0 %v1360
  %1937 = vmatpush1.bf16.msra.mxu0 %v1359
  %1938 = vmatprep.subr.bf16.mxu0 %v1364
  %1939 = vmatpush1.bf16.msra.mxu0 %v1363
  %1940 = vmatprep.mubr.bf16.mxu0 %v62
  %1941 = vmatmul.mubr.bf16.gmra.mrb[0].mxu0 %v61
  %v1942 = vpop.f32.mrb[0].mxu0
  %v1943 = vadd.f32 %v1902, %v1942
  %v1944 = vpop.f32.mrb[0].mxu0
  %v1945 = vadd.f32 %v1904, %v1944
  %v1946 = vpop.f32.mrb[0].mxu0
  %v1947 = vpop.f32.mrb[0].mxu0
  %1948 = vdwg.mxu0
  %v1949 = vld [vmem:[%s3] sm:$0xf]
  %v1950 = vld [vmem:[%s4] sm:$0xf]
  %vm1951 = vcmask 1043456
  %v1952 = vsel %vm1951, %v1779, 0.0
  %v1953 = vrot.slane %v1952, 4
  %v1954 = vadd.f32 %v1952, %v1953
  %v1955 = vrot.slane %v1954, 2
  %v1956 = vadd.f32 %v1954, %v1955
  %v1957 = vrot.slane %v1956, 1
  %v1958 = vadd.f32 %v1956, %v1957
  %v1959 = vsel %vm1951, %v1781, 0.0
  %v1960 = vrot.slane %v1959, 4
  %v1961 = vadd.f32 %v1959, %v1960
  %v1962 = vrot.slane %v1961, 2
  %v1963 = vadd.f32 %v1961, %v1962
  %v1964 = vrot.slane %v1963, 1
  %v1965 = vadd.f32 %v1963, %v1964
  %v1966 = vsel %vm1951, %v1943, 0.0
  %v1967 = vrot.slane %v1966, 4
  %v1968 = vadd.f32 %v1966, %v1967
  %v1969 = vrot.slane %v1968, 2
  %v1970 = vadd.f32 %v1968, %v1969
  %v1971 = vrot.slane %v1970, 1
  %v1972 = vadd.f32 %v1970, %v1971
  %v1973 = vsel %vm1951, %v1945, 0.0
  %v1974 = vrot.slane %v1973, 4
  %v1975 = vadd.f32 %v1973, %v1974
  %v1976 = vrot.slane %v1975, 2
  %v1977 = vadd.f32 %v1975, %v1976
  %v1978 = vrot.slane %v1977, 1
  %v1979 = vadd.f32 %v1977, %v1978
  %v1980 = vmul.f32 %v1958, 0.25
  %v1981 = vmul.f32 %v1965, 0.25
  %v1982 = vmul.f32 %v1972, 0.25
  %v1983 = vmul.f32 %v1979, 0.25
  %v1984 = vmul.f32 %v1779, %v1779
  %v1985 = vmul.f32 %v1781, %v1781
  %v1986 = vmul.f32 %v1943, %v1943
  %v1987 = vmul.f32 %v1945, %v1945
  %v1988 = vsel %vm1951, %v1984, 0.0
  %v1989 = vrot.slane %v1988, 4
  %v1990 = vadd.f32 %v1988, %v1989
  %v1991 = vrot.slane %v1990, 2
  %v1992 = vadd.f32 %v1990, %v1991
  %v1993 = vrot.slane %v1992, 1
  %v1994 = vadd.f32 %v1992, %v1993
  %v1995 = vsel %vm1951, %v1985, 0.0
  %v1996 = vrot.slane %v1995, 4
  %v1997 = vadd.f32 %v1995, %v1996
  %v1998 = vrot.slane %v1997, 2
  %v1999 = vadd.f32 %v1997, %v1998
  %v2000 = vrot.slane %v1999, 1
  %v2001 = vadd.f32 %v1999, %v2000
  %v2002 = vsel %vm1951, %v1986, 0.0
  %v2003 = vrot.slane %v2002, 4
  %v2004 = vadd.f32 %v2002, %v2003
  %v2005 = vrot.slane %v2004, 2
  %v2006 = vadd.f32 %v2004, %v2005
  %v2007 = vrot.slane %v2006, 1
  %v2008 = vadd.f32 %v2006, %v2007
  %v2009 = vsel %vm1951, %v1987, 0.0
  %v2010 = vrot.slane %v2009, 4
  %v2011 = vadd.f32 %v2009, %v2010
  %v2012 = vrot.slane %v2011, 2
  %v2013 = vadd.f32 %v2011, %v2012
  %v2014 = vrot.slane %v2013, 1
  %v2015 = vadd.f32 %v2013, %v2014
  %v2016 = vmul.f32 %v1994, 0.25
  %v2017 = vmul.f32 %v2001, 0.25
  %v2018 = vmul.f32 %v2008, 0.25
  %v2019 = vmul.f32 %v2015, 0.25
  %v2020 = vmul.f32 %v1980, %v1980
  %v2021 = vmul.f32 %v1981, %v1981
  %v2022 = vmul.f32 %v1982, %v1982
  %v2023 = vmul.f32 %v1983, %v1983
  %v2024 = vsub.f32 %v2016, %v2020
  %v2025 = vsub.f32 %v2017, %v2021
  %v2026 = vsub.f32 %v2018, %v2022
  %v2027 = vsub.f32 %v2019, %v2023
  %v2028 = vmax.f32 %v2024, 0.0
  %v2029 = vmax.f32 %v2025, 0.0
  %v2030 = vmax.f32 %v2026, 0.0
  %v2031 = vmax.f32 %v2027, 0.0
  %v2032 = vadd.f32 %v2028, 1e-05
  %v2033 = vadd.f32 %v2029, 1e-05
  %v2034 = vadd.f32 %v2030, 1e-05
  %v2035 = vadd.f32 %v2031, 1e-05
  %v2036 = vrsqrt.pop %v2032
  %v2037 = vrsqrt.pop %v2033
  %v2038 = vrsqrt.pop %v2034
  %v2039 = vrsqrt.pop %v2035
  %v2044 = vcombine.low %v2036, %v2037
  %v2045 = vcombine.low %v2038, %v2039
  %v2047 = vunpack.c.l.s4 1966171168
  %v2048 = vunpack.c.0.s8 %v2047
  %v2049 = vlaneseq
  %v2050 = vshrl.u32 %v2049, 7
  %v2051 = vsub.s32 %v2048, %v2050
  %v2052 = vrot.slane %v2044, %v2051
  %v2054 = vunpack.c.l.s4 1966171168
  %v2055 = vunpack.c.0.s8 %v2054
  %v2056 = vlaneseq
  %v2057 = vshrl.u32 %v2056, 7
  %v2058 = vsub.s32 %v2055, %v2057
  %v2059 = vrot.slane %v2045, %v2058
  %v2060 = vcombine.low %v2052, %v2059
  %v2062 = vunpack.c.l.s4 1966171168
  %v2063 = vunpack.c.0.s8 %v2062
  %v2064 = vlaneseq
  %v2065 = vshrl.u32 %v2064, 7
  %v2066 = vsub.s32 %v2063, %v2065
  %v2067 = vrot.slane %v2060, %v2066
  %v2069 = vmul.f32 %v1949, %v2067
  %v2071 = vlaneseq
  %v2072 = vshrl.u32 %v2071, 7
  %v2073 = vsub.s32 0, %v2072
  %v2074 = vrot.slane %v2069, %v2073
  %v2075 = vlaneseq
  %v2076 = vshrl.u32 %v2075, 7
  %v2077 = vsub.s32 1, %v2076
  %v2078 = vrot.slane %v2069, %v2077
  %v2079 = vlaneseq
  %v2080 = vshrl.u32 %v2079, 7
  %v2081 = vsub.s32 2, %v2080
  %v2082 = vrot.slane %v2069, %v2081
  %v2083 = vlaneseq
  %v2084 = vshrl.u32 %v2083, 7
  %v2085 = vsub.s32 3, %v2084
  %v2086 = vrot.slane %v2069, %v2085
  %v2091 = vmul.f32 %v1980, %v2074
  %v2092 = vmul.f32 %v1981, %v2078
  %v2093 = vmul.f32 %v1982, %v2082
  %v2094 = vmul.f32 %v1983, %v2086
  %v2099 = vcombine.low %v2091, %v2092
  %v2100 = vcombine.low %v2093, %v2094
  %v2102 = vunpack.c.l.s4 1966171168
  %v2103 = vunpack.c.0.s8 %v2102
  %v2104 = vlaneseq
  %v2105 = vshrl.u32 %v2104, 7
  %v2106 = vsub.s32 %v2103, %v2105
  %v2107 = vrot.slane %v2099, %v2106
  %v2109 = vunpack.c.l.s4 1966171168
  %v2110 = vunpack.c.0.s8 %v2109
  %v2111 = vlaneseq
  %v2112 = vshrl.u32 %v2111, 7
  %v2113 = vsub.s32 %v2110, %v2112
  %v2114 = vrot.slane %v2100, %v2113
  %v2115 = vcombine.low %v2107, %v2114
  %v2117 = vunpack.c.l.s4 1966171168
  %v2118 = vunpack.c.0.s8 %v2117
  %v2119 = vlaneseq
  %v2120 = vshrl.u32 %v2119, 7
  %v2121 = vsub.s32 %v2118, %v2120
  %v2122 = vrot.slane %v2115, %v2121
  %v2124 = vsub.f32 %v1950, %v2122
  %v2125 = vmul.f32 %v1779, %v2074
  %v2126 = vmul.f32 %v1781, %v2078
  %v2127 = vmul.f32 %v1943, %v2082
  %v2128 = vmul.f32 %v1945, %v2086
  %v2130 = vlaneseq
  %v2131 = vshrl.u32 %v2130, 7
  %v2132 = vsub.s32 0, %v2131
  %v2133 = vrot.slane %v2124, %v2132
  %v2134 = vlaneseq
  %v2135 = vshrl.u32 %v2134, 7
  %v2136 = vsub.s32 1, %v2135
  %v2137 = vrot.slane %v2124, %v2136
  %v2138 = vlaneseq
  %v2139 = vshrl.u32 %v2138, 7
  %v2140 = vsub.s32 2, %v2139
  %v2141 = vrot.slane %v2124, %v2140
  %v2142 = vlaneseq
  %v2143 = vshrl.u32 %v2142, 7
  %v2144 = vsub.s32 3, %v2143
  %v2145 = vrot.slane %v2124, %v2144
  %v2150 = vadd.f32 %v2125, %v2133
  %v2151 = vadd.f32 %v2126, %v2137
  %v2152 = vadd.f32 %v2127, %v2141
  %v2153 = vadd.f32 %v2128, %v2145
  %v2154 = vmax.f32 %v2150, 0.0
  %v2155 = vmax.f32 %v2151, 0.0
  %v2156 = vmax.f32 %v2152, 0.0
  %v2157 = vmax.f32 %v2153, 0.0
  %v2158 = vpack.c.bf16 %v2154, %v2154
  %v2159 = vpack.c.bf16 %v2155, %v2155
  %v2160 = vpack.c.bf16 %v2156, %v2156
  %v2161 = vpack.c.bf16 %v2157, %v2157
  %v2162 = vld [vmem:[%s5] sm:$0xff]
  %v2163 = vld [vmem:[%s5 + $0x8] sm:$0xff]
  %v2164 = vld [vmem:[%s5 + $0x10] sm:$0xff]
  %v2165 = vld [vmem:[%s5 + $0x18] sm:$0xff]
  %v2166 = vld [vmem:[%s5 + $0x20] sm:$0xff]
  %v2167 = vld [vmem:[%s5 + $0x28] sm:$0xff]
  %v2168 = vld [vmem:[%s5 + $0x30] sm:$0xff]
  %v2169 = vld [vmem:[%s5 + $0x38] sm:$0xff]
  %v2170 = vld [vmem:[%s5 + $0x40] sm:$0xff]
  %v2171 = vld [vmem:[%s5 + $0x48] sm:$0xff]
  %v2172 = vld [vmem:[%s5 + $0x50] sm:$0xff]
  %v2173 = vld [vmem:[%s5 + $0x58] sm:$0xff]
  %v2174 = vld [vmem:[%s5 + $0x60] sm:$0xff]
  %v2175 = vld [vmem:[%s5 + $0x68] sm:$0xff]
  %v2176 = vld [vmem:[%s5 + $0x70] sm:$0xff]
  %v2177 = vld [vmem:[%s5 + $0x78] sm:$0xff]
  %v2178 = vld [vmem:[%s5 + $0x80] sm:$0xff]
  %v2179 = vld [vmem:[%s5 + $0x88] sm:$0xff]
  %v2180 = vld [vmem:[%s5 + $0x90] sm:$0xff]
  %v2181 = vld [vmem:[%s5 + $0x98] sm:$0xff]
  %v2182 = vld [vmem:[%s5 + $0xa0] sm:$0xff]
  %v2183 = vld [vmem:[%s5 + $0xa8] sm:$0xff]
  %v2184 = vld [vmem:[%s5 + $0xb0] sm:$0xff]
  %v2185 = vld [vmem:[%s5 + $0xb8] sm:$0xff]
  %v2186 = vld [vmem:[%s5 + $0xc0] sm:$0xff]
  %v2187 = vld [vmem:[%s5 + $0xc8] sm:$0xff]
  %v2188 = vld [vmem:[%s5 + $0xd0] sm:$0xff]
  %v2189 = vld [vmem:[%s5 + $0xd8] sm:$0xff]
  %v2190 = vld [vmem:[%s5 + $0xe0] sm:$0xff]
  %v2191 = vld [vmem:[%s5 + $0xe8] sm:$0xff]
  %v2192 = vld [vmem:[%s5 + $0xf0] sm:$0xff]
  %v2193 = vld [vmem:[%s5 + $0xf8] sm:$0xff]
  %v2194 = vld [vmem:[%s5 + $0x100] sm:$0xff]
  %v2195 = vld [vmem:[%s5 + $0x108] sm:$0xff]
  %v2196 = vld [vmem:[%s5 + $0x110] sm:$0xff]
  %v2197 = vld [vmem:[%s5 + $0x118] sm:$0xff]
  %v2198 = vld [vmem:[%s5 + $0x120] sm:$0xff]
  %v2199 = vld [vmem:[%s5 + $0x128] sm:$0xff]
  %v2200 = vld [vmem:[%s5 + $0x130] sm:$0xff]
  %v2201 = vld [vmem:[%s5 + $0x138] sm:$0xff]
  %v2202 = vld [vmem:[%s5 + $0x140] sm:$0xff]
  %v2203 = vld [vmem:[%s5 + $0x148] sm:$0xff]
  %v2204 = vld [vmem:[%s5 + $0x150] sm:$0xff]
  %v2205 = vld [vmem:[%s5 + $0x158] sm:$0xff]
  %v2206 = vld [vmem:[%s5 + $0x160] sm:$0xff]
  %v2207 = vld [vmem:[%s5 + $0x168] sm:$0xff]
  %v2208 = vld [vmem:[%s5 + $0x170] sm:$0xff]
  %v2209 = vld [vmem:[%s5 + $0x178] sm:$0xff]
  %v2210 = vld [vmem:[%s5 + $0x180] sm:$0xff]
  %v2211 = vld [vmem:[%s5 + $0x188] sm:$0xff]
  %v2212 = vld [vmem:[%s5 + $0x190] sm:$0xff]
  %v2213 = vld [vmem:[%s5 + $0x198] sm:$0xff]
  %v2214 = vld [vmem:[%s5 + $0x1a0] sm:$0xff]
  %v2215 = vld [vmem:[%s5 + $0x1a8] sm:$0xff]
  %v2216 = vld [vmem:[%s5 + $0x1b0] sm:$0xff]
  %v2217 = vld [vmem:[%s5 + $0x1b8] sm:$0xff]
  %v2218 = vld [vmem:[%s5 + $0x1c0] sm:$0xff]
  %v2219 = vld [vmem:[%s5 + $0x1c8] sm:$0xff]
  %v2220 = vld [vmem:[%s5 + $0x1d0] sm:$0xff]
  %v2221 = vld [vmem:[%s5 + $0x1d8] sm:$0xff]
  %v2222 = vld [vmem:[%s5 + $0x1e0] sm:$0xff]
  %v2223 = vld [vmem:[%s5 + $0x1e8] sm:$0xff]
  %v2224 = vld [vmem:[%s5 + $0x1f0] sm:$0xff]
  %v2225 = vld [vmem:[%s5 + $0x1f8] sm:$0xff]
  %v2226 = vld [vmem:[%s6] sm:$0x3]
  %v2228 = vlaneseq
  %v2229 = vshrl.u32 %v2228, 7
  %v2230 = vsub.s32 0, %v2229
  %v2231 = vrot.slane %v2226, %v2230
  %v2232 = vlaneseq
  %v2233 = vshrl.u32 %v2232, 7
  %v2234 = vsub.s32 1, %v2233
  %v2235 = vrot.slane %v2226, %v2234
  %v2302 = vunpack.c.l.b16 %v2162
  %v2303 = vunpack.c.h.b16 %v2162
  %v2304 = vunpack.c.l.b16 %v2163
  %v2305 = vunpack.c.h.b16 %v2163
  %v2306 = vunpack.c.l.b16 %v2164
  %v2307 = vunpack.c.h.b16 %v2164
  %v2308 = vunpack.c.l.b16 %v2165
  %v2309 = vunpack.c.h.b16 %v2165
  %v2310 = vunpack.c.l.b16 %v2166
  %v2311 = vunpack.c.h.b16 %v2166
  %v2312 = vunpack.c.l.b16 %v2167
  %v2313 = vunpack.c.h.b16 %v2167
  %v2314 = vunpack.c.l.b16 %v2168
  %v2315 = vunpack.c.h.b16 %v2168
  %v2316 = vunpack.c.l.b16 %v2169
  %v2317 = vunpack.c.h.b16 %v2169
  %v2318 = vunpack.c.l.b16 %v2170
  %v2319 = vunpack.c.h.b16 %v2170
  %v2320 = vunpack.c.l.b16 %v2171
  %v2321 = vunpack.c.h.b16 %v2171
  %v2322 = vunpack.c.l.b16 %v2172
  %v2323 = vunpack.c.h.b16 %v2172
  %v2324 = vunpack.c.l.b16 %v2173
  %v2325 = vunpack.c.h.b16 %v2173
  %v2326 = vunpack.c.l.b16 %v2174
  %v2327 = vunpack.c.h.b16 %v2174
  %v2328 = vunpack.c.l.b16 %v2175
  %v2329 = vunpack.c.h.b16 %v2175
  %v2330 = vunpack.c.l.b16 %v2176
  %v2331 = vunpack.c.h.b16 %v2176
  %v2332 = vunpack.c.l.b16 %v2177
  %v2333 = vunpack.c.h.b16 %v2177
  %v2334 = vunpack.c.l.b16 %v2178
  %v2335 = vunpack.c.h.b16 %v2178
  %v2336 = vunpack.c.l.b16 %v2179
  %v2337 = vunpack.c.h.b16 %v2179
  %v2338 = vunpack.c.l.b16 %v2180
  %v2339 = vunpack.c.h.b16 %v2180
  %v2340 = vunpack.c.l.b16 %v2181
  %v2341 = vunpack.c.h.b16 %v2181
  %v2342 = vunpack.c.l.b16 %v2182
  %v2343 = vunpack.c.h.b16 %v2182
  %v2344 = vunpack.c.l.b16 %v2183
  %v2345 = vunpack.c.h.b16 %v2183
  %v2346 = vunpack.c.l.b16 %v2184
  %v2347 = vunpack.c.h.b16 %v2184
  %v2348 = vunpack.c.l.b16 %v2185
  %v2349 = vunpack.c.h.b16 %v2185
  %v2350 = vunpack.c.l.b16 %v2186
  %v2351 = vunpack.c.h.b16 %v2186
  %v2352 = vunpack.c.l.b16 %v2187
  %v2353 = vunpack.c.h.b16 %v2187
  %v2354 = vunpack.c.l.b16 %v2188
  %v2355 = vunpack.c.h.b16 %v2188
  %v2356 = vunpack.c.l.b16 %v2189
  %v2357 = vunpack.c.h.b16 %v2189
  %v2358 = vunpack.c.l.b16 %v2190
  %v2359 = vunpack.c.h.b16 %v2190
  %v2360 = vunpack.c.l.b16 %v2191
  %v2361 = vunpack.c.h.b16 %v2191
  %v2362 = vunpack.c.l.b16 %v2192
  %v2363 = vunpack.c.h.b16 %v2192
  %v2364 = vunpack.c.l.b16 %v2193
  %v2365 = vunpack.c.h.b16 %v2193
  %v2366 = vunpack.c.l.b16 %v2194
  %v2367 = vunpack.c.h.b16 %v2194
  %v2368 = vunpack.c.l.b16 %v2195
  %v2369 = vunpack.c.h.b16 %v2195
  %v2370 = vunpack.c.l.b16 %v2196
  %v2371 = vunpack.c.h.b16 %v2196
  %v2372 = vunpack.c.l.b16 %v2197
  %v2373 = vunpack.c.h.b16 %v2197
  %v2374 = vunpack.c.l.b16 %v2198
  %v2375 = vunpack.c.h.b16 %v2198
  %v2376 = vunpack.c.l.b16 %v2199
  %v2377 = vunpack.c.h.b16 %v2199
  %v2378 = vunpack.c.l.b16 %v2200
  %v2379 = vunpack.c.h.b16 %v2200
  %v2380 = vunpack.c.l.b16 %v2201
  %v2381 = vunpack.c.h.b16 %v2201
  %v2382 = vunpack.c.l.b16 %v2202
  %v2383 = vunpack.c.h.b16 %v2202
  %v2384 = vunpack.c.l.b16 %v2203
  %v2385 = vunpack.c.h.b16 %v2203
  %v2386 = vunpack.c.l.b16 %v2204
  %v2387 = vunpack.c.h.b16 %v2204
  %v2388 = vunpack.c.l.b16 %v2205
  %v2389 = vunpack.c.h.b16 %v2205
  %v2390 = vunpack.c.l.b16 %v2206
  %v2391 = vunpack.c.h.b16 %v2206
  %v2392 = vunpack.c.l.b16 %v2207
  %v2393 = vunpack.c.h.b16 %v2207
  %v2394 = vunpack.c.l.b16 %v2208
  %v2395 = vunpack.c.h.b16 %v2208
  %v2396 = vunpack.c.l.b16 %v2209
  %v2397 = vunpack.c.h.b16 %v2209
  %v2398 = vunpack.c.l.b16 %v2210
  %v2399 = vunpack.c.h.b16 %v2210
  %v2400 = vunpack.c.l.b16 %v2211
  %v2401 = vunpack.c.h.b16 %v2211
  %v2402 = vunpack.c.l.b16 %v2212
  %v2403 = vunpack.c.h.b16 %v2212
  %v2404 = vunpack.c.l.b16 %v2213
  %v2405 = vunpack.c.h.b16 %v2213
  %v2406 = vunpack.c.l.b16 %v2214
  %v2407 = vunpack.c.h.b16 %v2214
  %v2408 = vunpack.c.l.b16 %v2215
  %v2409 = vunpack.c.h.b16 %v2215
  %v2410 = vunpack.c.l.b16 %v2216
  %v2411 = vunpack.c.h.b16 %v2216
  %v2412 = vunpack.c.l.b16 %v2217
  %v2413 = vunpack.c.h.b16 %v2217
  %v2414 = vunpack.c.l.b16 %v2218
  %v2415 = vunpack.c.h.b16 %v2218
  %v2416 = vunpack.c.l.b16 %v2219
  %v2417 = vunpack.c.h.b16 %v2219
  %v2418 = vunpack.c.l.b16 %v2220
  %v2419 = vunpack.c.h.b16 %v2220
  %v2420 = vunpack.c.l.b16 %v2221
  %v2421 = vunpack.c.h.b16 %v2221
  %v2422 = vunpack.c.l.b16 %v2222
  %v2423 = vunpack.c.h.b16 %v2222
  %v2424 = vunpack.c.l.b16 %v2223
  %v2425 = vunpack.c.h.b16 %v2223
  %v2426 = vunpack.c.l.b16 %v2224
  %v2427 = vunpack.c.h.b16 %v2224
  %v2428 = vunpack.c.l.b16 %v2225
  %v2429 = vunpack.c.h.b16 %v2225
  %v2430 = vpack.c.b16 %v2304, %v2302
  %v2431 = vpack.c.b16 %v2305, %v2303
  %v2432 = vpack.c.b16 %v2308, %v2306
  %v2433 = vpack.c.b16 %v2309, %v2307
  %v2434 = vpack.c.b16 %v2312, %v2310
  %v2435 = vpack.c.b16 %v2313, %v2311
  %v2436 = vpack.c.b16 %v2316, %v2314
  %v2437 = vpack.c.b16 %v2317, %v2315
  %v2438 = vpack.c.b16 %v2320, %v2318
  %v2439 = vpack.c.b16 %v2321, %v2319
  %v2440 = vpack.c.b16 %v2324, %v2322
  %v2441 = vpack.c.b16 %v2325, %v2323
  %v2442 = vpack.c.b16 %v2328, %v2326
  %v2443 = vpack.c.b16 %v2329, %v2327
  %v2444 = vpack.c.b16 %v2332, %v2330
  %v2445 = vpack.c.b16 %v2333, %v2331
  %v2446 = vpack.c.b16 %v2336, %v2334
  %v2447 = vpack.c.b16 %v2337, %v2335
  %v2448 = vpack.c.b16 %v2340, %v2338
  %v2449 = vpack.c.b16 %v2341, %v2339
  %v2450 = vpack.c.b16 %v2344, %v2342
  %v2451 = vpack.c.b16 %v2345, %v2343
  %v2452 = vpack.c.b16 %v2348, %v2346
  %v2453 = vpack.c.b16 %v2349, %v2347
  %v2454 = vpack.c.b16 %v2352, %v2350
  %v2455 = vpack.c.b16 %v2353, %v2351
  %v2456 = vpack.c.b16 %v2356, %v2354
  %v2457 = vpack.c.b16 %v2357, %v2355
  %v2458 = vpack.c.b16 %v2360, %v2358
  %v2459 = vpack.c.b16 %v2361, %v2359
  %v2460 = vpack.c.b16 %v2364, %v2362
  %v2461 = vpack.c.b16 %v2365, %v2363
  %v2462 = vpack.c.b16 %v2368, %v2366
  %v2463 = vpack.c.b16 %v2369, %v2367
  %v2464 = vpack.c.b16 %v2372, %v2370
  %v2465 = vpack.c.b16 %v2373, %v2371
  %v2466 = vpack.c.b16 %v2376, %v2374
  %v2467 = vpack.c.b16 %v2377, %v2375
  %v2468 = vpack.c.b16 %v2380, %v2378
  %v2469 = vpack.c.b16 %v2381, %v2379
  %v2470 = vpack.c.b16 %v2384, %v2382
  %v2471 = vpack.c.b16 %v2385, %v2383
  %v2472 = vpack.c.b16 %v2388, %v2386
  %v2473 = vpack.c.b16 %v2389, %v2387
  %v2474 = vpack.c.b16 %v2392, %v2390
  %v2475 = vpack.c.b16 %v2393, %v2391
  %v2476 = vpack.c.b16 %v2396, %v2394
  %v2477 = vpack.c.b16 %v2397, %v2395
  %v2478 = vpack.c.b16 %v2400, %v2398
  %v2479 = vpack.c.b16 %v2401, %v2399
  %v2480 = vpack.c.b16 %v2404, %v2402
  %v2481 = vpack.c.b16 %v2405, %v2403
  %v2482 = vpack.c.b16 %v2408, %v2406
  %v2483 = vpack.c.b16 %v2409, %v2407
  %v2484 = vpack.c.b16 %v2412, %v2410
  %v2485 = vpack.c.b16 %v2413, %v2411
  %v2486 = vpack.c.b16 %v2416, %v2414
  %v2487 = vpack.c.b16 %v2417, %v2415
  %v2488 = vpack.c.b16 %v2420, %v2418
  %v2489 = vpack.c.b16 %v2421, %v2419
  %v2490 = vpack.c.b16 %v2424, %v2422
  %v2491 = vpack.c.b16 %v2425, %v2423
  %v2492 = vpack.c.b16 %v2428, %v2426
  %v2493 = vpack.c.b16 %v2429, %v2427
  %2558 = vmatprep.subr.bf16.mxu0 %v2431
  %2559 = vmatpush1.bf16.msra.mxu0 %v2430
  %2560 = vmatprep.subr.bf16.mxu0 %v2433
  %2561 = vmatpush1.bf16.msra.mxu0 %v2432
  %2562 = vmatprep.subr.bf16.mxu0 %v2435
  %2563 = vmatpush1.bf16.msra.mxu0 %v2434
  %2564 = vmatprep.subr.bf16.mxu0 %v2437
  %2565 = vmatpush1.bf16.msra.mxu0 %v2436
  %2566 = vmatprep.subr.bf16.mxu0 %v2439
  %2567 = vmatpush1.bf16.msra.mxu0 %v2438
  %2568 = vmatprep.subr.bf16.mxu0 %v2441
  %2569 = vmatpush1.bf16.msra.mxu0 %v2440
  %2570 = vmatprep.subr.bf16.mxu0 %v2443
  %2571 = vmatpush1.bf16.msra.mxu0 %v2442
  %2572 = vmatprep.subr.bf16.mxu0 %v2445
  %2573 = vmatpush1.bf16.msra.mxu0 %v2444
  %2574 = vmatprep.subr.bf16.mxu0 %v2447
  %2575 = vmatpush1.bf16.msra.mxu0 %v2446
  %2576 = vmatprep.subr.bf16.mxu0 %v2449
  %2577 = vmatpush1.bf16.msra.mxu0 %v2448
  %2578 = vmatprep.subr.bf16.mxu0 %v2451
  %2579 = vmatpush1.bf16.msra.mxu0 %v2450
  %2580 = vmatprep.subr.bf16.mxu0 %v2453
  %2581 = vmatpush1.bf16.msra.mxu0 %v2452
  %2582 = vmatprep.subr.bf16.mxu0 %v2455
  %2583 = vmatpush1.bf16.msra.mxu0 %v2454
  %2584 = vmatprep.subr.bf16.mxu0 %v2457
  %2585 = vmatpush1.bf16.msra.mxu0 %v2456
  %2586 = vmatprep.subr.bf16.mxu0 %v2459
  %2587 = vmatpush1.bf16.msra.mxu0 %v2458
  %2588 = vmatprep.subr.bf16.mxu0 %v2461
  %2589 = vmatpush1.bf16.msra.mxu0 %v2460
  %2590 = vmatprep.mubr.bf16.mxu0 %v2159
  %2591 = vmatmul.mubr.bf16.gmra.mrb[0].mxu0 %v2158
  %v2592 = vpop.f32.mrb[0].mxu0
  %v2593 = vadd.f32 %v2231, %v2592
  %v2594 = vpop.f32.mrb[0].mxu0
  %v2595 = vadd.f32 %v2235, %v2594
  %v2596 = vpop.f32.mrb[0].mxu0
  %v2597 = vpop.f32.mrb[0].mxu0
  %2598 = vdwg.mxu0
  %2599 = vmatprep.subr.bf16.mxu0 %v2463
  %2600 = vmatpush1.bf16.msra.mxu0 %v2462
  %2601 = vmatprep.subr.bf16.mxu0 %v2465
  %2602 = vmatpush1.bf16.msra.mxu0 %v2464
  %2603 = vmatprep.subr.bf16.mxu0 %v2467
  %2604 = vmatpush1.bf16.msra.mxu0 %v2466
  %2605 = vmatprep.subr.bf16.mxu0 %v2469
  %2606 = vmatpush1.bf16.msra.mxu0 %v2468
  %2607 = vmatprep.subr.bf16.mxu0 %v2471
  %2608 = vmatpush1.bf16.msra.mxu0 %v2470
  %2609 = vmatprep.subr.bf16.mxu0 %v2473
  %2610 = vmatpush1.bf16.msra.mxu0 %v2472
  %2611 = vmatprep.subr.bf16.mxu0 %v2475
  %2612 = vmatpush1.bf16.msra.mxu0 %v2474
  %2613 = vmatprep.subr.bf16.mxu0 %v2477
  %2614 = vmatpush1.bf16.msra.mxu0 %v2476
  %2615 = vmatprep.subr.bf16.mxu0 %v2479
  %2616 = vmatpush1.bf16.msra.mxu0 %v2478
  %2617 = vmatprep.subr.bf16.mxu0 %v2481
  %2618 = vmatpush1.bf16.msra.mxu0 %v2480
  %2619 = vmatprep.subr.bf16.mxu0 %v2483
  %2620 = vmatpush1.bf16.msra.mxu0 %v2482
  %2621 = vmatprep.subr.bf16.mxu0 %v2485
  %2622 = vmatpush1.bf16.msra.mxu0 %v2484
  %2623 = vmatprep.subr.bf16.mxu0 %v2487
  %2624 = vmatpush1.bf16.msra.mxu0 %v2486
  %2625 = vmatprep.subr.bf16.mxu0 %v2489
  %2626 = vmatpush1.bf16.msra.mxu0 %v2488
  %2627 = vmatprep.subr.bf16.mxu0 %v2491
  %2628 = vmatpush1.bf16.msra.mxu0 %v2490
  %2629 = vmatprep.subr.bf16.mxu0 %v2493
  %2630 = vmatpush1.bf16.msra.mxu0 %v2492
  %2631 = vmatprep.mubr.bf16.mxu0 %v2161
  %2632 = vmatmul.mubr.bf16.gmra.mrb[0].mxu0 %v2160
  %v2633 = vpop.f32.mrb[0].mxu0
  %v2634 = vadd.f32 %v2593, %v2633
  %v2635 = vpop.f32.mrb[0].mxu0
  %v2636 = vadd.f32 %v2595, %v2635
  %v2637 = vpop.f32.mrb[0].mxu0
  %v2638 = vpop.f32.mrb[0].mxu0
  %2639 = vdwg.mxu0
  %v2640 = vld [vmem:[%s7] sm:$0x3]
  %v2641 = vld [vmem:[%s8] sm:$0x3]
  %v2642 = vsel %vm1951, %v2634, 0.0
  %v2643 = vrot.slane %v2642, 4
  %v2644 = vadd.f32 %v2642, %v2643
  %v2645 = vrot.slane %v2644, 2
  %v2646 = vadd.f32 %v2644, %v2645
  %v2647 = vrot.slane %v2646, 1
  %v2648 = vadd.f32 %v2646, %v2647
  %v2649 = vsel %vm1951, %v2636, 0.0
  %v2650 = vrot.slane %v2649, 4
  %v2651 = vadd.f32 %v2649, %v2650
  %v2652 = vrot.slane %v2651, 2
  %v2653 = vadd.f32 %v2651, %v2652
  %v2654 = vrot.slane %v2653, 1
  %v2655 = vadd.f32 %v2653, %v2654
  %v2656 = vmul.f32 %v2648, 0.25
  %v2657 = vmul.f32 %v2655, 0.25
  %v2658 = vmul.f32 %v2634, %v2634
  %v2659 = vmul.f32 %v2636, %v2636
  %v2660 = vsel %vm1951, %v2658, 0.0
  %v2661 = vrot.slane %v2660, 4
  %v2662 = vadd.f32 %v2660, %v2661
  %v2663 = vrot.slane %v2662, 2
  %v2664 = vadd.f32 %v2662, %v2663
  %v2665 = vrot.slane %v2664, 1
  %v2666 = vadd.f32 %v2664, %v2665
  %v2667 = vsel %vm1951, %v2659, 0.0
  %v2668 = vrot.slane %v2667, 4
  %v2669 = vadd.f32 %v2667, %v2668
  %v2670 = vrot.slane %v2669, 2
  %v2671 = vadd.f32 %v2669, %v2670
  %v2672 = vrot.slane %v2671, 1
  %v2673 = vadd.f32 %v2671, %v2672
  %v2674 = vmul.f32 %v2666, 0.25
  %v2675 = vmul.f32 %v2673, 0.25
  %v2676 = vmul.f32 %v2656, %v2656
  %v2677 = vmul.f32 %v2657, %v2657
  %v2678 = vsub.f32 %v2674, %v2676
  %v2679 = vsub.f32 %v2675, %v2677
  %v2680 = vmax.f32 %v2678, 0.0
  %v2681 = vmax.f32 %v2679, 0.0
  %v2682 = vadd.f32 %v2680, 1e-05
  %v2683 = vadd.f32 %v2681, 1e-05
  %v2684 = vrsqrt.pop %v2682
  %v2685 = vrsqrt.pop %v2683
  %v2688 = vcombine.low %v2684, %v2685
  %v2690 = vunpack.c.l.s4 1966171168
  %v2691 = vunpack.c.0.s8 %v2690
  %v2692 = vlaneseq
  %v2693 = vshrl.u32 %v2692, 7
  %v2694 = vsub.s32 %v2691, %v2693
  %v2695 = vrot.slane %v2688, %v2694
  %v2697 = vunpack.c.l.s4 1966171168
  %v2698 = vunpack.c.0.s8 %v2697
  %v2699 = vlaneseq
  %v2700 = vshrl.u32 %v2699, 7
  %v2701 = vsub.s32 %v2698, %v2700
  %v2702 = vrot.slane %v2695, %v2701
  %v2704 = vmul.f32 %v2640, %v2702
  %v2706 = vlaneseq
  %v2707 = vshrl.u32 %v2706, 7
  %v2708 = vsub.s32 0, %v2707
  %v2709 = vrot.slane %v2704, %v2708
  %v2710 = vlaneseq
  %v2711 = vshrl.u32 %v2710, 7
  %v2712 = vsub.s32 1, %v2711
  %v2713 = vrot.slane %v2704, %v2712
  %v2716 = vmul.f32 %v2656, %v2709
  %v2717 = vmul.f32 %v2657, %v2713
  %v2720 = vcombine.low %v2716, %v2717
  %v2722 = vunpack.c.l.s4 1966171168
  %v2723 = vunpack.c.0.s8 %v2722
  %v2724 = vlaneseq
  %v2725 = vshrl.u32 %v2724, 7
  %v2726 = vsub.s32 %v2723, %v2725
  %v2727 = vrot.slane %v2720, %v2726
  %v2729 = vunpack.c.l.s4 1966171168
  %v2730 = vunpack.c.0.s8 %v2729
  %v2731 = vlaneseq
  %v2732 = vshrl.u32 %v2731, 7
  %v2733 = vsub.s32 %v2730, %v2732
  %v2734 = vrot.slane %v2727, %v2733
  %v2736 = vsub.f32 %v2641, %v2734
  %v2737 = vmul.f32 %v2634, %v2709
  %v2738 = vmul.f32 %v2636, %v2713
  %v2740 = vlaneseq
  %v2741 = vshrl.u32 %v2740, 7
  %v2742 = vsub.s32 0, %v2741
  %v2743 = vrot.slane %v2736, %v2742
  %v2744 = vlaneseq
  %v2745 = vshrl.u32 %v2744, 7
  %v2746 = vsub.s32 1, %v2745
  %v2747 = vrot.slane %v2736, %v2746
  %v2750 = vadd.f32 %v2737, %v2743
  %v2751 = vadd.f32 %v2738, %v2747
  %v2752 = vmax.f32 %v2750, 0.0
  %v2753 = vmax.f32 %v2751, 0.0
  %v2754 = vpack.c.bf16 %v2752, %v2752
  %v2755 = vpack.c.bf16 %v2753, %v2753
  %v2756 = vld [vmem:[%s9] sm:$0xf]
  %v2757 = vld [vmem:[%s9 + $0x4] sm:$0xf]
  %v2758 = vld [vmem:[%s9 + $0x8] sm:$0xf]
  %v2759 = vld [vmem:[%s9 + $0xc] sm:$0xf]
  %v2760 = vld [vmem:[%s9 + $0x10] sm:$0xf]
  %v2761 = vld [vmem:[%s9 + $0x14] sm:$0xf]
  %v2762 = vld [vmem:[%s9 + $0x18] sm:$0xf]
  %v2763 = vld [vmem:[%s9 + $0x1c] sm:$0xf]
  %v2764 = vld [vmem:[%s9 + $0x20] sm:$0xf]
  %v2765 = vld [vmem:[%s9 + $0x24] sm:$0xf]
  %v2766 = vld [vmem:[%s9 + $0x28] sm:$0xf]
  %v2767 = vld [vmem:[%s9 + $0x2c] sm:$0xf]
  %v2768 = vld [vmem:[%s9 + $0x30] sm:$0xf]
  %v2769 = vld [vmem:[%s9 + $0x34] sm:$0xf]
  %v2770 = vld [vmem:[%s9 + $0x38] sm:$0xf]
  %v2771 = vld [vmem:[%s9 + $0x3c] sm:$0xf]
  %v2772 = vld [vmem:[%s9 + $0x40] sm:$0xf]
  %v2773 = vld [vmem:[%s9 + $0x44] sm:$0xf]
  %v2774 = vld [vmem:[%s9 + $0x48] sm:$0xf]
  %v2775 = vld [vmem:[%s9 + $0x4c] sm:$0xf]
  %v2776 = vld [vmem:[%s9 + $0x50] sm:$0xf]
  %v2777 = vld [vmem:[%s9 + $0x54] sm:$0xf]
  %v2778 = vld [vmem:[%s9 + $0x58] sm:$0xf]
  %v2779 = vld [vmem:[%s9 + $0x5c] sm:$0xf]
  %v2780 = vld [vmem:[%s9 + $0x60] sm:$0xf]
  %v2781 = vld [vmem:[%s9 + $0x64] sm:$0xf]
  %v2782 = vld [vmem:[%s9 + $0x68] sm:$0xf]
  %v2783 = vld [vmem:[%s9 + $0x6c] sm:$0xf]
  %v2784 = vld [vmem:[%s9 + $0x70] sm:$0xf]
  %v2785 = vld [vmem:[%s9 + $0x74] sm:$0xf]
  %v2786 = vld [vmem:[%s9 + $0x78] sm:$0xf]
  %v2787 = vld [vmem:[%s9 + $0x7c] sm:$0xf]
  %v2788 = vld [vmem:[%s10] sm:$0x1]
  %v2790 = vlaneseq
  %v2791 = vshrl.u32 %v2790, 7
  %v2792 = vsub.s32 0, %v2791
  %v2793 = vrot.slane %v2788, %v2792
  %v2827 = vunpack.c.l.b16 %v2756
  %v2828 = vunpack.c.l.b16 %v2757
  %v2829 = vunpack.c.l.b16 %v2758
  %v2830 = vunpack.c.l.b16 %v2759
  %v2831 = vunpack.c.l.b16 %v2760
  %v2832 = vunpack.c.l.b16 %v2761
  %v2833 = vunpack.c.l.b16 %v2762
  %v2834 = vunpack.c.l.b16 %v2763
  %v2835 = vunpack.c.l.b16 %v2764
  %v2836 = vunpack.c.l.b16 %v2765
  %v2837 = vunpack.c.l.b16 %v2766
  %v2838 = vunpack.c.l.b16 %v2767
  %v2839 = vunpack.c.l.b16 %v2768
  %v2840 = vunpack.c.l.b16 %v2769
  %v2841 = vunpack.c.l.b16 %v2770
  %v2842 = vunpack.c.l.b16 %v2771
  %v2843 = vunpack.c.l.b16 %v2772
  %v2844 = vunpack.c.l.b16 %v2773
  %v2845 = vunpack.c.l.b16 %v2774
  %v2846 = vunpack.c.l.b16 %v2775
  %v2847 = vunpack.c.l.b16 %v2776
  %v2848 = vunpack.c.l.b16 %v2777
  %v2849 = vunpack.c.l.b16 %v2778
  %v2850 = vunpack.c.l.b16 %v2779
  %v2851 = vunpack.c.l.b16 %v2780
  %v2852 = vunpack.c.l.b16 %v2781
  %v2853 = vunpack.c.l.b16 %v2782
  %v2854 = vunpack.c.l.b16 %v2783
  %v2855 = vunpack.c.l.b16 %v2784
  %v2856 = vunpack.c.l.b16 %v2785
  %v2857 = vunpack.c.l.b16 %v2786
  %v2858 = vunpack.c.l.b16 %v2787
  %v2859 = vpack.c.b16 %v2828, %v2827
  %v2860 = vpack.c.b16 %v2830, %v2829
  %v2861 = vpack.c.b16 %v2832, %v2831
  %v2862 = vpack.c.b16 %v2834, %v2833
  %v2863 = vpack.c.b16 %v2836, %v2835
  %v2864 = vpack.c.b16 %v2838, %v2837
  %v2865 = vpack.c.b16 %v2840, %v2839
  %v2866 = vpack.c.b16 %v2842, %v2841
  %v2867 = vpack.c.b16 %v2844, %v2843
  %v2868 = vpack.c.b16 %v2846, %v2845
  %v2869 = vpack.c.b16 %v2848, %v2847
  %v2870 = vpack.c.b16 %v2850, %v2849
  %v2871 = vpack.c.b16 %v2852, %v2851
  %v2872 = vpack.c.b16 %v2854, %v2853
  %v2873 = vpack.c.b16 %v2856, %v2855
  %v2874 = vpack.c.b16 %v2858, %v2857
  %2891 = vmatprep.subr.bf16.mxu0 0
  %2892 = vmatpush1.bf16.msra.mxu0 %v2859
  %2893 = vmatprep.subr.bf16.mxu0 0
  %2894 = vmatpush1.bf16.msra.mxu0 %v2860
  %2895 = vmatprep.subr.bf16.mxu0 0
  %2896 = vmatpush1.bf16.msra.mxu0 %v2861
  %2897 = vmatprep.subr.bf16.mxu0 0
  %2898 = vmatpush1.bf16.msra.mxu0 %v2862
  %2899 = vmatprep.subr.bf16.mxu0 0
  %2900 = vmatpush1.bf16.msra.mxu0 %v2863
  %2901 = vmatprep.subr.bf16.mxu0 0
  %2902 = vmatpush1.bf16.msra.mxu0 %v2864
  %2903 = vmatprep.subr.bf16.mxu0 0
  %2904 = vmatpush1.bf16.msra.mxu0 %v2865
  %2905 = vmatprep.subr.bf16.mxu0 0
  %2906 = vmatpush1.bf16.msra.mxu0 %v2866
  %2907 = vmatprep.subr.bf16.mxu0 0
  %2908 = vmatpush1.bf16.msra.mxu0 %v2867
  %2909 = vmatprep.subr.bf16.mxu0 0
  %2910 = vmatpush1.bf16.msra.mxu0 %v2868
  %2911 = vmatprep.subr.bf16.mxu0 0
  %2912 = vmatpush1.bf16.msra.mxu0 %v2869
  %2913 = vmatprep.subr.bf16.mxu0 0
  %2914 = vmatpush1.bf16.msra.mxu0 %v2870
  %2915 = vmatprep.subr.bf16.mxu0 0
  %2916 = vmatpush1.bf16.msra.mxu0 %v2871
  %2917 = vmatprep.subr.bf16.mxu0 0
  %2918 = vmatpush1.bf16.msra.mxu0 %v2872
  %2919 = vmatprep.subr.bf16.mxu0 0
  %2920 = vmatpush1.bf16.msra.mxu0 %v2873
  %2921 = vmatprep.subr.bf16.mxu0 0
  %2922 = vmatpush1.bf16.msra.mxu0 %v2874
  %2923 = vmatprep.mubr.bf16.mxu0 %v2755
  %2924 = vmatmul.mubr.bf16.gmra.mrb[0].mxu0 %v2754
  %v2925 = vpop.f32.mrb[0].mxu0
  %v2926 = vadd.f32 %v2793, %v2925
  %v2927 = vpop.f32.mrb[0].mxu0
  %v2928 = vpop.f32.mrb[0].mxu0
  %v2929 = vpop.f32.mrb[0].mxu0
  %2930 = vdwg.mxu0
  %2931 = vst [vmem:[%s11] sm:$0xf] %v2926
  // Predicated region
  $region46: #{tnet_forward.7} parent=0 // pred_check
    _
  $region47: #{tnet_forward.7} parent=0 // pred_check_branch
    %2933 = sbr.rel (0) target = $region49
  $region48: #{tnet_forward.7} parent=0 // pred_region
    _
  $region49: #{tnet_forward.7} parent=0 // pred_fallthru
    _
  // Predicated region
  $region50: #{tnet_forward.7} parent=0 // pred_check
    _
  $region51: #{tnet_forward.7} parent=0 // pred_check_branch
    %2935 = sbr.rel (0) target = $region53
  $region52: #{tnet_forward.7} parent=0 // pred_region
    _
  $region53: #{tnet_forward.7} parent=0 // pred_fallthru
    _

</llo_original>
